<compile_context>
chip_gen: v6e
topology: v6e:2x2x1
jax: 0.10.0
libtpu: 0.0.40
codegen_flags: <defaults>
</compile_context>

<pallas_src>
import functools

import numpy as np

import jax
import jax.numpy as jnp
from jax import lax
from jax.experimental import pallas as pl
from jax.experimental.pallas import tpu as pltpu


def _resblock_kernel(offs, lanes,
                     x_ref, mask_ref, w1_ref, w2_ref, b1_ref, b2_ref, out_ref):
    # x_ref: (CIN, lanes) lane-dense block; lanes = BB * S.
    x = x_ref[...]

    def conv_taps(src, w_ref):
        # sum_k  w_k (Cout, Cin) @ (roll(src, -off_k) * mask_k) (Cin, lanes)
        # All operands stay in vregs; no im2col / staging stores.
        acc = None
        for k, off in enumerate(offs):
            if off == 0:
                patch = src                      # center tap: mask is all-ones
            else:
                shifted = pltpu.roll(src, shift=(-off) % lanes, axis=1)
                patch = shifted * mask_ref[pl.ds(k, 1), :]
            term = jnp.dot(w_ref[k], patch, preferred_element_type=jnp.float32)
            acc = term if acc is None else acc + term
        return acc

    # conv1 (+ folded bn1) + relu
    h1 = jnp.maximum(conv_taps(x, w1_ref) + b1_ref[...], 0.0)
    # conv2 (+ folded bn2) + residual + relu
    acc2 = conv_taps(h1, w2_ref)
    out_ref[...] = jnp.maximum(acc2 + b2_ref[...] + x, 0.0)


def resblock_pallas(x_ncdhw, w1_t, w2_t,
                    g1, be1, m1, v1, g2, be2, m2, v2, eps=1e-5):
    """x_ncdhw: (N, C, D, H, W) float32; conv weights in PyTorch (O, I, kd, kh, kw)."""
    N, C, D, H, W = x_ncdhw.shape
    CIN = C
    CMID = w1_t.shape[0]
    assert CMID == CIN, "ResBlock with stride=1 and no downsample needs planes == inplanes"
    S = D * H * W
    HW = H * W

    # Fold BB batch elements into the lane axis, but keep the grid >= 2
    # (>= 4 when possible) so v7x's 2 TensorCores get work and DMA pipelines.
    def pick_bb(n):
        for min_grid in (4, 2):
            for b in range(min(n, 8), 0, -1):
                if n % b == 0 and n // b >= min_grid:
                    return b
        return n  # n == 1: single-step grid is unavoidable

    BB = pick_bb(N)
    LANES = BB * S

    # NCDHW -> (C, N*S): channels on sublanes, batch*spatial on lanes.
    x_flat = jnp.transpose(x_ncdhw.reshape(N, CIN, S).astype(jnp.float32),
                           (1, 0, 2)).reshape(CIN, N * S)

    # Fold eval-mode BN scale into the conv weights; keep the shift as a bias.
    inv1 = 1.0 / jnp.sqrt(v1 + eps)
    inv2 = 1.0 / jnp.sqrt(v2 + eps)
    # torch (O, I, kd, kh, kw) -> per-tap (27, O, I); row-scale O by gamma/std.
    w1_k = jnp.transpose(w1_t, (2, 3, 4, 0, 1)).reshape(27, CMID, CIN)
    w2_k = jnp.transpose(w2_t, (2, 3, 4, 0, 1)).reshape(27, CMID, CMID)
    w1_eff = (w1_k * (g1 * inv1)[None, :, None]).astype(jnp.float32)
    w2_eff = (w2_k * (g2 * inv2)[None, :, None]).astype(jnp.float32)
    b1 = (be1 - m1 * g1 * inv1).reshape(CMID, 1).astype(jnp.float32)
    b2 = (be2 - m2 * g2 * inv2).reshape(CMID, 1).astype(jnp.float32)

    # Flattened tap offsets and per-tap boundary masks (host-side constants).
    offs = [(kd - 1) * HW + (kh - 1) * W + (kw - 1)
            for kd in range(3) for kh in range(3) for kw in range(3)]
    s_idx = np.arange(S)
    d_i, h_i, w_i = s_idx // HW, (s_idx // W) % H, s_idx % W
    masks_np = np.zeros((27, S), np.float32)
    k = 0
    for kd in range(3):
        for kh in range(3):
            for kw in range(3):
                valid = ((d_i + kd - 1 >= 0) & (d_i + kd - 1 < D) &
                         (h_i + kh - 1 >= 0) & (h_i + kh - 1 < H) &
                         (w_i + kw - 1 >= 0) & (w_i + kw - 1 < W))
                masks_np[k] = valid
                k += 1
    masks = jnp.asarray(np.tile(masks_np, (1, BB)))          # (27, BB*S)

    kernel = functools.partial(_resblock_kernel, offs, LANES)

    out_flat = pl.pallas_call(
        kernel,
        out_shape=jax.ShapeDtypeStruct((CMID, N * S), jnp.float32),
        grid_spec=pltpu.PrefetchScalarGridSpec(
            num_scalar_prefetch=0,
            grid=(N // BB,),
            in_specs=[
                pl.BlockSpec((CIN, LANES), lambda n: (0, n)),          # x block
                pl.BlockSpec((27, LANES), lambda n: (0, 0)),           # tap masks
                pl.BlockSpec((27, CMID, CIN), lambda n: (0, 0, 0)),    # w1 per-tap
                pl.BlockSpec((27, CMID, CMID), lambda n: (0, 0, 0)),   # w2 per-tap
                pl.BlockSpec((CMID, 1), lambda n: (0, 0)),             # bias1
                pl.BlockSpec((CMID, 1), lambda n: (0, 0)),             # bias2
            ],
            out_specs=pl.BlockSpec((CMID, LANES), lambda n: (0, n)),
        ),
        compiler_params=pltpu.CompilerParams(
            dimension_semantics=("parallel",)),
    )(x_flat, masks, w1_eff, w2_eff, b1, b2)

    # (CMID, N*S) -> NCDHW
    return jnp.transpose(out_flat.reshape(CMID, N, S),
                         (1, 0, 2)).reshape(N, CMID, D, H, W)


def resblock_ref(x, w1_t, w2_t, g1, be1, m1, v1, g2, be2, m2, v2, eps=1e-5):
    """Pure-JAX reference (NCDHW), matches PyTorch ResBlock in eval mode."""
    def conv3(y, w):
        return lax.conv_general_dilated(
            y, w, window_strides=(1, 1, 1), padding=[(1, 1)] * 3,
            dimension_numbers=('NCDHW', 'OIDHW', 'NCDHW'))

    def bn(y, g, b, m, v):
        sh = (1, -1, 1, 1, 1)
        return ((y - m.reshape(sh)) / jnp.sqrt(v.reshape(sh) + eps)
                * g.reshape(sh) + b.reshape(sh))

    out = jnp.maximum(bn(conv3(x, w1_t), g1, be1, m1, v1), 0.0)
    out = bn(conv3(out, w2_t), g2, be2, m2, v2)
    return jnp.maximum(out + x, 0.0)


if __name__ == "__main__":
    # Small shapes consistent with ResBlock(inplanes=4, planes=4, dims=3).
    N, C, D, H, W = 2, 4, 8, 8, 8
    planes = C

    key = jax.random.PRNGKey(0)
    ks = jax.random.split(key, 11)
    x = jax.random.normal(ks[0], (N, C, D, H, W), jnp.float32)

    w1_t = 0.2 * jax.random.normal(ks[1], (planes, C, 3, 3, 3), jnp.float32)
    w2_t = 0.2 * jax.random.normal(ks[2], (planes, planes, 3, 3, 3), jnp.float32)

    g1 = 1.0 + 0.1 * jax.random.normal(ks[3], (planes,), jnp.float32)
    be1 = 0.1 * jax.random.normal(ks[4], (planes,), jnp.float32)
    m1 = 0.1 * jax.random.normal(ks[5], (planes,), jnp.float32)
    v1 = 0.5 + jax.random.uniform(ks[6], (planes,), jnp.float32)

    g2 = 1.0 + 0.1 * jax.random.normal(ks[7], (planes,), jnp.float32)
    be2 = 0.1 * jax.random.normal(ks[8], (planes,), jnp.float32)
    m2 = 0.1 * jax.random.normal(ks[9], (planes,), jnp.float32)
    v2 = 0.5 + jax.random.uniform(ks[10], (planes,), jnp.float32)

    out = jax.block_until_ready(
        resblock_pallas(x, w1_t, w2_t, g1, be1, m1, v1, g2, be2, m2, v2))
    ref = resblock_ref(x, w1_t, w2_t, g1, be1, m1, v1, g2, be2, m2, v2)

    assert out.shape == x.shape, (out.shape, x.shape)
    max_err = float(jnp.max(jnp.abs(out - ref)))
    assert jnp.allclose(out, ref, rtol=1e-4, atol=1e-4), max_err
    print("KERNEL_OK")
</pallas_src>

<mosaic_0001>
module attributes {stable_mosaic.version = 11 : i64} {
  func.func @_resblock_kernel(%arg0: i32, %arg1: memref<4x512xf32, #tpu.memory_space<vmem>>, %arg2: memref<27x512xf32, #tpu.memory_space<vmem>>, %arg3: memref<27x4x4xf32, #tpu.memory_space<vmem>>, %arg4: memref<27x4x4xf32, #tpu.memory_space<vmem>>, %arg5: memref<4x1xf32, #tpu.memory_space<vmem>>, %arg6: memref<4x1xf32, #tpu.memory_space<vmem>>, %arg7: memref<4x512xf32, #tpu.memory_space<vmem>>) attributes {dimension_semantics = [#tpu.dimension_semantics<parallel>], iteration_bounds = array<i64: 2>, scalar_prefetch = 0 : i64, scratch_operands = 0 : i64, tpu.core_type = #tpu.core_type<tc>, window_params = [{transform_indices = @transform_0, window_bounds = array<i64: 4, 512>}, {pipeline_mode = #tpu.pipeline_mode<synchronous>, transform_indices = @transform_1, window_bounds = array<i64: 27, 512>}, {pipeline_mode = #tpu.pipeline_mode<synchronous>, transform_indices = @transform_2, window_bounds = array<i64: 27, 4, 4>}, {pipeline_mode = #tpu.pipeline_mode<synchronous>, transform_indices = @transform_3, window_bounds = array<i64: 27, 4, 4>}, {pipeline_mode = #tpu.pipeline_mode<synchronous>, transform_indices = @transform_4, window_bounds = array<i64: 4, 1>}, {pipeline_mode = #tpu.pipeline_mode<synchronous>, transform_indices = @transform_5, window_bounds = array<i64: 4, 1>}, {transform_indices = @transform_6, window_bounds = array<i64: 4, 512>}]} {
    %c0 = arith.constant 0 : index
    %c0_0 = arith.constant 0 : index
    %0 = vector.load %arg1[%c0, %c0_0] : memref<4x512xf32, #tpu.memory_space<vmem>>, vector<4x512xf32>
    %c73_i32 = arith.constant 73 : i32
    %1 = tpu.dynamic_rotate %0 by %c73_i32 dim 1 : vector<4x512xf32>, i32 -> vector<4x512xf32>
    %c0_1 = arith.constant 0 : index
    %c0_2 = arith.constant 0 : index
    %2 = vector.load %arg2[%c0_1, %c0_2] : memref<27x512xf32, #tpu.memory_space<vmem>>, vector<1x512xf32>
    %3 = vector.broadcast %2 : vector<1x512xf32> to vector<4x512xf32>
    %4 = arith.mulf %1, %3 : vector<4x512xf32>
    %c0_3 = arith.constant 0 : index
    %c0_4 = arith.constant 0 : index
    %c0_5 = arith.constant 0 : index
    %5 = vector.load %arg3[%c0_3, %c0_4, %c0_5] : memref<27x4x4xf32, #tpu.memory_space<vmem>>, vector<1x4x4xf32>
    %6 = vector.shape_cast %5 : vector<1x4x4xf32> to vector<4x4xf32>
    %cst = arith.constant dense<0.000000e+00> : vector<4x512xf32>
    %7 = tpu.matmul %6, %4, %cst {dimension_numbers = #tpu.dot_dimension_numbers<[1], [0], [0], [1], [0, 0, 1, 1], [], []>} : vector<4x4xf32>, vector<4x512xf32>, vector<4x512xf32> -> vector<4x512xf32>
    %c72_i32 = arith.constant 72 : i32
    %8 = tpu.dynamic_rotate %0 by %c72_i32 dim 1 : vector<4x512xf32>, i32 -> vector<4x512xf32>
    %c1 = arith.constant 1 : index
    %c0_6 = arith.constant 0 : index
    %9 = vector.load %arg2[%c1, %c0_6] : memref<27x512xf32, #tpu.memory_space<vmem>>, vector<1x512xf32>
    %10 = vector.broadcast %9 : vector<1x512xf32> to vector<4x512xf32>
    %11 = arith.mulf %8, %10 : vector<4x512xf32>
    %c1_7 = arith.constant 1 : index
    %c0_8 = arith.constant 0 : index
    %c0_9 = arith.constant 0 : index
    %12 = vector.load %arg3[%c1_7, %c0_8, %c0_9] : memref<27x4x4xf32, #tpu.memory_space<vmem>>, vector<1x4x4xf32>
    %13 = vector.shape_cast %12 : vector<1x4x4xf32> to vector<4x4xf32>
    %cst_10 = arith.constant dense<0.000000e+00> : vector<4x512xf32>
    %14 = tpu.matmul %13, %11, %cst_10 {dimension_numbers = #tpu.dot_dimension_numbers<[1], [0], [0], [1], [0, 0, 1, 1], [], []>} : vector<4x4xf32>, vector<4x512xf32>, vector<4x512xf32> -> vector<4x512xf32>
    %15 = arith.addf %7, %14 : vector<4x512xf32>
    %c71_i32 = arith.constant 71 : i32
    %16 = tpu.dynamic_rotate %0 by %c71_i32 dim 1 : vector<4x512xf32>, i32 -> vector<4x512xf32>
    %c2 = arith.constant 2 : index
    %c0_11 = arith.constant 0 : index
    %17 = vector.load %arg2[%c2, %c0_11] : memref<27x512xf32, #tpu.memory_space<vmem>>, vector<1x512xf32>
    %18 = vector.broadcast %17 : vector<1x512xf32> to vector<4x512xf32>
    %19 = arith.mulf %16, %18 : vector<4x512xf32>
    %c2_12 = arith.constant 2 : index
    %c0_13 = arith.constant 0 : index
    %c0_14 = arith.constant 0 : index
    %20 = vector.load %arg3[%c2_12, %c0_13, %c0_14] : memref<27x4x4xf32, #tpu.memory_space<vmem>>, vector<1x4x4xf32>
    %21 = vector.shape_cast %20 : vector<1x4x4xf32> to vector<4x4xf32>
    %cst_15 = arith.constant dense<0.000000e+00> : vector<4x512xf32>
    %22 = tpu.matmul %21, %19, %cst_15 {dimension_numbers = #tpu.dot_dimension_numbers<[1], [0], [0], [1], [0, 0, 1, 1], [], []>} : vector<4x4xf32>, vector<4x512xf32>, vector<4x512xf32> -> vector<4x512xf32>
    %23 = arith.addf %15, %22 : vector<4x512xf32>
    %c65_i32 = arith.constant 65 : i32
    %24 = tpu.dynamic_rotate %0 by %c65_i32 dim 1 : vector<4x512xf32>, i32 -> vector<4x512xf32>
    %c3 = arith.constant 3 : index
    %c0_16 = arith.constant 0 : index
    %25 = vector.load %arg2[%c3, %c0_16] : memref<27x512xf32, #tpu.memory_space<vmem>>, vector<1x512xf32>
    %26 = vector.broadcast %25 : vector<1x512xf32> to vector<4x512xf32>
    %27 = arith.mulf %24, %26 : vector<4x512xf32>
    %c3_17 = arith.constant 3 : index
    %c0_18 = arith.constant 0 : index
    %c0_19 = arith.constant 0 : index
    %28 = vector.load %arg3[%c3_17, %c0_18, %c0_19] : memref<27x4x4xf32, #tpu.memory_space<vmem>>, vector<1x4x4xf32>
    %29 = vector.shape_cast %28 : vector<1x4x4xf32> to vector<4x4xf32>
    %cst_20 = arith.constant dense<0.000000e+00> : vector<4x512xf32>
    %30 = tpu.matmul %29, %27, %cst_20 {dimension_numbers = #tpu.dot_dimension_numbers<[1], [0], [0], [1], [0, 0, 1, 1], [], []>} : vector<4x4xf32>, vector<4x512xf32>, vector<4x512xf32> -> vector<4x512xf32>
    %31 = arith.addf %23, %30 : vector<4x512xf32>
    %c64_i32 = arith.constant 64 : i32
    %32 = tpu.dynamic_rotate %0 by %c64_i32 dim 1 : vector<4x512xf32>, i32 -> vector<4x512xf32>
    %c4 = arith.constant 4 : index
    %c0_21 = arith.constant 0 : index
    %33 = vector.load %arg2[%c4, %c0_21] : memref<27x512xf32, #tpu.memory_space<vmem>>, vector<1x512xf32>
    %34 = vector.broadcast %33 : vector<1x512xf32> to vector<4x512xf32>
    %35 = arith.mulf %32, %34 : vector<4x512xf32>
    %c4_22 = arith.constant 4 : index
    %c0_23 = arith.constant 0 : index
    %c0_24 = arith.constant 0 : index
    %36 = vector.load %arg3[%c4_22, %c0_23, %c0_24] : memref<27x4x4xf32, #tpu.memory_space<vmem>>, vector<1x4x4xf32>
    %37 = vector.shape_cast %36 : vector<1x4x4xf32> to vector<4x4xf32>
    %cst_25 = arith.constant dense<0.000000e+00> : vector<4x512xf32>
    %38 = tpu.matmul %37, %35, %cst_25 {dimension_numbers = #tpu.dot_dimension_numbers<[1], [0], [0], [1], [0, 0, 1, 1], [], []>} : vector<4x4xf32>, vector<4x512xf32>, vector<4x512xf32> -> vector<4x512xf32>
    %39 = arith.addf %31, %38 : vector<4x512xf32>
    %c63_i32 = arith.constant 63 : i32
    %40 = tpu.dynamic_rotate %0 by %c63_i32 dim 1 : vector<4x512xf32>, i32 -> vector<4x512xf32>
    %c5 = arith.constant 5 : index
    %c0_26 = arith.constant 0 : index
    %41 = vector.load %arg2[%c5, %c0_26] : memref<27x512xf32, #tpu.memory_space<vmem>>, vector<1x512xf32>
    %42 = vector.broadcast %41 : vector<1x512xf32> to vector<4x512xf32>
    %43 = arith.mulf %40, %42 : vector<4x512xf32>
    %c5_27 = arith.constant 5 : index
    %c0_28 = arith.constant 0 : index
    %c0_29 = arith.constant 0 : index
    %44 = vector.load %arg3[%c5_27, %c0_28, %c0_29] : memref<27x4x4xf32, #tpu.memory_space<vmem>>, vector<1x4x4xf32>
    %45 = vector.shape_cast %44 : vector<1x4x4xf32> to vector<4x4xf32>
    %cst_30 = arith.constant dense<0.000000e+00> : vector<4x512xf32>
    %46 = tpu.matmul %45, %43, %cst_30 {dimension_numbers = #tpu.dot_dimension_numbers<[1], [0], [0], [1], [0, 0, 1, 1], [], []>} : vector<4x4xf32>, vector<4x512xf32>, vector<4x512xf32> -> vector<4x512xf32>
    %47 = arith.addf %39, %46 : vector<4x512xf32>
    %c57_i32 = arith.constant 57 : i32
    %48 = tpu.dynamic_rotate %0 by %c57_i32 dim 1 : vector<4x512xf32>, i32 -> vector<4x512xf32>
    %c6 = arith.constant 6 : index
    %c0_31 = arith.constant 0 : index
    %49 = vector.load %arg2[%c6, %c0_31] : memref<27x512xf32, #tpu.memory_space<vmem>>, vector<1x512xf32>
    %50 = vector.broadcast %49 : vector<1x512xf32> to vector<4x512xf32>
    %51 = arith.mulf %48, %50 : vector<4x512xf32>
    %c6_32 = arith.constant 6 : index
    %c0_33 = arith.constant 0 : index
    %c0_34 = arith.constant 0 : index
    %52 = vector.load %arg3[%c6_32, %c0_33, %c0_34] : memref<27x4x4xf32, #tpu.memory_space<vmem>>, vector<1x4x4xf32>
    %53 = vector.shape_cast %52 : vector<1x4x4xf32> to vector<4x4xf32>
    %cst_35 = arith.constant dense<0.000000e+00> : vector<4x512xf32>
    %54 = tpu.matmul %53, %51, %cst_35 {dimension_numbers = #tpu.dot_dimension_numbers<[1], [0], [0], [1], [0, 0, 1, 1], [], []>} : vector<4x4xf32>, vector<4x512xf32>, vector<4x512xf32> -> vector<4x512xf32>
    %55 = arith.addf %47, %54 : vector<4x512xf32>
    %c56_i32 = arith.constant 56 : i32
    %56 = tpu.dynamic_rotate %0 by %c56_i32 dim 1 : vector<4x512xf32>, i32 -> vector<4x512xf32>
    %c7 = arith.constant 7 : index
    %c0_36 = arith.constant 0 : index
    %57 = vector.load %arg2[%c7, %c0_36] : memref<27x512xf32, #tpu.memory_space<vmem>>, vector<1x512xf32>
    %58 = vector.broadcast %57 : vector<1x512xf32> to vector<4x512xf32>
    %59 = arith.mulf %56, %58 : vector<4x512xf32>
    %c7_37 = arith.constant 7 : index
    %c0_38 = arith.constant 0 : index
    %c0_39 = arith.constant 0 : index
    %60 = vector.load %arg3[%c7_37, %c0_38, %c0_39] : memref<27x4x4xf32, #tpu.memory_space<vmem>>, vector<1x4x4xf32>
    %61 = vector.shape_cast %60 : vector<1x4x4xf32> to vector<4x4xf32>
    %cst_40 = arith.constant dense<0.000000e+00> : vector<4x512xf32>
    %62 = tpu.matmul %61, %59, %cst_40 {dimension_numbers = #tpu.dot_dimension_numbers<[1], [0], [0], [1], [0, 0, 1, 1], [], []>} : vector<4x4xf32>, vector<4x512xf32>, vector<4x512xf32> -> vector<4x512xf32>
    %63 = arith.addf %55, %62 : vector<4x512xf32>
    %c55_i32 = arith.constant 55 : i32
    %64 = tpu.dynamic_rotate %0 by %c55_i32 dim 1 : vector<4x512xf32>, i32 -> vector<4x512xf32>
    %c8 = arith.constant 8 : index
    %c0_41 = arith.constant 0 : index
    %65 = vector.load %arg2[%c8, %c0_41] : memref<27x512xf32, #tpu.memory_space<vmem>>, vector<1x512xf32>
    %66 = vector.broadcast %65 : vector<1x512xf32> to vector<4x512xf32>
    %67 = arith.mulf %64, %66 : vector<4x512xf32>
    %c8_42 = arith.constant 8 : index
    %c0_43 = arith.constant 0 : index
    %c0_44 = arith.constant 0 : index
    %68 = vector.load %arg3[%c8_42, %c0_43, %c0_44] : memref<27x4x4xf32, #tpu.memory_space<vmem>>, vector<1x4x4xf32>
    %69 = vector.shape_cast %68 : vector<1x4x4xf32> to vector<4x4xf32>
    %cst_45 = arith.constant dense<0.000000e+00> : vector<4x512xf32>
    %70 = tpu.matmul %69, %67, %cst_45 {dimension_numbers = #tpu.dot_dimension_numbers<[1], [0], [0], [1], [0, 0, 1, 1], [], []>} : vector<4x4xf32>, vector<4x512xf32>, vector<4x512xf32> -> vector<4x512xf32>
    %71 = arith.addf %63, %70 : vector<4x512xf32>
    %c9_i32 = arith.constant 9 : i32
    %72 = tpu.dynamic_rotate %0 by %c9_i32 dim 1 : vector<4x512xf32>, i32 -> vector<4x512xf32>
    %c9 = arith.constant 9 : index
    %c0_46 = arith.constant 0 : index
    %73 = vector.load %arg2[%c9, %c0_46] : memref<27x512xf32, #tpu.memory_space<vmem>>, vector<1x512xf32>
    %74 = vector.broadcast %73 : vector<1x512xf32> to vector<4x512xf32>
    %75 = arith.mulf %72, %74 : vector<4x512xf32>
    %c9_47 = arith.constant 9 : index
    %c0_48 = arith.constant 0 : index
    %c0_49 = arith.constant 0 : index
    %76 = vector.load %arg3[%c9_47, %c0_48, %c0_49] : memref<27x4x4xf32, #tpu.memory_space<vmem>>, vector<1x4x4xf32>
    %77 = vector.shape_cast %76 : vector<1x4x4xf32> to vector<4x4xf32>
    %cst_50 = arith.constant dense<0.000000e+00> : vector<4x512xf32>
    %78 = tpu.matmul %77, %75, %cst_50 {dimension_numbers = #tpu.dot_dimension_numbers<[1], [0], [0], [1], [0, 0, 1, 1], [], []>} : vector<4x4xf32>, vector<4x512xf32>, vector<4x512xf32> -> vector<4x512xf32>
    %79 = arith.addf %71, %78 : vector<4x512xf32>
    %c8_i32 = arith.constant 8 : i32
    %80 = tpu.dynamic_rotate %0 by %c8_i32 dim 1 : vector<4x512xf32>, i32 -> vector<4x512xf32>
    %c10 = arith.constant 10 : index
    %c0_51 = arith.constant 0 : index
    %81 = vector.load %arg2[%c10, %c0_51] : memref<27x512xf32, #tpu.memory_space<vmem>>, vector<1x512xf32>
    %82 = vector.broadcast %81 : vector<1x512xf32> to vector<4x512xf32>
    %83 = arith.mulf %80, %82 : vector<4x512xf32>
    %c10_52 = arith.constant 10 : index
    %c0_53 = arith.constant 0 : index
    %c0_54 = arith.constant 0 : index
    %84 = vector.load %arg3[%c10_52, %c0_53, %c0_54] : memref<27x4x4xf32, #tpu.memory_space<vmem>>, vector<1x4x4xf32>
    %85 = vector.shape_cast %84 : vector<1x4x4xf32> to vector<4x4xf32>
    %cst_55 = arith.constant dense<0.000000e+00> : vector<4x512xf32>
    %86 = tpu.matmul %85, %83, %cst_55 {dimension_numbers = #tpu.dot_dimension_numbers<[1], [0], [0], [1], [0, 0, 1, 1], [], []>} : vector<4x4xf32>, vector<4x512xf32>, vector<4x512xf32> -> vector<4x512xf32>
    %87 = arith.addf %79, %86 : vector<4x512xf32>
    %c7_i32 = arith.constant 7 : i32
    %88 = tpu.dynamic_rotate %0 by %c7_i32 dim 1 : vector<4x512xf32>, i32 -> vector<4x512xf32>
    %c11 = arith.constant 11 : index
    %c0_56 = arith.constant 0 : index
    %89 = vector.load %arg2[%c11, %c0_56] : memref<27x512xf32, #tpu.memory_space<vmem>>, vector<1x512xf32>
    %90 = vector.broadcast %89 : vector<1x512xf32> to vector<4x512xf32>
    %91 = arith.mulf %88, %90 : vector<4x512xf32>
    %c11_57 = arith.constant 11 : index
    %c0_58 = arith.constant 0 : index
    %c0_59 = arith.constant 0 : index
    %92 = vector.load %arg3[%c11_57, %c0_58, %c0_59] : memref<27x4x4xf32, #tpu.memory_space<vmem>>, vector<1x4x4xf32>
    %93 = vector.shape_cast %92 : vector<1x4x4xf32> to vector<4x4xf32>
    %cst_60 = arith.constant dense<0.000000e+00> : vector<4x512xf32>
    %94 = tpu.matmul %93, %91, %cst_60 {dimension_numbers = #tpu.dot_dimension_numbers<[1], [0], [0], [1], [0, 0, 1, 1], [], []>} : vector<4x4xf32>, vector<4x512xf32>, vector<4x512xf32> -> vector<4x512xf32>
    %95 = arith.addf %87, %94 : vector<4x512xf32>
    %c1_i32 = arith.constant 1 : i32
    %96 = tpu.dynamic_rotate %0 by %c1_i32 dim 1 : vector<4x512xf32>, i32 -> vector<4x512xf32>
    %c12 = arith.constant 12 : index
    %c0_61 = arith.constant 0 : index
    %97 = vector.load %arg2[%c12, %c0_61] : memref<27x512xf32, #tpu.memory_space<vmem>>, vector<1x512xf32>
    %98 = vector.broadcast %97 : vector<1x512xf32> to vector<4x512xf32>
    %99 = arith.mulf %96, %98 : vector<4x512xf32>
    %c12_62 = arith.constant 12 : index
    %c0_63 = arith.constant 0 : index
    %c0_64 = arith.constant 0 : index
    %100 = vector.load %arg3[%c12_62, %c0_63, %c0_64] : memref<27x4x4xf32, #tpu.memory_space<vmem>>, vector<1x4x4xf32>
    %101 = vector.shape_cast %100 : vector<1x4x4xf32> to vector<4x4xf32>
    %cst_65 = arith.constant dense<0.000000e+00> : vector<4x512xf32>
    %102 = tpu.matmul %101, %99, %cst_65 {dimension_numbers = #tpu.dot_dimension_numbers<[1], [0], [0], [1], [0, 0, 1, 1], [], []>} : vector<4x4xf32>, vector<4x512xf32>, vector<4x512xf32> -> vector<4x512xf32>
    %103 = arith.addf %95, %102 : vector<4x512xf32>
    %c13 = arith.constant 13 : index
    %c0_66 = arith.constant 0 : index
    %c0_67 = arith.constant 0 : index
    %104 = vector.load %arg3[%c13, %c0_66, %c0_67] : memref<27x4x4xf32, #tpu.memory_space<vmem>>, vector<1x4x4xf32>
    %105 = vector.shape_cast %104 : vector<1x4x4xf32> to vector<4x4xf32>
    %cst_68 = arith.constant dense<0.000000e+00> : vector<4x512xf32>
    %106 = tpu.matmul %105, %0, %cst_68 {dimension_numbers = #tpu.dot_dimension_numbers<[1], [0], [0], [1], [0, 0, 1, 1], [], []>} : vector<4x4xf32>, vector<4x512xf32>, vector<4x512xf32> -> vector<4x512xf32>
    %107 = arith.addf %103, %106 : vector<4x512xf32>
    %c511_i32 = arith.constant 511 : i32
    %108 = tpu.dynamic_rotate %0 by %c511_i32 dim 1 : vector<4x512xf32>, i32 -> vector<4x512xf32>
    %c14 = arith.constant 14 : index
    %c0_69 = arith.constant 0 : index
    %109 = vector.load %arg2[%c14, %c0_69] : memref<27x512xf32, #tpu.memory_space<vmem>>, vector<1x512xf32>
    %110 = vector.broadcast %109 : vector<1x512xf32> to vector<4x512xf32>
    %111 = arith.mulf %108, %110 : vector<4x512xf32>
    %c14_70 = arith.constant 14 : index
    %c0_71 = arith.constant 0 : index
    %c0_72 = arith.constant 0 : index
    %112 = vector.load %arg3[%c14_70, %c0_71, %c0_72] : memref<27x4x4xf32, #tpu.memory_space<vmem>>, vector<1x4x4xf32>
    %113 = vector.shape_cast %112 : vector<1x4x4xf32> to vector<4x4xf32>
    %cst_73 = arith.constant dense<0.000000e+00> : vector<4x512xf32>
    %114 = tpu.matmul %113, %111, %cst_73 {dimension_numbers = #tpu.dot_dimension_numbers<[1], [0], [0], [1], [0, 0, 1, 1], [], []>} : vector<4x4xf32>, vector<4x512xf32>, vector<4x512xf32> -> vector<4x512xf32>
    %115 = arith.addf %107, %114 : vector<4x512xf32>
    %c505_i32 = arith.constant 505 : i32
    %116 = tpu.dynamic_rotate %0 by %c505_i32 dim 1 : vector<4x512xf32>, i32 -> vector<4x512xf32>
    %c15 = arith.constant 15 : index
    %c0_74 = arith.constant 0 : index
    %117 = vector.load %arg2[%c15, %c0_74] : memref<27x512xf32, #tpu.memory_space<vmem>>, vector<1x512xf32>
    %118 = vector.broadcast %117 : vector<1x512xf32> to vector<4x512xf32>
    %119 = arith.mulf %116, %118 : vector<4x512xf32>
    %c15_75 = arith.constant 15 : index
    %c0_76 = arith.constant 0 : index
    %c0_77 = arith.constant 0 : index
    %120 = vector.load %arg3[%c15_75, %c0_76, %c0_77] : memref<27x4x4xf32, #tpu.memory_space<vmem>>, vector<1x4x4xf32>
    %121 = vector.shape_cast %120 : vector<1x4x4xf32> to vector<4x4xf32>
    %cst_78 = arith.constant dense<0.000000e+00> : vector<4x512xf32>
    %122 = tpu.matmul %121, %119, %cst_78 {dimension_numbers = #tpu.dot_dimension_numbers<[1], [0], [0], [1], [0, 0, 1, 1], [], []>} : vector<4x4xf32>, vector<4x512xf32>, vector<4x512xf32> -> vector<4x512xf32>
    %123 = arith.addf %115, %122 : vector<4x512xf32>
    %c504_i32 = arith.constant 504 : i32
    %124 = tpu.dynamic_rotate %0 by %c504_i32 dim 1 : vector<4x512xf32>, i32 -> vector<4x512xf32>
    %c16 = arith.constant 16 : index
    %c0_79 = arith.constant 0 : index
    %125 = vector.load %arg2[%c16, %c0_79] : memref<27x512xf32, #tpu.memory_space<vmem>>, vector<1x512xf32>
    %126 = vector.broadcast %125 : vector<1x512xf32> to vector<4x512xf32>
    %127 = arith.mulf %124, %126 : vector<4x512xf32>
    %c16_80 = arith.constant 16 : index
    %c0_81 = arith.constant 0 : index
    %c0_82 = arith.constant 0 : index
    %128 = vector.load %arg3[%c16_80, %c0_81, %c0_82] : memref<27x4x4xf32, #tpu.memory_space<vmem>>, vector<1x4x4xf32>
    %129 = vector.shape_cast %128 : vector<1x4x4xf32> to vector<4x4xf32>
    %cst_83 = arith.constant dense<0.000000e+00> : vector<4x512xf32>
    %130 = tpu.matmul %129, %127, %cst_83 {dimension_numbers = #tpu.dot_dimension_numbers<[1], [0], [0], [1], [0, 0, 1, 1], [], []>} : vector<4x4xf32>, vector<4x512xf32>, vector<4x512xf32> -> vector<4x512xf32>
    %131 = arith.addf %123, %130 : vector<4x512xf32>
    %c503_i32 = arith.constant 503 : i32
    %132 = tpu.dynamic_rotate %0 by %c503_i32 dim 1 : vector<4x512xf32>, i32 -> vector<4x512xf32>
    %c17 = arith.constant 17 : index
    %c0_84 = arith.constant 0 : index
    %133 = vector.load %arg2[%c17, %c0_84] : memref<27x512xf32, #tpu.memory_space<vmem>>, vector<1x512xf32>
    %134 = vector.broadcast %133 : vector<1x512xf32> to vector<4x512xf32>
    %135 = arith.mulf %132, %134 : vector<4x512xf32>
    %c17_85 = arith.constant 17 : index
    %c0_86 = arith.constant 0 : index
    %c0_87 = arith.constant 0 : index
    %136 = vector.load %arg3[%c17_85, %c0_86, %c0_87] : memref<27x4x4xf32, #tpu.memory_space<vmem>>, vector<1x4x4xf32>
    %137 = vector.shape_cast %136 : vector<1x4x4xf32> to vector<4x4xf32>
    %cst_88 = arith.constant dense<0.000000e+00> : vector<4x512xf32>
    %138 = tpu.matmul %137, %135, %cst_88 {dimension_numbers = #tpu.dot_dimension_numbers<[1], [0], [0], [1], [0, 0, 1, 1], [], []>} : vector<4x4xf32>, vector<4x512xf32>, vector<4x512xf32> -> vector<4x512xf32>
    %139 = arith.addf %131, %138 : vector<4x512xf32>
    %c457_i32 = arith.constant 457 : i32
    %140 = tpu.dynamic_rotate %0 by %c457_i32 dim 1 : vector<4x512xf32>, i32 -> vector<4x512xf32>
    %c18 = arith.constant 18 : index
    %c0_89 = arith.constant 0 : index
    %141 = vector.load %arg2[%c18, %c0_89] : memref<27x512xf32, #tpu.memory_space<vmem>>, vector<1x512xf32>
    %142 = vector.broadcast %141 : vector<1x512xf32> to vector<4x512xf32>
    %143 = arith.mulf %140, %142 : vector<4x512xf32>
    %c18_90 = arith.constant 18 : index
    %c0_91 = arith.constant 0 : index
    %c0_92 = arith.constant 0 : index
    %144 = vector.load %arg3[%c18_90, %c0_91, %c0_92] : memref<27x4x4xf32, #tpu.memory_space<vmem>>, vector<1x4x4xf32>
    %145 = vector.shape_cast %144 : vector<1x4x4xf32> to vector<4x4xf32>
    %cst_93 = arith.constant dense<0.000000e+00> : vector<4x512xf32>
    %146 = tpu.matmul %145, %143, %cst_93 {dimension_numbers = #tpu.dot_dimension_numbers<[1], [0], [0], [1], [0, 0, 1, 1], [], []>} : vector<4x4xf32>, vector<4x512xf32>, vector<4x512xf32> -> vector<4x512xf32>
    %147 = arith.addf %139, %146 : vector<4x512xf32>
    %c456_i32 = arith.constant 456 : i32
    %148 = tpu.dynamic_rotate %0 by %c456_i32 dim 1 : vector<4x512xf32>, i32 -> vector<4x512xf32>
    %c19 = arith.constant 19 : index
    %c0_94 = arith.constant 0 : index
    %149 = vector.load %arg2[%c19, %c0_94] : memref<27x512xf32, #tpu.memory_space<vmem>>, vector<1x512xf32>
    %150 = vector.broadcast %149 : vector<1x512xf32> to vector<4x512xf32>
    %151 = arith.mulf %148, %150 : vector<4x512xf32>
    %c19_95 = arith.constant 19 : index
    %c0_96 = arith.constant 0 : index
    %c0_97 = arith.constant 0 : index
    %152 = vector.load %arg3[%c19_95, %c0_96, %c0_97] : memref<27x4x4xf32, #tpu.memory_space<vmem>>, vector<1x4x4xf32>
    %153 = vector.shape_cast %152 : vector<1x4x4xf32> to vector<4x4xf32>
    %cst_98 = arith.constant dense<0.000000e+00> : vector<4x512xf32>
    %154 = tpu.matmul %153, %151, %cst_98 {dimension_numbers = #tpu.dot_dimension_numbers<[1], [0], [0], [1], [0, 0, 1, 1], [], []>} : vector<4x4xf32>, vector<4x512xf32>, vector<4x512xf32> -> vector<4x512xf32>
    %155 = arith.addf %147, %154 : vector<4x512xf32>
    %c455_i32 = arith.constant 455 : i32
    %156 = tpu.dynamic_rotate %0 by %c455_i32 dim 1 : vector<4x512xf32>, i32 -> vector<4x512xf32>
    %c20 = arith.constant 20 : index
    %c0_99 = arith.constant 0 : index
    %157 = vector.load %arg2[%c20, %c0_99] : memref<27x512xf32, #tpu.memory_space<vmem>>, vector<1x512xf32>
    %158 = vector.broadcast %157 : vector<1x512xf32> to vector<4x512xf32>
    %159 = arith.mulf %156, %158 : vector<4x512xf32>
    %c20_100 = arith.constant 20 : index
    %c0_101 = arith.constant 0 : index
    %c0_102 = arith.constant 0 : index
    %160 = vector.load %arg3[%c20_100, %c0_101, %c0_102] : memref<27x4x4xf32, #tpu.memory_space<vmem>>, vector<1x4x4xf32>
    %161 = vector.shape_cast %160 : vector<1x4x4xf32> to vector<4x4xf32>
    %cst_103 = arith.constant dense<0.000000e+00> : vector<4x512xf32>
    %162 = tpu.matmul %161, %159, %cst_103 {dimension_numbers = #tpu.dot_dimension_numbers<[1], [0], [0], [1], [0, 0, 1, 1], [], []>} : vector<4x4xf32>, vector<4x512xf32>, vector<4x512xf32> -> vector<4x512xf32>
    %163 = arith.addf %155, %162 : vector<4x512xf32>
    %c449_i32 = arith.constant 449 : i32
    %164 = tpu.dynamic_rotate %0 by %c449_i32 dim 1 : vector<4x512xf32>, i32 -> vector<4x512xf32>
    %c21 = arith.constant 21 : index
    %c0_104 = arith.constant 0 : index
    %165 = vector.load %arg2[%c21, %c0_104] : memref<27x512xf32, #tpu.memory_space<vmem>>, vector<1x512xf32>
    %166 = vector.broadcast %165 : vector<1x512xf32> to vector<4x512xf32>
    %167 = arith.mulf %164, %166 : vector<4x512xf32>
    %c21_105 = arith.constant 21 : index
    %c0_106 = arith.constant 0 : index
    %c0_107 = arith.constant 0 : index
    %168 = vector.load %arg3[%c21_105, %c0_106, %c0_107] : memref<27x4x4xf32, #tpu.memory_space<vmem>>, vector<1x4x4xf32>
    %169 = vector.shape_cast %168 : vector<1x4x4xf32> to vector<4x4xf32>
    %cst_108 = arith.constant dense<0.000000e+00> : vector<4x512xf32>
    %170 = tpu.matmul %169, %167, %cst_108 {dimension_numbers = #tpu.dot_dimension_numbers<[1], [0], [0], [1], [0, 0, 1, 1], [], []>} : vector<4x4xf32>, vector<4x512xf32>, vector<4x512xf32> -> vector<4x512xf32>
    %171 = arith.addf %163, %170 : vector<4x512xf32>
    %c448_i32 = arith.constant 448 : i32
    %172 = tpu.dynamic_rotate %0 by %c448_i32 dim 1 : vector<4x512xf32>, i32 -> vector<4x512xf32>
    %c22 = arith.constant 22 : index
    %c0_109 = arith.constant 0 : index
    %173 = vector.load %arg2[%c22, %c0_109] : memref<27x512xf32, #tpu.memory_space<vmem>>, vector<1x512xf32>
    %174 = vector.broadcast %173 : vector<1x512xf32> to vector<4x512xf32>
    %175 = arith.mulf %172, %174 : vector<4x512xf32>
    %c22_110 = arith.constant 22 : index
    %c0_111 = arith.constant 0 : index
    %c0_112 = arith.constant 0 : index
    %176 = vector.load %arg3[%c22_110, %c0_111, %c0_112] : memref<27x4x4xf32, #tpu.memory_space<vmem>>, vector<1x4x4xf32>
    %177 = vector.shape_cast %176 : vector<1x4x4xf32> to vector<4x4xf32>
    %cst_113 = arith.constant dense<0.000000e+00> : vector<4x512xf32>
    %178 = tpu.matmul %177, %175, %cst_113 {dimension_numbers = #tpu.dot_dimension_numbers<[1], [0], [0], [1], [0, 0, 1, 1], [], []>} : vector<4x4xf32>, vector<4x512xf32>, vector<4x512xf32> -> vector<4x512xf32>
    %179 = arith.addf %171, %178 : vector<4x512xf32>
    %c447_i32 = arith.constant 447 : i32
    %180 = tpu.dynamic_rotate %0 by %c447_i32 dim 1 : vector<4x512xf32>, i32 -> vector<4x512xf32>
    %c23 = arith.constant 23 : index
    %c0_114 = arith.constant 0 : index
    %181 = vector.load %arg2[%c23, %c0_114] : memref<27x512xf32, #tpu.memory_space<vmem>>, vector<1x512xf32>
    %182 = vector.broadcast %181 : vector<1x512xf32> to vector<4x512xf32>
    %183 = arith.mulf %180, %182 : vector<4x512xf32>
    %c23_115 = arith.constant 23 : index
    %c0_116 = arith.constant 0 : index
    %c0_117 = arith.constant 0 : index
    %184 = vector.load %arg3[%c23_115, %c0_116, %c0_117] : memref<27x4x4xf32, #tpu.memory_space<vmem>>, vector<1x4x4xf32>
    %185 = vector.shape_cast %184 : vector<1x4x4xf32> to vector<4x4xf32>
    %cst_118 = arith.constant dense<0.000000e+00> : vector<4x512xf32>
    %186 = tpu.matmul %185, %183, %cst_118 {dimension_numbers = #tpu.dot_dimension_numbers<[1], [0], [0], [1], [0, 0, 1, 1], [], []>} : vector<4x4xf32>, vector<4x512xf32>, vector<4x512xf32> -> vector<4x512xf32>
    %187 = arith.addf %179, %186 : vector<4x512xf32>
    %c441_i32 = arith.constant 441 : i32
    %188 = tpu.dynamic_rotate %0 by %c441_i32 dim 1 : vector<4x512xf32>, i32 -> vector<4x512xf32>
    %c24 = arith.constant 24 : index
    %c0_119 = arith.constant 0 : index
    %189 = vector.load %arg2[%c24, %c0_119] : memref<27x512xf32, #tpu.memory_space<vmem>>, vector<1x512xf32>
    %190 = vector.broadcast %189 : vector<1x512xf32> to vector<4x512xf32>
    %191 = arith.mulf %188, %190 : vector<4x512xf32>
    %c24_120 = arith.constant 24 : index
    %c0_121 = arith.constant 0 : index
    %c0_122 = arith.constant 0 : index
    %192 = vector.load %arg3[%c24_120, %c0_121, %c0_122] : memref<27x4x4xf32, #tpu.memory_space<vmem>>, vector<1x4x4xf32>
    %193 = vector.shape_cast %192 : vector<1x4x4xf32> to vector<4x4xf32>
    %cst_123 = arith.constant dense<0.000000e+00> : vector<4x512xf32>
    %194 = tpu.matmul %193, %191, %cst_123 {dimension_numbers = #tpu.dot_dimension_numbers<[1], [0], [0], [1], [0, 0, 1, 1], [], []>} : vector<4x4xf32>, vector<4x512xf32>, vector<4x512xf32> -> vector<4x512xf32>
    %195 = arith.addf %187, %194 : vector<4x512xf32>
    %c440_i32 = arith.constant 440 : i32
    %196 = tpu.dynamic_rotate %0 by %c440_i32 dim 1 : vector<4x512xf32>, i32 -> vector<4x512xf32>
    %c25 = arith.constant 25 : index
    %c0_124 = arith.constant 0 : index
    %197 = vector.load %arg2[%c25, %c0_124] : memref<27x512xf32, #tpu.memory_space<vmem>>, vector<1x512xf32>
    %198 = vector.broadcast %197 : vector<1x512xf32> to vector<4x512xf32>
    %199 = arith.mulf %196, %198 : vector<4x512xf32>
    %c25_125 = arith.constant 25 : index
    %c0_126 = arith.constant 0 : index
    %c0_127 = arith.constant 0 : index
    %200 = vector.load %arg3[%c25_125, %c0_126, %c0_127] : memref<27x4x4xf32, #tpu.memory_space<vmem>>, vector<1x4x4xf32>
    %201 = vector.shape_cast %200 : vector<1x4x4xf32> to vector<4x4xf32>
    %cst_128 = arith.constant dense<0.000000e+00> : vector<4x512xf32>
    %202 = tpu.matmul %201, %199, %cst_128 {dimension_numbers = #tpu.dot_dimension_numbers<[1], [0], [0], [1], [0, 0, 1, 1], [], []>} : vector<4x4xf32>, vector<4x512xf32>, vector<4x512xf32> -> vector<4x512xf32>
    %203 = arith.addf %195, %202 : vector<4x512xf32>
    %c439_i32 = arith.constant 439 : i32
    %204 = tpu.dynamic_rotate %0 by %c439_i32 dim 1 : vector<4x512xf32>, i32 -> vector<4x512xf32>
    %c26 = arith.constant 26 : index
    %c0_129 = arith.constant 0 : index
    %205 = vector.load %arg2[%c26, %c0_129] : memref<27x512xf32, #tpu.memory_space<vmem>>, vector<1x512xf32>
    %206 = vector.broadcast %205 : vector<1x512xf32> to vector<4x512xf32>
    %207 = arith.mulf %204, %206 : vector<4x512xf32>
    %c26_130 = arith.constant 26 : index
    %c0_131 = arith.constant 0 : index
    %c0_132 = arith.constant 0 : index
    %208 = vector.load %arg3[%c26_130, %c0_131, %c0_132] : memref<27x4x4xf32, #tpu.memory_space<vmem>>, vector<1x4x4xf32>
    %209 = vector.shape_cast %208 : vector<1x4x4xf32> to vector<4x4xf32>
    %cst_133 = arith.constant dense<0.000000e+00> : vector<4x512xf32>
    %210 = tpu.matmul %209, %207, %cst_133 {dimension_numbers = #tpu.dot_dimension_numbers<[1], [0], [0], [1], [0, 0, 1, 1], [], []>} : vector<4x4xf32>, vector<4x512xf32>, vector<4x512xf32> -> vector<4x512xf32>
    %211 = arith.addf %203, %210 : vector<4x512xf32>
    %c0_134 = arith.constant 0 : index
    %c0_135 = arith.constant 0 : index
    %212 = vector.load %arg5[%c0_134, %c0_135] : memref<4x1xf32, #tpu.memory_space<vmem>>, vector<4x1xf32>
    %213 = vector.broadcast %212 : vector<4x1xf32> to vector<4x512xf32>
    %214 = arith.addf %211, %213 : vector<4x512xf32>
    %cst_136 = arith.constant 0.000000e+00 : f32
    %215 = vector.broadcast %cst_136 : f32 to vector<4x512xf32>
    %216 = arith.maximumf %214, %215 : vector<4x512xf32>
    %c73_i32_137 = arith.constant 73 : i32
    %217 = tpu.dynamic_rotate %216 by %c73_i32_137 dim 1 : vector<4x512xf32>, i32 -> vector<4x512xf32>
    %c0_138 = arith.constant 0 : index
    %c0_139 = arith.constant 0 : index
    %218 = vector.load %arg2[%c0_138, %c0_139] : memref<27x512xf32, #tpu.memory_space<vmem>>, vector<1x512xf32>
    %219 = vector.broadcast %218 : vector<1x512xf32> to vector<4x512xf32>
    %220 = arith.mulf %217, %219 : vector<4x512xf32>
    %c0_140 = arith.constant 0 : index
    %c0_141 = arith.constant 0 : index
    %c0_142 = arith.constant 0 : index
    %221 = vector.load %arg4[%c0_140, %c0_141, %c0_142] : memref<27x4x4xf32, #tpu.memory_space<vmem>>, vector<1x4x4xf32>
    %222 = vector.shape_cast %221 : vector<1x4x4xf32> to vector<4x4xf32>
    %cst_143 = arith.constant dense<0.000000e+00> : vector<4x512xf32>
    %223 = tpu.matmul %222, %220, %cst_143 {dimension_numbers = #tpu.dot_dimension_numbers<[1], [0], [0], [1], [0, 0, 1, 1], [], []>} : vector<4x4xf32>, vector<4x512xf32>, vector<4x512xf32> -> vector<4x512xf32>
    %c72_i32_144 = arith.constant 72 : i32
    %224 = tpu.dynamic_rotate %216 by %c72_i32_144 dim 1 : vector<4x512xf32>, i32 -> vector<4x512xf32>
    %c1_145 = arith.constant 1 : index
    %c0_146 = arith.constant 0 : index
    %225 = vector.load %arg2[%c1_145, %c0_146] : memref<27x512xf32, #tpu.memory_space<vmem>>, vector<1x512xf32>
    %226 = vector.broadcast %225 : vector<1x512xf32> to vector<4x512xf32>
    %227 = arith.mulf %224, %226 : vector<4x512xf32>
    %c1_147 = arith.constant 1 : index
    %c0_148 = arith.constant 0 : index
    %c0_149 = arith.constant 0 : index
    %228 = vector.load %arg4[%c1_147, %c0_148, %c0_149] : memref<27x4x4xf32, #tpu.memory_space<vmem>>, vector<1x4x4xf32>
    %229 = vector.shape_cast %228 : vector<1x4x4xf32> to vector<4x4xf32>
    %cst_150 = arith.constant dense<0.000000e+00> : vector<4x512xf32>
    %230 = tpu.matmul %229, %227, %cst_150 {dimension_numbers = #tpu.dot_dimension_numbers<[1], [0], [0], [1], [0, 0, 1, 1], [], []>} : vector<4x4xf32>, vector<4x512xf32>, vector<4x512xf32> -> vector<4x512xf32>
    %231 = arith.addf %223, %230 : vector<4x512xf32>
    %c71_i32_151 = arith.constant 71 : i32
    %232 = tpu.dynamic_rotate %216 by %c71_i32_151 dim 1 : vector<4x512xf32>, i32 -> vector<4x512xf32>
    %c2_152 = arith.constant 2 : index
    %c0_153 = arith.constant 0 : index
    %233 = vector.load %arg2[%c2_152, %c0_153] : memref<27x512xf32, #tpu.memory_space<vmem>>, vector<1x512xf32>
    %234 = vector.broadcast %233 : vector<1x512xf32> to vector<4x512xf32>
    %235 = arith.mulf %232, %234 : vector<4x512xf32>
    %c2_154 = arith.constant 2 : index
    %c0_155 = arith.constant 0 : index
    %c0_156 = arith.constant 0 : index
    %236 = vector.load %arg4[%c2_154, %c0_155, %c0_156] : memref<27x4x4xf32, #tpu.memory_space<vmem>>, vector<1x4x4xf32>
    %237 = vector.shape_cast %236 : vector<1x4x4xf32> to vector<4x4xf32>
    %cst_157 = arith.constant dense<0.000000e+00> : vector<4x512xf32>
    %238 = tpu.matmul %237, %235, %cst_157 {dimension_numbers = #tpu.dot_dimension_numbers<[1], [0], [0], [1], [0, 0, 1, 1], [], []>} : vector<4x4xf32>, vector<4x512xf32>, vector<4x512xf32> -> vector<4x512xf32>
    %239 = arith.addf %231, %238 : vector<4x512xf32>
    %c65_i32_158 = arith.constant 65 : i32
    %240 = tpu.dynamic_rotate %216 by %c65_i32_158 dim 1 : vector<4x512xf32>, i32 -> vector<4x512xf32>
    %c3_159 = arith.constant 3 : index
    %c0_160 = arith.constant 0 : index
    %241 = vector.load %arg2[%c3_159, %c0_160] : memref<27x512xf32, #tpu.memory_space<vmem>>, vector<1x512xf32>
    %242 = vector.broadcast %241 : vector<1x512xf32> to vector<4x512xf32>
    %243 = arith.mulf %240, %242 : vector<4x512xf32>
    %c3_161 = arith.constant 3 : index
    %c0_162 = arith.constant 0 : index
    %c0_163 = arith.constant 0 : index
    %244 = vector.load %arg4[%c3_161, %c0_162, %c0_163] : memref<27x4x4xf32, #tpu.memory_space<vmem>>, vector<1x4x4xf32>
    %245 = vector.shape_cast %244 : vector<1x4x4xf32> to vector<4x4xf32>
    %cst_164 = arith.constant dense<0.000000e+00> : vector<4x512xf32>
    %246 = tpu.matmul %245, %243, %cst_164 {dimension_numbers = #tpu.dot_dimension_numbers<[1], [0], [0], [1], [0, 0, 1, 1], [], []>} : vector<4x4xf32>, vector<4x512xf32>, vector<4x512xf32> -> vector<4x512xf32>
    %247 = arith.addf %239, %246 : vector<4x512xf32>
    %c64_i32_165 = arith.constant 64 : i32
    %248 = tpu.dynamic_rotate %216 by %c64_i32_165 dim 1 : vector<4x512xf32>, i32 -> vector<4x512xf32>
    %c4_166 = arith.constant 4 : index
    %c0_167 = arith.constant 0 : index
    %249 = vector.load %arg2[%c4_166, %c0_167] : memref<27x512xf32, #tpu.memory_space<vmem>>, vector<1x512xf32>
    %250 = vector.broadcast %249 : vector<1x512xf32> to vector<4x512xf32>
    %251 = arith.mulf %248, %250 : vector<4x512xf32>
    %c4_168 = arith.constant 4 : index
    %c0_169 = arith.constant 0 : index
    %c0_170 = arith.constant 0 : index
    %252 = vector.load %arg4[%c4_168, %c0_169, %c0_170] : memref<27x4x4xf32, #tpu.memory_space<vmem>>, vector<1x4x4xf32>
    %253 = vector.shape_cast %252 : vector<1x4x4xf32> to vector<4x4xf32>
    %cst_171 = arith.constant dense<0.000000e+00> : vector<4x512xf32>
    %254 = tpu.matmul %253, %251, %cst_171 {dimension_numbers = #tpu.dot_dimension_numbers<[1], [0], [0], [1], [0, 0, 1, 1], [], []>} : vector<4x4xf32>, vector<4x512xf32>, vector<4x512xf32> -> vector<4x512xf32>
    %255 = arith.addf %247, %254 : vector<4x512xf32>
    %c63_i32_172 = arith.constant 63 : i32
    %256 = tpu.dynamic_rotate %216 by %c63_i32_172 dim 1 : vector<4x512xf32>, i32 -> vector<4x512xf32>
    %c5_173 = arith.constant 5 : index
    %c0_174 = arith.constant 0 : index
    %257 = vector.load %arg2[%c5_173, %c0_174] : memref<27x512xf32, #tpu.memory_space<vmem>>, vector<1x512xf32>
    %258 = vector.broadcast %257 : vector<1x512xf32> to vector<4x512xf32>
    %259 = arith.mulf %256, %258 : vector<4x512xf32>
    %c5_175 = arith.constant 5 : index
    %c0_176 = arith.constant 0 : index
    %c0_177 = arith.constant 0 : index
    %260 = vector.load %arg4[%c5_175, %c0_176, %c0_177] : memref<27x4x4xf32, #tpu.memory_space<vmem>>, vector<1x4x4xf32>
    %261 = vector.shape_cast %260 : vector<1x4x4xf32> to vector<4x4xf32>
    %cst_178 = arith.constant dense<0.000000e+00> : vector<4x512xf32>
    %262 = tpu.matmul %261, %259, %cst_178 {dimension_numbers = #tpu.dot_dimension_numbers<[1], [0], [0], [1], [0, 0, 1, 1], [], []>} : vector<4x4xf32>, vector<4x512xf32>, vector<4x512xf32> -> vector<4x512xf32>
    %263 = arith.addf %255, %262 : vector<4x512xf32>
    %c57_i32_179 = arith.constant 57 : i32
    %264 = tpu.dynamic_rotate %216 by %c57_i32_179 dim 1 : vector<4x512xf32>, i32 -> vector<4x512xf32>
    %c6_180 = arith.constant 6 : index
    %c0_181 = arith.constant 0 : index
    %265 = vector.load %arg2[%c6_180, %c0_181] : memref<27x512xf32, #tpu.memory_space<vmem>>, vector<1x512xf32>
    %266 = vector.broadcast %265 : vector<1x512xf32> to vector<4x512xf32>
    %267 = arith.mulf %264, %266 : vector<4x512xf32>
    %c6_182 = arith.constant 6 : index
    %c0_183 = arith.constant 0 : index
    %c0_184 = arith.constant 0 : index
    %268 = vector.load %arg4[%c6_182, %c0_183, %c0_184] : memref<27x4x4xf32, #tpu.memory_space<vmem>>, vector<1x4x4xf32>
    %269 = vector.shape_cast %268 : vector<1x4x4xf32> to vector<4x4xf32>
    %cst_185 = arith.constant dense<0.000000e+00> : vector<4x512xf32>
    %270 = tpu.matmul %269, %267, %cst_185 {dimension_numbers = #tpu.dot_dimension_numbers<[1], [0], [0], [1], [0, 0, 1, 1], [], []>} : vector<4x4xf32>, vector<4x512xf32>, vector<4x512xf32> -> vector<4x512xf32>
    %271 = arith.addf %263, %270 : vector<4x512xf32>
    %c56_i32_186 = arith.constant 56 : i32
    %272 = tpu.dynamic_rotate %216 by %c56_i32_186 dim 1 : vector<4x512xf32>, i32 -> vector<4x512xf32>
    %c7_187 = arith.constant 7 : index
    %c0_188 = arith.constant 0 : index
    %273 = vector.load %arg2[%c7_187, %c0_188] : memref<27x512xf32, #tpu.memory_space<vmem>>, vector<1x512xf32>
    %274 = vector.broadcast %273 : vector<1x512xf32> to vector<4x512xf32>
    %275 = arith.mulf %272, %274 : vector<4x512xf32>
    %c7_189 = arith.constant 7 : index
    %c0_190 = arith.constant 0 : index
    %c0_191 = arith.constant 0 : index
    %276 = vector.load %arg4[%c7_189, %c0_190, %c0_191] : memref<27x4x4xf32, #tpu.memory_space<vmem>>, vector<1x4x4xf32>
    %277 = vector.shape_cast %276 : vector<1x4x4xf32> to vector<4x4xf32>
    %cst_192 = arith.constant dense<0.000000e+00> : vector<4x512xf32>
    %278 = tpu.matmul %277, %275, %cst_192 {dimension_numbers = #tpu.dot_dimension_numbers<[1], [0], [0], [1], [0, 0, 1, 1], [], []>} : vector<4x4xf32>, vector<4x512xf32>, vector<4x512xf32> -> vector<4x512xf32>
    %279 = arith.addf %271, %278 : vector<4x512xf32>
    %c55_i32_193 = arith.constant 55 : i32
    %280 = tpu.dynamic_rotate %216 by %c55_i32_193 dim 1 : vector<4x512xf32>, i32 -> vector<4x512xf32>
    %c8_194 = arith.constant 8 : index
    %c0_195 = arith.constant 0 : index
    %281 = vector.load %arg2[%c8_194, %c0_195] : memref<27x512xf32, #tpu.memory_space<vmem>>, vector<1x512xf32>
    %282 = vector.broadcast %281 : vector<1x512xf32> to vector<4x512xf32>
    %283 = arith.mulf %280, %282 : vector<4x512xf32>
    %c8_196 = arith.constant 8 : index
    %c0_197 = arith.constant 0 : index
    %c0_198 = arith.constant 0 : index
    %284 = vector.load %arg4[%c8_196, %c0_197, %c0_198] : memref<27x4x4xf32, #tpu.memory_space<vmem>>, vector<1x4x4xf32>
    %285 = vector.shape_cast %284 : vector<1x4x4xf32> to vector<4x4xf32>
    %cst_199 = arith.constant dense<0.000000e+00> : vector<4x512xf32>
    %286 = tpu.matmul %285, %283, %cst_199 {dimension_numbers = #tpu.dot_dimension_numbers<[1], [0], [0], [1], [0, 0, 1, 1], [], []>} : vector<4x4xf32>, vector<4x512xf32>, vector<4x512xf32> -> vector<4x512xf32>
    %287 = arith.addf %279, %286 : vector<4x512xf32>
    %c9_i32_200 = arith.constant 9 : i32
    %288 = tpu.dynamic_rotate %216 by %c9_i32_200 dim 1 : vector<4x512xf32>, i32 -> vector<4x512xf32>
    %c9_201 = arith.constant 9 : index
    %c0_202 = arith.constant 0 : index
    %289 = vector.load %arg2[%c9_201, %c0_202] : memref<27x512xf32, #tpu.memory_space<vmem>>, vector<1x512xf32>
    %290 = vector.broadcast %289 : vector<1x512xf32> to vector<4x512xf32>
    %291 = arith.mulf %288, %290 : vector<4x512xf32>
    %c9_203 = arith.constant 9 : index
    %c0_204 = arith.constant 0 : index
    %c0_205 = arith.constant 0 : index
    %292 = vector.load %arg4[%c9_203, %c0_204, %c0_205] : memref<27x4x4xf32, #tpu.memory_space<vmem>>, vector<1x4x4xf32>
    %293 = vector.shape_cast %292 : vector<1x4x4xf32> to vector<4x4xf32>
    %cst_206 = arith.constant dense<0.000000e+00> : vector<4x512xf32>
    %294 = tpu.matmul %293, %291, %cst_206 {dimension_numbers = #tpu.dot_dimension_numbers<[1], [0], [0], [1], [0, 0, 1, 1], [], []>} : vector<4x4xf32>, vector<4x512xf32>, vector<4x512xf32> -> vector<4x512xf32>
    %295 = arith.addf %287, %294 : vector<4x512xf32>
    %c8_i32_207 = arith.constant 8 : i32
    %296 = tpu.dynamic_rotate %216 by %c8_i32_207 dim 1 : vector<4x512xf32>, i32 -> vector<4x512xf32>
    %c10_208 = arith.constant 10 : index
    %c0_209 = arith.constant 0 : index
    %297 = vector.load %arg2[%c10_208, %c0_209] : memref<27x512xf32, #tpu.memory_space<vmem>>, vector<1x512xf32>
    %298 = vector.broadcast %297 : vector<1x512xf32> to vector<4x512xf32>
    %299 = arith.mulf %296, %298 : vector<4x512xf32>
    %c10_210 = arith.constant 10 : index
    %c0_211 = arith.constant 0 : index
    %c0_212 = arith.constant 0 : index
    %300 = vector.load %arg4[%c10_210, %c0_211, %c0_212] : memref<27x4x4xf32, #tpu.memory_space<vmem>>, vector<1x4x4xf32>
    %301 = vector.shape_cast %300 : vector<1x4x4xf32> to vector<4x4xf32>
    %cst_213 = arith.constant dense<0.000000e+00> : vector<4x512xf32>
    %302 = tpu.matmul %301, %299, %cst_213 {dimension_numbers = #tpu.dot_dimension_numbers<[1], [0], [0], [1], [0, 0, 1, 1], [], []>} : vector<4x4xf32>, vector<4x512xf32>, vector<4x512xf32> -> vector<4x512xf32>
    %303 = arith.addf %295, %302 : vector<4x512xf32>
    %c7_i32_214 = arith.constant 7 : i32
    %304 = tpu.dynamic_rotate %216 by %c7_i32_214 dim 1 : vector<4x512xf32>, i32 -> vector<4x512xf32>
    %c11_215 = arith.constant 11 : index
    %c0_216 = arith.constant 0 : index
    %305 = vector.load %arg2[%c11_215, %c0_216] : memref<27x512xf32, #tpu.memory_space<vmem>>, vector<1x512xf32>
    %306 = vector.broadcast %305 : vector<1x512xf32> to vector<4x512xf32>
    %307 = arith.mulf %304, %306 : vector<4x512xf32>
    %c11_217 = arith.constant 11 : index
    %c0_218 = arith.constant 0 : index
    %c0_219 = arith.constant 0 : index
    %308 = vector.load %arg4[%c11_217, %c0_218, %c0_219] : memref<27x4x4xf32, #tpu.memory_space<vmem>>, vector<1x4x4xf32>
    %309 = vector.shape_cast %308 : vector<1x4x4xf32> to vector<4x4xf32>
    %cst_220 = arith.constant dense<0.000000e+00> : vector<4x512xf32>
    %310 = tpu.matmul %309, %307, %cst_220 {dimension_numbers = #tpu.dot_dimension_numbers<[1], [0], [0], [1], [0, 0, 1, 1], [], []>} : vector<4x4xf32>, vector<4x512xf32>, vector<4x512xf32> -> vector<4x512xf32>
    %311 = arith.addf %303, %310 : vector<4x512xf32>
    %c1_i32_221 = arith.constant 1 : i32
    %312 = tpu.dynamic_rotate %216 by %c1_i32_221 dim 1 : vector<4x512xf32>, i32 -> vector<4x512xf32>
    %c12_222 = arith.constant 12 : index
    %c0_223 = arith.constant 0 : index
    %313 = vector.load %arg2[%c12_222, %c0_223] : memref<27x512xf32, #tpu.memory_space<vmem>>, vector<1x512xf32>
    %314 = vector.broadcast %313 : vector<1x512xf32> to vector<4x512xf32>
    %315 = arith.mulf %312, %314 : vector<4x512xf32>
    %c12_224 = arith.constant 12 : index
    %c0_225 = arith.constant 0 : index
    %c0_226 = arith.constant 0 : index
    %316 = vector.load %arg4[%c12_224, %c0_225, %c0_226] : memref<27x4x4xf32, #tpu.memory_space<vmem>>, vector<1x4x4xf32>
    %317 = vector.shape_cast %316 : vector<1x4x4xf32> to vector<4x4xf32>
    %cst_227 = arith.constant dense<0.000000e+00> : vector<4x512xf32>
    %318 = tpu.matmul %317, %315, %cst_227 {dimension_numbers = #tpu.dot_dimension_numbers<[1], [0], [0], [1], [0, 0, 1, 1], [], []>} : vector<4x4xf32>, vector<4x512xf32>, vector<4x512xf32> -> vector<4x512xf32>
    %319 = arith.addf %311, %318 : vector<4x512xf32>
    %c13_228 = arith.constant 13 : index
    %c0_229 = arith.constant 0 : index
    %c0_230 = arith.constant 0 : index
    %320 = vector.load %arg4[%c13_228, %c0_229, %c0_230] : memref<27x4x4xf32, #tpu.memory_space<vmem>>, vector<1x4x4xf32>
    %321 = vector.shape_cast %320 : vector<1x4x4xf32> to vector<4x4xf32>
    %cst_231 = arith.constant dense<0.000000e+00> : vector<4x512xf32>
    %322 = tpu.matmul %321, %216, %cst_231 {dimension_numbers = #tpu.dot_dimension_numbers<[1], [0], [0], [1], [0, 0, 1, 1], [], []>} : vector<4x4xf32>, vector<4x512xf32>, vector<4x512xf32> -> vector<4x512xf32>
    %323 = arith.addf %319, %322 : vector<4x512xf32>
    %c511_i32_232 = arith.constant 511 : i32
    %324 = tpu.dynamic_rotate %216 by %c511_i32_232 dim 1 : vector<4x512xf32>, i32 -> vector<4x512xf32>
    %c14_233 = arith.constant 14 : index
    %c0_234 = arith.constant 0 : index
    %325 = vector.load %arg2[%c14_233, %c0_234] : memref<27x512xf32, #tpu.memory_space<vmem>>, vector<1x512xf32>
    %326 = vector.broadcast %325 : vector<1x512xf32> to vector<4x512xf32>
    %327 = arith.mulf %324, %326 : vector<4x512xf32>
    %c14_235 = arith.constant 14 : index
    %c0_236 = arith.constant 0 : index
    %c0_237 = arith.constant 0 : index
    %328 = vector.load %arg4[%c14_235, %c0_236, %c0_237] : memref<27x4x4xf32, #tpu.memory_space<vmem>>, vector<1x4x4xf32>
    %329 = vector.shape_cast %328 : vector<1x4x4xf32> to vector<4x4xf32>
    %cst_238 = arith.constant dense<0.000000e+00> : vector<4x512xf32>
    %330 = tpu.matmul %329, %327, %cst_238 {dimension_numbers = #tpu.dot_dimension_numbers<[1], [0], [0], [1], [0, 0, 1, 1], [], []>} : vector<4x4xf32>, vector<4x512xf32>, vector<4x512xf32> -> vector<4x512xf32>
    %331 = arith.addf %323, %330 : vector<4x512xf32>
    %c505_i32_239 = arith.constant 505 : i32
    %332 = tpu.dynamic_rotate %216 by %c505_i32_239 dim 1 : vector<4x512xf32>, i32 -> vector<4x512xf32>
    %c15_240 = arith.constant 15 : index
    %c0_241 = arith.constant 0 : index
    %333 = vector.load %arg2[%c15_240, %c0_241] : memref<27x512xf32, #tpu.memory_space<vmem>>, vector<1x512xf32>
    %334 = vector.broadcast %333 : vector<1x512xf32> to vector<4x512xf32>
    %335 = arith.mulf %332, %334 : vector<4x512xf32>
    %c15_242 = arith.constant 15 : index
    %c0_243 = arith.constant 0 : index
    %c0_244 = arith.constant 0 : index
    %336 = vector.load %arg4[%c15_242, %c0_243, %c0_244] : memref<27x4x4xf32, #tpu.memory_space<vmem>>, vector<1x4x4xf32>
    %337 = vector.shape_cast %336 : vector<1x4x4xf32> to vector<4x4xf32>
    %cst_245 = arith.constant dense<0.000000e+00> : vector<4x512xf32>
    %338 = tpu.matmul %337, %335, %cst_245 {dimension_numbers = #tpu.dot_dimension_numbers<[1], [0], [0], [1], [0, 0, 1, 1], [], []>} : vector<4x4xf32>, vector<4x512xf32>, vector<4x512xf32> -> vector<4x512xf32>
    %339 = arith.addf %331, %338 : vector<4x512xf32>
    %c504_i32_246 = arith.constant 504 : i32
    %340 = tpu.dynamic_rotate %216 by %c504_i32_246 dim 1 : vector<4x512xf32>, i32 -> vector<4x512xf32>
    %c16_247 = arith.constant 16 : index
    %c0_248 = arith.constant 0 : index
    %341 = vector.load %arg2[%c16_247, %c0_248] : memref<27x512xf32, #tpu.memory_space<vmem>>, vector<1x512xf32>
    %342 = vector.broadcast %341 : vector<1x512xf32> to vector<4x512xf32>
    %343 = arith.mulf %340, %342 : vector<4x512xf32>
    %c16_249 = arith.constant 16 : index
    %c0_250 = arith.constant 0 : index
    %c0_251 = arith.constant 0 : index
    %344 = vector.load %arg4[%c16_249, %c0_250, %c0_251] : memref<27x4x4xf32, #tpu.memory_space<vmem>>, vector<1x4x4xf32>
    %345 = vector.shape_cast %344 : vector<1x4x4xf32> to vector<4x4xf32>
    %cst_252 = arith.constant dense<0.000000e+00> : vector<4x512xf32>
    %346 = tpu.matmul %345, %343, %cst_252 {dimension_numbers = #tpu.dot_dimension_numbers<[1], [0], [0], [1], [0, 0, 1, 1], [], []>} : vector<4x4xf32>, vector<4x512xf32>, vector<4x512xf32> -> vector<4x512xf32>
    %347 = arith.addf %339, %346 : vector<4x512xf32>
    %c503_i32_253 = arith.constant 503 : i32
    %348 = tpu.dynamic_rotate %216 by %c503_i32_253 dim 1 : vector<4x512xf32>, i32 -> vector<4x512xf32>
    %c17_254 = arith.constant 17 : index
    %c0_255 = arith.constant 0 : index
    %349 = vector.load %arg2[%c17_254, %c0_255] : memref<27x512xf32, #tpu.memory_space<vmem>>, vector<1x512xf32>
    %350 = vector.broadcast %349 : vector<1x512xf32> to vector<4x512xf32>
    %351 = arith.mulf %348, %350 : vector<4x512xf32>
    %c17_256 = arith.constant 17 : index
    %c0_257 = arith.constant 0 : index
    %c0_258 = arith.constant 0 : index
    %352 = vector.load %arg4[%c17_256, %c0_257, %c0_258] : memref<27x4x4xf32, #tpu.memory_space<vmem>>, vector<1x4x4xf32>
    %353 = vector.shape_cast %352 : vector<1x4x4xf32> to vector<4x4xf32>
    %cst_259 = arith.constant dense<0.000000e+00> : vector<4x512xf32>
    %354 = tpu.matmul %353, %351, %cst_259 {dimension_numbers = #tpu.dot_dimension_numbers<[1], [0], [0], [1], [0, 0, 1, 1], [], []>} : vector<4x4xf32>, vector<4x512xf32>, vector<4x512xf32> -> vector<4x512xf32>
    %355 = arith.addf %347, %354 : vector<4x512xf32>
    %c457_i32_260 = arith.constant 457 : i32
    %356 = tpu.dynamic_rotate %216 by %c457_i32_260 dim 1 : vector<4x512xf32>, i32 -> vector<4x512xf32>
    %c18_261 = arith.constant 18 : index
    %c0_262 = arith.constant 0 : index
    %357 = vector.load %arg2[%c18_261, %c0_262] : memref<27x512xf32, #tpu.memory_space<vmem>>, vector<1x512xf32>
    %358 = vector.broadcast %357 : vector<1x512xf32> to vector<4x512xf32>
    %359 = arith.mulf %356, %358 : vector<4x512xf32>
    %c18_263 = arith.constant 18 : index
    %c0_264 = arith.constant 0 : index
    %c0_265 = arith.constant 0 : index
    %360 = vector.load %arg4[%c18_263, %c0_264, %c0_265] : memref<27x4x4xf32, #tpu.memory_space<vmem>>, vector<1x4x4xf32>
    %361 = vector.shape_cast %360 : vector<1x4x4xf32> to vector<4x4xf32>
    %cst_266 = arith.constant dense<0.000000e+00> : vector<4x512xf32>
    %362 = tpu.matmul %361, %359, %cst_266 {dimension_numbers = #tpu.dot_dimension_numbers<[1], [0], [0], [1], [0, 0, 1, 1], [], []>} : vector<4x4xf32>, vector<4x512xf32>, vector<4x512xf32> -> vector<4x512xf32>
    %363 = arith.addf %355, %362 : vector<4x512xf32>
    %c456_i32_267 = arith.constant 456 : i32
    %364 = tpu.dynamic_rotate %216 by %c456_i32_267 dim 1 : vector<4x512xf32>, i32 -> vector<4x512xf32>
    %c19_268 = arith.constant 19 : index
    %c0_269 = arith.constant 0 : index
    %365 = vector.load %arg2[%c19_268, %c0_269] : memref<27x512xf32, #tpu.memory_space<vmem>>, vector<1x512xf32>
    %366 = vector.broadcast %365 : vector<1x512xf32> to vector<4x512xf32>
    %367 = arith.mulf %364, %366 : vector<4x512xf32>
    %c19_270 = arith.constant 19 : index
    %c0_271 = arith.constant 0 : index
    %c0_272 = arith.constant 0 : index
    %368 = vector.load %arg4[%c19_270, %c0_271, %c0_272] : memref<27x4x4xf32, #tpu.memory_space<vmem>>, vector<1x4x4xf32>
    %369 = vector.shape_cast %368 : vector<1x4x4xf32> to vector<4x4xf32>
    %cst_273 = arith.constant dense<0.000000e+00> : vector<4x512xf32>
    %370 = tpu.matmul %369, %367, %cst_273 {dimension_numbers = #tpu.dot_dimension_numbers<[1], [0], [0], [1], [0, 0, 1, 1], [], []>} : vector<4x4xf32>, vector<4x512xf32>, vector<4x512xf32> -> vector<4x512xf32>
    %371 = arith.addf %363, %370 : vector<4x512xf32>
    %c455_i32_274 = arith.constant 455 : i32
    %372 = tpu.dynamic_rotate %216 by %c455_i32_274 dim 1 : vector<4x512xf32>, i32 -> vector<4x512xf32>
    %c20_275 = arith.constant 20 : index
    %c0_276 = arith.constant 0 : index
    %373 = vector.load %arg2[%c20_275, %c0_276] : memref<27x512xf32, #tpu.memory_space<vmem>>, vector<1x512xf32>
    %374 = vector.broadcast %373 : vector<1x512xf32> to vector<4x512xf32>
    %375 = arith.mulf %372, %374 : vector<4x512xf32>
    %c20_277 = arith.constant 20 : index
    %c0_278 = arith.constant 0 : index
    %c0_279 = arith.constant 0 : index
    %376 = vector.load %arg4[%c20_277, %c0_278, %c0_279] : memref<27x4x4xf32, #tpu.memory_space<vmem>>, vector<1x4x4xf32>
    %377 = vector.shape_cast %376 : vector<1x4x4xf32> to vector<4x4xf32>
    %cst_280 = arith.constant dense<0.000000e+00> : vector<4x512xf32>
    %378 = tpu.matmul %377, %375, %cst_280 {dimension_numbers = #tpu.dot_dimension_numbers<[1], [0], [0], [1], [0, 0, 1, 1], [], []>} : vector<4x4xf32>, vector<4x512xf32>, vector<4x512xf32> -> vector<4x512xf32>
    %379 = arith.addf %371, %378 : vector<4x512xf32>
    %c449_i32_281 = arith.constant 449 : i32
    %380 = tpu.dynamic_rotate %216 by %c449_i32_281 dim 1 : vector<4x512xf32>, i32 -> vector<4x512xf32>
    %c21_282 = arith.constant 21 : index
    %c0_283 = arith.constant 0 : index
    %381 = vector.load %arg2[%c21_282, %c0_283] : memref<27x512xf32, #tpu.memory_space<vmem>>, vector<1x512xf32>
    %382 = vector.broadcast %381 : vector<1x512xf32> to vector<4x512xf32>
    %383 = arith.mulf %380, %382 : vector<4x512xf32>
    %c21_284 = arith.constant 21 : index
    %c0_285 = arith.constant 0 : index
    %c0_286 = arith.constant 0 : index
    %384 = vector.load %arg4[%c21_284, %c0_285, %c0_286] : memref<27x4x4xf32, #tpu.memory_space<vmem>>, vector<1x4x4xf32>
    %385 = vector.shape_cast %384 : vector<1x4x4xf32> to vector<4x4xf32>
    %cst_287 = arith.constant dense<0.000000e+00> : vector<4x512xf32>
    %386 = tpu.matmul %385, %383, %cst_287 {dimension_numbers = #tpu.dot_dimension_numbers<[1], [0], [0], [1], [0, 0, 1, 1], [], []>} : vector<4x4xf32>, vector<4x512xf32>, vector<4x512xf32> -> vector<4x512xf32>
    %387 = arith.addf %379, %386 : vector<4x512xf32>
    %c448_i32_288 = arith.constant 448 : i32
    %388 = tpu.dynamic_rotate %216 by %c448_i32_288 dim 1 : vector<4x512xf32>, i32 -> vector<4x512xf32>
    %c22_289 = arith.constant 22 : index
    %c0_290 = arith.constant 0 : index
    %389 = vector.load %arg2[%c22_289, %c0_290] : memref<27x512xf32, #tpu.memory_space<vmem>>, vector<1x512xf32>
    %390 = vector.broadcast %389 : vector<1x512xf32> to vector<4x512xf32>
    %391 = arith.mulf %388, %390 : vector<4x512xf32>
    %c22_291 = arith.constant 22 : index
    %c0_292 = arith.constant 0 : index
    %c0_293 = arith.constant 0 : index
    %392 = vector.load %arg4[%c22_291, %c0_292, %c0_293] : memref<27x4x4xf32, #tpu.memory_space<vmem>>, vector<1x4x4xf32>
    %393 = vector.shape_cast %392 : vector<1x4x4xf32> to vector<4x4xf32>
    %cst_294 = arith.constant dense<0.000000e+00> : vector<4x512xf32>
    %394 = tpu.matmul %393, %391, %cst_294 {dimension_numbers = #tpu.dot_dimension_numbers<[1], [0], [0], [1], [0, 0, 1, 1], [], []>} : vector<4x4xf32>, vector<4x512xf32>, vector<4x512xf32> -> vector<4x512xf32>
    %395 = arith.addf %387, %394 : vector<4x512xf32>
    %c447_i32_295 = arith.constant 447 : i32
    %396 = tpu.dynamic_rotate %216 by %c447_i32_295 dim 1 : vector<4x512xf32>, i32 -> vector<4x512xf32>
    %c23_296 = arith.constant 23 : index
    %c0_297 = arith.constant 0 : index
    %397 = vector.load %arg2[%c23_296, %c0_297] : memref<27x512xf32, #tpu.memory_space<vmem>>, vector<1x512xf32>
    %398 = vector.broadcast %397 : vector<1x512xf32> to vector<4x512xf32>
    %399 = arith.mulf %396, %398 : vector<4x512xf32>
    %c23_298 = arith.constant 23 : index
    %c0_299 = arith.constant 0 : index
    %c0_300 = arith.constant 0 : index
    %400 = vector.load %arg4[%c23_298, %c0_299, %c0_300] : memref<27x4x4xf32, #tpu.memory_space<vmem>>, vector<1x4x4xf32>
    %401 = vector.shape_cast %400 : vector<1x4x4xf32> to vector<4x4xf32>
    %cst_301 = arith.constant dense<0.000000e+00> : vector<4x512xf32>
    %402 = tpu.matmul %401, %399, %cst_301 {dimension_numbers = #tpu.dot_dimension_numbers<[1], [0], [0], [1], [0, 0, 1, 1], [], []>} : vector<4x4xf32>, vector<4x512xf32>, vector<4x512xf32> -> vector<4x512xf32>
    %403 = arith.addf %395, %402 : vector<4x512xf32>
    %c441_i32_302 = arith.constant 441 : i32
    %404 = tpu.dynamic_rotate %216 by %c441_i32_302 dim 1 : vector<4x512xf32>, i32 -> vector<4x512xf32>
    %c24_303 = arith.constant 24 : index
    %c0_304 = arith.constant 0 : index
    %405 = vector.load %arg2[%c24_303, %c0_304] : memref<27x512xf32, #tpu.memory_space<vmem>>, vector<1x512xf32>
    %406 = vector.broadcast %405 : vector<1x512xf32> to vector<4x512xf32>
    %407 = arith.mulf %404, %406 : vector<4x512xf32>
    %c24_305 = arith.constant 24 : index
    %c0_306 = arith.constant 0 : index
    %c0_307 = arith.constant 0 : index
    %408 = vector.load %arg4[%c24_305, %c0_306, %c0_307] : memref<27x4x4xf32, #tpu.memory_space<vmem>>, vector<1x4x4xf32>
    %409 = vector.shape_cast %408 : vector<1x4x4xf32> to vector<4x4xf32>
    %cst_308 = arith.constant dense<0.000000e+00> : vector<4x512xf32>
    %410 = tpu.matmul %409, %407, %cst_308 {dimension_numbers = #tpu.dot_dimension_numbers<[1], [0], [0], [1], [0, 0, 1, 1], [], []>} : vector<4x4xf32>, vector<4x512xf32>, vector<4x512xf32> -> vector<4x512xf32>
    %411 = arith.addf %403, %410 : vector<4x512xf32>
    %c440_i32_309 = arith.constant 440 : i32
    %412 = tpu.dynamic_rotate %216 by %c440_i32_309 dim 1 : vector<4x512xf32>, i32 -> vector<4x512xf32>
    %c25_310 = arith.constant 25 : index
    %c0_311 = arith.constant 0 : index
    %413 = vector.load %arg2[%c25_310, %c0_311] : memref<27x512xf32, #tpu.memory_space<vmem>>, vector<1x512xf32>
    %414 = vector.broadcast %413 : vector<1x512xf32> to vector<4x512xf32>
    %415 = arith.mulf %412, %414 : vector<4x512xf32>
    %c25_312 = arith.constant 25 : index
    %c0_313 = arith.constant 0 : index
    %c0_314 = arith.constant 0 : index
    %416 = vector.load %arg4[%c25_312, %c0_313, %c0_314] : memref<27x4x4xf32, #tpu.memory_space<vmem>>, vector<1x4x4xf32>
    %417 = vector.shape_cast %416 : vector<1x4x4xf32> to vector<4x4xf32>
    %cst_315 = arith.constant dense<0.000000e+00> : vector<4x512xf32>
    %418 = tpu.matmul %417, %415, %cst_315 {dimension_numbers = #tpu.dot_dimension_numbers<[1], [0], [0], [1], [0, 0, 1, 1], [], []>} : vector<4x4xf32>, vector<4x512xf32>, vector<4x512xf32> -> vector<4x512xf32>
    %419 = arith.addf %411, %418 : vector<4x512xf32>
    %c439_i32_316 = arith.constant 439 : i32
    %420 = tpu.dynamic_rotate %216 by %c439_i32_316 dim 1 : vector<4x512xf32>, i32 -> vector<4x512xf32>
    %c26_317 = arith.constant 26 : index
    %c0_318 = arith.constant 0 : index
    %421 = vector.load %arg2[%c26_317, %c0_318] : memref<27x512xf32, #tpu.memory_space<vmem>>, vector<1x512xf32>
    %422 = vector.broadcast %421 : vector<1x512xf32> to vector<4x512xf32>
    %423 = arith.mulf %420, %422 : vector<4x512xf32>
    %c26_319 = arith.constant 26 : index
    %c0_320 = arith.constant 0 : index
    %c0_321 = arith.constant 0 : index
    %424 = vector.load %arg4[%c26_319, %c0_320, %c0_321] : memref<27x4x4xf32, #tpu.memory_space<vmem>>, vector<1x4x4xf32>
    %425 = vector.shape_cast %424 : vector<1x4x4xf32> to vector<4x4xf32>
    %cst_322 = arith.constant dense<0.000000e+00> : vector<4x512xf32>
    %426 = tpu.matmul %425, %423, %cst_322 {dimension_numbers = #tpu.dot_dimension_numbers<[1], [0], [0], [1], [0, 0, 1, 1], [], []>} : vector<4x4xf32>, vector<4x512xf32>, vector<4x512xf32> -> vector<4x512xf32>
    %427 = arith.addf %419, %426 : vector<4x512xf32>
    %c0_323 = arith.constant 0 : index
    %c0_324 = arith.constant 0 : index
    %428 = vector.load %arg6[%c0_323, %c0_324] : memref<4x1xf32, #tpu.memory_space<vmem>>, vector<4x1xf32>
    %429 = vector.broadcast %428 : vector<4x1xf32> to vector<4x512xf32>
    %430 = arith.addf %427, %429 : vector<4x512xf32>
    %431 = arith.addf %430, %0 : vector<4x512xf32>
    %cst_325 = arith.constant 0.000000e+00 : f32
    %432 = vector.broadcast %cst_325 : f32 to vector<4x512xf32>
    %433 = arith.maximumf %431, %432 : vector<4x512xf32>
    %c0_326 = arith.constant 0 : index
    %c0_327 = arith.constant 0 : index
    %434 = vector.load %arg7[%c0_326, %c0_327] : memref<4x512xf32, #tpu.memory_space<vmem>>, vector<4x512xf32>
    tpu.vector_store %arg7[%c0_326, %c0_327], %433 {strides = array<i32>} : memref<4x512xf32, #tpu.memory_space<vmem>>, vector<4x512xf32>,
    return
  }
  func.func @transform_0(%arg0: i32) -> (i32, i32) {
    %c0_i32 = arith.constant 0 : i32
    %c0_i32_0 = arith.constant 0 : i32
    return %c0_i32, %arg0 : i32, i32
  }
  func.func @transform_1(%arg0: i32) -> (i32, i32) {
    %c0_i32 = arith.constant 0 : i32
    %c0_i32_0 = arith.constant 0 : i32
    %c0_i32_1 = arith.constant 0 : i32
    return %c0_i32, %c0_i32_0 : i32, i32
  }
  func.func @transform_2(%arg0: i32) -> (i32, i32, i32) {
    %c0_i32 = arith.constant 0 : i32
    %c0_i32_0 = arith.constant 0 : i32
    %c0_i32_1 = arith.constant 0 : i32
    %c0_i32_2 = arith.constant 0 : i32
    return %c0_i32, %c0_i32_0, %c0_i32_1 : i32, i32, i32
  }
  func.func @transform_3(%arg0: i32) -> (i32, i32, i32) {
    %c0_i32 = arith.constant 0 : i32
    %c0_i32_0 = arith.constant 0 : i32
    %c0_i32_1 = arith.constant 0 : i32
    %c0_i32_2 = arith.constant 0 : i32
    return %c0_i32, %c0_i32_0, %c0_i32_1 : i32, i32, i32
  }
  func.func @transform_4(%arg0: i32) -> (i32, i32) {
    %c0_i32 = arith.constant 0 : i32
    %c0_i32_0 = arith.constant 0 : i32
    %c0_i32_1 = arith.constant 0 : i32
    return %c0_i32, %c0_i32_0 : i32, i32
  }
  func.func @transform_5(%arg0: i32) -> (i32, i32) {
    %c0_i32 = arith.constant 0 : i32
    %c0_i32_0 = arith.constant 0 : i32
    %c0_i32_1 = arith.constant 0 : i32
    return %c0_i32, %c0_i32_0 : i32, i32
  }
  func.func @transform_6(%arg0: i32) -> (i32, i32) {
    %c0_i32 = arith.constant 0 : i32
    %c0_i32_0 = arith.constant 0 : i32
    return %c0_i32, %arg0 : i32, i32
  }
}

</mosaic_0001>

<llo_original>
// kernel: tpu_custom_call.1
$region0: #{tpu_custom_call.1}
  #allocation0 [shape = 'u32[]', space=smem, size = 0x4, offset = 0x4, fixed_abs, tag = 'smem constant byte address 0x4 - core index']
  #allocation1 [shape = 'u32[144,128]{1,0:T(1,128)}', space=vmem, size = 0x12000, scoped, tag = 'internal scratch']
  %s0 = inlined_call_operand.vmem [shape: f32[4,1024], index: 0, kind: input, shape index: {}]
  %s1 = inlined_call_operand.vmem [shape: f32[27,512], index: 1, kind: input, shape index: {}]
  %s2 = inlined_call_operand.vmem [shape: f32[27,4,4], index: 2, kind: input, shape index: {}]
  %s3 = inlined_call_operand.vmem [shape: f32[27,4,4], index: 3, kind: input, shape index: {}]
  %s4 = inlined_call_operand.vmem [shape: f32[4,1], index: 4, kind: input, shape index: {}]
  %s5 = inlined_call_operand.vmem [shape: f32[4,1], index: 5, kind: input, shape index: {}]
  %s6 = inlined_call_operand.hbm [shape: f32[4,1024], index: 6, kind: output, shape index: {}]
  %s7 = sld [smem:[#allocation0]]
  $region57: #{tpu_custom_call.1} parent=0
    _
  %s9 = ssub.s32 1, %s7
  %s10 = scalar_select 0, %s9, %s7
  $region1: #{tpu_custom_call.1} parent=0
    #allocation2 [shape = 'u8[16384]{0}', space=vmem, size = 0x4000, scoped, tag = 'output window, operand 0']
    #allocation3 [shape = 's32[2]{0}', space=sflag, size = 0x8, scoped, tag = 'scoped memory for tpu_custom_call.1']
    %11 = vsyncpa [#allocation3], 0
    %s12 = scalar_lea.sflag [#allocation3], 1
    %13 = vsyncpa %s12, 0
    loop: start=0, step=1, limit=4
    $region2: #{tpu_custom_call.1} parent=1 // loop_pre_header
      _
    $region3: #{tpu_custom_call.1} parent=1 // loop_header
      %s15 = sphi 0, %s19
      %p16 = scmp.ge.s32.totalorder %s15, 4
      %s25 = sphi 0, %s27
      %s28 = sphi 0, %s25
      %s29 = sphi 0, %s28
      %s45 = sphi 0, %s29
      %s49 = sphi 0, %s49
      %s51 = sphi 0, %s49
      %s52 = sphi 0, %s51
      %s66 = sphi 0, %s52
      %s70 = sphi 0, %s70
      %s72 = sphi 0, %s70
      %s73 = sphi 0, %s72
      %s87 = sphi 0, %s73
      %s91 = sphi 0, %s91
      %s93 = sphi 0, %s91
      %s94 = sphi 0, %s93
      %s108 = sphi 0, %s94
      %s112 = sphi 0, %s112
      %s114 = sphi 0, %s112
      %s115 = sphi 0, %s114
      %s129 = sphi 0, %s115
      %s133 = sphi 0, %s133
      %s135 = sphi 0, %s133
      %s136 = sphi 0, %s135
      %s150 = sphi 0, %s136
      %s156 = sphi 0, %s158
      %s159 = sphi 0, %s156
      %s160 = sphi 0, %s159
      %s176 = sphi 0, %s160
    $region4: #{tpu_custom_call.1} parent=1 // loop_header_branch
      %18 = sbr.rel (%p16) target = $region8
    $region5: #{tpu_custom_call.1} parent=1 // loop_body
      %s20 = ssub.s32 %s15, 1
      %s21 = ssub.s32 %s15, 2
      %s22 = sadd.s32 %s15, 1
      %s23 = ssub.s32 %s15, %s22
      %p24 = scmp.eq.s32.totalorder %s23, 0
      %s26 = sadd.s32 %s25, 1
      %s27 = scalar_select %p24, %s25, %s26
      %p30 = pneg %p24
      %p31 = scmp.eq.s32.totalorder %s15, 1
      %p32 = por %p30, %p31
      %p33 = scmp.ne.s32.totalorder %s25, %s28
      %p34 = scmp.eq.s32.totalorder %s15, 0
      %p35 = por %p33, %p34
      %p36 = scmp.ne.s32.totalorder %s25, %s28
      %p37 = scmp.eq.s32.totalorder %s20, 1
      %p38 = por %p36, %p37
      %p39 = scmp.ne.s32.totalorder %s28, %s29
      %p40 = scmp.eq.s32.totalorder %s20, 0
      %p41 = por %p39, %p40
      %p42 = scmp.ne.s32.totalorder %s28, %s29
      %p43 = scmp.eq.s32.totalorder %s21, 1
      %p44 = por %p42, %p43
      %p46 = scmp.ne.s32.totalorder %s29, %s45
      %p47 = scmp.eq.s32.totalorder %s21, 0
      %p48 = por %p46, %p47
      %s50 = sadd.s32 %s49, 1
      %p53 = scmp.eq.s32.totalorder %s15, 1
      %p54 = scmp.ne.s32.totalorder %s49, %s51
      %p55 = scmp.eq.s32.totalorder %s15, 0
      %p56 = por %p54, %p55
      %p57 = scmp.ne.s32.totalorder %s49, %s51
      %p58 = scmp.eq.s32.totalorder %s20, 1
      %p59 = por %p57, %p58
      %p60 = scmp.ne.s32.totalorder %s51, %s52
      %p61 = scmp.eq.s32.totalorder %s20, 0
      %p62 = por %p60, %p61
      %p63 = scmp.ne.s32.totalorder %s51, %s52
      %p64 = scmp.eq.s32.totalorder %s21, 1
      %p65 = por %p63, %p64
      %p67 = scmp.ne.s32.totalorder %s52, %s66
      %p68 = scmp.eq.s32.totalorder %s21, 0
      %p69 = por %p67, %p68
      %s71 = sadd.s32 %s70, 1
      %p74 = scmp.eq.s32.totalorder %s15, 1
      %p75 = scmp.ne.s32.totalorder %s70, %s72
      %p76 = scmp.eq.s32.totalorder %s15, 0
      %p77 = por %p75, %p76
      %p78 = scmp.ne.s32.totalorder %s70, %s72
      %p79 = scmp.eq.s32.totalorder %s20, 1
      %p80 = por %p78, %p79
      %p81 = scmp.ne.s32.totalorder %s72, %s73
      %p82 = scmp.eq.s32.totalorder %s20, 0
      %p83 = por %p81, %p82
      %p84 = scmp.ne.s32.totalorder %s72, %s73
      %p85 = scmp.eq.s32.totalorder %s21, 1
      %p86 = por %p84, %p85
      %p88 = scmp.ne.s32.totalorder %s73, %s87
      %p89 = scmp.eq.s32.totalorder %s21, 0
      %p90 = por %p88, %p89
      %s92 = sadd.s32 %s91, 1
      %p95 = scmp.eq.s32.totalorder %s15, 1
      %p96 = scmp.ne.s32.totalorder %s91, %s93
      %p97 = scmp.eq.s32.totalorder %s15, 0
      %p98 = por %p96, %p97
      %p99 = scmp.ne.s32.totalorder %s91, %s93
      %p100 = scmp.eq.s32.totalorder %s20, 1
      %p101 = por %p99, %p100
      %p102 = scmp.ne.s32.totalorder %s93, %s94
      %p103 = scmp.eq.s32.totalorder %s20, 0
      %p104 = por %p102, %p103
      %p105 = scmp.ne.s32.totalorder %s93, %s94
      %p106 = scmp.eq.s32.totalorder %s21, 1
      %p107 = por %p105, %p106
      %p109 = scmp.ne.s32.totalorder %s94, %s108
      %p110 = scmp.eq.s32.totalorder %s21, 0
      %p111 = por %p109, %p110
      %s113 = sadd.s32 %s112, 1
      %p116 = scmp.eq.s32.totalorder %s15, 1
      %p117 = scmp.ne.s32.totalorder %s112, %s114
      %p118 = scmp.eq.s32.totalorder %s15, 0
      %p119 = por %p117, %p118
      %p120 = scmp.ne.s32.totalorder %s112, %s114
      %p121 = scmp.eq.s32.totalorder %s20, 1
      %p122 = por %p120, %p121
      %p123 = scmp.ne.s32.totalorder %s114, %s115
      %p124 = scmp.eq.s32.totalorder %s20, 0
      %p125 = por %p123, %p124
      %p126 = scmp.ne.s32.totalorder %s114, %s115
      %p127 = scmp.eq.s32.totalorder %s21, 1
      %p128 = por %p126, %p127
      %p130 = scmp.ne.s32.totalorder %s115, %s129
      %p131 = scmp.eq.s32.totalorder %s21, 0
      %p132 = por %p130, %p131
      %s134 = sadd.s32 %s133, 1
      %p137 = scmp.eq.s32.totalorder %s15, 1
      %p138 = scmp.ne.s32.totalorder %s133, %s135
      %p139 = scmp.eq.s32.totalorder %s15, 0
      %p140 = por %p138, %p139
      %p141 = scmp.ne.s32.totalorder %s133, %s135
      %p142 = scmp.eq.s32.totalorder %s20, 1
      %p143 = por %p141, %p142
      %p144 = scmp.ne.s32.totalorder %s135, %s136
      %p145 = scmp.eq.s32.totalorder %s20, 0
      %p146 = por %p144, %p145
      %p147 = scmp.ne.s32.totalorder %s135, %s136
      %p148 = scmp.eq.s32.totalorder %s21, 1
      %p149 = por %p147, %p148
      %p151 = scmp.ne.s32.totalorder %s136, %s150
      %p152 = scmp.eq.s32.totalorder %s21, 0
      %p153 = por %p151, %p152
      %s154 = ssub.s32 %s15, %s22
      %p155 = scmp.eq.s32.totalorder %s154, 0
      %s157 = sadd.s32 %s156, 1
      %s158 = scalar_select %p155, %s156, %s157
      %p161 = pneg %p155
      %p162 = scmp.eq.s32.totalorder %s15, 1
      %p163 = por %p161, %p162
      %p164 = scmp.ne.s32.totalorder %s156, %s159
      %p165 = scmp.eq.s32.totalorder %s15, 0
      %p166 = por %p164, %p165
      %p167 = scmp.ne.s32.totalorder %s156, %s159
      %p168 = scmp.eq.s32.totalorder %s20, 1
      %p169 = por %p167, %p168
      %p170 = scmp.ne.s32.totalorder %s159, %s160
      %p171 = scmp.eq.s32.totalorder %s20, 0
      %p172 = por %p170, %p171
      %p173 = scmp.ne.s32.totalorder %s159, %s160
      %p174 = scmp.eq.s32.totalorder %s21, 1
      %p175 = por %p173, %p174
      %p177 = scmp.ne.s32.totalorder %s160, %s176
      %p178 = scmp.eq.s32.totalorder %s21, 0
      %p179 = por %p177, %p178
      %p180 = scmp.le.s32.totalorder 1, %s15
      %p181 = scmp.lt.s32.totalorder %s15, 3
      %p182 = pnand %p180, %p181
      %p183 = pneg %p182
      // Predicated region
      $region9: #{tpu_custom_call.1} parent=5 // pred_check
        _
      $region10: #{tpu_custom_call.1} parent=5 // pred_check_branch
        %185 = sbr.rel (%p182) target = $region12
      $region11: #{tpu_custom_call.1} parent=5 // pred_region
        %s186 = ssub.s32 %s15, 1
        // Predicated region
        $region13: #{tpu_custom_call.1} parent=11 // pred_check
          %p187 = pneg %p62
        $region14: #{tpu_custom_call.1} parent=11 // pred_check_branch
          %189 = sbr.rel (%p187) target = $region16
        $region15: #{tpu_custom_call.1} parent=11 // pred_region
          _
        $region16: #{tpu_custom_call.1} parent=11 // pred_fallthru
          _
        // Predicated region
        $region17: #{tpu_custom_call.1} parent=11 // pred_check
          %p190 = pneg %p83
        $region18: #{tpu_custom_call.1} parent=11 // pred_check_branch
          %192 = sbr.rel (%p190) target = $region20
        $region19: #{tpu_custom_call.1} parent=11 // pred_region
          _
        $region20: #{tpu_custom_call.1} parent=11 // pred_fallthru
          _
        // Predicated region
        $region21: #{tpu_custom_call.1} parent=11 // pred_check
          %p193 = pneg %p104
        $region22: #{tpu_custom_call.1} parent=11 // pred_check_branch
          %195 = sbr.rel (%p193) target = $region24
        $region23: #{tpu_custom_call.1} parent=11 // pred_region
          _
        $region24: #{tpu_custom_call.1} parent=11 // pred_fallthru
          _
        // Predicated region
        $region25: #{tpu_custom_call.1} parent=11 // pred_check
          %p196 = pneg %p125
        $region26: #{tpu_custom_call.1} parent=11 // pred_check_branch
          %198 = sbr.rel (%p196) target = $region28
        $region27: #{tpu_custom_call.1} parent=11 // pred_region
          _
        $region28: #{tpu_custom_call.1} parent=11 // pred_fallthru
          _
        // Predicated region
        $region29: #{tpu_custom_call.1} parent=11 // pred_check
          %p199 = pneg %p146
        $region30: #{tpu_custom_call.1} parent=11 // pred_check_branch
          %201 = sbr.rel (%p199) target = $region32
        $region31: #{tpu_custom_call.1} parent=11 // pred_region
          _
        $region32: #{tpu_custom_call.1} parent=11 // pred_fallthru
          _
      $region12: #{tpu_custom_call.1} parent=5 // pred_fallthru
        _
      %p202 = scmp.lt.s32.totalorder %s15, 2
      // Predicated region
      $region33: #{tpu_custom_call.1} parent=5 // pred_check
        %p203 = pneg %p202
      $region34: #{tpu_custom_call.1} parent=5 // pred_check_branch
        %205 = sbr.rel (%p203) target = $region36
      $region35: #{tpu_custom_call.1} parent=5 // pred_region
        // Predicated region
        $region37: #{tpu_custom_call.1} parent=35 // pred_check
          %p206 = pneg %p35
        $region38: #{tpu_custom_call.1} parent=35 // pred_check_branch
          %208 = sbr.rel (%p206) target = $region40
        $region39: #{tpu_custom_call.1} parent=35 // pred_region
          %s209 = smul.u32 4, %s15
          %p210 = scmp.lt.s32.totalorder %s209, 7
          %s211 = scalar_select %p210, %s209, 7
          %s212 = smul.addr %s211, 4
          %s213 = scalar_lea.vmem %s0, %s212
          %s214 = smul.u32 4, %s15
        $region40: #{tpu_custom_call.1} parent=35 // pred_fallthru
          _
      $region36: #{tpu_custom_call.1} parent=5 // pred_fallthru
        _
      %p215 = scmp.le.s32.totalorder 1, %s15
      %p216 = scmp.lt.s32.totalorder %s15, 3
      %p217 = pnand %p215, %p216
      %p218 = pneg %p217
      // Predicated region
      $region41: #{tpu_custom_call.1} parent=5 // pred_check
        _
      $region42: #{tpu_custom_call.1} parent=5 // pred_check_branch
        %220 = sbr.rel (%p217) target = $region44
      $region43: #{tpu_custom_call.1} parent=5 // pred_region
        %s221 = ssub.s32 %s15, 1
        %s222 = smul.u32 4, %s20
        %p223 = scmp.lt.s32.totalorder %s222, 7
        %s224 = scalar_select %p223, %s222, 7
        %s225 = smul.addr %s224, 4
        %s226 = scalar_lea.vmem %s0, %s225
        %p227 = pneg %p41
        %p228 = pneg %p38
        %p229 = pneg %p62
        %p230 = pneg %p59
        %p231 = pneg %p83
        %p232 = pneg %p80
        %p233 = pneg %p104
        %p234 = pneg %p101
        %p235 = pneg %p125
        %p236 = pneg %p122
        %p237 = pneg %p146
        %p238 = pneg %p143
        %p239 = pneg %p172
        %p240 = pneg %p169
        %s241 = sand.u32 %s159, 1
        %s242 = scalar_lea.sflag [#allocation3], %s241
        %s243 = sand.u32 %s159, 1
        %s244 = smul.addr %s243, 16
        %s245 = scalar_lea.vmem [#allocation2], %s244
        %s246 = smul.u32 4, %s20
        %p247 = scmp.lt.s32.totalorder %s246, 7
        %s248 = scalar_select %p247, %s246, 7
        %s249 = smul.addr %s248, 4
        %s250 = scalar_lea.vmem %s0, %s249
        %s251 = smul.u32 4, %s20
        %s252 = smul.u32 4, %s20
        %v253 = vld [vmem:[%s250] sm:$0xff]
        %v254 = vld [vmem:[%s250 + $0x8] sm:$0xff]
        %v257 = vcombine.high %v253, %v253
        %v258 = vcombine.high %v254, %v254
        %261 = vrot.lane.b32.xlu0 %v253, 73
        %v262 = vpop.permute.xlu0 %261
        %263 = vrot.lane.b32.xlu0 %v257, 73
        %v264 = vpop.permute.xlu0 %263
        %265 = vrot.lane.b32.xlu0 %v254, 73
        %v266 = vpop.permute.xlu0 %265
        %267 = vrot.lane.b32.xlu0 %v258, 73
        %v268 = vpop.permute.xlu0 %267
        %v269 = vlaneseq
        %v270 = vand.u32 %v269, 127
        %vm271 = vcmp.lt.s32.totalorder %v270, 73
        %v272 = vsel %vm271, %v266, %v268
        %v273 = vsel %vm271, %v264, %v266
        %v274 = vsel %vm271, %v262, %v264
        %v275 = vsel %vm271, %v268, %v262
        %v276 = vld [vmem:[%s1] ss:$8 sm:$0xf]
        %v278 = vlaneseq
        %v279 = vshrl.u32 %v278, 7
        %v280 = vsub.s32 0, %v279
        %v281 = vrot.slane %v276, %v280
        %v282 = vlaneseq
        %v283 = vshrl.u32 %v282, 7
        %v284 = vsub.s32 1, %v283
        %v285 = vrot.slane %v276, %v284
        %v286 = vlaneseq
        %v287 = vshrl.u32 %v286, 7
        %v288 = vsub.s32 2, %v287
        %v289 = vrot.slane %v276, %v288
        %v290 = vlaneseq
        %v291 = vshrl.u32 %v290, 7
        %v292 = vsub.s32 3, %v291
        %v293 = vrot.slane %v276, %v292
        %v298 = vmul.f32 %v275, %v281
        %v299 = vmul.f32 %v274, %v285
        %v300 = vmul.f32 %v273, %v289
        %v301 = vmul.f32 %v272, %v293
        %v302 = vld [vmem:[%s2] sm:$0xf]
        %303 = vrot.lane.b32.xlu0 %v253, 72
        %v304 = vpop.permute.xlu0 %303
        %305 = vrot.lane.b32.xlu0 %v257, 72
        %v306 = vpop.permute.xlu0 %305
        %307 = vrot.lane.b32.xlu0 %v254, 72
        %v308 = vpop.permute.xlu0 %307
        %309 = vrot.lane.b32.xlu0 %v258, 72
        %v310 = vpop.permute.xlu0 %309
        %vm311 = vcmp.lt.s32.totalorder %v270, 72
        %v312 = vsel %vm311, %v308, %v310
        %v313 = vsel %vm311, %v306, %v308
        %v314 = vsel %vm311, %v304, %v306
        %v315 = vsel %vm311, %v310, %v304
        %s316 = scalar_lea.vmem %s1, 1
        %v317 = vld [vmem:[%s316] ss:$8 sm:$0xf]
        %v319 = vlaneseq
        %v320 = vshrl.u32 %v319, 7
        %v321 = vsub.s32 0, %v320
        %v322 = vrot.slane %v317, %v321
        %v323 = vlaneseq
        %v324 = vshrl.u32 %v323, 7
        %v325 = vsub.s32 1, %v324
        %v326 = vrot.slane %v317, %v325
        %v327 = vlaneseq
        %v328 = vshrl.u32 %v327, 7
        %v329 = vsub.s32 2, %v328
        %v330 = vrot.slane %v317, %v329
        %v331 = vlaneseq
        %v332 = vshrl.u32 %v331, 7
        %v333 = vsub.s32 3, %v332
        %v334 = vrot.slane %v317, %v333
        %v339 = vmul.f32 %v315, %v322
        %v340 = vmul.f32 %v314, %v326
        %v341 = vmul.f32 %v313, %v330
        %v342 = vmul.f32 %v312, %v334
        %s343 = scalar_lea.vmem %s2, 4
        %v344 = vld [vmem:[%s343] sm:$0xf]
        %vm345 = vcmask 31744
        %v347 = vsel %vm345, %v344, 0
        %vm349 = vcmask 1043456
        %v351 = vsel %vm349, %v339, 0
        %v354 = vsel %vm349, %v340, 0
        %v357 = vsel %vm349, %v341, 0
        %v360 = vsel %vm349, %v342, 0
        %362 = vmatprep.subr.mxu0 0.0
        %363 = vmatpush1.msra.mxu0 0.0
        %364 = vmatprep.subr.mxu0 0.0
        %365 = vmatpush1.msra.mxu0 0.0
        %366 = vmatprep.subr.mxu0 0.0
        %367 = vmatpush1.msra.mxu0 0.0
        %368 = vmatprep.subr.mxu0 0.0
        %369 = vmatpush1.msra.mxu0 0.0
        %370 = vmatprep.subr.mxu0 0.0
        %371 = vmatpush1.msra.mxu0 0.0
        %372 = vmatprep.subr.mxu0 0.0
        %373 = vmatpush1.msra.mxu0 0.0
        %374 = vmatprep.subr.mxu0 0.0
        %375 = vmatpush1.msra.mxu0 0.0
        %376 = vmatprep.subr.mxu0 0.0
        %377 = vmatpush1.msra.mxu0 0.0
        %378 = vmatprep.subr.mxu0 0.0
        %379 = vmatpush1.msra.mxu0 0.0
        %380 = vmatprep.subr.mxu0 0.0
        %381 = vmatpush1.msra.mxu0 0.0
        %382 = vmatprep.subr.mxu0 0.0
        %383 = vmatpush1.msra.mxu0 0.0
        %384 = vmatprep.subr.mxu0 0.0
        %385 = vmatpush1.msra.mxu0 0.0
        %386 = vmatprep.subr.mxu0 0.0
        %387 = vmatpush1.msra.mxu0 0.0
        %388 = vmatprep.subr.mxu0 0.0
        %389 = vmatpush1.msra.mxu0 0.0
        %390 = vmatprep.subr.mxu0 0.0
        %391 = vmatpush1.msra.mxu0 0.0
        %392 = vmatprep.subr.mxu0 %v354
        %393 = vmatpush1.msra.mxu0 %v351
        %394 = vmatprep.subr.mxu0 0.0
        %395 = vmatpush2.msra.mxu0 0.0
        %396 = vmatprep.subr.mxu0 0.0
        %397 = vmatpush2.msra.mxu0 0.0
        %398 = vmatprep.subr.mxu0 0.0
        %399 = vmatpush2.msra.mxu0 0.0
        %400 = vmatprep.subr.mxu0 0.0
        %401 = vmatpush2.msra.mxu0 0.0
        %402 = vmatprep.subr.mxu0 0.0
        %403 = vmatpush2.msra.mxu0 0.0
        %404 = vmatprep.subr.mxu0 0.0
        %405 = vmatpush2.msra.mxu0 0.0
        %406 = vmatprep.subr.mxu0 0.0
        %407 = vmatpush2.msra.mxu0 0.0
        %408 = vmatprep.subr.mxu0 0.0
        %409 = vmatpush2.msra.mxu0 0.0
        %410 = vmatprep.subr.mxu0 0.0
        %411 = vmatpush2.msra.mxu0 0.0
        %412 = vmatprep.subr.mxu0 0.0
        %413 = vmatpush2.msra.mxu0 0.0
        %414 = vmatprep.subr.mxu0 0.0
        %415 = vmatpush2.msra.mxu0 0.0
        %416 = vmatprep.subr.mxu0 0.0
        %417 = vmatpush2.msra.mxu0 0.0
        %418 = vmatprep.subr.mxu0 0.0
        %419 = vmatpush2.msra.mxu0 0.0
        %420 = vmatprep.subr.mxu0 0.0
        %421 = vmatpush2.msra.mxu0 0.0
        %422 = vmatprep.subr.mxu0 0.0
        %423 = vmatpush2.msra.mxu0 0.0
        %424 = vmatprep.subr.mxu0 0.0
        %425 = vmatpush2.msra.mxu0 0.0
        %426 = vmatprep.mubr.f32.mxu0 0.0
        %427 = vmatmul.mubr.f32.gmra.mxu0 %v347
        %v428 = vpop.f32.mrf.mxu0
        %v429 = vadd.f32 0.0, %v428
        %v430 = vpop.f32.mrf.mxu0
        %v431 = vadd.f32 0.0, %v430
        %432 = vdwg.mxu0
        %433 = vmatprep.subr.mxu0 0.0
        %434 = vmatpush1.msra.mxu0 0.0
        %435 = vmatprep.subr.mxu0 0.0
        %436 = vmatpush1.msra.mxu0 0.0
        %437 = vmatprep.subr.mxu0 0.0
        %438 = vmatpush1.msra.mxu0 0.0
        %439 = vmatprep.subr.mxu0 0.0
        %440 = vmatpush1.msra.mxu0 0.0
        %441 = vmatprep.subr.mxu0 0.0
        %442 = vmatpush1.msra.mxu0 0.0
        %443 = vmatprep.subr.mxu0 0.0
        %444 = vmatpush1.msra.mxu0 0.0
        %445 = vmatprep.subr.mxu0 0.0
        %446 = vmatpush1.msra.mxu0 0.0
        %447 = vmatprep.subr.mxu0 0.0
        %448 = vmatpush1.msra.mxu0 0.0
        %449 = vmatprep.subr.mxu0 0.0
        %450 = vmatpush1.msra.mxu0 0.0
        %451 = vmatprep.subr.mxu0 0.0
        %452 = vmatpush1.msra.mxu0 0.0
        %453 = vmatprep.subr.mxu0 0.0
        %454 = vmatpush1.msra.mxu0 0.0
        %455 = vmatprep.subr.mxu0 0.0
        %456 = vmatpush1.msra.mxu0 0.0
        %457 = vmatprep.subr.mxu0 0.0
        %458 = vmatpush1.msra.mxu0 0.0
        %459 = vmatprep.subr.mxu0 0.0
        %460 = vmatpush1.msra.mxu0 0.0
        %461 = vmatprep.subr.mxu0 0.0
        %462 = vmatpush1.msra.mxu0 0.0
        %463 = vmatprep.subr.mxu0 %v360
        %464 = vmatpush1.msra.mxu0 %v357
        %465 = vmatprep.subr.mxu0 0.0
        %466 = vmatpush2.msra.mxu0 0.0
        %467 = vmatprep.subr.mxu0 0.0
        %468 = vmatpush2.msra.mxu0 0.0
        %469 = vmatprep.subr.mxu0 0.0
        %470 = vmatpush2.msra.mxu0 0.0
        %471 = vmatprep.subr.mxu0 0.0
        %472 = vmatpush2.msra.mxu0 0.0
        %473 = vmatprep.subr.mxu0 0.0
        %474 = vmatpush2.msra.mxu0 0.0
        %475 = vmatprep.subr.mxu0 0.0
        %476 = vmatpush2.msra.mxu0 0.0
        %477 = vmatprep.subr.mxu0 0.0
        %478 = vmatpush2.msra.mxu0 0.0
        %479 = vmatprep.subr.mxu0 0.0
        %480 = vmatpush2.msra.mxu0 0.0
        %481 = vmatprep.subr.mxu0 0.0
        %482 = vmatpush2.msra.mxu0 0.0
        %483 = vmatprep.subr.mxu0 0.0
        %484 = vmatpush2.msra.mxu0 0.0
        %485 = vmatprep.subr.mxu0 0.0
        %486 = vmatpush2.msra.mxu0 0.0
        %487 = vmatprep.subr.mxu0 0.0
        %488 = vmatpush2.msra.mxu0 0.0
        %489 = vmatprep.subr.mxu0 0.0
        %490 = vmatpush2.msra.mxu0 0.0
        %491 = vmatprep.subr.mxu0 0.0
        %492 = vmatpush2.msra.mxu0 0.0
        %493 = vmatprep.subr.mxu0 0.0
        %494 = vmatpush2.msra.mxu0 0.0
        %495 = vmatprep.subr.mxu0 0.0
        %496 = vmatpush2.msra.mxu0 0.0
        %497 = vmatprep.mubr.f32.mxu0 0.0
        %498 = vmatmul.mubr.f32.gmra.mxu0 %v347
        %v499 = vpop.f32.mrf.mxu0
        %v500 = vadd.f32 0.0, %v499
        %v501 = vpop.f32.mrf.mxu0
        %v502 = vadd.f32 0.0, %v501
        %503 = vdwg.mxu0
        %v505 = vsel %vm345, %v302, 0
        %v508 = vsel %vm349, %v298, 0
        %v511 = vsel %vm349, %v299, 0
        %v514 = vsel %vm349, %v300, 0
        %v517 = vsel %vm349, %v301, 0
        %519 = vmatprep.subr.mxu0 0.0
        %520 = vmatpush1.msra.mxu0 0.0
        %521 = vmatprep.subr.mxu0 0.0
        %522 = vmatpush1.msra.mxu0 0.0
        %523 = vmatprep.subr.mxu0 0.0
        %524 = vmatpush1.msra.mxu0 0.0
        %525 = vmatprep.subr.mxu0 0.0
        %526 = vmatpush1.msra.mxu0 0.0
        %527 = vmatprep.subr.mxu0 0.0
        %528 = vmatpush1.msra.mxu0 0.0
        %529 = vmatprep.subr.mxu0 0.0
        %530 = vmatpush1.msra.mxu0 0.0
        %531 = vmatprep.subr.mxu0 0.0
        %532 = vmatpush1.msra.mxu0 0.0
        %533 = vmatprep.subr.mxu0 0.0
        %534 = vmatpush1.msra.mxu0 0.0
        %535 = vmatprep.subr.mxu0 0.0
        %536 = vmatpush1.msra.mxu0 0.0
        %537 = vmatprep.subr.mxu0 0.0
        %538 = vmatpush1.msra.mxu0 0.0
        %539 = vmatprep.subr.mxu0 0.0
        %540 = vmatpush1.msra.mxu0 0.0
        %541 = vmatprep.subr.mxu0 0.0
        %542 = vmatpush1.msra.mxu0 0.0
        %543 = vmatprep.subr.mxu0 0.0
        %544 = vmatpush1.msra.mxu0 0.0
        %545 = vmatprep.subr.mxu0 0.0
        %546 = vmatpush1.msra.mxu0 0.0
        %547 = vmatprep.subr.mxu0 0.0
        %548 = vmatpush1.msra.mxu0 0.0
        %549 = vmatprep.subr.mxu0 %v511
        %550 = vmatpush1.msra.mxu0 %v508
        %551 = vmatprep.subr.mxu0 0.0
        %552 = vmatpush2.msra.mxu0 0.0
        %553 = vmatprep.subr.mxu0 0.0
        %554 = vmatpush2.msra.mxu0 0.0
        %555 = vmatprep.subr.mxu0 0.0
        %556 = vmatpush2.msra.mxu0 0.0
        %557 = vmatprep.subr.mxu0 0.0
        %558 = vmatpush2.msra.mxu0 0.0
        %559 = vmatprep.subr.mxu0 0.0
        %560 = vmatpush2.msra.mxu0 0.0
        %561 = vmatprep.subr.mxu0 0.0
        %562 = vmatpush2.msra.mxu0 0.0
        %563 = vmatprep.subr.mxu0 0.0
        %564 = vmatpush2.msra.mxu0 0.0
        %565 = vmatprep.subr.mxu0 0.0
        %566 = vmatpush2.msra.mxu0 0.0
        %567 = vmatprep.subr.mxu0 0.0
        %568 = vmatpush2.msra.mxu0 0.0
        %569 = vmatprep.subr.mxu0 0.0
        %570 = vmatpush2.msra.mxu0 0.0
        %571 = vmatprep.subr.mxu0 0.0
        %572 = vmatpush2.msra.mxu0 0.0
        %573 = vmatprep.subr.mxu0 0.0
        %574 = vmatpush2.msra.mxu0 0.0
        %575 = vmatprep.subr.mxu0 0.0
        %576 = vmatpush2.msra.mxu0 0.0
        %577 = vmatprep.subr.mxu0 0.0
        %578 = vmatpush2.msra.mxu0 0.0
        %579 = vmatprep.subr.mxu0 0.0
        %580 = vmatpush2.msra.mxu0 0.0
        %581 = vmatprep.subr.mxu0 0.0
        %582 = vmatpush2.msra.mxu0 0.0
        %583 = vmatprep.mubr.f32.mxu0 0.0
        %584 = vmatmul.mubr.f32.gmra.mxu0 %v505
        %v585 = vpop.f32.mrf.mxu0
        %v586 = vadd.f32 %v429, %v585
        %v587 = vpop.f32.mrf.mxu0
        %v588 = vadd.f32 %v431, %v587
        %589 = vdwg.mxu0
        %590 = vmatprep.subr.mxu0 0.0
        %591 = vmatpush1.msra.mxu0 0.0
        %592 = vmatprep.subr.mxu0 0.0
        %593 = vmatpush1.msra.mxu0 0.0
        %594 = vmatprep.subr.mxu0 0.0
        %595 = vmatpush1.msra.mxu0 0.0
        %596 = vmatprep.subr.mxu0 0.0
        %597 = vmatpush1.msra.mxu0 0.0
        %598 = vmatprep.subr.mxu0 0.0
        %599 = vmatpush1.msra.mxu0 0.0
        %600 = vmatprep.subr.mxu0 0.0
        %601 = vmatpush1.msra.mxu0 0.0
        %602 = vmatprep.subr.mxu0 0.0
        %603 = vmatpush1.msra.mxu0 0.0
        %604 = vmatprep.subr.mxu0 0.0
        %605 = vmatpush1.msra.mxu0 0.0
        %606 = vmatprep.subr.mxu0 0.0
        %607 = vmatpush1.msra.mxu0 0.0
        %608 = vmatprep.subr.mxu0 0.0
        %609 = vmatpush1.msra.mxu0 0.0
        %610 = vmatprep.subr.mxu0 0.0
        %611 = vmatpush1.msra.mxu0 0.0
        %612 = vmatprep.subr.mxu0 0.0
        %613 = vmatpush1.msra.mxu0 0.0
        %614 = vmatprep.subr.mxu0 0.0
        %615 = vmatpush1.msra.mxu0 0.0
        %616 = vmatprep.subr.mxu0 0.0
        %617 = vmatpush1.msra.mxu0 0.0
        %618 = vmatprep.subr.mxu0 0.0
        %619 = vmatpush1.msra.mxu0 0.0
        %620 = vmatprep.subr.mxu0 %v517
        %621 = vmatpush1.msra.mxu0 %v514
        %622 = vmatprep.subr.mxu0 0.0
        %623 = vmatpush2.msra.mxu0 0.0
        %624 = vmatprep.subr.mxu0 0.0
        %625 = vmatpush2.msra.mxu0 0.0
        %626 = vmatprep.subr.mxu0 0.0
        %627 = vmatpush2.msra.mxu0 0.0
        %628 = vmatprep.subr.mxu0 0.0
        %629 = vmatpush2.msra.mxu0 0.0
        %630 = vmatprep.subr.mxu0 0.0
        %631 = vmatpush2.msra.mxu0 0.0
        %632 = vmatprep.subr.mxu0 0.0
        %633 = vmatpush2.msra.mxu0 0.0
        %634 = vmatprep.subr.mxu0 0.0
        %635 = vmatpush2.msra.mxu0 0.0
        %636 = vmatprep.subr.mxu0 0.0
        %637 = vmatpush2.msra.mxu0 0.0
        %638 = vmatprep.subr.mxu0 0.0
        %639 = vmatpush2.msra.mxu0 0.0
        %640 = vmatprep.subr.mxu0 0.0
        %641 = vmatpush2.msra.mxu0 0.0
        %642 = vmatprep.subr.mxu0 0.0
        %643 = vmatpush2.msra.mxu0 0.0
        %644 = vmatprep.subr.mxu0 0.0
        %645 = vmatpush2.msra.mxu0 0.0
        %646 = vmatprep.subr.mxu0 0.0
        %647 = vmatpush2.msra.mxu0 0.0
        %648 = vmatprep.subr.mxu0 0.0
        %649 = vmatpush2.msra.mxu0 0.0
        %650 = vmatprep.subr.mxu0 0.0
        %651 = vmatpush2.msra.mxu0 0.0
        %652 = vmatprep.subr.mxu0 0.0
        %653 = vmatpush2.msra.mxu0 0.0
        %654 = vmatprep.mubr.f32.mxu0 0.0
        %655 = vmatmul.mubr.f32.gmra.mxu0 %v505
        %v656 = vpop.f32.mrf.mxu0
        %v657 = vadd.f32 %v500, %v656
        %v658 = vpop.f32.mrf.mxu0
        %v659 = vadd.f32 %v502, %v658
        %660 = vdwg.mxu0
        %661 = vrot.lane.b32.xlu0 %v253, 71
        %v662 = vpop.permute.xlu0 %661
        %663 = vrot.lane.b32.xlu0 %v257, 71
        %v664 = vpop.permute.xlu0 %663
        %665 = vrot.lane.b32.xlu0 %v254, 71
        %v666 = vpop.permute.xlu0 %665
        %667 = vrot.lane.b32.xlu0 %v258, 71
        %v668 = vpop.permute.xlu0 %667
        %vm669 = vcmp.lt.s32.totalorder %v270, 71
        %v670 = vsel %vm669, %v666, %v668
        %v671 = vsel %vm669, %v664, %v666
        %v672 = vsel %vm669, %v662, %v664
        %v673 = vsel %vm669, %v668, %v662
        %s674 = scalar_lea.vmem %s1, 2
        %v675 = vld [vmem:[%s674] ss:$8 sm:$0xf]
        %v677 = vlaneseq
        %v678 = vshrl.u32 %v677, 7
        %v679 = vsub.s32 0, %v678
        %v680 = vrot.slane %v675, %v679
        %v681 = vlaneseq
        %v682 = vshrl.u32 %v681, 7
        %v683 = vsub.s32 1, %v682
        %v684 = vrot.slane %v675, %v683
        %v685 = vlaneseq
        %v686 = vshrl.u32 %v685, 7
        %v687 = vsub.s32 2, %v686
        %v688 = vrot.slane %v675, %v687
        %v689 = vlaneseq
        %v690 = vshrl.u32 %v689, 7
        %v691 = vsub.s32 3, %v690
        %v692 = vrot.slane %v675, %v691
        %v697 = vmul.f32 %v673, %v680
        %v698 = vmul.f32 %v672, %v684
        %v699 = vmul.f32 %v671, %v688
        %v700 = vmul.f32 %v670, %v692
        %s701 = scalar_lea.vmem %s2, 8
        %v702 = vld [vmem:[%s701] sm:$0xf]
        %v704 = vsel %vm345, %v702, 0
        %v707 = vsel %vm349, %v697, 0
        %v710 = vsel %vm349, %v698, 0
        %v713 = vsel %vm349, %v699, 0
        %v716 = vsel %vm349, %v700, 0
        %718 = vmatprep.subr.mxu0 0.0
        %719 = vmatpush1.msra.mxu0 0.0
        %720 = vmatprep.subr.mxu0 0.0
        %721 = vmatpush1.msra.mxu0 0.0
        %722 = vmatprep.subr.mxu0 0.0
        %723 = vmatpush1.msra.mxu0 0.0
        %724 = vmatprep.subr.mxu0 0.0
        %725 = vmatpush1.msra.mxu0 0.0
        %726 = vmatprep.subr.mxu0 0.0
        %727 = vmatpush1.msra.mxu0 0.0
        %728 = vmatprep.subr.mxu0 0.0
        %729 = vmatpush1.msra.mxu0 0.0
        %730 = vmatprep.subr.mxu0 0.0
        %731 = vmatpush1.msra.mxu0 0.0
        %732 = vmatprep.subr.mxu0 0.0
        %733 = vmatpush1.msra.mxu0 0.0
        %734 = vmatprep.subr.mxu0 0.0
        %735 = vmatpush1.msra.mxu0 0.0
        %736 = vmatprep.subr.mxu0 0.0
        %737 = vmatpush1.msra.mxu0 0.0
        %738 = vmatprep.subr.mxu0 0.0
        %739 = vmatpush1.msra.mxu0 0.0
        %740 = vmatprep.subr.mxu0 0.0
        %741 = vmatpush1.msra.mxu0 0.0
        %742 = vmatprep.subr.mxu0 0.0
        %743 = vmatpush1.msra.mxu0 0.0
        %744 = vmatprep.subr.mxu0 0.0
        %745 = vmatpush1.msra.mxu0 0.0
        %746 = vmatprep.subr.mxu0 0.0
        %747 = vmatpush1.msra.mxu0 0.0
        %748 = vmatprep.subr.mxu0 %v710
        %749 = vmatpush1.msra.mxu0 %v707
        %750 = vmatprep.subr.mxu0 0.0
        %751 = vmatpush2.msra.mxu0 0.0
        %752 = vmatprep.subr.mxu0 0.0
        %753 = vmatpush2.msra.mxu0 0.0
        %754 = vmatprep.subr.mxu0 0.0
        %755 = vmatpush2.msra.mxu0 0.0
        %756 = vmatprep.subr.mxu0 0.0
        %757 = vmatpush2.msra.mxu0 0.0
        %758 = vmatprep.subr.mxu0 0.0
        %759 = vmatpush2.msra.mxu0 0.0
        %760 = vmatprep.subr.mxu0 0.0
        %761 = vmatpush2.msra.mxu0 0.0
        %762 = vmatprep.subr.mxu0 0.0
        %763 = vmatpush2.msra.mxu0 0.0
        %764 = vmatprep.subr.mxu0 0.0
        %765 = vmatpush2.msra.mxu0 0.0
        %766 = vmatprep.subr.mxu0 0.0
        %767 = vmatpush2.msra.mxu0 0.0
        %768 = vmatprep.subr.mxu0 0.0
        %769 = vmatpush2.msra.mxu0 0.0
        %770 = vmatprep.subr.mxu0 0.0
        %771 = vmatpush2.msra.mxu0 0.0
        %772 = vmatprep.subr.mxu0 0.0
        %773 = vmatpush2.msra.mxu0 0.0
        %774 = vmatprep.subr.mxu0 0.0
        %775 = vmatpush2.msra.mxu0 0.0
        %776 = vmatprep.subr.mxu0 0.0
        %777 = vmatpush2.msra.mxu0 0.0
        %778 = vmatprep.subr.mxu0 0.0
        %779 = vmatpush2.msra.mxu0 0.0
        %780 = vmatprep.subr.mxu0 0.0
        %781 = vmatpush2.msra.mxu0 0.0
        %782 = vmatprep.mubr.f32.mxu0 0.0
        %783 = vmatmul.mubr.f32.gmra.mxu0 %v704
        %v784 = vpop.f32.mrf.mxu0
        %v785 = vadd.f32 0.0, %v784
        %v786 = vpop.f32.mrf.mxu0
        %v787 = vadd.f32 0.0, %v786
        %788 = vdwg.mxu0
        %789 = vmatprep.subr.mxu0 0.0
        %790 = vmatpush1.msra.mxu0 0.0
        %791 = vmatprep.subr.mxu0 0.0
        %792 = vmatpush1.msra.mxu0 0.0
        %793 = vmatprep.subr.mxu0 0.0
        %794 = vmatpush1.msra.mxu0 0.0
        %795 = vmatprep.subr.mxu0 0.0
        %796 = vmatpush1.msra.mxu0 0.0
        %797 = vmatprep.subr.mxu0 0.0
        %798 = vmatpush1.msra.mxu0 0.0
        %799 = vmatprep.subr.mxu0 0.0
        %800 = vmatpush1.msra.mxu0 0.0
        %801 = vmatprep.subr.mxu0 0.0
        %802 = vmatpush1.msra.mxu0 0.0
        %803 = vmatprep.subr.mxu0 0.0
        %804 = vmatpush1.msra.mxu0 0.0
        %805 = vmatprep.subr.mxu0 0.0
        %806 = vmatpush1.msra.mxu0 0.0
        %807 = vmatprep.subr.mxu0 0.0
        %808 = vmatpush1.msra.mxu0 0.0
        %809 = vmatprep.subr.mxu0 0.0
        %810 = vmatpush1.msra.mxu0 0.0
        %811 = vmatprep.subr.mxu0 0.0
        %812 = vmatpush1.msra.mxu0 0.0
        %813 = vmatprep.subr.mxu0 0.0
        %814 = vmatpush1.msra.mxu0 0.0
        %815 = vmatprep.subr.mxu0 0.0
        %816 = vmatpush1.msra.mxu0 0.0
        %817 = vmatprep.subr.mxu0 0.0
        %818 = vmatpush1.msra.mxu0 0.0
        %819 = vmatprep.subr.mxu0 %v716
        %820 = vmatpush1.msra.mxu0 %v713
        %821 = vmatprep.subr.mxu0 0.0
        %822 = vmatpush2.msra.mxu0 0.0
        %823 = vmatprep.subr.mxu0 0.0
        %824 = vmatpush2.msra.mxu0 0.0
        %825 = vmatprep.subr.mxu0 0.0
        %826 = vmatpush2.msra.mxu0 0.0
        %827 = vmatprep.subr.mxu0 0.0
        %828 = vmatpush2.msra.mxu0 0.0
        %829 = vmatprep.subr.mxu0 0.0
        %830 = vmatpush2.msra.mxu0 0.0
        %831 = vmatprep.subr.mxu0 0.0
        %832 = vmatpush2.msra.mxu0 0.0
        %833 = vmatprep.subr.mxu0 0.0
        %834 = vmatpush2.msra.mxu0 0.0
        %835 = vmatprep.subr.mxu0 0.0
        %836 = vmatpush2.msra.mxu0 0.0
        %837 = vmatprep.subr.mxu0 0.0
        %838 = vmatpush2.msra.mxu0 0.0
        %839 = vmatprep.subr.mxu0 0.0
        %840 = vmatpush2.msra.mxu0 0.0
        %841 = vmatprep.subr.mxu0 0.0
        %842 = vmatpush2.msra.mxu0 0.0
        %843 = vmatprep.subr.mxu0 0.0
        %844 = vmatpush2.msra.mxu0 0.0
        %845 = vmatprep.subr.mxu0 0.0
        %846 = vmatpush2.msra.mxu0 0.0
        %847 = vmatprep.subr.mxu0 0.0
        %848 = vmatpush2.msra.mxu0 0.0
        %849 = vmatprep.subr.mxu0 0.0
        %850 = vmatpush2.msra.mxu0 0.0
        %851 = vmatprep.subr.mxu0 0.0
        %852 = vmatpush2.msra.mxu0 0.0
        %853 = vmatprep.mubr.f32.mxu0 0.0
        %854 = vmatmul.mubr.f32.gmra.mxu0 %v704
        %v855 = vpop.f32.mrf.mxu0
        %v856 = vadd.f32 0.0, %v855
        %v857 = vpop.f32.mrf.mxu0
        %v858 = vadd.f32 0.0, %v857
        %859 = vdwg.mxu0
        %v860 = vadd.f32 %v586, %v785
        %v861 = vadd.f32 %v588, %v787
        %v862 = vadd.f32 %v657, %v856
        %v863 = vadd.f32 %v659, %v858
        %864 = vrot.lane.b32.xlu0 %v253, 65
        %v865 = vpop.permute.xlu0 %864
        %866 = vrot.lane.b32.xlu0 %v257, 65
        %v867 = vpop.permute.xlu0 %866
        %868 = vrot.lane.b32.xlu0 %v254, 65
        %v869 = vpop.permute.xlu0 %868
        %870 = vrot.lane.b32.xlu0 %v258, 65
        %v871 = vpop.permute.xlu0 %870
        %vm872 = vcmp.lt.s32.totalorder %v270, 65
        %v873 = vsel %vm872, %v869, %v871
        %v874 = vsel %vm872, %v867, %v869
        %v875 = vsel %vm872, %v865, %v867
        %v876 = vsel %vm872, %v871, %v865
        %s877 = scalar_lea.vmem %s1, 3
        %v878 = vld [vmem:[%s877] ss:$8 sm:$0xf]
        %v880 = vlaneseq
        %v881 = vshrl.u32 %v880, 7
        %v882 = vsub.s32 0, %v881
        %v883 = vrot.slane %v878, %v882
        %v884 = vlaneseq
        %v885 = vshrl.u32 %v884, 7
        %v886 = vsub.s32 1, %v885
        %v887 = vrot.slane %v878, %v886
        %v888 = vlaneseq
        %v889 = vshrl.u32 %v888, 7
        %v890 = vsub.s32 2, %v889
        %v891 = vrot.slane %v878, %v890
        %v892 = vlaneseq
        %v893 = vshrl.u32 %v892, 7
        %v894 = vsub.s32 3, %v893
        %v895 = vrot.slane %v878, %v894
        %v900 = vmul.f32 %v876, %v883
        %v901 = vmul.f32 %v875, %v887
        %v902 = vmul.f32 %v874, %v891
        %v903 = vmul.f32 %v873, %v895
        %s904 = scalar_lea.vmem %s2, 12
        %v905 = vld [vmem:[%s904] sm:$0xf]
        %v907 = vsel %vm345, %v905, 0
        %v910 = vsel %vm349, %v900, 0
        %v913 = vsel %vm349, %v901, 0
        %v916 = vsel %vm349, %v902, 0
        %v919 = vsel %vm349, %v903, 0
        %921 = vmatprep.subr.mxu0 0.0
        %922 = vmatpush1.msra.mxu0 0.0
        %923 = vmatprep.subr.mxu0 0.0
        %924 = vmatpush1.msra.mxu0 0.0
        %925 = vmatprep.subr.mxu0 0.0
        %926 = vmatpush1.msra.mxu0 0.0
        %927 = vmatprep.subr.mxu0 0.0
        %928 = vmatpush1.msra.mxu0 0.0
        %929 = vmatprep.subr.mxu0 0.0
        %930 = vmatpush1.msra.mxu0 0.0
        %931 = vmatprep.subr.mxu0 0.0
        %932 = vmatpush1.msra.mxu0 0.0
        %933 = vmatprep.subr.mxu0 0.0
        %934 = vmatpush1.msra.mxu0 0.0
        %935 = vmatprep.subr.mxu0 0.0
        %936 = vmatpush1.msra.mxu0 0.0
        %937 = vmatprep.subr.mxu0 0.0
        %938 = vmatpush1.msra.mxu0 0.0
        %939 = vmatprep.subr.mxu0 0.0
        %940 = vmatpush1.msra.mxu0 0.0
        %941 = vmatprep.subr.mxu0 0.0
        %942 = vmatpush1.msra.mxu0 0.0
        %943 = vmatprep.subr.mxu0 0.0
        %944 = vmatpush1.msra.mxu0 0.0
        %945 = vmatprep.subr.mxu0 0.0
        %946 = vmatpush1.msra.mxu0 0.0
        %947 = vmatprep.subr.mxu0 0.0
        %948 = vmatpush1.msra.mxu0 0.0
        %949 = vmatprep.subr.mxu0 0.0
        %950 = vmatpush1.msra.mxu0 0.0
        %951 = vmatprep.subr.mxu0 %v913
        %952 = vmatpush1.msra.mxu0 %v910
        %953 = vmatprep.subr.mxu0 0.0
        %954 = vmatpush2.msra.mxu0 0.0
        %955 = vmatprep.subr.mxu0 0.0
        %956 = vmatpush2.msra.mxu0 0.0
        %957 = vmatprep.subr.mxu0 0.0
        %958 = vmatpush2.msra.mxu0 0.0
        %959 = vmatprep.subr.mxu0 0.0
        %960 = vmatpush2.msra.mxu0 0.0
        %961 = vmatprep.subr.mxu0 0.0
        %962 = vmatpush2.msra.mxu0 0.0
        %963 = vmatprep.subr.mxu0 0.0
        %964 = vmatpush2.msra.mxu0 0.0
        %965 = vmatprep.subr.mxu0 0.0
        %966 = vmatpush2.msra.mxu0 0.0
        %967 = vmatprep.subr.mxu0 0.0
        %968 = vmatpush2.msra.mxu0 0.0
        %969 = vmatprep.subr.mxu0 0.0
        %970 = vmatpush2.msra.mxu0 0.0
        %971 = vmatprep.subr.mxu0 0.0
        %972 = vmatpush2.msra.mxu0 0.0
        %973 = vmatprep.subr.mxu0 0.0
        %974 = vmatpush2.msra.mxu0 0.0
        %975 = vmatprep.subr.mxu0 0.0
        %976 = vmatpush2.msra.mxu0 0.0
        %977 = vmatprep.subr.mxu0 0.0
        %978 = vmatpush2.msra.mxu0 0.0
        %979 = vmatprep.subr.mxu0 0.0
        %980 = vmatpush2.msra.mxu0 0.0
        %981 = vmatprep.subr.mxu0 0.0
        %982 = vmatpush2.msra.mxu0 0.0
        %983 = vmatprep.subr.mxu0 0.0
        %984 = vmatpush2.msra.mxu0 0.0
        %985 = vmatprep.mubr.f32.mxu0 0.0
        %986 = vmatmul.mubr.f32.gmra.mxu0 %v907
        %v987 = vpop.f32.mrf.mxu0
        %v988 = vadd.f32 0.0, %v987
        %v989 = vpop.f32.mrf.mxu0
        %v990 = vadd.f32 0.0, %v989
        %991 = vdwg.mxu0
        %992 = vmatprep.subr.mxu0 0.0
        %993 = vmatpush1.msra.mxu0 0.0
        %994 = vmatprep.subr.mxu0 0.0
        %995 = vmatpush1.msra.mxu0 0.0
        %996 = vmatprep.subr.mxu0 0.0
        %997 = vmatpush1.msra.mxu0 0.0
        %998 = vmatprep.subr.mxu0 0.0
        %999 = vmatpush1.msra.mxu0 0.0
        %1000 = vmatprep.subr.mxu0 0.0
        %1001 = vmatpush1.msra.mxu0 0.0
        %1002 = vmatprep.subr.mxu0 0.0
        %1003 = vmatpush1.msra.mxu0 0.0
        %1004 = vmatprep.subr.mxu0 0.0
        %1005 = vmatpush1.msra.mxu0 0.0
        %1006 = vmatprep.subr.mxu0 0.0
        %1007 = vmatpush1.msra.mxu0 0.0
        %1008 = vmatprep.subr.mxu0 0.0
        %1009 = vmatpush1.msra.mxu0 0.0
        %1010 = vmatprep.subr.mxu0 0.0
        %1011 = vmatpush1.msra.mxu0 0.0
        %1012 = vmatprep.subr.mxu0 0.0
        %1013 = vmatpush1.msra.mxu0 0.0
        %1014 = vmatprep.subr.mxu0 0.0
        %1015 = vmatpush1.msra.mxu0 0.0
        %1016 = vmatprep.subr.mxu0 0.0
        %1017 = vmatpush1.msra.mxu0 0.0
        %1018 = vmatprep.subr.mxu0 0.0
        %1019 = vmatpush1.msra.mxu0 0.0
        %1020 = vmatprep.subr.mxu0 0.0
        %1021 = vmatpush1.msra.mxu0 0.0
        %1022 = vmatprep.subr.mxu0 %v919
        %1023 = vmatpush1.msra.mxu0 %v916
        %1024 = vmatprep.subr.mxu0 0.0
        %1025 = vmatpush2.msra.mxu0 0.0
        %1026 = vmatprep.subr.mxu0 0.0
        %1027 = vmatpush2.msra.mxu0 0.0
        %1028 = vmatprep.subr.mxu0 0.0
        %1029 = vmatpush2.msra.mxu0 0.0
        %1030 = vmatprep.subr.mxu0 0.0
        %1031 = vmatpush2.msra.mxu0 0.0
        %1032 = vmatprep.subr.mxu0 0.0
        %1033 = vmatpush2.msra.mxu0 0.0
        %1034 = vmatprep.subr.mxu0 0.0
        %1035 = vmatpush2.msra.mxu0 0.0
        %1036 = vmatprep.subr.mxu0 0.0
        %1037 = vmatpush2.msra.mxu0 0.0
        %1038 = vmatprep.subr.mxu0 0.0
        %1039 = vmatpush2.msra.mxu0 0.0
        %1040 = vmatprep.subr.mxu0 0.0
        %1041 = vmatpush2.msra.mxu0 0.0
        %1042 = vmatprep.subr.mxu0 0.0
        %1043 = vmatpush2.msra.mxu0 0.0
        %1044 = vmatprep.subr.mxu0 0.0
        %1045 = vmatpush2.msra.mxu0 0.0
        %1046 = vmatprep.subr.mxu0 0.0
        %1047 = vmatpush2.msra.mxu0 0.0
        %1048 = vmatprep.subr.mxu0 0.0
        %1049 = vmatpush2.msra.mxu0 0.0
        %1050 = vmatprep.subr.mxu0 0.0
        %1051 = vmatpush2.msra.mxu0 0.0
        %1052 = vmatprep.subr.mxu0 0.0
        %1053 = vmatpush2.msra.mxu0 0.0
        %1054 = vmatprep.subr.mxu0 0.0
        %1055 = vmatpush2.msra.mxu0 0.0
        %1056 = vmatprep.mubr.f32.mxu0 0.0
        %1057 = vmatmul.mubr.f32.gmra.mxu0 %v907
        %v1058 = vpop.f32.mrf.mxu0
        %v1059 = vadd.f32 0.0, %v1058
        %v1060 = vpop.f32.mrf.mxu0
        %v1061 = vadd.f32 0.0, %v1060
        %1062 = vdwg.mxu0
        %v1063 = vadd.f32 %v860, %v988
        %v1064 = vadd.f32 %v861, %v990
        %v1065 = vadd.f32 %v862, %v1059
        %v1066 = vadd.f32 %v863, %v1061
        %1067 = vrot.lane.b32.xlu0 %v253, 64
        %v1068 = vpop.permute.xlu0 %1067
        %1069 = vrot.lane.b32.xlu0 %v257, 64
        %v1070 = vpop.permute.xlu0 %1069
        %1071 = vrot.lane.b32.xlu0 %v254, 64
        %v1072 = vpop.permute.xlu0 %1071
        %1073 = vrot.lane.b32.xlu0 %v258, 64
        %v1074 = vpop.permute.xlu0 %1073
        %vm1075 = vcmp.lt.s32.totalorder %v270, 64
        %v1076 = vsel %vm1075, %v1072, %v1074
        %v1077 = vsel %vm1075, %v1070, %v1072
        %v1078 = vsel %vm1075, %v1068, %v1070
        %v1079 = vsel %vm1075, %v1074, %v1068
        %s1080 = scalar_lea.vmem %s1, 4
        %v1081 = vld [vmem:[%s1080] ss:$8 sm:$0xf]
        %v1083 = vlaneseq
        %v1084 = vshrl.u32 %v1083, 7
        %v1085 = vsub.s32 0, %v1084
        %v1086 = vrot.slane %v1081, %v1085
        %v1087 = vlaneseq
        %v1088 = vshrl.u32 %v1087, 7
        %v1089 = vsub.s32 1, %v1088
        %v1090 = vrot.slane %v1081, %v1089
        %v1091 = vlaneseq
        %v1092 = vshrl.u32 %v1091, 7
        %v1093 = vsub.s32 2, %v1092
        %v1094 = vrot.slane %v1081, %v1093
        %v1095 = vlaneseq
        %v1096 = vshrl.u32 %v1095, 7
        %v1097 = vsub.s32 3, %v1096
        %v1098 = vrot.slane %v1081, %v1097
        %v1103 = vmul.f32 %v1079, %v1086
        %v1104 = vmul.f32 %v1078, %v1090
        %v1105 = vmul.f32 %v1077, %v1094
        %v1106 = vmul.f32 %v1076, %v1098
        %s1107 = scalar_lea.vmem %s2, 16
        %v1108 = vld [vmem:[%s1107] sm:$0xf]
        %v1110 = vsel %vm345, %v1108, 0
        %v1113 = vsel %vm349, %v1103, 0
        %v1116 = vsel %vm349, %v1104, 0
        %v1119 = vsel %vm349, %v1105, 0
        %v1122 = vsel %vm349, %v1106, 0
        %1124 = vmatprep.subr.mxu0 0.0
        %1125 = vmatpush1.msra.mxu0 0.0
        %1126 = vmatprep.subr.mxu0 0.0
        %1127 = vmatpush1.msra.mxu0 0.0
        %1128 = vmatprep.subr.mxu0 0.0
        %1129 = vmatpush1.msra.mxu0 0.0
        %1130 = vmatprep.subr.mxu0 0.0
        %1131 = vmatpush1.msra.mxu0 0.0
        %1132 = vmatprep.subr.mxu0 0.0
        %1133 = vmatpush1.msra.mxu0 0.0
        %1134 = vmatprep.subr.mxu0 0.0
        %1135 = vmatpush1.msra.mxu0 0.0
        %1136 = vmatprep.subr.mxu0 0.0
        %1137 = vmatpush1.msra.mxu0 0.0
        %1138 = vmatprep.subr.mxu0 0.0
        %1139 = vmatpush1.msra.mxu0 0.0
        %1140 = vmatprep.subr.mxu0 0.0
        %1141 = vmatpush1.msra.mxu0 0.0
        %1142 = vmatprep.subr.mxu0 0.0
        %1143 = vmatpush1.msra.mxu0 0.0
        %1144 = vmatprep.subr.mxu0 0.0
        %1145 = vmatpush1.msra.mxu0 0.0
        %1146 = vmatprep.subr.mxu0 0.0
        %1147 = vmatpush1.msra.mxu0 0.0
        %1148 = vmatprep.subr.mxu0 0.0
        %1149 = vmatpush1.msra.mxu0 0.0
        %1150 = vmatprep.subr.mxu0 0.0
        %1151 = vmatpush1.msra.mxu0 0.0
        %1152 = vmatprep.subr.mxu0 0.0
        %1153 = vmatpush1.msra.mxu0 0.0
        %1154 = vmatprep.subr.mxu0 %v1116
        %1155 = vmatpush1.msra.mxu0 %v1113
        %1156 = vmatprep.subr.mxu0 0.0
        %1157 = vmatpush2.msra.mxu0 0.0
        %1158 = vmatprep.subr.mxu0 0.0
        %1159 = vmatpush2.msra.mxu0 0.0
        %1160 = vmatprep.subr.mxu0 0.0
        %1161 = vmatpush2.msra.mxu0 0.0
        %1162 = vmatprep.subr.mxu0 0.0
        %1163 = vmatpush2.msra.mxu0 0.0
        %1164 = vmatprep.subr.mxu0 0.0
        %1165 = vmatpush2.msra.mxu0 0.0
        %1166 = vmatprep.subr.mxu0 0.0
        %1167 = vmatpush2.msra.mxu0 0.0
        %1168 = vmatprep.subr.mxu0 0.0
        %1169 = vmatpush2.msra.mxu0 0.0
        %1170 = vmatprep.subr.mxu0 0.0
        %1171 = vmatpush2.msra.mxu0 0.0
        %1172 = vmatprep.subr.mxu0 0.0
        %1173 = vmatpush2.msra.mxu0 0.0
        %1174 = vmatprep.subr.mxu0 0.0
        %1175 = vmatpush2.msra.mxu0 0.0
        %1176 = vmatprep.subr.mxu0 0.0
        %1177 = vmatpush2.msra.mxu0 0.0
        %1178 = vmatprep.subr.mxu0 0.0
        %1179 = vmatpush2.msra.mxu0 0.0
        %1180 = vmatprep.subr.mxu0 0.0
        %1181 = vmatpush2.msra.mxu0 0.0
        %1182 = vmatprep.subr.mxu0 0.0
        %1183 = vmatpush2.msra.mxu0 0.0
        %1184 = vmatprep.subr.mxu0 0.0
        %1185 = vmatpush2.msra.mxu0 0.0
        %1186 = vmatprep.subr.mxu0 0.0
        %1187 = vmatpush2.msra.mxu0 0.0
        %1188 = vmatprep.mubr.f32.mxu0 0.0
        %1189 = vmatmul.mubr.f32.gmra.mxu0 %v1110
        %v1190 = vpop.f32.mrf.mxu0
        %v1191 = vadd.f32 0.0, %v1190
        %v1192 = vpop.f32.mrf.mxu0
        %v1193 = vadd.f32 0.0, %v1192
        %1194 = vdwg.mxu0
        %1195 = vmatprep.subr.mxu0 0.0
        %1196 = vmatpush1.msra.mxu0 0.0
        %1197 = vmatprep.subr.mxu0 0.0
        %1198 = vmatpush1.msra.mxu0 0.0
        %1199 = vmatprep.subr.mxu0 0.0
        %1200 = vmatpush1.msra.mxu0 0.0
        %1201 = vmatprep.subr.mxu0 0.0
        %1202 = vmatpush1.msra.mxu0 0.0
        %1203 = vmatprep.subr.mxu0 0.0
        %1204 = vmatpush1.msra.mxu0 0.0
        %1205 = vmatprep.subr.mxu0 0.0
        %1206 = vmatpush1.msra.mxu0 0.0
        %1207 = vmatprep.subr.mxu0 0.0
        %1208 = vmatpush1.msra.mxu0 0.0
        %1209 = vmatprep.subr.mxu0 0.0
        %1210 = vmatpush1.msra.mxu0 0.0
        %1211 = vmatprep.subr.mxu0 0.0
        %1212 = vmatpush1.msra.mxu0 0.0
        %1213 = vmatprep.subr.mxu0 0.0
        %1214 = vmatpush1.msra.mxu0 0.0
        %1215 = vmatprep.subr.mxu0 0.0
        %1216 = vmatpush1.msra.mxu0 0.0
        %1217 = vmatprep.subr.mxu0 0.0
        %1218 = vmatpush1.msra.mxu0 0.0
        %1219 = vmatprep.subr.mxu0 0.0
        %1220 = vmatpush1.msra.mxu0 0.0
        %1221 = vmatprep.subr.mxu0 0.0
        %1222 = vmatpush1.msra.mxu0 0.0
        %1223 = vmatprep.subr.mxu0 0.0
        %1224 = vmatpush1.msra.mxu0 0.0
        %1225 = vmatprep.subr.mxu0 %v1122
        %1226 = vmatpush1.msra.mxu0 %v1119
        %1227 = vmatprep.subr.mxu0 0.0
        %1228 = vmatpush2.msra.mxu0 0.0
        %1229 = vmatprep.subr.mxu0 0.0
        %1230 = vmatpush2.msra.mxu0 0.0
        %1231 = vmatprep.subr.mxu0 0.0
        %1232 = vmatpush2.msra.mxu0 0.0
        %1233 = vmatprep.subr.mxu0 0.0
        %1234 = vmatpush2.msra.mxu0 0.0
        %1235 = vmatprep.subr.mxu0 0.0
        %1236 = vmatpush2.msra.mxu0 0.0
        %1237 = vmatprep.subr.mxu0 0.0
        %1238 = vmatpush2.msra.mxu0 0.0
        %1239 = vmatprep.subr.mxu0 0.0
        %1240 = vmatpush2.msra.mxu0 0.0
        %1241 = vmatprep.subr.mxu0 0.0
        %1242 = vmatpush2.msra.mxu0 0.0
        %1243 = vmatprep.subr.mxu0 0.0
        %1244 = vmatpush2.msra.mxu0 0.0
        %1245 = vmatprep.subr.mxu0 0.0
        %1246 = vmatpush2.msra.mxu0 0.0
        %1247 = vmatprep.subr.mxu0 0.0
        %1248 = vmatpush2.msra.mxu0 0.0
        %1249 = vmatprep.subr.mxu0 0.0
        %1250 = vmatpush2.msra.mxu0 0.0
        %1251 = vmatprep.subr.mxu0 0.0
        %1252 = vmatpush2.msra.mxu0 0.0
        %1253 = vmatprep.subr.mxu0 0.0
        %1254 = vmatpush2.msra.mxu0 0.0
        %1255 = vmatprep.subr.mxu0 0.0
        %1256 = vmatpush2.msra.mxu0 0.0
        %1257 = vmatprep.subr.mxu0 0.0
        %1258 = vmatpush2.msra.mxu0 0.0
        %1259 = vmatprep.mubr.f32.mxu0 0.0
        %1260 = vmatmul.mubr.f32.gmra.mxu0 %v1110
        %v1261 = vpop.f32.mrf.mxu0
        %v1262 = vadd.f32 0.0, %v1261
        %v1263 = vpop.f32.mrf.mxu0
        %v1264 = vadd.f32 0.0, %v1263
        %1265 = vdwg.mxu0
        %v1266 = vadd.f32 %v1063, %v1191
        %v1267 = vadd.f32 %v1064, %v1193
        %v1268 = vadd.f32 %v1065, %v1262
        %v1269 = vadd.f32 %v1066, %v1264
        %1270 = vrot.lane.b32.xlu0 %v253, 63
        %v1271 = vpop.permute.xlu0 %1270
        %1272 = vrot.lane.b32.xlu0 %v257, 63
        %v1273 = vpop.permute.xlu0 %1272
        %1274 = vrot.lane.b32.xlu0 %v254, 63
        %v1275 = vpop.permute.xlu0 %1274
        %1276 = vrot.lane.b32.xlu0 %v258, 63
        %v1277 = vpop.permute.xlu0 %1276
        %vm1278 = vcmp.lt.s32.totalorder %v270, 63
        %v1279 = vsel %vm1278, %v1275, %v1277
        %v1280 = vsel %vm1278, %v1273, %v1275
        %v1281 = vsel %vm1278, %v1271, %v1273
        %v1282 = vsel %vm1278, %v1277, %v1271
        %s1283 = scalar_lea.vmem %s1, 5
        %v1284 = vld [vmem:[%s1283] ss:$8 sm:$0xf]
        %v1286 = vlaneseq
        %v1287 = vshrl.u32 %v1286, 7
        %v1288 = vsub.s32 0, %v1287
        %v1289 = vrot.slane %v1284, %v1288
        %v1290 = vlaneseq
        %v1291 = vshrl.u32 %v1290, 7
        %v1292 = vsub.s32 1, %v1291
        %v1293 = vrot.slane %v1284, %v1292
        %v1294 = vlaneseq
        %v1295 = vshrl.u32 %v1294, 7
        %v1296 = vsub.s32 2, %v1295
        %v1297 = vrot.slane %v1284, %v1296
        %v1298 = vlaneseq
        %v1299 = vshrl.u32 %v1298, 7
        %v1300 = vsub.s32 3, %v1299
        %v1301 = vrot.slane %v1284, %v1300
        %v1306 = vmul.f32 %v1282, %v1289
        %v1307 = vmul.f32 %v1281, %v1293
        %v1308 = vmul.f32 %v1280, %v1297
        %v1309 = vmul.f32 %v1279, %v1301
        %s1310 = scalar_lea.vmem %s2, 20
        %v1311 = vld [vmem:[%s1310] sm:$0xf]
        %v1313 = vsel %vm345, %v1311, 0
        %v1316 = vsel %vm349, %v1306, 0
        %v1319 = vsel %vm349, %v1307, 0
        %v1322 = vsel %vm349, %v1308, 0
        %v1325 = vsel %vm349, %v1309, 0
        %1327 = vmatprep.subr.mxu0 0.0
        %1328 = vmatpush1.msra.mxu0 0.0
        %1329 = vmatprep.subr.mxu0 0.0
        %1330 = vmatpush1.msra.mxu0 0.0
        %1331 = vmatprep.subr.mxu0 0.0
        %1332 = vmatpush1.msra.mxu0 0.0
        %1333 = vmatprep.subr.mxu0 0.0
        %1334 = vmatpush1.msra.mxu0 0.0
        %1335 = vmatprep.subr.mxu0 0.0
        %1336 = vmatpush1.msra.mxu0 0.0
        %1337 = vmatprep.subr.mxu0 0.0
        %1338 = vmatpush1.msra.mxu0 0.0
        %1339 = vmatprep.subr.mxu0 0.0
        %1340 = vmatpush1.msra.mxu0 0.0
        %1341 = vmatprep.subr.mxu0 0.0
        %1342 = vmatpush1.msra.mxu0 0.0
        %1343 = vmatprep.subr.mxu0 0.0
        %1344 = vmatpush1.msra.mxu0 0.0
        %1345 = vmatprep.subr.mxu0 0.0
        %1346 = vmatpush1.msra.mxu0 0.0
        %1347 = vmatprep.subr.mxu0 0.0
        %1348 = vmatpush1.msra.mxu0 0.0
        %1349 = vmatprep.subr.mxu0 0.0
        %1350 = vmatpush1.msra.mxu0 0.0
        %1351 = vmatprep.subr.mxu0 0.0
        %1352 = vmatpush1.msra.mxu0 0.0
        %1353 = vmatprep.subr.mxu0 0.0
        %1354 = vmatpush1.msra.mxu0 0.0
        %1355 = vmatprep.subr.mxu0 0.0
        %1356 = vmatpush1.msra.mxu0 0.0
        %1357 = vmatprep.subr.mxu0 %v1319
        %1358 = vmatpush1.msra.mxu0 %v1316
        %1359 = vmatprep.subr.mxu0 0.0
        %1360 = vmatpush2.msra.mxu0 0.0
        %1361 = vmatprep.subr.mxu0 0.0
        %1362 = vmatpush2.msra.mxu0 0.0
        %1363 = vmatprep.subr.mxu0 0.0
        %1364 = vmatpush2.msra.mxu0 0.0
        %1365 = vmatprep.subr.mxu0 0.0
        %1366 = vmatpush2.msra.mxu0 0.0
        %1367 = vmatprep.subr.mxu0 0.0
        %1368 = vmatpush2.msra.mxu0 0.0
        %1369 = vmatprep.subr.mxu0 0.0
        %1370 = vmatpush2.msra.mxu0 0.0
        %1371 = vmatprep.subr.mxu0 0.0
        %1372 = vmatpush2.msra.mxu0 0.0
        %1373 = vmatprep.subr.mxu0 0.0
        %1374 = vmatpush2.msra.mxu0 0.0
        %1375 = vmatprep.subr.mxu0 0.0
        %1376 = vmatpush2.msra.mxu0 0.0
        %1377 = vmatprep.subr.mxu0 0.0
        %1378 = vmatpush2.msra.mxu0 0.0
        %1379 = vmatprep.subr.mxu0 0.0
        %1380 = vmatpush2.msra.mxu0 0.0
        %1381 = vmatprep.subr.mxu0 0.0
        %1382 = vmatpush2.msra.mxu0 0.0
        %1383 = vmatprep.subr.mxu0 0.0
        %1384 = vmatpush2.msra.mxu0 0.0
        %1385 = vmatprep.subr.mxu0 0.0
        %1386 = vmatpush2.msra.mxu0 0.0
        %1387 = vmatprep.subr.mxu0 0.0
        %1388 = vmatpush2.msra.mxu0 0.0
        %1389 = vmatprep.subr.mxu0 0.0
        %1390 = vmatpush2.msra.mxu0 0.0
        %1391 = vmatprep.mubr.f32.mxu0 0.0
        %1392 = vmatmul.mubr.f32.gmra.mxu0 %v1313
        %v1393 = vpop.f32.mrf.mxu0
        %v1394 = vadd.f32 0.0, %v1393
        %v1395 = vpop.f32.mrf.mxu0
        %v1396 = vadd.f32 0.0, %v1395
        %1397 = vdwg.mxu0
        %1398 = vmatprep.subr.mxu0 0.0
        %1399 = vmatpush1.msra.mxu0 0.0
        %1400 = vmatprep.subr.mxu0 0.0
        %1401 = vmatpush1.msra.mxu0 0.0
        %1402 = vmatprep.subr.mxu0 0.0
        %1403 = vmatpush1.msra.mxu0 0.0
        %1404 = vmatprep.subr.mxu0 0.0
        %1405 = vmatpush1.msra.mxu0 0.0
        %1406 = vmatprep.subr.mxu0 0.0
        %1407 = vmatpush1.msra.mxu0 0.0
        %1408 = vmatprep.subr.mxu0 0.0
        %1409 = vmatpush1.msra.mxu0 0.0
        %1410 = vmatprep.subr.mxu0 0.0
        %1411 = vmatpush1.msra.mxu0 0.0
        %1412 = vmatprep.subr.mxu0 0.0
        %1413 = vmatpush1.msra.mxu0 0.0
        %1414 = vmatprep.subr.mxu0 0.0
        %1415 = vmatpush1.msra.mxu0 0.0
        %1416 = vmatprep.subr.mxu0 0.0
        %1417 = vmatpush1.msra.mxu0 0.0
        %1418 = vmatprep.subr.mxu0 0.0
        %1419 = vmatpush1.msra.mxu0 0.0
        %1420 = vmatprep.subr.mxu0 0.0
        %1421 = vmatpush1.msra.mxu0 0.0
        %1422 = vmatprep.subr.mxu0 0.0
        %1423 = vmatpush1.msra.mxu0 0.0
        %1424 = vmatprep.subr.mxu0 0.0
        %1425 = vmatpush1.msra.mxu0 0.0
        %1426 = vmatprep.subr.mxu0 0.0
        %1427 = vmatpush1.msra.mxu0 0.0
        %1428 = vmatprep.subr.mxu0 %v1325
        %1429 = vmatpush1.msra.mxu0 %v1322
        %1430 = vmatprep.subr.mxu0 0.0
        %1431 = vmatpush2.msra.mxu0 0.0
        %1432 = vmatprep.subr.mxu0 0.0
        %1433 = vmatpush2.msra.mxu0 0.0
        %1434 = vmatprep.subr.mxu0 0.0
        %1435 = vmatpush2.msra.mxu0 0.0
        %1436 = vmatprep.subr.mxu0 0.0
        %1437 = vmatpush2.msra.mxu0 0.0
        %1438 = vmatprep.subr.mxu0 0.0
        %1439 = vmatpush2.msra.mxu0 0.0
        %1440 = vmatprep.subr.mxu0 0.0
        %1441 = vmatpush2.msra.mxu0 0.0
        %1442 = vmatprep.subr.mxu0 0.0
        %1443 = vmatpush2.msra.mxu0 0.0
        %1444 = vmatprep.subr.mxu0 0.0
        %1445 = vmatpush2.msra.mxu0 0.0
        %1446 = vmatprep.subr.mxu0 0.0
        %1447 = vmatpush2.msra.mxu0 0.0
        %1448 = vmatprep.subr.mxu0 0.0
        %1449 = vmatpush2.msra.mxu0 0.0
        %1450 = vmatprep.subr.mxu0 0.0
        %1451 = vmatpush2.msra.mxu0 0.0
        %1452 = vmatprep.subr.mxu0 0.0
        %1453 = vmatpush2.msra.mxu0 0.0
        %1454 = vmatprep.subr.mxu0 0.0
        %1455 = vmatpush2.msra.mxu0 0.0
        %1456 = vmatprep.subr.mxu0 0.0
        %1457 = vmatpush2.msra.mxu0 0.0
        %1458 = vmatprep.subr.mxu0 0.0
        %1459 = vmatpush2.msra.mxu0 0.0
        %1460 = vmatprep.subr.mxu0 0.0
        %1461 = vmatpush2.msra.mxu0 0.0
        %1462 = vmatprep.mubr.f32.mxu0 0.0
        %1463 = vmatmul.mubr.f32.gmra.mxu0 %v1313
        %v1464 = vpop.f32.mrf.mxu0
        %v1465 = vadd.f32 0.0, %v1464
        %v1466 = vpop.f32.mrf.mxu0
        %v1467 = vadd.f32 0.0, %v1466
        %1468 = vdwg.mxu0
        %v1469 = vadd.f32 %v1266, %v1394
        %v1470 = vadd.f32 %v1267, %v1396
        %v1471 = vadd.f32 %v1268, %v1465
        %v1472 = vadd.f32 %v1269, %v1467
        %1473 = vrot.lane.b32.xlu0 %v253, 57
        %v1474 = vpop.permute.xlu0 %1473
        %1475 = vrot.lane.b32.xlu0 %v257, 57
        %v1476 = vpop.permute.xlu0 %1475
        %1477 = vrot.lane.b32.xlu0 %v254, 57
        %v1478 = vpop.permute.xlu0 %1477
        %1479 = vrot.lane.b32.xlu0 %v258, 57
        %v1480 = vpop.permute.xlu0 %1479
        %vm1481 = vcmp.lt.s32.totalorder %v270, 57
        %v1482 = vsel %vm1481, %v1478, %v1480
        %v1483 = vsel %vm1481, %v1476, %v1478
        %v1484 = vsel %vm1481, %v1474, %v1476
        %v1485 = vsel %vm1481, %v1480, %v1474
        %s1486 = scalar_lea.vmem %s1, 6
        %v1487 = vld [vmem:[%s1486] ss:$8 sm:$0xf]
        %v1489 = vlaneseq
        %v1490 = vshrl.u32 %v1489, 7
        %v1491 = vsub.s32 0, %v1490
        %v1492 = vrot.slane %v1487, %v1491
        %v1493 = vlaneseq
        %v1494 = vshrl.u32 %v1493, 7
        %v1495 = vsub.s32 1, %v1494
        %v1496 = vrot.slane %v1487, %v1495
        %v1497 = vlaneseq
        %v1498 = vshrl.u32 %v1497, 7
        %v1499 = vsub.s32 2, %v1498
        %v1500 = vrot.slane %v1487, %v1499
        %v1501 = vlaneseq
        %v1502 = vshrl.u32 %v1501, 7
        %v1503 = vsub.s32 3, %v1502
        %v1504 = vrot.slane %v1487, %v1503
        %v1509 = vmul.f32 %v1485, %v1492
        %v1510 = vmul.f32 %v1484, %v1496
        %v1511 = vmul.f32 %v1483, %v1500
        %v1512 = vmul.f32 %v1482, %v1504
        %s1513 = scalar_lea.vmem %s2, 24
        %v1514 = vld [vmem:[%s1513] sm:$0xf]
        %v1516 = vsel %vm345, %v1514, 0
        %v1519 = vsel %vm349, %v1509, 0
        %v1522 = vsel %vm349, %v1510, 0
        %v1525 = vsel %vm349, %v1511, 0
        %v1528 = vsel %vm349, %v1512, 0
        %1530 = vmatprep.subr.mxu0 0.0
        %1531 = vmatpush1.msra.mxu0 0.0
        %1532 = vmatprep.subr.mxu0 0.0
        %1533 = vmatpush1.msra.mxu0 0.0
        %1534 = vmatprep.subr.mxu0 0.0
        %1535 = vmatpush1.msra.mxu0 0.0
        %1536 = vmatprep.subr.mxu0 0.0
        %1537 = vmatpush1.msra.mxu0 0.0
        %1538 = vmatprep.subr.mxu0 0.0
        %1539 = vmatpush1.msra.mxu0 0.0
        %1540 = vmatprep.subr.mxu0 0.0
        %1541 = vmatpush1.msra.mxu0 0.0
        %1542 = vmatprep.subr.mxu0 0.0
        %1543 = vmatpush1.msra.mxu0 0.0
        %1544 = vmatprep.subr.mxu0 0.0
        %1545 = vmatpush1.msra.mxu0 0.0
        %1546 = vmatprep.subr.mxu0 0.0
        %1547 = vmatpush1.msra.mxu0 0.0
        %1548 = vmatprep.subr.mxu0 0.0
        %1549 = vmatpush1.msra.mxu0 0.0
        %1550 = vmatprep.subr.mxu0 0.0
        %1551 = vmatpush1.msra.mxu0 0.0
        %1552 = vmatprep.subr.mxu0 0.0
        %1553 = vmatpush1.msra.mxu0 0.0
        %1554 = vmatprep.subr.mxu0 0.0
        %1555 = vmatpush1.msra.mxu0 0.0
        %1556 = vmatprep.subr.mxu0 0.0
        %1557 = vmatpush1.msra.mxu0 0.0
        %1558 = vmatprep.subr.mxu0 0.0
        %1559 = vmatpush1.msra.mxu0 0.0
        %1560 = vmatprep.subr.mxu0 %v1522
        %1561 = vmatpush1.msra.mxu0 %v1519
        %1562 = vmatprep.subr.mxu0 0.0
        %1563 = vmatpush2.msra.mxu0 0.0
        %1564 = vmatprep.subr.mxu0 0.0
        %1565 = vmatpush2.msra.mxu0 0.0
        %1566 = vmatprep.subr.mxu0 0.0
        %1567 = vmatpush2.msra.mxu0 0.0
        %1568 = vmatprep.subr.mxu0 0.0
        %1569 = vmatpush2.msra.mxu0 0.0
        %1570 = vmatprep.subr.mxu0 0.0
        %1571 = vmatpush2.msra.mxu0 0.0
        %1572 = vmatprep.subr.mxu0 0.0
        %1573 = vmatpush2.msra.mxu0 0.0
        %1574 = vmatprep.subr.mxu0 0.0
        %1575 = vmatpush2.msra.mxu0 0.0
        %1576 = vmatprep.subr.mxu0 0.0
        %1577 = vmatpush2.msra.mxu0 0.0
        %1578 = vmatprep.subr.mxu0 0.0
        %1579 = vmatpush2.msra.mxu0 0.0
        %1580 = vmatprep.subr.mxu0 0.0
        %1581 = vmatpush2.msra.mxu0 0.0
        %1582 = vmatprep.subr.mxu0 0.0
        %1583 = vmatpush2.msra.mxu0 0.0
        %1584 = vmatprep.subr.mxu0 0.0
        %1585 = vmatpush2.msra.mxu0 0.0
        %1586 = vmatprep.subr.mxu0 0.0
        %1587 = vmatpush2.msra.mxu0 0.0
        %1588 = vmatprep.subr.mxu0 0.0
        %1589 = vmatpush2.msra.mxu0 0.0
        %1590 = vmatprep.subr.mxu0 0.0
        %1591 = vmatpush2.msra.mxu0 0.0
        %1592 = vmatprep.subr.mxu0 0.0
        %1593 = vmatpush2.msra.mxu0 0.0
        %1594 = vmatprep.mubr.f32.mxu0 0.0
        %1595 = vmatmul.mubr.f32.gmra.mxu0 %v1516
        %v1596 = vpop.f32.mrf.mxu0
        %v1597 = vadd.f32 0.0, %v1596
        %v1598 = vpop.f32.mrf.mxu0
        %v1599 = vadd.f32 0.0, %v1598
        %1600 = vdwg.mxu0
        %1601 = vmatprep.subr.mxu0 0.0
        %1602 = vmatpush1.msra.mxu0 0.0
        %1603 = vmatprep.subr.mxu0 0.0
        %1604 = vmatpush1.msra.mxu0 0.0
        %1605 = vmatprep.subr.mxu0 0.0
        %1606 = vmatpush1.msra.mxu0 0.0
        %1607 = vmatprep.subr.mxu0 0.0
        %1608 = vmatpush1.msra.mxu0 0.0
        %1609 = vmatprep.subr.mxu0 0.0
        %1610 = vmatpush1.msra.mxu0 0.0
        %1611 = vmatprep.subr.mxu0 0.0
        %1612 = vmatpush1.msra.mxu0 0.0
        %1613 = vmatprep.subr.mxu0 0.0
        %1614 = vmatpush1.msra.mxu0 0.0
        %1615 = vmatprep.subr.mxu0 0.0
        %1616 = vmatpush1.msra.mxu0 0.0
        %1617 = vmatprep.subr.mxu0 0.0
        %1618 = vmatpush1.msra.mxu0 0.0
        %1619 = vmatprep.subr.mxu0 0.0
        %1620 = vmatpush1.msra.mxu0 0.0
        %1621 = vmatprep.subr.mxu0 0.0
        %1622 = vmatpush1.msra.mxu0 0.0
        %1623 = vmatprep.subr.mxu0 0.0
        %1624 = vmatpush1.msra.mxu0 0.0
        %1625 = vmatprep.subr.mxu0 0.0
        %1626 = vmatpush1.msra.mxu0 0.0
        %1627 = vmatprep.subr.mxu0 0.0
        %1628 = vmatpush1.msra.mxu0 0.0
        %1629 = vmatprep.subr.mxu0 0.0
        %1630 = vmatpush1.msra.mxu0 0.0
        %1631 = vmatprep.subr.mxu0 %v1528
        %1632 = vmatpush1.msra.mxu0 %v1525
        %1633 = vmatprep.subr.mxu0 0.0
        %1634 = vmatpush2.msra.mxu0 0.0
        %1635 = vmatprep.subr.mxu0 0.0
        %1636 = vmatpush2.msra.mxu0 0.0
        %1637 = vmatprep.subr.mxu0 0.0
        %1638 = vmatpush2.msra.mxu0 0.0
        %1639 = vmatprep.subr.mxu0 0.0
        %1640 = vmatpush2.msra.mxu0 0.0
        %1641 = vmatprep.subr.mxu0 0.0
        %1642 = vmatpush2.msra.mxu0 0.0
        %1643 = vmatprep.subr.mxu0 0.0
        %1644 = vmatpush2.msra.mxu0 0.0
        %1645 = vmatprep.subr.mxu0 0.0
        %1646 = vmatpush2.msra.mxu0 0.0
        %1647 = vmatprep.subr.mxu0 0.0
        %1648 = vmatpush2.msra.mxu0 0.0
        %1649 = vmatprep.subr.mxu0 0.0
        %1650 = vmatpush2.msra.mxu0 0.0
        %1651 = vmatprep.subr.mxu0 0.0
        %1652 = vmatpush2.msra.mxu0 0.0
        %1653 = vmatprep.subr.mxu0 0.0
        %1654 = vmatpush2.msra.mxu0 0.0
        %1655 = vmatprep.subr.mxu0 0.0
        %1656 = vmatpush2.msra.mxu0 0.0
        %1657 = vmatprep.subr.mxu0 0.0
        %1658 = vmatpush2.msra.mxu0 0.0
        %1659 = vmatprep.subr.mxu0 0.0
        %1660 = vmatpush2.msra.mxu0 0.0
        %1661 = vmatprep.subr.mxu0 0.0
        %1662 = vmatpush2.msra.mxu0 0.0
        %1663 = vmatprep.subr.mxu0 0.0
        %1664 = vmatpush2.msra.mxu0 0.0
        %1665 = vmatprep.mubr.f32.mxu0 0.0
        %1666 = vmatmul.mubr.f32.gmra.mxu0 %v1516
        %v1667 = vpop.f32.mrf.mxu0
        %v1668 = vadd.f32 0.0, %v1667
        %v1669 = vpop.f32.mrf.mxu0
        %v1670 = vadd.f32 0.0, %v1669
        %1671 = vdwg.mxu0
        %v1672 = vadd.f32 %v1469, %v1597
        %v1673 = vadd.f32 %v1470, %v1599
        %v1674 = vadd.f32 %v1471, %v1668
        %v1675 = vadd.f32 %v1472, %v1670
        %1676 = vrot.lane.b32.xlu0 %v253, 56
        %v1677 = vpop.permute.xlu0 %1676
        %1678 = vrot.lane.b32.xlu0 %v257, 56
        %v1679 = vpop.permute.xlu0 %1678
        %1680 = vrot.lane.b32.xlu0 %v254, 56
        %v1681 = vpop.permute.xlu0 %1680
        %1682 = vrot.lane.b32.xlu0 %v258, 56
        %v1683 = vpop.permute.xlu0 %1682
        %vm1684 = vcmp.lt.s32.totalorder %v270, 56
        %v1685 = vsel %vm1684, %v1681, %v1683
        %v1686 = vsel %vm1684, %v1679, %v1681
        %v1687 = vsel %vm1684, %v1677, %v1679
        %v1688 = vsel %vm1684, %v1683, %v1677
        %s1689 = scalar_lea.vmem %s1, 7
        %v1690 = vld [vmem:[%s1689] ss:$8 sm:$0xf]
        %v1692 = vlaneseq
        %v1693 = vshrl.u32 %v1692, 7
        %v1694 = vsub.s32 0, %v1693
        %v1695 = vrot.slane %v1690, %v1694
        %v1696 = vlaneseq
        %v1697 = vshrl.u32 %v1696, 7
        %v1698 = vsub.s32 1, %v1697
        %v1699 = vrot.slane %v1690, %v1698
        %v1700 = vlaneseq
        %v1701 = vshrl.u32 %v1700, 7
        %v1702 = vsub.s32 2, %v1701
        %v1703 = vrot.slane %v1690, %v1702
        %v1704 = vlaneseq
        %v1705 = vshrl.u32 %v1704, 7
        %v1706 = vsub.s32 3, %v1705
        %v1707 = vrot.slane %v1690, %v1706
        %v1712 = vmul.f32 %v1688, %v1695
        %v1713 = vmul.f32 %v1687, %v1699
        %v1714 = vmul.f32 %v1686, %v1703
        %v1715 = vmul.f32 %v1685, %v1707
        %s1716 = scalar_lea.vmem %s2, 28
        %v1717 = vld [vmem:[%s1716] sm:$0xf]
        %v1719 = vsel %vm345, %v1717, 0
        %v1722 = vsel %vm349, %v1712, 0
        %v1725 = vsel %vm349, %v1713, 0
        %v1728 = vsel %vm349, %v1714, 0
        %v1731 = vsel %vm349, %v1715, 0
        %1733 = vmatprep.subr.mxu0 0.0
        %1734 = vmatpush1.msra.mxu0 0.0
        %1735 = vmatprep.subr.mxu0 0.0
        %1736 = vmatpush1.msra.mxu0 0.0
        %1737 = vmatprep.subr.mxu0 0.0
        %1738 = vmatpush1.msra.mxu0 0.0
        %1739 = vmatprep.subr.mxu0 0.0
        %1740 = vmatpush1.msra.mxu0 0.0
        %1741 = vmatprep.subr.mxu0 0.0
        %1742 = vmatpush1.msra.mxu0 0.0
        %1743 = vmatprep.subr.mxu0 0.0
        %1744 = vmatpush1.msra.mxu0 0.0
        %1745 = vmatprep.subr.mxu0 0.0
        %1746 = vmatpush1.msra.mxu0 0.0
        %1747 = vmatprep.subr.mxu0 0.0
        %1748 = vmatpush1.msra.mxu0 0.0
        %1749 = vmatprep.subr.mxu0 0.0
        %1750 = vmatpush1.msra.mxu0 0.0
        %1751 = vmatprep.subr.mxu0 0.0
        %1752 = vmatpush1.msra.mxu0 0.0
        %1753 = vmatprep.subr.mxu0 0.0
        %1754 = vmatpush1.msra.mxu0 0.0
        %1755 = vmatprep.subr.mxu0 0.0
        %1756 = vmatpush1.msra.mxu0 0.0
        %1757 = vmatprep.subr.mxu0 0.0
        %1758 = vmatpush1.msra.mxu0 0.0
        %1759 = vmatprep.subr.mxu0 0.0
        %1760 = vmatpush1.msra.mxu0 0.0
        %1761 = vmatprep.subr.mxu0 0.0
        %1762 = vmatpush1.msra.mxu0 0.0
        %1763 = vmatprep.subr.mxu0 %v1725
        %1764 = vmatpush1.msra.mxu0 %v1722
        %1765 = vmatprep.subr.mxu0 0.0
        %1766 = vmatpush2.msra.mxu0 0.0
        %1767 = vmatprep.subr.mxu0 0.0
        %1768 = vmatpush2.msra.mxu0 0.0
        %1769 = vmatprep.subr.mxu0 0.0
        %1770 = vmatpush2.msra.mxu0 0.0
        %1771 = vmatprep.subr.mxu0 0.0
        %1772 = vmatpush2.msra.mxu0 0.0
        %1773 = vmatprep.subr.mxu0 0.0
        %1774 = vmatpush2.msra.mxu0 0.0
        %1775 = vmatprep.subr.mxu0 0.0
        %1776 = vmatpush2.msra.mxu0 0.0
        %1777 = vmatprep.subr.mxu0 0.0
        %1778 = vmatpush2.msra.mxu0 0.0
        %1779 = vmatprep.subr.mxu0 0.0
        %1780 = vmatpush2.msra.mxu0 0.0
        %1781 = vmatprep.subr.mxu0 0.0
        %1782 = vmatpush2.msra.mxu0 0.0
        %1783 = vmatprep.subr.mxu0 0.0
        %1784 = vmatpush2.msra.mxu0 0.0
        %1785 = vmatprep.subr.mxu0 0.0
        %1786 = vmatpush2.msra.mxu0 0.0
        %1787 = vmatprep.subr.mxu0 0.0
        %1788 = vmatpush2.msra.mxu0 0.0
        %1789 = vmatprep.subr.mxu0 0.0
        %1790 = vmatpush2.msra.mxu0 0.0
        %1791 = vmatprep.subr.mxu0 0.0
        %1792 = vmatpush2.msra.mxu0 0.0
        %1793 = vmatprep.subr.mxu0 0.0
        %1794 = vmatpush2.msra.mxu0 0.0
        %1795 = vmatprep.subr.mxu0 0.0
        %1796 = vmatpush2.msra.mxu0 0.0
        %1797 = vmatprep.mubr.f32.mxu0 0.0
        %1798 = vmatmul.mubr.f32.gmra.mxu0 %v1719
        %v1799 = vpop.f32.mrf.mxu0
        %v1800 = vadd.f32 0.0, %v1799
        %v1801 = vpop.f32.mrf.mxu0
        %v1802 = vadd.f32 0.0, %v1801
        %1803 = vdwg.mxu0
        %1804 = vmatprep.subr.mxu0 0.0
        %1805 = vmatpush1.msra.mxu0 0.0
        %1806 = vmatprep.subr.mxu0 0.0
        %1807 = vmatpush1.msra.mxu0 0.0
        %1808 = vmatprep.subr.mxu0 0.0
        %1809 = vmatpush1.msra.mxu0 0.0
        %1810 = vmatprep.subr.mxu0 0.0
        %1811 = vmatpush1.msra.mxu0 0.0
        %1812 = vmatprep.subr.mxu0 0.0
        %1813 = vmatpush1.msra.mxu0 0.0
        %1814 = vmatprep.subr.mxu0 0.0
        %1815 = vmatpush1.msra.mxu0 0.0
        %1816 = vmatprep.subr.mxu0 0.0
        %1817 = vmatpush1.msra.mxu0 0.0
        %1818 = vmatprep.subr.mxu0 0.0
        %1819 = vmatpush1.msra.mxu0 0.0
        %1820 = vmatprep.subr.mxu0 0.0
        %1821 = vmatpush1.msra.mxu0 0.0
        %1822 = vmatprep.subr.mxu0 0.0
        %1823 = vmatpush1.msra.mxu0 0.0
        %1824 = vmatprep.subr.mxu0 0.0
        %1825 = vmatpush1.msra.mxu0 0.0
        %1826 = vmatprep.subr.mxu0 0.0
        %1827 = vmatpush1.msra.mxu0 0.0
        %1828 = vmatprep.subr.mxu0 0.0
        %1829 = vmatpush1.msra.mxu0 0.0
        %1830 = vmatprep.subr.mxu0 0.0
        %1831 = vmatpush1.msra.mxu0 0.0
        %1832 = vmatprep.subr.mxu0 0.0
        %1833 = vmatpush1.msra.mxu0 0.0
        %1834 = vmatprep.subr.mxu0 %v1731
        %1835 = vmatpush1.msra.mxu0 %v1728
        %1836 = vmatprep.subr.mxu0 0.0
        %1837 = vmatpush2.msra.mxu0 0.0
        %1838 = vmatprep.subr.mxu0 0.0
        %1839 = vmatpush2.msra.mxu0 0.0
        %1840 = vmatprep.subr.mxu0 0.0
        %1841 = vmatpush2.msra.mxu0 0.0
        %1842 = vmatprep.subr.mxu0 0.0
        %1843 = vmatpush2.msra.mxu0 0.0
        %1844 = vmatprep.subr.mxu0 0.0
        %1845 = vmatpush2.msra.mxu0 0.0
        %1846 = vmatprep.subr.mxu0 0.0
        %1847 = vmatpush2.msra.mxu0 0.0
        %1848 = vmatprep.subr.mxu0 0.0
        %1849 = vmatpush2.msra.mxu0 0.0
        %1850 = vmatprep.subr.mxu0 0.0
        %1851 = vmatpush2.msra.mxu0 0.0
        %1852 = vmatprep.subr.mxu0 0.0
        %1853 = vmatpush2.msra.mxu0 0.0
        %1854 = vmatprep.subr.mxu0 0.0
        %1855 = vmatpush2.msra.mxu0 0.0
        %1856 = vmatprep.subr.mxu0 0.0
        %1857 = vmatpush2.msra.mxu0 0.0
        %1858 = vmatprep.subr.mxu0 0.0
        %1859 = vmatpush2.msra.mxu0 0.0
        %1860 = vmatprep.subr.mxu0 0.0
        %1861 = vmatpush2.msra.mxu0 0.0
        %1862 = vmatprep.subr.mxu0 0.0
        %1863 = vmatpush2.msra.mxu0 0.0
        %1864 = vmatprep.subr.mxu0 0.0
        %1865 = vmatpush2.msra.mxu0 0.0
        %1866 = vmatprep.subr.mxu0 0.0
        %1867 = vmatpush2.msra.mxu0 0.0
        %1868 = vmatprep.mubr.f32.mxu0 0.0
        %1869 = vmatmul.mubr.f32.gmra.mxu0 %v1719
        %v1870 = vpop.f32.mrf.mxu0
        %v1871 = vadd.f32 0.0, %v1870
        %v1872 = vpop.f32.mrf.mxu0
        %v1873 = vadd.f32 0.0, %v1872
        %1874 = vdwg.mxu0
        %v1875 = vadd.f32 %v1672, %v1800
        %v1876 = vadd.f32 %v1673, %v1802
        %v1877 = vadd.f32 %v1674, %v1871
        %v1878 = vadd.f32 %v1675, %v1873
        %1879 = vrot.lane.b32.xlu0 %v253, 55
        %v1880 = vpop.permute.xlu0 %1879
        %1881 = vrot.lane.b32.xlu0 %v257, 55
        %v1882 = vpop.permute.xlu0 %1881
        %1883 = vrot.lane.b32.xlu0 %v254, 55
        %v1884 = vpop.permute.xlu0 %1883
        %1885 = vrot.lane.b32.xlu0 %v258, 55
        %v1886 = vpop.permute.xlu0 %1885
        %vm1887 = vcmp.lt.s32.totalorder %v270, 55
        %v1888 = vsel %vm1887, %v1884, %v1886
        %v1889 = vsel %vm1887, %v1882, %v1884
        %v1890 = vsel %vm1887, %v1880, %v1882
        %v1891 = vsel %vm1887, %v1886, %v1880
        %s1892 = scalar_lea.vmem %s1, 32
        %v1893 = vld [vmem:[%s1892] ss:$8 sm:$0xf]
        %v1895 = vlaneseq
        %v1896 = vshrl.u32 %v1895, 7
        %v1897 = vsub.s32 0, %v1896
        %v1898 = vrot.slane %v1893, %v1897
        %v1899 = vlaneseq
        %v1900 = vshrl.u32 %v1899, 7
        %v1901 = vsub.s32 1, %v1900
        %v1902 = vrot.slane %v1893, %v1901
        %v1903 = vlaneseq
        %v1904 = vshrl.u32 %v1903, 7
        %v1905 = vsub.s32 2, %v1904
        %v1906 = vrot.slane %v1893, %v1905
        %v1907 = vlaneseq
        %v1908 = vshrl.u32 %v1907, 7
        %v1909 = vsub.s32 3, %v1908
        %v1910 = vrot.slane %v1893, %v1909
        %v1915 = vmul.f32 %v1891, %v1898
        %v1916 = vmul.f32 %v1890, %v1902
        %v1917 = vmul.f32 %v1889, %v1906
        %v1918 = vmul.f32 %v1888, %v1910
        %s1919 = scalar_lea.vmem %s2, 32
        %v1920 = vld [vmem:[%s1919] sm:$0xf]
        %v1922 = vsel %vm345, %v1920, 0
        %v1925 = vsel %vm349, %v1915, 0
        %v1928 = vsel %vm349, %v1916, 0
        %v1931 = vsel %vm349, %v1917, 0
        %v1934 = vsel %vm349, %v1918, 0
        %1936 = vmatprep.subr.mxu0 0.0
        %1937 = vmatpush1.msra.mxu0 0.0
        %1938 = vmatprep.subr.mxu0 0.0
        %1939 = vmatpush1.msra.mxu0 0.0
        %1940 = vmatprep.subr.mxu0 0.0
        %1941 = vmatpush1.msra.mxu0 0.0
        %1942 = vmatprep.subr.mxu0 0.0
        %1943 = vmatpush1.msra.mxu0 0.0
        %1944 = vmatprep.subr.mxu0 0.0
        %1945 = vmatpush1.msra.mxu0 0.0
        %1946 = vmatprep.subr.mxu0 0.0
        %1947 = vmatpush1.msra.mxu0 0.0
        %1948 = vmatprep.subr.mxu0 0.0
        %1949 = vmatpush1.msra.mxu0 0.0
        %1950 = vmatprep.subr.mxu0 0.0
        %1951 = vmatpush1.msra.mxu0 0.0
        %1952 = vmatprep.subr.mxu0 0.0
        %1953 = vmatpush1.msra.mxu0 0.0
        %1954 = vmatprep.subr.mxu0 0.0
        %1955 = vmatpush1.msra.mxu0 0.0
        %1956 = vmatprep.subr.mxu0 0.0
        %1957 = vmatpush1.msra.mxu0 0.0
        %1958 = vmatprep.subr.mxu0 0.0
        %1959 = vmatpush1.msra.mxu0 0.0
        %1960 = vmatprep.subr.mxu0 0.0
        %1961 = vmatpush1.msra.mxu0 0.0
        %1962 = vmatprep.subr.mxu0 0.0
        %1963 = vmatpush1.msra.mxu0 0.0
        %1964 = vmatprep.subr.mxu0 0.0
        %1965 = vmatpush1.msra.mxu0 0.0
        %1966 = vmatprep.subr.mxu0 %v1928
        %1967 = vmatpush1.msra.mxu0 %v1925
        %1968 = vmatprep.subr.mxu0 0.0
        %1969 = vmatpush2.msra.mxu0 0.0
        %1970 = vmatprep.subr.mxu0 0.0
        %1971 = vmatpush2.msra.mxu0 0.0
        %1972 = vmatprep.subr.mxu0 0.0
        %1973 = vmatpush2.msra.mxu0 0.0
        %1974 = vmatprep.subr.mxu0 0.0
        %1975 = vmatpush2.msra.mxu0 0.0
        %1976 = vmatprep.subr.mxu0 0.0
        %1977 = vmatpush2.msra.mxu0 0.0
        %1978 = vmatprep.subr.mxu0 0.0
        %1979 = vmatpush2.msra.mxu0 0.0
        %1980 = vmatprep.subr.mxu0 0.0
        %1981 = vmatpush2.msra.mxu0 0.0
        %1982 = vmatprep.subr.mxu0 0.0
        %1983 = vmatpush2.msra.mxu0 0.0
        %1984 = vmatprep.subr.mxu0 0.0
        %1985 = vmatpush2.msra.mxu0 0.0
        %1986 = vmatprep.subr.mxu0 0.0
        %1987 = vmatpush2.msra.mxu0 0.0
        %1988 = vmatprep.subr.mxu0 0.0
        %1989 = vmatpush2.msra.mxu0 0.0
        %1990 = vmatprep.subr.mxu0 0.0
        %1991 = vmatpush2.msra.mxu0 0.0
        %1992 = vmatprep.subr.mxu0 0.0
        %1993 = vmatpush2.msra.mxu0 0.0
        %1994 = vmatprep.subr.mxu0 0.0
        %1995 = vmatpush2.msra.mxu0 0.0
        %1996 = vmatprep.subr.mxu0 0.0
        %1997 = vmatpush2.msra.mxu0 0.0
        %1998 = vmatprep.subr.mxu0 0.0
        %1999 = vmatpush2.msra.mxu0 0.0
        %2000 = vmatprep.mubr.f32.mxu0 0.0
        %2001 = vmatmul.mubr.f32.gmra.mxu0 %v1922
        %v2002 = vpop.f32.mrf.mxu0
        %v2003 = vadd.f32 0.0, %v2002
        %v2004 = vpop.f32.mrf.mxu0
        %v2005 = vadd.f32 0.0, %v2004
        %2006 = vdwg.mxu0
        %2007 = vmatprep.subr.mxu0 0.0
        %2008 = vmatpush1.msra.mxu0 0.0
        %2009 = vmatprep.subr.mxu0 0.0
        %2010 = vmatpush1.msra.mxu0 0.0
        %2011 = vmatprep.subr.mxu0 0.0
        %2012 = vmatpush1.msra.mxu0 0.0
        %2013 = vmatprep.subr.mxu0 0.0
        %2014 = vmatpush1.msra.mxu0 0.0
        %2015 = vmatprep.subr.mxu0 0.0
        %2016 = vmatpush1.msra.mxu0 0.0
        %2017 = vmatprep.subr.mxu0 0.0
        %2018 = vmatpush1.msra.mxu0 0.0
        %2019 = vmatprep.subr.mxu0 0.0
        %2020 = vmatpush1.msra.mxu0 0.0
        %2021 = vmatprep.subr.mxu0 0.0
        %2022 = vmatpush1.msra.mxu0 0.0
        %2023 = vmatprep.subr.mxu0 0.0
        %2024 = vmatpush1.msra.mxu0 0.0
        %2025 = vmatprep.subr.mxu0 0.0
        %2026 = vmatpush1.msra.mxu0 0.0
        %2027 = vmatprep.subr.mxu0 0.0
        %2028 = vmatpush1.msra.mxu0 0.0
        %2029 = vmatprep.subr.mxu0 0.0
        %2030 = vmatpush1.msra.mxu0 0.0
        %2031 = vmatprep.subr.mxu0 0.0
        %2032 = vmatpush1.msra.mxu0 0.0
        %2033 = vmatprep.subr.mxu0 0.0
        %2034 = vmatpush1.msra.mxu0 0.0
        %2035 = vmatprep.subr.mxu0 0.0
        %2036 = vmatpush1.msra.mxu0 0.0
        %2037 = vmatprep.subr.mxu0 %v1934
        %2038 = vmatpush1.msra.mxu0 %v1931
        %2039 = vmatprep.subr.mxu0 0.0
        %2040 = vmatpush2.msra.mxu0 0.0
        %2041 = vmatprep.subr.mxu0 0.0
        %2042 = vmatpush2.msra.mxu0 0.0
        %2043 = vmatprep.subr.mxu0 0.0
        %2044 = vmatpush2.msra.mxu0 0.0
        %2045 = vmatprep.subr.mxu0 0.0
        %2046 = vmatpush2.msra.mxu0 0.0
        %2047 = vmatprep.subr.mxu0 0.0
        %2048 = vmatpush2.msra.mxu0 0.0
        %2049 = vmatprep.subr.mxu0 0.0
        %2050 = vmatpush2.msra.mxu0 0.0
        %2051 = vmatprep.subr.mxu0 0.0
        %2052 = vmatpush2.msra.mxu0 0.0
        %2053 = vmatprep.subr.mxu0 0.0
        %2054 = vmatpush2.msra.mxu0 0.0
        %2055 = vmatprep.subr.mxu0 0.0
        %2056 = vmatpush2.msra.mxu0 0.0
        %2057 = vmatprep.subr.mxu0 0.0
        %2058 = vmatpush2.msra.mxu0 0.0
        %2059 = vmatprep.subr.mxu0 0.0
        %2060 = vmatpush2.msra.mxu0 0.0
        %2061 = vmatprep.subr.mxu0 0.0
        %2062 = vmatpush2.msra.mxu0 0.0
        %2063 = vmatprep.subr.mxu0 0.0
        %2064 = vmatpush2.msra.mxu0 0.0
        %2065 = vmatprep.subr.mxu0 0.0
        %2066 = vmatpush2.msra.mxu0 0.0
        %2067 = vmatprep.subr.mxu0 0.0
        %2068 = vmatpush2.msra.mxu0 0.0
        %2069 = vmatprep.subr.mxu0 0.0
        %2070 = vmatpush2.msra.mxu0 0.0
        %2071 = vmatprep.mubr.f32.mxu0 0.0
        %2072 = vmatmul.mubr.f32.gmra.mxu0 %v1922
        %v2073 = vpop.f32.mrf.mxu0
        %v2074 = vadd.f32 0.0, %v2073
        %v2075 = vpop.f32.mrf.mxu0
        %v2076 = vadd.f32 0.0, %v2075
        %2077 = vdwg.mxu0
        %v2078 = vadd.f32 %v1875, %v2003
        %v2079 = vadd.f32 %v1876, %v2005
        %v2080 = vadd.f32 %v1877, %v2074
        %v2081 = vadd.f32 %v1878, %v2076
        %2082 = vrot.lane.b32.xlu0 %v253, 9
        %v2083 = vpop.permute.xlu0 %2082
        %2084 = vrot.lane.b32.xlu0 %v257, 9
        %v2085 = vpop.permute.xlu0 %2084
        %2086 = vrot.lane.b32.xlu0 %v254, 9
        %v2087 = vpop.permute.xlu0 %2086
        %2088 = vrot.lane.b32.xlu0 %v258, 9
        %v2089 = vpop.permute.xlu0 %2088
        %vm2090 = vcmp.lt.s32.totalorder %v270, 9
        %v2091 = vsel %vm2090, %v2087, %v2089
        %v2092 = vsel %vm2090, %v2085, %v2087
        %v2093 = vsel %vm2090, %v2083, %v2085
        %v2094 = vsel %vm2090, %v2089, %v2083
        %s2095 = scalar_lea.vmem %s1, 33
        %v2096 = vld [vmem:[%s2095] ss:$8 sm:$0xf]
        %v2098 = vlaneseq
        %v2099 = vshrl.u32 %v2098, 7
        %v2100 = vsub.s32 0, %v2099
        %v2101 = vrot.slane %v2096, %v2100
        %v2102 = vlaneseq
        %v2103 = vshrl.u32 %v2102, 7
        %v2104 = vsub.s32 1, %v2103
        %v2105 = vrot.slane %v2096, %v2104
        %v2106 = vlaneseq
        %v2107 = vshrl.u32 %v2106, 7
        %v2108 = vsub.s32 2, %v2107
        %v2109 = vrot.slane %v2096, %v2108
        %v2110 = vlaneseq
        %v2111 = vshrl.u32 %v2110, 7
        %v2112 = vsub.s32 3, %v2111
        %v2113 = vrot.slane %v2096, %v2112
        %v2118 = vmul.f32 %v2094, %v2101
        %v2119 = vmul.f32 %v2093, %v2105
        %v2120 = vmul.f32 %v2092, %v2109
        %v2121 = vmul.f32 %v2091, %v2113
        %s2122 = scalar_lea.vmem %s2, 36
        %v2123 = vld [vmem:[%s2122] sm:$0xf]
        %v2125 = vsel %vm345, %v2123, 0
        %v2128 = vsel %vm349, %v2118, 0
        %v2131 = vsel %vm349, %v2119, 0
        %v2134 = vsel %vm349, %v2120, 0
        %v2137 = vsel %vm349, %v2121, 0
        %2139 = vmatprep.subr.mxu0 0.0
        %2140 = vmatpush1.msra.mxu0 0.0
        %2141 = vmatprep.subr.mxu0 0.0
        %2142 = vmatpush1.msra.mxu0 0.0
        %2143 = vmatprep.subr.mxu0 0.0
        %2144 = vmatpush1.msra.mxu0 0.0
        %2145 = vmatprep.subr.mxu0 0.0
        %2146 = vmatpush1.msra.mxu0 0.0
        %2147 = vmatprep.subr.mxu0 0.0
        %2148 = vmatpush1.msra.mxu0 0.0
        %2149 = vmatprep.subr.mxu0 0.0
        %2150 = vmatpush1.msra.mxu0 0.0
        %2151 = vmatprep.subr.mxu0 0.0
        %2152 = vmatpush1.msra.mxu0 0.0
        %2153 = vmatprep.subr.mxu0 0.0
        %2154 = vmatpush1.msra.mxu0 0.0
        %2155 = vmatprep.subr.mxu0 0.0
        %2156 = vmatpush1.msra.mxu0 0.0
        %2157 = vmatprep.subr.mxu0 0.0
        %2158 = vmatpush1.msra.mxu0 0.0
        %2159 = vmatprep.subr.mxu0 0.0
        %2160 = vmatpush1.msra.mxu0 0.0
        %2161 = vmatprep.subr.mxu0 0.0
        %2162 = vmatpush1.msra.mxu0 0.0
        %2163 = vmatprep.subr.mxu0 0.0
        %2164 = vmatpush1.msra.mxu0 0.0
        %2165 = vmatprep.subr.mxu0 0.0
        %2166 = vmatpush1.msra.mxu0 0.0
        %2167 = vmatprep.subr.mxu0 0.0
        %2168 = vmatpush1.msra.mxu0 0.0
        %2169 = vmatprep.subr.mxu0 %v2131
        %2170 = vmatpush1.msra.mxu0 %v2128
        %2171 = vmatprep.subr.mxu0 0.0
        %2172 = vmatpush2.msra.mxu0 0.0
        %2173 = vmatprep.subr.mxu0 0.0
        %2174 = vmatpush2.msra.mxu0 0.0
        %2175 = vmatprep.subr.mxu0 0.0
        %2176 = vmatpush2.msra.mxu0 0.0
        %2177 = vmatprep.subr.mxu0 0.0
        %2178 = vmatpush2.msra.mxu0 0.0
        %2179 = vmatprep.subr.mxu0 0.0
        %2180 = vmatpush2.msra.mxu0 0.0
        %2181 = vmatprep.subr.mxu0 0.0
        %2182 = vmatpush2.msra.mxu0 0.0
        %2183 = vmatprep.subr.mxu0 0.0
        %2184 = vmatpush2.msra.mxu0 0.0
        %2185 = vmatprep.subr.mxu0 0.0
        %2186 = vmatpush2.msra.mxu0 0.0
        %2187 = vmatprep.subr.mxu0 0.0
        %2188 = vmatpush2.msra.mxu0 0.0
        %2189 = vmatprep.subr.mxu0 0.0
        %2190 = vmatpush2.msra.mxu0 0.0
        %2191 = vmatprep.subr.mxu0 0.0
        %2192 = vmatpush2.msra.mxu0 0.0
        %2193 = vmatprep.subr.mxu0 0.0
        %2194 = vmatpush2.msra.mxu0 0.0
        %2195 = vmatprep.subr.mxu0 0.0
        %2196 = vmatpush2.msra.mxu0 0.0
        %2197 = vmatprep.subr.mxu0 0.0
        %2198 = vmatpush2.msra.mxu0 0.0
        %2199 = vmatprep.subr.mxu0 0.0
        %2200 = vmatpush2.msra.mxu0 0.0
        %2201 = vmatprep.subr.mxu0 0.0
        %2202 = vmatpush2.msra.mxu0 0.0
        %2203 = vmatprep.mubr.f32.mxu0 0.0
        %2204 = vmatmul.mubr.f32.gmra.mxu0 %v2125
        %v2205 = vpop.f32.mrf.mxu0
        %v2206 = vadd.f32 0.0, %v2205
        %v2207 = vpop.f32.mrf.mxu0
        %v2208 = vadd.f32 0.0, %v2207
        %2209 = vdwg.mxu0
        %2210 = vmatprep.subr.mxu0 0.0
        %2211 = vmatpush1.msra.mxu0 0.0
        %2212 = vmatprep.subr.mxu0 0.0
        %2213 = vmatpush1.msra.mxu0 0.0
        %2214 = vmatprep.subr.mxu0 0.0
        %2215 = vmatpush1.msra.mxu0 0.0
        %2216 = vmatprep.subr.mxu0 0.0
        %2217 = vmatpush1.msra.mxu0 0.0
        %2218 = vmatprep.subr.mxu0 0.0
        %2219 = vmatpush1.msra.mxu0 0.0
        %2220 = vmatprep.subr.mxu0 0.0
        %2221 = vmatpush1.msra.mxu0 0.0
        %2222 = vmatprep.subr.mxu0 0.0
        %2223 = vmatpush1.msra.mxu0 0.0
        %2224 = vmatprep.subr.mxu0 0.0
        %2225 = vmatpush1.msra.mxu0 0.0
        %2226 = vmatprep.subr.mxu0 0.0
        %2227 = vmatpush1.msra.mxu0 0.0
        %2228 = vmatprep.subr.mxu0 0.0
        %2229 = vmatpush1.msra.mxu0 0.0
        %2230 = vmatprep.subr.mxu0 0.0
        %2231 = vmatpush1.msra.mxu0 0.0
        %2232 = vmatprep.subr.mxu0 0.0
        %2233 = vmatpush1.msra.mxu0 0.0
        %2234 = vmatprep.subr.mxu0 0.0
        %2235 = vmatpush1.msra.mxu0 0.0
        %2236 = vmatprep.subr.mxu0 0.0
        %2237 = vmatpush1.msra.mxu0 0.0
        %2238 = vmatprep.subr.mxu0 0.0
        %2239 = vmatpush1.msra.mxu0 0.0
        %2240 = vmatprep.subr.mxu0 %v2137
        %2241 = vmatpush1.msra.mxu0 %v2134
        %2242 = vmatprep.subr.mxu0 0.0
        %2243 = vmatpush2.msra.mxu0 0.0
        %2244 = vmatprep.subr.mxu0 0.0
        %2245 = vmatpush2.msra.mxu0 0.0
        %2246 = vmatprep.subr.mxu0 0.0
        %2247 = vmatpush2.msra.mxu0 0.0
        %2248 = vmatprep.subr.mxu0 0.0
        %2249 = vmatpush2.msra.mxu0 0.0
        %2250 = vmatprep.subr.mxu0 0.0
        %2251 = vmatpush2.msra.mxu0 0.0
        %2252 = vmatprep.subr.mxu0 0.0
        %2253 = vmatpush2.msra.mxu0 0.0
        %2254 = vmatprep.subr.mxu0 0.0
        %2255 = vmatpush2.msra.mxu0 0.0
        %2256 = vmatprep.subr.mxu0 0.0
        %2257 = vmatpush2.msra.mxu0 0.0
        %2258 = vmatprep.subr.mxu0 0.0
        %2259 = vmatpush2.msra.mxu0 0.0
        %2260 = vmatprep.subr.mxu0 0.0
        %2261 = vmatpush2.msra.mxu0 0.0
        %2262 = vmatprep.subr.mxu0 0.0
        %2263 = vmatpush2.msra.mxu0 0.0
        %2264 = vmatprep.subr.mxu0 0.0
        %2265 = vmatpush2.msra.mxu0 0.0
        %2266 = vmatprep.subr.mxu0 0.0
        %2267 = vmatpush2.msra.mxu0 0.0
        %2268 = vmatprep.subr.mxu0 0.0
        %2269 = vmatpush2.msra.mxu0 0.0
        %2270 = vmatprep.subr.mxu0 0.0
        %2271 = vmatpush2.msra.mxu0 0.0
        %2272 = vmatprep.subr.mxu0 0.0
        %2273 = vmatpush2.msra.mxu0 0.0
        %2274 = vmatprep.mubr.f32.mxu0 0.0
        %2275 = vmatmul.mubr.f32.gmra.mxu0 %v2125
        %v2276 = vpop.f32.mrf.mxu0
        %v2277 = vadd.f32 0.0, %v2276
        %v2278 = vpop.f32.mrf.mxu0
        %v2279 = vadd.f32 0.0, %v2278
        %2280 = vdwg.mxu0
        %v2281 = vadd.f32 %v2078, %v2206
        %v2282 = vadd.f32 %v2079, %v2208
        %v2283 = vadd.f32 %v2080, %v2277
        %v2284 = vadd.f32 %v2081, %v2279
        %2285 = vrot.lane.b32.xlu0 %v253, 8
        %v2286 = vpop.permute.xlu0 %2285
        %2287 = vrot.lane.b32.xlu0 %v257, 8
        %v2288 = vpop.permute.xlu0 %2287
        %2289 = vrot.lane.b32.xlu0 %v254, 8
        %v2290 = vpop.permute.xlu0 %2289
        %2291 = vrot.lane.b32.xlu0 %v258, 8
        %v2292 = vpop.permute.xlu0 %2291
        %vm2293 = vcmp.lt.s32.totalorder %v270, 8
        %v2294 = vsel %vm2293, %v2290, %v2292
        %v2295 = vsel %vm2293, %v2288, %v2290
        %v2296 = vsel %vm2293, %v2286, %v2288
        %v2297 = vsel %vm2293, %v2292, %v2286
        %s2298 = scalar_lea.vmem %s1, 34
        %v2299 = vld [vmem:[%s2298] ss:$8 sm:$0xf]
        %v2301 = vlaneseq
        %v2302 = vshrl.u32 %v2301, 7
        %v2303 = vsub.s32 0, %v2302
        %v2304 = vrot.slane %v2299, %v2303
        %v2305 = vlaneseq
        %v2306 = vshrl.u32 %v2305, 7
        %v2307 = vsub.s32 1, %v2306
        %v2308 = vrot.slane %v2299, %v2307
        %v2309 = vlaneseq
        %v2310 = vshrl.u32 %v2309, 7
        %v2311 = vsub.s32 2, %v2310
        %v2312 = vrot.slane %v2299, %v2311
        %v2313 = vlaneseq
        %v2314 = vshrl.u32 %v2313, 7
        %v2315 = vsub.s32 3, %v2314
        %v2316 = vrot.slane %v2299, %v2315
        %v2321 = vmul.f32 %v2297, %v2304
        %v2322 = vmul.f32 %v2296, %v2308
        %v2323 = vmul.f32 %v2295, %v2312
        %v2324 = vmul.f32 %v2294, %v2316
        %s2325 = scalar_lea.vmem %s2, 40
        %v2326 = vld [vmem:[%s2325] sm:$0xf]
        %v2328 = vsel %vm345, %v2326, 0
        %v2331 = vsel %vm349, %v2321, 0
        %v2334 = vsel %vm349, %v2322, 0
        %v2337 = vsel %vm349, %v2323, 0
        %v2340 = vsel %vm349, %v2324, 0
        %2342 = vmatprep.subr.mxu0 0.0
        %2343 = vmatpush1.msra.mxu0 0.0
        %2344 = vmatprep.subr.mxu0 0.0
        %2345 = vmatpush1.msra.mxu0 0.0
        %2346 = vmatprep.subr.mxu0 0.0
        %2347 = vmatpush1.msra.mxu0 0.0
        %2348 = vmatprep.subr.mxu0 0.0
        %2349 = vmatpush1.msra.mxu0 0.0
        %2350 = vmatprep.subr.mxu0 0.0
        %2351 = vmatpush1.msra.mxu0 0.0
        %2352 = vmatprep.subr.mxu0 0.0
        %2353 = vmatpush1.msra.mxu0 0.0
        %2354 = vmatprep.subr.mxu0 0.0
        %2355 = vmatpush1.msra.mxu0 0.0
        %2356 = vmatprep.subr.mxu0 0.0
        %2357 = vmatpush1.msra.mxu0 0.0
        %2358 = vmatprep.subr.mxu0 0.0
        %2359 = vmatpush1.msra.mxu0 0.0
        %2360 = vmatprep.subr.mxu0 0.0
        %2361 = vmatpush1.msra.mxu0 0.0
        %2362 = vmatprep.subr.mxu0 0.0
        %2363 = vmatpush1.msra.mxu0 0.0
        %2364 = vmatprep.subr.mxu0 0.0
        %2365 = vmatpush1.msra.mxu0 0.0
        %2366 = vmatprep.subr.mxu0 0.0
        %2367 = vmatpush1.msra.mxu0 0.0
        %2368 = vmatprep.subr.mxu0 0.0
        %2369 = vmatpush1.msra.mxu0 0.0
        %2370 = vmatprep.subr.mxu0 0.0
        %2371 = vmatpush1.msra.mxu0 0.0
        %2372 = vmatprep.subr.mxu0 %v2334
        %2373 = vmatpush1.msra.mxu0 %v2331
        %2374 = vmatprep.subr.mxu0 0.0
        %2375 = vmatpush2.msra.mxu0 0.0
        %2376 = vmatprep.subr.mxu0 0.0
        %2377 = vmatpush2.msra.mxu0 0.0
        %2378 = vmatprep.subr.mxu0 0.0
        %2379 = vmatpush2.msra.mxu0 0.0
        %2380 = vmatprep.subr.mxu0 0.0
        %2381 = vmatpush2.msra.mxu0 0.0
        %2382 = vmatprep.subr.mxu0 0.0
        %2383 = vmatpush2.msra.mxu0 0.0
        %2384 = vmatprep.subr.mxu0 0.0
        %2385 = vmatpush2.msra.mxu0 0.0
        %2386 = vmatprep.subr.mxu0 0.0
        %2387 = vmatpush2.msra.mxu0 0.0
        %2388 = vmatprep.subr.mxu0 0.0
        %2389 = vmatpush2.msra.mxu0 0.0
        %2390 = vmatprep.subr.mxu0 0.0
        %2391 = vmatpush2.msra.mxu0 0.0
        %2392 = vmatprep.subr.mxu0 0.0
        %2393 = vmatpush2.msra.mxu0 0.0
        %2394 = vmatprep.subr.mxu0 0.0
        %2395 = vmatpush2.msra.mxu0 0.0
        %2396 = vmatprep.subr.mxu0 0.0
        %2397 = vmatpush2.msra.mxu0 0.0
        %2398 = vmatprep.subr.mxu0 0.0
        %2399 = vmatpush2.msra.mxu0 0.0
        %2400 = vmatprep.subr.mxu0 0.0
        %2401 = vmatpush2.msra.mxu0 0.0
        %2402 = vmatprep.subr.mxu0 0.0
        %2403 = vmatpush2.msra.mxu0 0.0
        %2404 = vmatprep.subr.mxu0 0.0
        %2405 = vmatpush2.msra.mxu0 0.0
        %2406 = vmatprep.mubr.f32.mxu0 0.0
        %2407 = vmatmul.mubr.f32.gmra.mxu0 %v2328
        %v2408 = vpop.f32.mrf.mxu0
        %v2409 = vadd.f32 0.0, %v2408
        %v2410 = vpop.f32.mrf.mxu0
        %v2411 = vadd.f32 0.0, %v2410
        %2412 = vdwg.mxu0
        %2413 = vmatprep.subr.mxu0 0.0
        %2414 = vmatpush1.msra.mxu0 0.0
        %2415 = vmatprep.subr.mxu0 0.0
        %2416 = vmatpush1.msra.mxu0 0.0
        %2417 = vmatprep.subr.mxu0 0.0
        %2418 = vmatpush1.msra.mxu0 0.0
        %2419 = vmatprep.subr.mxu0 0.0
        %2420 = vmatpush1.msra.mxu0 0.0
        %2421 = vmatprep.subr.mxu0 0.0
        %2422 = vmatpush1.msra.mxu0 0.0
        %2423 = vmatprep.subr.mxu0 0.0
        %2424 = vmatpush1.msra.mxu0 0.0
        %2425 = vmatprep.subr.mxu0 0.0
        %2426 = vmatpush1.msra.mxu0 0.0
        %2427 = vmatprep.subr.mxu0 0.0
        %2428 = vmatpush1.msra.mxu0 0.0
        %2429 = vmatprep.subr.mxu0 0.0
        %2430 = vmatpush1.msra.mxu0 0.0
        %2431 = vmatprep.subr.mxu0 0.0
        %2432 = vmatpush1.msra.mxu0 0.0
        %2433 = vmatprep.subr.mxu0 0.0
        %2434 = vmatpush1.msra.mxu0 0.0
        %2435 = vmatprep.subr.mxu0 0.0
        %2436 = vmatpush1.msra.mxu0 0.0
        %2437 = vmatprep.subr.mxu0 0.0
        %2438 = vmatpush1.msra.mxu0 0.0
        %2439 = vmatprep.subr.mxu0 0.0
        %2440 = vmatpush1.msra.mxu0 0.0
        %2441 = vmatprep.subr.mxu0 0.0
        %2442 = vmatpush1.msra.mxu0 0.0
        %2443 = vmatprep.subr.mxu0 %v2340
        %2444 = vmatpush1.msra.mxu0 %v2337
        %2445 = vmatprep.subr.mxu0 0.0
        %2446 = vmatpush2.msra.mxu0 0.0
        %2447 = vmatprep.subr.mxu0 0.0
        %2448 = vmatpush2.msra.mxu0 0.0
        %2449 = vmatprep.subr.mxu0 0.0
        %2450 = vmatpush2.msra.mxu0 0.0
        %2451 = vmatprep.subr.mxu0 0.0
        %2452 = vmatpush2.msra.mxu0 0.0
        %2453 = vmatprep.subr.mxu0 0.0
        %2454 = vmatpush2.msra.mxu0 0.0
        %2455 = vmatprep.subr.mxu0 0.0
        %2456 = vmatpush2.msra.mxu0 0.0
        %2457 = vmatprep.subr.mxu0 0.0
        %2458 = vmatpush2.msra.mxu0 0.0
        %2459 = vmatprep.subr.mxu0 0.0
        %2460 = vmatpush2.msra.mxu0 0.0
        %2461 = vmatprep.subr.mxu0 0.0
        %2462 = vmatpush2.msra.mxu0 0.0
        %2463 = vmatprep.subr.mxu0 0.0
        %2464 = vmatpush2.msra.mxu0 0.0
        %2465 = vmatprep.subr.mxu0 0.0
        %2466 = vmatpush2.msra.mxu0 0.0
        %2467 = vmatprep.subr.mxu0 0.0
        %2468 = vmatpush2.msra.mxu0 0.0
        %2469 = vmatprep.subr.mxu0 0.0
        %2470 = vmatpush2.msra.mxu0 0.0
        %2471 = vmatprep.subr.mxu0 0.0
        %2472 = vmatpush2.msra.mxu0 0.0
        %2473 = vmatprep.subr.mxu0 0.0
        %2474 = vmatpush2.msra.mxu0 0.0
        %2475 = vmatprep.subr.mxu0 0.0
        %2476 = vmatpush2.msra.mxu0 0.0
        %2477 = vmatprep.mubr.f32.mxu0 0.0
        %2478 = vmatmul.mubr.f32.gmra.mxu0 %v2328
        %v2479 = vpop.f32.mrf.mxu0
        %v2480 = vadd.f32 0.0, %v2479
        %v2481 = vpop.f32.mrf.mxu0
        %v2482 = vadd.f32 0.0, %v2481
        %2483 = vdwg.mxu0
        %v2484 = vadd.f32 %v2281, %v2409
        %v2485 = vadd.f32 %v2282, %v2411
        %v2486 = vadd.f32 %v2283, %v2480
        %v2487 = vadd.f32 %v2284, %v2482
        %2488 = vrot.lane.b32.xlu0 %v253, 7
        %v2489 = vpop.permute.xlu0 %2488
        %2490 = vrot.lane.b32.xlu0 %v257, 7
        %v2491 = vpop.permute.xlu0 %2490
        %2492 = vrot.lane.b32.xlu0 %v254, 7
        %v2493 = vpop.permute.xlu0 %2492
        %2494 = vrot.lane.b32.xlu0 %v258, 7
        %v2495 = vpop.permute.xlu0 %2494
        %vm2496 = vcmp.lt.s32.totalorder %v270, 7
        %v2497 = vsel %vm2496, %v2493, %v2495
        %v2498 = vsel %vm2496, %v2491, %v2493
        %v2499 = vsel %vm2496, %v2489, %v2491
        %v2500 = vsel %vm2496, %v2495, %v2489
        %s2501 = scalar_lea.vmem %s1, 35
        %v2502 = vld [vmem:[%s2501] ss:$8 sm:$0xf]
        %v2504 = vlaneseq
        %v2505 = vshrl.u32 %v2504, 7
        %v2506 = vsub.s32 0, %v2505
        %v2507 = vrot.slane %v2502, %v2506
        %v2508 = vlaneseq
        %v2509 = vshrl.u32 %v2508, 7
        %v2510 = vsub.s32 1, %v2509
        %v2511 = vrot.slane %v2502, %v2510
        %v2512 = vlaneseq
        %v2513 = vshrl.u32 %v2512, 7
        %v2514 = vsub.s32 2, %v2513
        %v2515 = vrot.slane %v2502, %v2514
        %v2516 = vlaneseq
        %v2517 = vshrl.u32 %v2516, 7
        %v2518 = vsub.s32 3, %v2517
        %v2519 = vrot.slane %v2502, %v2518
        %v2524 = vmul.f32 %v2500, %v2507
        %v2525 = vmul.f32 %v2499, %v2511
        %v2526 = vmul.f32 %v2498, %v2515
        %v2527 = vmul.f32 %v2497, %v2519
        %s2528 = scalar_lea.vmem %s2, 44
        %v2529 = vld [vmem:[%s2528] sm:$0xf]
        %v2531 = vsel %vm345, %v2529, 0
        %v2534 = vsel %vm349, %v2524, 0
        %v2537 = vsel %vm349, %v2525, 0
        %v2540 = vsel %vm349, %v2526, 0
        %v2543 = vsel %vm349, %v2527, 0
        %2545 = vmatprep.subr.mxu0 0.0
        %2546 = vmatpush1.msra.mxu0 0.0
        %2547 = vmatprep.subr.mxu0 0.0
        %2548 = vmatpush1.msra.mxu0 0.0
        %2549 = vmatprep.subr.mxu0 0.0
        %2550 = vmatpush1.msra.mxu0 0.0
        %2551 = vmatprep.subr.mxu0 0.0
        %2552 = vmatpush1.msra.mxu0 0.0
        %2553 = vmatprep.subr.mxu0 0.0
        %2554 = vmatpush1.msra.mxu0 0.0
        %2555 = vmatprep.subr.mxu0 0.0
        %2556 = vmatpush1.msra.mxu0 0.0
        %2557 = vmatprep.subr.mxu0 0.0
        %2558 = vmatpush1.msra.mxu0 0.0
        %2559 = vmatprep.subr.mxu0 0.0
        %2560 = vmatpush1.msra.mxu0 0.0
        %2561 = vmatprep.subr.mxu0 0.0
        %2562 = vmatpush1.msra.mxu0 0.0
        %2563 = vmatprep.subr.mxu0 0.0
        %2564 = vmatpush1.msra.mxu0 0.0
        %2565 = vmatprep.subr.mxu0 0.0
        %2566 = vmatpush1.msra.mxu0 0.0
        %2567 = vmatprep.subr.mxu0 0.0
        %2568 = vmatpush1.msra.mxu0 0.0
        %2569 = vmatprep.subr.mxu0 0.0
        %2570 = vmatpush1.msra.mxu0 0.0
        %2571 = vmatprep.subr.mxu0 0.0
        %2572 = vmatpush1.msra.mxu0 0.0
        %2573 = vmatprep.subr.mxu0 0.0
        %2574 = vmatpush1.msra.mxu0 0.0
        %2575 = vmatprep.subr.mxu0 %v2537
        %2576 = vmatpush1.msra.mxu0 %v2534
        %2577 = vmatprep.subr.mxu0 0.0
        %2578 = vmatpush2.msra.mxu0 0.0
        %2579 = vmatprep.subr.mxu0 0.0
        %2580 = vmatpush2.msra.mxu0 0.0
        %2581 = vmatprep.subr.mxu0 0.0
        %2582 = vmatpush2.msra.mxu0 0.0
        %2583 = vmatprep.subr.mxu0 0.0
        %2584 = vmatpush2.msra.mxu0 0.0
        %2585 = vmatprep.subr.mxu0 0.0
        %2586 = vmatpush2.msra.mxu0 0.0
        %2587 = vmatprep.subr.mxu0 0.0
        %2588 = vmatpush2.msra.mxu0 0.0
        %2589 = vmatprep.subr.mxu0 0.0
        %2590 = vmatpush2.msra.mxu0 0.0
        %2591 = vmatprep.subr.mxu0 0.0
        %2592 = vmatpush2.msra.mxu0 0.0
        %2593 = vmatprep.subr.mxu0 0.0
        %2594 = vmatpush2.msra.mxu0 0.0
        %2595 = vmatprep.subr.mxu0 0.0
        %2596 = vmatpush2.msra.mxu0 0.0
        %2597 = vmatprep.subr.mxu0 0.0
        %2598 = vmatpush2.msra.mxu0 0.0
        %2599 = vmatprep.subr.mxu0 0.0
        %2600 = vmatpush2.msra.mxu0 0.0
        %2601 = vmatprep.subr.mxu0 0.0
        %2602 = vmatpush2.msra.mxu0 0.0
        %2603 = vmatprep.subr.mxu0 0.0
        %2604 = vmatpush2.msra.mxu0 0.0
        %2605 = vmatprep.subr.mxu0 0.0
        %2606 = vmatpush2.msra.mxu0 0.0
        %2607 = vmatprep.subr.mxu0 0.0
        %2608 = vmatpush2.msra.mxu0 0.0
        %2609 = vmatprep.mubr.f32.mxu0 0.0
        %2610 = vmatmul.mubr.f32.gmra.mxu0 %v2531
        %v2611 = vpop.f32.mrf.mxu0
        %v2612 = vadd.f32 0.0, %v2611
        %v2613 = vpop.f32.mrf.mxu0
        %v2614 = vadd.f32 0.0, %v2613
        %2615 = vdwg.mxu0
        %2616 = vmatprep.subr.mxu0 0.0
        %2617 = vmatpush1.msra.mxu0 0.0
        %2618 = vmatprep.subr.mxu0 0.0
        %2619 = vmatpush1.msra.mxu0 0.0
        %2620 = vmatprep.subr.mxu0 0.0
        %2621 = vmatpush1.msra.mxu0 0.0
        %2622 = vmatprep.subr.mxu0 0.0
        %2623 = vmatpush1.msra.mxu0 0.0
        %2624 = vmatprep.subr.mxu0 0.0
        %2625 = vmatpush1.msra.mxu0 0.0
        %2626 = vmatprep.subr.mxu0 0.0
        %2627 = vmatpush1.msra.mxu0 0.0
        %2628 = vmatprep.subr.mxu0 0.0
        %2629 = vmatpush1.msra.mxu0 0.0
        %2630 = vmatprep.subr.mxu0 0.0
        %2631 = vmatpush1.msra.mxu0 0.0
        %2632 = vmatprep.subr.mxu0 0.0
        %2633 = vmatpush1.msra.mxu0 0.0
        %2634 = vmatprep.subr.mxu0 0.0
        %2635 = vmatpush1.msra.mxu0 0.0
        %2636 = vmatprep.subr.mxu0 0.0
        %2637 = vmatpush1.msra.mxu0 0.0
        %2638 = vmatprep.subr.mxu0 0.0
        %2639 = vmatpush1.msra.mxu0 0.0
        %2640 = vmatprep.subr.mxu0 0.0
        %2641 = vmatpush1.msra.mxu0 0.0
        %2642 = vmatprep.subr.mxu0 0.0
        %2643 = vmatpush1.msra.mxu0 0.0
        %2644 = vmatprep.subr.mxu0 0.0
        %2645 = vmatpush1.msra.mxu0 0.0
        %2646 = vmatprep.subr.mxu0 %v2543
        %2647 = vmatpush1.msra.mxu0 %v2540
        %2648 = vmatprep.subr.mxu0 0.0
        %2649 = vmatpush2.msra.mxu0 0.0
        %2650 = vmatprep.subr.mxu0 0.0
        %2651 = vmatpush2.msra.mxu0 0.0
        %2652 = vmatprep.subr.mxu0 0.0
        %2653 = vmatpush2.msra.mxu0 0.0
        %2654 = vmatprep.subr.mxu0 0.0
        %2655 = vmatpush2.msra.mxu0 0.0
        %2656 = vmatprep.subr.mxu0 0.0
        %2657 = vmatpush2.msra.mxu0 0.0
        %2658 = vmatprep.subr.mxu0 0.0
        %2659 = vmatpush2.msra.mxu0 0.0
        %2660 = vmatprep.subr.mxu0 0.0
        %2661 = vmatpush2.msra.mxu0 0.0
        %2662 = vmatprep.subr.mxu0 0.0
        %2663 = vmatpush2.msra.mxu0 0.0
        %2664 = vmatprep.subr.mxu0 0.0
        %2665 = vmatpush2.msra.mxu0 0.0
        %2666 = vmatprep.subr.mxu0 0.0
        %2667 = vmatpush2.msra.mxu0 0.0
        %2668 = vmatprep.subr.mxu0 0.0
        %2669 = vmatpush2.msra.mxu0 0.0
        %2670 = vmatprep.subr.mxu0 0.0
        %2671 = vmatpush2.msra.mxu0 0.0
        %2672 = vmatprep.subr.mxu0 0.0
        %2673 = vmatpush2.msra.mxu0 0.0
        %2674 = vmatprep.subr.mxu0 0.0
        %2675 = vmatpush2.msra.mxu0 0.0
        %2676 = vmatprep.subr.mxu0 0.0
        %2677 = vmatpush2.msra.mxu0 0.0
        %2678 = vmatprep.subr.mxu0 0.0
        %2679 = vmatpush2.msra.mxu0 0.0
        %2680 = vmatprep.mubr.f32.mxu0 0.0
        %2681 = vmatmul.mubr.f32.gmra.mxu0 %v2531
        %v2682 = vpop.f32.mrf.mxu0
        %v2683 = vadd.f32 0.0, %v2682
        %v2684 = vpop.f32.mrf.mxu0
        %v2685 = vadd.f32 0.0, %v2684
        %2686 = vdwg.mxu0
        %v2687 = vadd.f32 %v2484, %v2612
        %v2688 = vadd.f32 %v2485, %v2614
        %v2689 = vadd.f32 %v2486, %v2683
        %v2690 = vadd.f32 %v2487, %v2685
        %2691 = vrot.lane.b32.xlu0 %v253, 1
        %v2692 = vpop.permute.xlu0 %2691
        %2693 = vrot.lane.b32.xlu0 %v257, 1
        %v2694 = vpop.permute.xlu0 %2693
        %2695 = vrot.lane.b32.xlu0 %v254, 1
        %v2696 = vpop.permute.xlu0 %2695
        %2697 = vrot.lane.b32.xlu0 %v258, 1
        %v2698 = vpop.permute.xlu0 %2697
        %vm2699 = vcmp.lt.s32.totalorder %v270, 1
        %v2700 = vsel %vm2699, %v2696, %v2698
        %v2701 = vsel %vm2699, %v2694, %v2696
        %v2702 = vsel %vm2699, %v2692, %v2694
        %v2703 = vsel %vm2699, %v2698, %v2692
        %s2704 = scalar_lea.vmem %s1, 36
        %v2705 = vld [vmem:[%s2704] ss:$8 sm:$0xf]
        %v2707 = vlaneseq
        %v2708 = vshrl.u32 %v2707, 7
        %v2709 = vsub.s32 0, %v2708
        %v2710 = vrot.slane %v2705, %v2709
        %v2711 = vlaneseq
        %v2712 = vshrl.u32 %v2711, 7
        %v2713 = vsub.s32 1, %v2712
        %v2714 = vrot.slane %v2705, %v2713
        %v2715 = vlaneseq
        %v2716 = vshrl.u32 %v2715, 7
        %v2717 = vsub.s32 2, %v2716
        %v2718 = vrot.slane %v2705, %v2717
        %v2719 = vlaneseq
        %v2720 = vshrl.u32 %v2719, 7
        %v2721 = vsub.s32 3, %v2720
        %v2722 = vrot.slane %v2705, %v2721
        %v2727 = vmul.f32 %v2703, %v2710
        %v2728 = vmul.f32 %v2702, %v2714
        %v2729 = vmul.f32 %v2701, %v2718
        %v2730 = vmul.f32 %v2700, %v2722
        %s2731 = scalar_lea.vmem %s2, 48
        %v2732 = vld [vmem:[%s2731] sm:$0xf]
        %v2734 = vsel %vm345, %v2732, 0
        %v2737 = vsel %vm349, %v2727, 0
        %v2740 = vsel %vm349, %v2728, 0
        %v2743 = vsel %vm349, %v2729, 0
        %v2746 = vsel %vm349, %v2730, 0
        %2748 = vmatprep.subr.mxu0 0.0
        %2749 = vmatpush1.msra.mxu0 0.0
        %2750 = vmatprep.subr.mxu0 0.0
        %2751 = vmatpush1.msra.mxu0 0.0
        %2752 = vmatprep.subr.mxu0 0.0
        %2753 = vmatpush1.msra.mxu0 0.0
        %2754 = vmatprep.subr.mxu0 0.0
        %2755 = vmatpush1.msra.mxu0 0.0
        %2756 = vmatprep.subr.mxu0 0.0
        %2757 = vmatpush1.msra.mxu0 0.0
        %2758 = vmatprep.subr.mxu0 0.0
        %2759 = vmatpush1.msra.mxu0 0.0
        %2760 = vmatprep.subr.mxu0 0.0
        %2761 = vmatpush1.msra.mxu0 0.0
        %2762 = vmatprep.subr.mxu0 0.0
        %2763 = vmatpush1.msra.mxu0 0.0
        %2764 = vmatprep.subr.mxu0 0.0
        %2765 = vmatpush1.msra.mxu0 0.0
        %2766 = vmatprep.subr.mxu0 0.0
        %2767 = vmatpush1.msra.mxu0 0.0
        %2768 = vmatprep.subr.mxu0 0.0
        %2769 = vmatpush1.msra.mxu0 0.0
        %2770 = vmatprep.subr.mxu0 0.0
        %2771 = vmatpush1.msra.mxu0 0.0
        %2772 = vmatprep.subr.mxu0 0.0
        %2773 = vmatpush1.msra.mxu0 0.0
        %2774 = vmatprep.subr.mxu0 0.0
        %2775 = vmatpush1.msra.mxu0 0.0
        %2776 = vmatprep.subr.mxu0 0.0
        %2777 = vmatpush1.msra.mxu0 0.0
        %2778 = vmatprep.subr.mxu0 %v2740
        %2779 = vmatpush1.msra.mxu0 %v2737
        %2780 = vmatprep.subr.mxu0 0.0
        %2781 = vmatpush2.msra.mxu0 0.0
        %2782 = vmatprep.subr.mxu0 0.0
        %2783 = vmatpush2.msra.mxu0 0.0
        %2784 = vmatprep.subr.mxu0 0.0
        %2785 = vmatpush2.msra.mxu0 0.0
        %2786 = vmatprep.subr.mxu0 0.0
        %2787 = vmatpush2.msra.mxu0 0.0
        %2788 = vmatprep.subr.mxu0 0.0
        %2789 = vmatpush2.msra.mxu0 0.0
        %2790 = vmatprep.subr.mxu0 0.0
        %2791 = vmatpush2.msra.mxu0 0.0
        %2792 = vmatprep.subr.mxu0 0.0
        %2793 = vmatpush2.msra.mxu0 0.0
        %2794 = vmatprep.subr.mxu0 0.0
        %2795 = vmatpush2.msra.mxu0 0.0
        %2796 = vmatprep.subr.mxu0 0.0
        %2797 = vmatpush2.msra.mxu0 0.0
        %2798 = vmatprep.subr.mxu0 0.0
        %2799 = vmatpush2.msra.mxu0 0.0
        %2800 = vmatprep.subr.mxu0 0.0
        %2801 = vmatpush2.msra.mxu0 0.0
        %2802 = vmatprep.subr.mxu0 0.0
        %2803 = vmatpush2.msra.mxu0 0.0
        %2804 = vmatprep.subr.mxu0 0.0
        %2805 = vmatpush2.msra.mxu0 0.0
        %2806 = vmatprep.subr.mxu0 0.0
        %2807 = vmatpush2.msra.mxu0 0.0
        %2808 = vmatprep.subr.mxu0 0.0
        %2809 = vmatpush2.msra.mxu0 0.0
        %2810 = vmatprep.subr.mxu0 0.0
        %2811 = vmatpush2.msra.mxu0 0.0
        %2812 = vmatprep.mubr.f32.mxu0 0.0
        %2813 = vmatmul.mubr.f32.gmra.mxu0 %v2734
        %v2814 = vpop.f32.mrf.mxu0
        %v2815 = vadd.f32 0.0, %v2814
        %v2816 = vpop.f32.mrf.mxu0
        %v2817 = vadd.f32 0.0, %v2816
        %2818 = vdwg.mxu0
        %2819 = vmatprep.subr.mxu0 0.0
        %2820 = vmatpush1.msra.mxu0 0.0
        %2821 = vmatprep.subr.mxu0 0.0
        %2822 = vmatpush1.msra.mxu0 0.0
        %2823 = vmatprep.subr.mxu0 0.0
        %2824 = vmatpush1.msra.mxu0 0.0
        %2825 = vmatprep.subr.mxu0 0.0
        %2826 = vmatpush1.msra.mxu0 0.0
        %2827 = vmatprep.subr.mxu0 0.0
        %2828 = vmatpush1.msra.mxu0 0.0
        %2829 = vmatprep.subr.mxu0 0.0
        %2830 = vmatpush1.msra.mxu0 0.0
        %2831 = vmatprep.subr.mxu0 0.0
        %2832 = vmatpush1.msra.mxu0 0.0
        %2833 = vmatprep.subr.mxu0 0.0
        %2834 = vmatpush1.msra.mxu0 0.0
        %2835 = vmatprep.subr.mxu0 0.0
        %2836 = vmatpush1.msra.mxu0 0.0
        %2837 = vmatprep.subr.mxu0 0.0
        %2838 = vmatpush1.msra.mxu0 0.0
        %2839 = vmatprep.subr.mxu0 0.0
        %2840 = vmatpush1.msra.mxu0 0.0
        %2841 = vmatprep.subr.mxu0 0.0
        %2842 = vmatpush1.msra.mxu0 0.0
        %2843 = vmatprep.subr.mxu0 0.0
        %2844 = vmatpush1.msra.mxu0 0.0
        %2845 = vmatprep.subr.mxu0 0.0
        %2846 = vmatpush1.msra.mxu0 0.0
        %2847 = vmatprep.subr.mxu0 0.0
        %2848 = vmatpush1.msra.mxu0 0.0
        %2849 = vmatprep.subr.mxu0 %v2746
        %2850 = vmatpush1.msra.mxu0 %v2743
        %2851 = vmatprep.subr.mxu0 0.0
        %2852 = vmatpush2.msra.mxu0 0.0
        %2853 = vmatprep.subr.mxu0 0.0
        %2854 = vmatpush2.msra.mxu0 0.0
        %2855 = vmatprep.subr.mxu0 0.0
        %2856 = vmatpush2.msra.mxu0 0.0
        %2857 = vmatprep.subr.mxu0 0.0
        %2858 = vmatpush2.msra.mxu0 0.0
        %2859 = vmatprep.subr.mxu0 0.0
        %2860 = vmatpush2.msra.mxu0 0.0
        %2861 = vmatprep.subr.mxu0 0.0
        %2862 = vmatpush2.msra.mxu0 0.0
        %2863 = vmatprep.subr.mxu0 0.0
        %2864 = vmatpush2.msra.mxu0 0.0
        %2865 = vmatprep.subr.mxu0 0.0
        %2866 = vmatpush2.msra.mxu0 0.0
        %2867 = vmatprep.subr.mxu0 0.0
        %2868 = vmatpush2.msra.mxu0 0.0
        %2869 = vmatprep.subr.mxu0 0.0
        %2870 = vmatpush2.msra.mxu0 0.0
        %2871 = vmatprep.subr.mxu0 0.0
        %2872 = vmatpush2.msra.mxu0 0.0
        %2873 = vmatprep.subr.mxu0 0.0
        %2874 = vmatpush2.msra.mxu0 0.0
        %2875 = vmatprep.subr.mxu0 0.0
        %2876 = vmatpush2.msra.mxu0 0.0
        %2877 = vmatprep.subr.mxu0 0.0
        %2878 = vmatpush2.msra.mxu0 0.0
        %2879 = vmatprep.subr.mxu0 0.0
        %2880 = vmatpush2.msra.mxu0 0.0
        %2881 = vmatprep.subr.mxu0 0.0
        %2882 = vmatpush2.msra.mxu0 0.0
        %2883 = vmatprep.mubr.f32.mxu0 0.0
        %2884 = vmatmul.mubr.f32.gmra.mxu0 %v2734
        %v2885 = vpop.f32.mrf.mxu0
        %v2886 = vadd.f32 0.0, %v2885
        %v2887 = vpop.f32.mrf.mxu0
        %v2888 = vadd.f32 0.0, %v2887
        %2889 = vdwg.mxu0
        %v2890 = vadd.f32 %v2687, %v2815
        %v2891 = vadd.f32 %v2688, %v2817
        %v2892 = vadd.f32 %v2689, %v2886
        %v2893 = vadd.f32 %v2690, %v2888
        %s2894 = scalar_lea.vmem %s2, 52
        %v2895 = vld [vmem:[%s2894] sm:$0xf]
        %v2897 = vsel %vm345, %v2895, 0
        %v2899 = vsel %vm349, %v253, 0
        %v2901 = vsel %vm349, %v257, 0
        %v2903 = vsel %vm349, %v254, 0
        %v2905 = vsel %vm349, %v258, 0
        %2907 = vmatprep.subr.mxu0 0.0
        %2908 = vmatpush1.msra.mxu0 0.0
        %2909 = vmatprep.subr.mxu0 0.0
        %2910 = vmatpush1.msra.mxu0 0.0
        %2911 = vmatprep.subr.mxu0 0.0
        %2912 = vmatpush1.msra.mxu0 0.0
        %2913 = vmatprep.subr.mxu0 0.0
        %2914 = vmatpush1.msra.mxu0 0.0
        %2915 = vmatprep.subr.mxu0 0.0
        %2916 = vmatpush1.msra.mxu0 0.0
        %2917 = vmatprep.subr.mxu0 0.0
        %2918 = vmatpush1.msra.mxu0 0.0
        %2919 = vmatprep.subr.mxu0 0.0
        %2920 = vmatpush1.msra.mxu0 0.0
        %2921 = vmatprep.subr.mxu0 0.0
        %2922 = vmatpush1.msra.mxu0 0.0
        %2923 = vmatprep.subr.mxu0 0.0
        %2924 = vmatpush1.msra.mxu0 0.0
        %2925 = vmatprep.subr.mxu0 0.0
        %2926 = vmatpush1.msra.mxu0 0.0
        %2927 = vmatprep.subr.mxu0 0.0
        %2928 = vmatpush1.msra.mxu0 0.0
        %2929 = vmatprep.subr.mxu0 0.0
        %2930 = vmatpush1.msra.mxu0 0.0
        %2931 = vmatprep.subr.mxu0 0.0
        %2932 = vmatpush1.msra.mxu0 0.0
        %2933 = vmatprep.subr.mxu0 0.0
        %2934 = vmatpush1.msra.mxu0 0.0
        %2935 = vmatprep.subr.mxu0 0.0
        %2936 = vmatpush1.msra.mxu0 0.0
        %2937 = vmatprep.subr.mxu0 %v2901
        %2938 = vmatpush1.msra.mxu0 %v2899
        %2939 = vmatprep.subr.mxu0 0.0
        %2940 = vmatpush2.msra.mxu0 0.0
        %2941 = vmatprep.subr.mxu0 0.0
        %2942 = vmatpush2.msra.mxu0 0.0
        %2943 = vmatprep.subr.mxu0 0.0
        %2944 = vmatpush2.msra.mxu0 0.0
        %2945 = vmatprep.subr.mxu0 0.0
        %2946 = vmatpush2.msra.mxu0 0.0
        %2947 = vmatprep.subr.mxu0 0.0
        %2948 = vmatpush2.msra.mxu0 0.0
        %2949 = vmatprep.subr.mxu0 0.0
        %2950 = vmatpush2.msra.mxu0 0.0
        %2951 = vmatprep.subr.mxu0 0.0
        %2952 = vmatpush2.msra.mxu0 0.0
        %2953 = vmatprep.subr.mxu0 0.0
        %2954 = vmatpush2.msra.mxu0 0.0
        %2955 = vmatprep.subr.mxu0 0.0
        %2956 = vmatpush2.msra.mxu0 0.0
        %2957 = vmatprep.subr.mxu0 0.0
        %2958 = vmatpush2.msra.mxu0 0.0
        %2959 = vmatprep.subr.mxu0 0.0
        %2960 = vmatpush2.msra.mxu0 0.0
        %2961 = vmatprep.subr.mxu0 0.0
        %2962 = vmatpush2.msra.mxu0 0.0
        %2963 = vmatprep.subr.mxu0 0.0
        %2964 = vmatpush2.msra.mxu0 0.0
        %2965 = vmatprep.subr.mxu0 0.0
        %2966 = vmatpush2.msra.mxu0 0.0
        %2967 = vmatprep.subr.mxu0 0.0
        %2968 = vmatpush2.msra.mxu0 0.0
        %2969 = vmatprep.subr.mxu0 0.0
        %2970 = vmatpush2.msra.mxu0 0.0
        %2971 = vmatprep.mubr.f32.mxu0 0.0
        %2972 = vmatmul.mubr.f32.gmra.mxu0 %v2897
        %v2973 = vpop.f32.mrf.mxu0
        %v2974 = vadd.f32 0.0, %v2973
        %v2975 = vpop.f32.mrf.mxu0
        %v2976 = vadd.f32 0.0, %v2975
        %2977 = vdwg.mxu0
        %2978 = vmatprep.subr.mxu0 0.0
        %2979 = vmatpush1.msra.mxu0 0.0
        %2980 = vmatprep.subr.mxu0 0.0
        %2981 = vmatpush1.msra.mxu0 0.0
        %2982 = vmatprep.subr.mxu0 0.0
        %2983 = vmatpush1.msra.mxu0 0.0
        %2984 = vmatprep.subr.mxu0 0.0
        %2985 = vmatpush1.msra.mxu0 0.0
        %2986 = vmatprep.subr.mxu0 0.0
        %2987 = vmatpush1.msra.mxu0 0.0
        %2988 = vmatprep.subr.mxu0 0.0
        %2989 = vmatpush1.msra.mxu0 0.0
        %2990 = vmatprep.subr.mxu0 0.0
        %2991 = vmatpush1.msra.mxu0 0.0
        %2992 = vmatprep.subr.mxu0 0.0
        %2993 = vmatpush1.msra.mxu0 0.0
        %2994 = vmatprep.subr.mxu0 0.0
        %2995 = vmatpush1.msra.mxu0 0.0
        %2996 = vmatprep.subr.mxu0 0.0
        %2997 = vmatpush1.msra.mxu0 0.0
        %2998 = vmatprep.subr.mxu0 0.0
        %2999 = vmatpush1.msra.mxu0 0.0
        %3000 = vmatprep.subr.mxu0 0.0
        %3001 = vmatpush1.msra.mxu0 0.0
        %3002 = vmatprep.subr.mxu0 0.0
        %3003 = vmatpush1.msra.mxu0 0.0
        %3004 = vmatprep.subr.mxu0 0.0
        %3005 = vmatpush1.msra.mxu0 0.0
        %3006 = vmatprep.subr.mxu0 0.0
        %3007 = vmatpush1.msra.mxu0 0.0
        %3008 = vmatprep.subr.mxu0 %v2905
        %3009 = vmatpush1.msra.mxu0 %v2903
        %3010 = vmatprep.subr.mxu0 0.0
        %3011 = vmatpush2.msra.mxu0 0.0
        %3012 = vmatprep.subr.mxu0 0.0
        %3013 = vmatpush2.msra.mxu0 0.0
        %3014 = vmatprep.subr.mxu0 0.0
        %3015 = vmatpush2.msra.mxu0 0.0
        %3016 = vmatprep.subr.mxu0 0.0
        %3017 = vmatpush2.msra.mxu0 0.0
        %3018 = vmatprep.subr.mxu0 0.0
        %3019 = vmatpush2.msra.mxu0 0.0
        %3020 = vmatprep.subr.mxu0 0.0
        %3021 = vmatpush2.msra.mxu0 0.0
        %3022 = vmatprep.subr.mxu0 0.0
        %3023 = vmatpush2.msra.mxu0 0.0
        %3024 = vmatprep.subr.mxu0 0.0
        %3025 = vmatpush2.msra.mxu0 0.0
        %3026 = vmatprep.subr.mxu0 0.0
        %3027 = vmatpush2.msra.mxu0 0.0
        %3028 = vmatprep.subr.mxu0 0.0
        %3029 = vmatpush2.msra.mxu0 0.0
        %3030 = vmatprep.subr.mxu0 0.0
        %3031 = vmatpush2.msra.mxu0 0.0
        %3032 = vmatprep.subr.mxu0 0.0
        %3033 = vmatpush2.msra.mxu0 0.0
        %3034 = vmatprep.subr.mxu0 0.0
        %3035 = vmatpush2.msra.mxu0 0.0
        %3036 = vmatprep.subr.mxu0 0.0
        %3037 = vmatpush2.msra.mxu0 0.0
        %3038 = vmatprep.subr.mxu0 0.0
        %3039 = vmatpush2.msra.mxu0 0.0
        %3040 = vmatprep.subr.mxu0 0.0
        %3041 = vmatpush2.msra.mxu0 0.0
        %3042 = vmatprep.mubr.f32.mxu0 0.0
        %3043 = vmatmul.mubr.f32.gmra.mxu0 %v2897
        %v3044 = vpop.f32.mrf.mxu0
        %v3045 = vadd.f32 0.0, %v3044
        %v3046 = vpop.f32.mrf.mxu0
        %v3047 = vadd.f32 0.0, %v3046
        %3048 = vdwg.mxu0
        %v3049 = vadd.f32 %v2890, %v2974
        %v3050 = vadd.f32 %v2891, %v2976
        %v3051 = vadd.f32 %v2892, %v3045
        %v3052 = vadd.f32 %v2893, %v3047
        %3053 = vrot.lane.b32.xlu0 %v253, 127
        %v3054 = vpop.permute.xlu0 %3053
        %3055 = vrot.lane.b32.xlu0 %v257, 127
        %v3056 = vpop.permute.xlu0 %3055
        %3057 = vrot.lane.b32.xlu0 %v254, 127
        %v3058 = vpop.permute.xlu0 %3057
        %3059 = vrot.lane.b32.xlu0 %v258, 127
        %v3060 = vpop.permute.xlu0 %3059
        %vm3061 = vcmp.lt.s32.totalorder %v270, 127
        %v3062 = vsel %vm3061, %v3058, %v3060
        %v3063 = vsel %vm3061, %v3056, %v3058
        %v3064 = vsel %vm3061, %v3054, %v3056
        %v3065 = vsel %vm3061, %v3060, %v3054
        %s3066 = scalar_lea.vmem %s1, 38
        %v3067 = vld [vmem:[%s3066] ss:$8 sm:$0xf]
        %v3069 = vlaneseq
        %v3070 = vshrl.u32 %v3069, 7
        %v3071 = vsub.s32 0, %v3070
        %v3072 = vrot.slane %v3067, %v3071
        %v3073 = vlaneseq
        %v3074 = vshrl.u32 %v3073, 7
        %v3075 = vsub.s32 1, %v3074
        %v3076 = vrot.slane %v3067, %v3075
        %v3077 = vlaneseq
        %v3078 = vshrl.u32 %v3077, 7
        %v3079 = vsub.s32 2, %v3078
        %v3080 = vrot.slane %v3067, %v3079
        %v3081 = vlaneseq
        %v3082 = vshrl.u32 %v3081, 7
        %v3083 = vsub.s32 3, %v3082
        %v3084 = vrot.slane %v3067, %v3083
        %v3089 = vmul.f32 %v3064, %v3072
        %v3090 = vmul.f32 %v3063, %v3076
        %v3091 = vmul.f32 %v3062, %v3080
        %v3092 = vmul.f32 %v3065, %v3084
        %s3093 = scalar_lea.vmem %s2, 56
        %v3094 = vld [vmem:[%s3093] sm:$0xf]
        %v3096 = vsel %vm345, %v3094, 0
        %v3099 = vsel %vm349, %v3089, 0
        %v3102 = vsel %vm349, %v3090, 0
        %v3105 = vsel %vm349, %v3091, 0
        %v3108 = vsel %vm349, %v3092, 0
        %3110 = vmatprep.subr.mxu0 0.0
        %3111 = vmatpush1.msra.mxu0 0.0
        %3112 = vmatprep.subr.mxu0 0.0
        %3113 = vmatpush1.msra.mxu0 0.0
        %3114 = vmatprep.subr.mxu0 0.0
        %3115 = vmatpush1.msra.mxu0 0.0
        %3116 = vmatprep.subr.mxu0 0.0
        %3117 = vmatpush1.msra.mxu0 0.0
        %3118 = vmatprep.subr.mxu0 0.0
        %3119 = vmatpush1.msra.mxu0 0.0
        %3120 = vmatprep.subr.mxu0 0.0
        %3121 = vmatpush1.msra.mxu0 0.0
        %3122 = vmatprep.subr.mxu0 0.0
        %3123 = vmatpush1.msra.mxu0 0.0
        %3124 = vmatprep.subr.mxu0 0.0
        %3125 = vmatpush1.msra.mxu0 0.0
        %3126 = vmatprep.subr.mxu0 0.0
        %3127 = vmatpush1.msra.mxu0 0.0
        %3128 = vmatprep.subr.mxu0 0.0
        %3129 = vmatpush1.msra.mxu0 0.0
        %3130 = vmatprep.subr.mxu0 0.0
        %3131 = vmatpush1.msra.mxu0 0.0
        %3132 = vmatprep.subr.mxu0 0.0
        %3133 = vmatpush1.msra.mxu0 0.0
        %3134 = vmatprep.subr.mxu0 0.0
        %3135 = vmatpush1.msra.mxu0 0.0
        %3136 = vmatprep.subr.mxu0 0.0
        %3137 = vmatpush1.msra.mxu0 0.0
        %3138 = vmatprep.subr.mxu0 0.0
        %3139 = vmatpush1.msra.mxu0 0.0
        %3140 = vmatprep.subr.mxu0 %v3102
        %3141 = vmatpush1.msra.mxu0 %v3099
        %3142 = vmatprep.subr.mxu0 0.0
        %3143 = vmatpush2.msra.mxu0 0.0
        %3144 = vmatprep.subr.mxu0 0.0
        %3145 = vmatpush2.msra.mxu0 0.0
        %3146 = vmatprep.subr.mxu0 0.0
        %3147 = vmatpush2.msra.mxu0 0.0
        %3148 = vmatprep.subr.mxu0 0.0
        %3149 = vmatpush2.msra.mxu0 0.0
        %3150 = vmatprep.subr.mxu0 0.0
        %3151 = vmatpush2.msra.mxu0 0.0
        %3152 = vmatprep.subr.mxu0 0.0
        %3153 = vmatpush2.msra.mxu0 0.0
        %3154 = vmatprep.subr.mxu0 0.0
        %3155 = vmatpush2.msra.mxu0 0.0
        %3156 = vmatprep.subr.mxu0 0.0
        %3157 = vmatpush2.msra.mxu0 0.0
        %3158 = vmatprep.subr.mxu0 0.0
        %3159 = vmatpush2.msra.mxu0 0.0
        %3160 = vmatprep.subr.mxu0 0.0
        %3161 = vmatpush2.msra.mxu0 0.0
        %3162 = vmatprep.subr.mxu0 0.0
        %3163 = vmatpush2.msra.mxu0 0.0
        %3164 = vmatprep.subr.mxu0 0.0
        %3165 = vmatpush2.msra.mxu0 0.0
        %3166 = vmatprep.subr.mxu0 0.0
        %3167 = vmatpush2.msra.mxu0 0.0
        %3168 = vmatprep.subr.mxu0 0.0
        %3169 = vmatpush2.msra.mxu0 0.0
        %3170 = vmatprep.subr.mxu0 0.0
        %3171 = vmatpush2.msra.mxu0 0.0
        %3172 = vmatprep.subr.mxu0 0.0
        %3173 = vmatpush2.msra.mxu0 0.0
        %3174 = vmatprep.mubr.f32.mxu0 0.0
        %3175 = vmatmul.mubr.f32.gmra.mxu0 %v3096
        %v3176 = vpop.f32.mrf.mxu0
        %v3177 = vadd.f32 0.0, %v3176
        %v3178 = vpop.f32.mrf.mxu0
        %v3179 = vadd.f32 0.0, %v3178
        %3180 = vdwg.mxu0
        %3181 = vmatprep.subr.mxu0 0.0
        %3182 = vmatpush1.msra.mxu0 0.0
        %3183 = vmatprep.subr.mxu0 0.0
        %3184 = vmatpush1.msra.mxu0 0.0
        %3185 = vmatprep.subr.mxu0 0.0
        %3186 = vmatpush1.msra.mxu0 0.0
        %3187 = vmatprep.subr.mxu0 0.0
        %3188 = vmatpush1.msra.mxu0 0.0
        %3189 = vmatprep.subr.mxu0 0.0
        %3190 = vmatpush1.msra.mxu0 0.0
        %3191 = vmatprep.subr.mxu0 0.0
        %3192 = vmatpush1.msra.mxu0 0.0
        %3193 = vmatprep.subr.mxu0 0.0
        %3194 = vmatpush1.msra.mxu0 0.0
        %3195 = vmatprep.subr.mxu0 0.0
        %3196 = vmatpush1.msra.mxu0 0.0
        %3197 = vmatprep.subr.mxu0 0.0
        %3198 = vmatpush1.msra.mxu0 0.0
        %3199 = vmatprep.subr.mxu0 0.0
        %3200 = vmatpush1.msra.mxu0 0.0
        %3201 = vmatprep.subr.mxu0 0.0
        %3202 = vmatpush1.msra.mxu0 0.0
        %3203 = vmatprep.subr.mxu0 0.0
        %3204 = vmatpush1.msra.mxu0 0.0
        %3205 = vmatprep.subr.mxu0 0.0
        %3206 = vmatpush1.msra.mxu0 0.0
        %3207 = vmatprep.subr.mxu0 0.0
        %3208 = vmatpush1.msra.mxu0 0.0
        %3209 = vmatprep.subr.mxu0 0.0
        %3210 = vmatpush1.msra.mxu0 0.0
        %3211 = vmatprep.subr.mxu0 %v3108
        %3212 = vmatpush1.msra.mxu0 %v3105
        %3213 = vmatprep.subr.mxu0 0.0
        %3214 = vmatpush2.msra.mxu0 0.0
        %3215 = vmatprep.subr.mxu0 0.0
        %3216 = vmatpush2.msra.mxu0 0.0
        %3217 = vmatprep.subr.mxu0 0.0
        %3218 = vmatpush2.msra.mxu0 0.0
        %3219 = vmatprep.subr.mxu0 0.0
        %3220 = vmatpush2.msra.mxu0 0.0
        %3221 = vmatprep.subr.mxu0 0.0
        %3222 = vmatpush2.msra.mxu0 0.0
        %3223 = vmatprep.subr.mxu0 0.0
        %3224 = vmatpush2.msra.mxu0 0.0
        %3225 = vmatprep.subr.mxu0 0.0
        %3226 = vmatpush2.msra.mxu0 0.0
        %3227 = vmatprep.subr.mxu0 0.0
        %3228 = vmatpush2.msra.mxu0 0.0
        %3229 = vmatprep.subr.mxu0 0.0
        %3230 = vmatpush2.msra.mxu0 0.0
        %3231 = vmatprep.subr.mxu0 0.0
        %3232 = vmatpush2.msra.mxu0 0.0
        %3233 = vmatprep.subr.mxu0 0.0
        %3234 = vmatpush2.msra.mxu0 0.0
        %3235 = vmatprep.subr.mxu0 0.0
        %3236 = vmatpush2.msra.mxu0 0.0
        %3237 = vmatprep.subr.mxu0 0.0
        %3238 = vmatpush2.msra.mxu0 0.0
        %3239 = vmatprep.subr.mxu0 0.0
        %3240 = vmatpush2.msra.mxu0 0.0
        %3241 = vmatprep.subr.mxu0 0.0
        %3242 = vmatpush2.msra.mxu0 0.0
        %3243 = vmatprep.subr.mxu0 0.0
        %3244 = vmatpush2.msra.mxu0 0.0
        %3245 = vmatprep.mubr.f32.mxu0 0.0
        %3246 = vmatmul.mubr.f32.gmra.mxu0 %v3096
        %v3247 = vpop.f32.mrf.mxu0
        %v3248 = vadd.f32 0.0, %v3247
        %v3249 = vpop.f32.mrf.mxu0
        %v3250 = vadd.f32 0.0, %v3249
        %3251 = vdwg.mxu0
        %v3252 = vadd.f32 %v3049, %v3177
        %v3253 = vadd.f32 %v3050, %v3179
        %v3254 = vadd.f32 %v3051, %v3248
        %v3255 = vadd.f32 %v3052, %v3250
        %3256 = vrot.lane.b32.xlu0 %v253, 121
        %v3257 = vpop.permute.xlu0 %3256
        %3258 = vrot.lane.b32.xlu0 %v257, 121
        %v3259 = vpop.permute.xlu0 %3258
        %3260 = vrot.lane.b32.xlu0 %v254, 121
        %v3261 = vpop.permute.xlu0 %3260
        %3262 = vrot.lane.b32.xlu0 %v258, 121
        %v3263 = vpop.permute.xlu0 %3262
        %vm3264 = vcmp.lt.s32.totalorder %v270, 121
        %v3265 = vsel %vm3264, %v3261, %v3263
        %v3266 = vsel %vm3264, %v3259, %v3261
        %v3267 = vsel %vm3264, %v3257, %v3259
        %v3268 = vsel %vm3264, %v3263, %v3257
        %s3269 = scalar_lea.vmem %s1, 39
        %v3270 = vld [vmem:[%s3269] ss:$8 sm:$0xf]
        %v3272 = vlaneseq
        %v3273 = vshrl.u32 %v3272, 7
        %v3274 = vsub.s32 0, %v3273
        %v3275 = vrot.slane %v3270, %v3274
        %v3276 = vlaneseq
        %v3277 = vshrl.u32 %v3276, 7
        %v3278 = vsub.s32 1, %v3277
        %v3279 = vrot.slane %v3270, %v3278
        %v3280 = vlaneseq
        %v3281 = vshrl.u32 %v3280, 7
        %v3282 = vsub.s32 2, %v3281
        %v3283 = vrot.slane %v3270, %v3282
        %v3284 = vlaneseq
        %v3285 = vshrl.u32 %v3284, 7
        %v3286 = vsub.s32 3, %v3285
        %v3287 = vrot.slane %v3270, %v3286
        %v3292 = vmul.f32 %v3267, %v3275
        %v3293 = vmul.f32 %v3266, %v3279
        %v3294 = vmul.f32 %v3265, %v3283
        %v3295 = vmul.f32 %v3268, %v3287
        %s3296 = scalar_lea.vmem %s2, 60
        %v3297 = vld [vmem:[%s3296] sm:$0xf]
        %v3299 = vsel %vm345, %v3297, 0
        %v3302 = vsel %vm349, %v3292, 0
        %v3305 = vsel %vm349, %v3293, 0
        %v3308 = vsel %vm349, %v3294, 0
        %v3311 = vsel %vm349, %v3295, 0
        %3313 = vmatprep.subr.mxu0 0.0
        %3314 = vmatpush1.msra.mxu0 0.0
        %3315 = vmatprep.subr.mxu0 0.0
        %3316 = vmatpush1.msra.mxu0 0.0
        %3317 = vmatprep.subr.mxu0 0.0
        %3318 = vmatpush1.msra.mxu0 0.0
        %3319 = vmatprep.subr.mxu0 0.0
        %3320 = vmatpush1.msra.mxu0 0.0
        %3321 = vmatprep.subr.mxu0 0.0
        %3322 = vmatpush1.msra.mxu0 0.0
        %3323 = vmatprep.subr.mxu0 0.0
        %3324 = vmatpush1.msra.mxu0 0.0
        %3325 = vmatprep.subr.mxu0 0.0
        %3326 = vmatpush1.msra.mxu0 0.0
        %3327 = vmatprep.subr.mxu0 0.0
        %3328 = vmatpush1.msra.mxu0 0.0
        %3329 = vmatprep.subr.mxu0 0.0
        %3330 = vmatpush1.msra.mxu0 0.0
        %3331 = vmatprep.subr.mxu0 0.0
        %3332 = vmatpush1.msra.mxu0 0.0
        %3333 = vmatprep.subr.mxu0 0.0
        %3334 = vmatpush1.msra.mxu0 0.0
        %3335 = vmatprep.subr.mxu0 0.0
        %3336 = vmatpush1.msra.mxu0 0.0
        %3337 = vmatprep.subr.mxu0 0.0
        %3338 = vmatpush1.msra.mxu0 0.0
        %3339 = vmatprep.subr.mxu0 0.0
        %3340 = vmatpush1.msra.mxu0 0.0
        %3341 = vmatprep.subr.mxu0 0.0
        %3342 = vmatpush1.msra.mxu0 0.0
        %3343 = vmatprep.subr.mxu0 %v3305
        %3344 = vmatpush1.msra.mxu0 %v3302
        %3345 = vmatprep.subr.mxu0 0.0
        %3346 = vmatpush2.msra.mxu0 0.0
        %3347 = vmatprep.subr.mxu0 0.0
        %3348 = vmatpush2.msra.mxu0 0.0
        %3349 = vmatprep.subr.mxu0 0.0
        %3350 = vmatpush2.msra.mxu0 0.0
        %3351 = vmatprep.subr.mxu0 0.0
        %3352 = vmatpush2.msra.mxu0 0.0
        %3353 = vmatprep.subr.mxu0 0.0
        %3354 = vmatpush2.msra.mxu0 0.0
        %3355 = vmatprep.subr.mxu0 0.0
        %3356 = vmatpush2.msra.mxu0 0.0
        %3357 = vmatprep.subr.mxu0 0.0
        %3358 = vmatpush2.msra.mxu0 0.0
        %3359 = vmatprep.subr.mxu0 0.0
        %3360 = vmatpush2.msra.mxu0 0.0
        %3361 = vmatprep.subr.mxu0 0.0
        %3362 = vmatpush2.msra.mxu0 0.0
        %3363 = vmatprep.subr.mxu0 0.0
        %3364 = vmatpush2.msra.mxu0 0.0
        %3365 = vmatprep.subr.mxu0 0.0
        %3366 = vmatpush2.msra.mxu0 0.0
        %3367 = vmatprep.subr.mxu0 0.0
        %3368 = vmatpush2.msra.mxu0 0.0
        %3369 = vmatprep.subr.mxu0 0.0
        %3370 = vmatpush2.msra.mxu0 0.0
        %3371 = vmatprep.subr.mxu0 0.0
        %3372 = vmatpush2.msra.mxu0 0.0
        %3373 = vmatprep.subr.mxu0 0.0
        %3374 = vmatpush2.msra.mxu0 0.0
        %3375 = vmatprep.subr.mxu0 0.0
        %3376 = vmatpush2.msra.mxu0 0.0
        %3377 = vmatprep.mubr.f32.mxu0 0.0
        %3378 = vmatmul.mubr.f32.gmra.mxu0 %v3299
        %v3379 = vpop.f32.mrf.mxu0
        %v3380 = vadd.f32 0.0, %v3379
        %v3381 = vpop.f32.mrf.mxu0
        %v3382 = vadd.f32 0.0, %v3381
        %3383 = vdwg.mxu0
        %3384 = vmatprep.subr.mxu0 0.0
        %3385 = vmatpush1.msra.mxu0 0.0
        %3386 = vmatprep.subr.mxu0 0.0
        %3387 = vmatpush1.msra.mxu0 0.0
        %3388 = vmatprep.subr.mxu0 0.0
        %3389 = vmatpush1.msra.mxu0 0.0
        %3390 = vmatprep.subr.mxu0 0.0
        %3391 = vmatpush1.msra.mxu0 0.0
        %3392 = vmatprep.subr.mxu0 0.0
        %3393 = vmatpush1.msra.mxu0 0.0
        %3394 = vmatprep.subr.mxu0 0.0
        %3395 = vmatpush1.msra.mxu0 0.0
        %3396 = vmatprep.subr.mxu0 0.0
        %3397 = vmatpush1.msra.mxu0 0.0
        %3398 = vmatprep.subr.mxu0 0.0
        %3399 = vmatpush1.msra.mxu0 0.0
        %3400 = vmatprep.subr.mxu0 0.0
        %3401 = vmatpush1.msra.mxu0 0.0
        %3402 = vmatprep.subr.mxu0 0.0
        %3403 = vmatpush1.msra.mxu0 0.0
        %3404 = vmatprep.subr.mxu0 0.0
        %3405 = vmatpush1.msra.mxu0 0.0
        %3406 = vmatprep.subr.mxu0 0.0
        %3407 = vmatpush1.msra.mxu0 0.0
        %3408 = vmatprep.subr.mxu0 0.0
        %3409 = vmatpush1.msra.mxu0 0.0
        %3410 = vmatprep.subr.mxu0 0.0
        %3411 = vmatpush1.msra.mxu0 0.0
        %3412 = vmatprep.subr.mxu0 0.0
        %3413 = vmatpush1.msra.mxu0 0.0
        %3414 = vmatprep.subr.mxu0 %v3311
        %3415 = vmatpush1.msra.mxu0 %v3308
        %3416 = vmatprep.subr.mxu0 0.0
        %3417 = vmatpush2.msra.mxu0 0.0
        %3418 = vmatprep.subr.mxu0 0.0
        %3419 = vmatpush2.msra.mxu0 0.0
        %3420 = vmatprep.subr.mxu0 0.0
        %3421 = vmatpush2.msra.mxu0 0.0
        %3422 = vmatprep.subr.mxu0 0.0
        %3423 = vmatpush2.msra.mxu0 0.0
        %3424 = vmatprep.subr.mxu0 0.0
        %3425 = vmatpush2.msra.mxu0 0.0
        %3426 = vmatprep.subr.mxu0 0.0
        %3427 = vmatpush2.msra.mxu0 0.0
        %3428 = vmatprep.subr.mxu0 0.0
        %3429 = vmatpush2.msra.mxu0 0.0
        %3430 = vmatprep.subr.mxu0 0.0
        %3431 = vmatpush2.msra.mxu0 0.0
        %3432 = vmatprep.subr.mxu0 0.0
        %3433 = vmatpush2.msra.mxu0 0.0
        %3434 = vmatprep.subr.mxu0 0.0
        %3435 = vmatpush2.msra.mxu0 0.0
        %3436 = vmatprep.subr.mxu0 0.0
        %3437 = vmatpush2.msra.mxu0 0.0
        %3438 = vmatprep.subr.mxu0 0.0
        %3439 = vmatpush2.msra.mxu0 0.0
        %3440 = vmatprep.subr.mxu0 0.0
        %3441 = vmatpush2.msra.mxu0 0.0
        %3442 = vmatprep.subr.mxu0 0.0
        %3443 = vmatpush2.msra.mxu0 0.0
        %3444 = vmatprep.subr.mxu0 0.0
        %3445 = vmatpush2.msra.mxu0 0.0
        %3446 = vmatprep.subr.mxu0 0.0
        %3447 = vmatpush2.msra.mxu0 0.0
        %3448 = vmatprep.mubr.f32.mxu0 0.0
        %3449 = vmatmul.mubr.f32.gmra.mxu0 %v3299
        %v3450 = vpop.f32.mrf.mxu0
        %v3451 = vadd.f32 0.0, %v3450
        %v3452 = vpop.f32.mrf.mxu0
        %v3453 = vadd.f32 0.0, %v3452
        %3454 = vdwg.mxu0
        %v3455 = vadd.f32 %v3252, %v3380
        %v3456 = vadd.f32 %v3253, %v3382
        %v3457 = vadd.f32 %v3254, %v3451
        %v3458 = vadd.f32 %v3255, %v3453
        %3459 = vrot.lane.b32.xlu0 %v253, 120
        %v3460 = vpop.permute.xlu0 %3459
        %3461 = vrot.lane.b32.xlu0 %v257, 120
        %v3462 = vpop.permute.xlu0 %3461
        %3463 = vrot.lane.b32.xlu0 %v254, 120
        %v3464 = vpop.permute.xlu0 %3463
        %3465 = vrot.lane.b32.xlu0 %v258, 120
        %v3466 = vpop.permute.xlu0 %3465
        %vm3467 = vcmp.lt.s32.totalorder %v270, 120
        %v3468 = vsel %vm3467, %v3464, %v3466
        %v3469 = vsel %vm3467, %v3462, %v3464
        %v3470 = vsel %vm3467, %v3460, %v3462
        %v3471 = vsel %vm3467, %v3466, %v3460
        %s3472 = scalar_lea.vmem %s1, 64
        %v3473 = vld [vmem:[%s3472] ss:$8 sm:$0xf]
        %v3475 = vlaneseq
        %v3476 = vshrl.u32 %v3475, 7
        %v3477 = vsub.s32 0, %v3476
        %v3478 = vrot.slane %v3473, %v3477
        %v3479 = vlaneseq
        %v3480 = vshrl.u32 %v3479, 7
        %v3481 = vsub.s32 1, %v3480
        %v3482 = vrot.slane %v3473, %v3481
        %v3483 = vlaneseq
        %v3484 = vshrl.u32 %v3483, 7
        %v3485 = vsub.s32 2, %v3484
        %v3486 = vrot.slane %v3473, %v3485
        %v3487 = vlaneseq
        %v3488 = vshrl.u32 %v3487, 7
        %v3489 = vsub.s32 3, %v3488
        %v3490 = vrot.slane %v3473, %v3489
        %v3495 = vmul.f32 %v3470, %v3478
        %v3496 = vmul.f32 %v3469, %v3482
        %v3497 = vmul.f32 %v3468, %v3486
        %v3498 = vmul.f32 %v3471, %v3490
        %s3499 = scalar_lea.vmem %s2, 64
        %v3500 = vld [vmem:[%s3499] sm:$0xf]
        %v3502 = vsel %vm345, %v3500, 0
        %v3505 = vsel %vm349, %v3495, 0
        %v3508 = vsel %vm349, %v3496, 0
        %v3511 = vsel %vm349, %v3497, 0
        %v3514 = vsel %vm349, %v3498, 0
        %3516 = vmatprep.subr.mxu0 0.0
        %3517 = vmatpush1.msra.mxu0 0.0
        %3518 = vmatprep.subr.mxu0 0.0
        %3519 = vmatpush1.msra.mxu0 0.0
        %3520 = vmatprep.subr.mxu0 0.0
        %3521 = vmatpush1.msra.mxu0 0.0
        %3522 = vmatprep.subr.mxu0 0.0
        %3523 = vmatpush1.msra.mxu0 0.0
        %3524 = vmatprep.subr.mxu0 0.0
        %3525 = vmatpush1.msra.mxu0 0.0
        %3526 = vmatprep.subr.mxu0 0.0
        %3527 = vmatpush1.msra.mxu0 0.0
        %3528 = vmatprep.subr.mxu0 0.0
        %3529 = vmatpush1.msra.mxu0 0.0
        %3530 = vmatprep.subr.mxu0 0.0
        %3531 = vmatpush1.msra.mxu0 0.0
        %3532 = vmatprep.subr.mxu0 0.0
        %3533 = vmatpush1.msra.mxu0 0.0
        %3534 = vmatprep.subr.mxu0 0.0
        %3535 = vmatpush1.msra.mxu0 0.0
        %3536 = vmatprep.subr.mxu0 0.0
        %3537 = vmatpush1.msra.mxu0 0.0
        %3538 = vmatprep.subr.mxu0 0.0
        %3539 = vmatpush1.msra.mxu0 0.0
        %3540 = vmatprep.subr.mxu0 0.0
        %3541 = vmatpush1.msra.mxu0 0.0
        %3542 = vmatprep.subr.mxu0 0.0
        %3543 = vmatpush1.msra.mxu0 0.0
        %3544 = vmatprep.subr.mxu0 0.0
        %3545 = vmatpush1.msra.mxu0 0.0
        %3546 = vmatprep.subr.mxu0 %v3508
        %3547 = vmatpush1.msra.mxu0 %v3505
        %3548 = vmatprep.subr.mxu0 0.0
        %3549 = vmatpush2.msra.mxu0 0.0
        %3550 = vmatprep.subr.mxu0 0.0
        %3551 = vmatpush2.msra.mxu0 0.0
        %3552 = vmatprep.subr.mxu0 0.0
        %3553 = vmatpush2.msra.mxu0 0.0
        %3554 = vmatprep.subr.mxu0 0.0
        %3555 = vmatpush2.msra.mxu0 0.0
        %3556 = vmatprep.subr.mxu0 0.0
        %3557 = vmatpush2.msra.mxu0 0.0
        %3558 = vmatprep.subr.mxu0 0.0
        %3559 = vmatpush2.msra.mxu0 0.0
        %3560 = vmatprep.subr.mxu0 0.0
        %3561 = vmatpush2.msra.mxu0 0.0
        %3562 = vmatprep.subr.mxu0 0.0
        %3563 = vmatpush2.msra.mxu0 0.0
        %3564 = vmatprep.subr.mxu0 0.0
        %3565 = vmatpush2.msra.mxu0 0.0
        %3566 = vmatprep.subr.mxu0 0.0
        %3567 = vmatpush2.msra.mxu0 0.0
        %3568 = vmatprep.subr.mxu0 0.0
        %3569 = vmatpush2.msra.mxu0 0.0
        %3570 = vmatprep.subr.mxu0 0.0
        %3571 = vmatpush2.msra.mxu0 0.0
        %3572 = vmatprep.subr.mxu0 0.0
        %3573 = vmatpush2.msra.mxu0 0.0
        %3574 = vmatprep.subr.mxu0 0.0
        %3575 = vmatpush2.msra.mxu0 0.0
        %3576 = vmatprep.subr.mxu0 0.0
        %3577 = vmatpush2.msra.mxu0 0.0
        %3578 = vmatprep.subr.mxu0 0.0
        %3579 = vmatpush2.msra.mxu0 0.0
        %3580 = vmatprep.mubr.f32.mxu0 0.0
        %3581 = vmatmul.mubr.f32.gmra.mxu0 %v3502
        %v3582 = vpop.f32.mrf.mxu0
        %v3583 = vadd.f32 0.0, %v3582
        %v3584 = vpop.f32.mrf.mxu0
        %v3585 = vadd.f32 0.0, %v3584
        %3586 = vdwg.mxu0
        %3587 = vmatprep.subr.mxu0 0.0
        %3588 = vmatpush1.msra.mxu0 0.0
        %3589 = vmatprep.subr.mxu0 0.0
        %3590 = vmatpush1.msra.mxu0 0.0
        %3591 = vmatprep.subr.mxu0 0.0
        %3592 = vmatpush1.msra.mxu0 0.0
        %3593 = vmatprep.subr.mxu0 0.0
        %3594 = vmatpush1.msra.mxu0 0.0
        %3595 = vmatprep.subr.mxu0 0.0
        %3596 = vmatpush1.msra.mxu0 0.0
        %3597 = vmatprep.subr.mxu0 0.0
        %3598 = vmatpush1.msra.mxu0 0.0
        %3599 = vmatprep.subr.mxu0 0.0
        %3600 = vmatpush1.msra.mxu0 0.0
        %3601 = vmatprep.subr.mxu0 0.0
        %3602 = vmatpush1.msra.mxu0 0.0
        %3603 = vmatprep.subr.mxu0 0.0
        %3604 = vmatpush1.msra.mxu0 0.0
        %3605 = vmatprep.subr.mxu0 0.0
        %3606 = vmatpush1.msra.mxu0 0.0
        %3607 = vmatprep.subr.mxu0 0.0
        %3608 = vmatpush1.msra.mxu0 0.0
        %3609 = vmatprep.subr.mxu0 0.0
        %3610 = vmatpush1.msra.mxu0 0.0
        %3611 = vmatprep.subr.mxu0 0.0
        %3612 = vmatpush1.msra.mxu0 0.0
        %3613 = vmatprep.subr.mxu0 0.0
        %3614 = vmatpush1.msra.mxu0 0.0
        %3615 = vmatprep.subr.mxu0 0.0
        %3616 = vmatpush1.msra.mxu0 0.0
        %3617 = vmatprep.subr.mxu0 %v3514
        %3618 = vmatpush1.msra.mxu0 %v3511
        %3619 = vmatprep.subr.mxu0 0.0
        %3620 = vmatpush2.msra.mxu0 0.0
        %3621 = vmatprep.subr.mxu0 0.0
        %3622 = vmatpush2.msra.mxu0 0.0
        %3623 = vmatprep.subr.mxu0 0.0
        %3624 = vmatpush2.msra.mxu0 0.0
        %3625 = vmatprep.subr.mxu0 0.0
        %3626 = vmatpush2.msra.mxu0 0.0
        %3627 = vmatprep.subr.mxu0 0.0
        %3628 = vmatpush2.msra.mxu0 0.0
        %3629 = vmatprep.subr.mxu0 0.0
        %3630 = vmatpush2.msra.mxu0 0.0
        %3631 = vmatprep.subr.mxu0 0.0
        %3632 = vmatpush2.msra.mxu0 0.0
        %3633 = vmatprep.subr.mxu0 0.0
        %3634 = vmatpush2.msra.mxu0 0.0
        %3635 = vmatprep.subr.mxu0 0.0
        %3636 = vmatpush2.msra.mxu0 0.0
        %3637 = vmatprep.subr.mxu0 0.0
        %3638 = vmatpush2.msra.mxu0 0.0
        %3639 = vmatprep.subr.mxu0 0.0
        %3640 = vmatpush2.msra.mxu0 0.0
        %3641 = vmatprep.subr.mxu0 0.0
        %3642 = vmatpush2.msra.mxu0 0.0
        %3643 = vmatprep.subr.mxu0 0.0
        %3644 = vmatpush2.msra.mxu0 0.0
        %3645 = vmatprep.subr.mxu0 0.0
        %3646 = vmatpush2.msra.mxu0 0.0
        %3647 = vmatprep.subr.mxu0 0.0
        %3648 = vmatpush2.msra.mxu0 0.0
        %3649 = vmatprep.subr.mxu0 0.0
        %3650 = vmatpush2.msra.mxu0 0.0
        %3651 = vmatprep.mubr.f32.mxu0 0.0
        %3652 = vmatmul.mubr.f32.gmra.mxu0 %v3502
        %v3653 = vpop.f32.mrf.mxu0
        %v3654 = vadd.f32 0.0, %v3653
        %v3655 = vpop.f32.mrf.mxu0
        %v3656 = vadd.f32 0.0, %v3655
        %3657 = vdwg.mxu0
        %v3658 = vadd.f32 %v3455, %v3583
        %v3659 = vadd.f32 %v3456, %v3585
        %v3660 = vadd.f32 %v3457, %v3654
        %v3661 = vadd.f32 %v3458, %v3656
        %3662 = vrot.lane.b32.xlu0 %v253, 119
        %v3663 = vpop.permute.xlu0 %3662
        %3664 = vrot.lane.b32.xlu0 %v257, 119
        %v3665 = vpop.permute.xlu0 %3664
        %3666 = vrot.lane.b32.xlu0 %v254, 119
        %v3667 = vpop.permute.xlu0 %3666
        %3668 = vrot.lane.b32.xlu0 %v258, 119
        %v3669 = vpop.permute.xlu0 %3668
        %vm3670 = vcmp.lt.s32.totalorder %v270, 119
        %v3671 = vsel %vm3670, %v3667, %v3669
        %v3672 = vsel %vm3670, %v3665, %v3667
        %v3673 = vsel %vm3670, %v3663, %v3665
        %v3674 = vsel %vm3670, %v3669, %v3663
        %s3675 = scalar_lea.vmem %s1, 65
        %v3676 = vld [vmem:[%s3675] ss:$8 sm:$0xf]
        %v3678 = vlaneseq
        %v3679 = vshrl.u32 %v3678, 7
        %v3680 = vsub.s32 0, %v3679
        %v3681 = vrot.slane %v3676, %v3680
        %v3682 = vlaneseq
        %v3683 = vshrl.u32 %v3682, 7
        %v3684 = vsub.s32 1, %v3683
        %v3685 = vrot.slane %v3676, %v3684
        %v3686 = vlaneseq
        %v3687 = vshrl.u32 %v3686, 7
        %v3688 = vsub.s32 2, %v3687
        %v3689 = vrot.slane %v3676, %v3688
        %v3690 = vlaneseq
        %v3691 = vshrl.u32 %v3690, 7
        %v3692 = vsub.s32 3, %v3691
        %v3693 = vrot.slane %v3676, %v3692
        %v3698 = vmul.f32 %v3673, %v3681
        %v3699 = vmul.f32 %v3672, %v3685
        %v3700 = vmul.f32 %v3671, %v3689
        %v3701 = vmul.f32 %v3674, %v3693
        %s3702 = scalar_lea.vmem %s2, 68
        %v3703 = vld [vmem:[%s3702] sm:$0xf]
        %v3705 = vsel %vm345, %v3703, 0
        %v3708 = vsel %vm349, %v3698, 0
        %v3711 = vsel %vm349, %v3699, 0
        %v3714 = vsel %vm349, %v3700, 0
        %v3717 = vsel %vm349, %v3701, 0
        %3719 = vmatprep.subr.mxu0 0.0
        %3720 = vmatpush1.msra.mxu0 0.0
        %3721 = vmatprep.subr.mxu0 0.0
        %3722 = vmatpush1.msra.mxu0 0.0
        %3723 = vmatprep.subr.mxu0 0.0
        %3724 = vmatpush1.msra.mxu0 0.0
        %3725 = vmatprep.subr.mxu0 0.0
        %3726 = vmatpush1.msra.mxu0 0.0
        %3727 = vmatprep.subr.mxu0 0.0
        %3728 = vmatpush1.msra.mxu0 0.0
        %3729 = vmatprep.subr.mxu0 0.0
        %3730 = vmatpush1.msra.mxu0 0.0
        %3731 = vmatprep.subr.mxu0 0.0
        %3732 = vmatpush1.msra.mxu0 0.0
        %3733 = vmatprep.subr.mxu0 0.0
        %3734 = vmatpush1.msra.mxu0 0.0
        %3735 = vmatprep.subr.mxu0 0.0
        %3736 = vmatpush1.msra.mxu0 0.0
        %3737 = vmatprep.subr.mxu0 0.0
        %3738 = vmatpush1.msra.mxu0 0.0
        %3739 = vmatprep.subr.mxu0 0.0
        %3740 = vmatpush1.msra.mxu0 0.0
        %3741 = vmatprep.subr.mxu0 0.0
        %3742 = vmatpush1.msra.mxu0 0.0
        %3743 = vmatprep.subr.mxu0 0.0
        %3744 = vmatpush1.msra.mxu0 0.0
        %3745 = vmatprep.subr.mxu0 0.0
        %3746 = vmatpush1.msra.mxu0 0.0
        %3747 = vmatprep.subr.mxu0 0.0
        %3748 = vmatpush1.msra.mxu0 0.0
        %3749 = vmatprep.subr.mxu0 %v3711
        %3750 = vmatpush1.msra.mxu0 %v3708
        %3751 = vmatprep.subr.mxu0 0.0
        %3752 = vmatpush2.msra.mxu0 0.0
        %3753 = vmatprep.subr.mxu0 0.0
        %3754 = vmatpush2.msra.mxu0 0.0
        %3755 = vmatprep.subr.mxu0 0.0
        %3756 = vmatpush2.msra.mxu0 0.0
        %3757 = vmatprep.subr.mxu0 0.0
        %3758 = vmatpush2.msra.mxu0 0.0
        %3759 = vmatprep.subr.mxu0 0.0
        %3760 = vmatpush2.msra.mxu0 0.0
        %3761 = vmatprep.subr.mxu0 0.0
        %3762 = vmatpush2.msra.mxu0 0.0
        %3763 = vmatprep.subr.mxu0 0.0
        %3764 = vmatpush2.msra.mxu0 0.0
        %3765 = vmatprep.subr.mxu0 0.0
        %3766 = vmatpush2.msra.mxu0 0.0
        %3767 = vmatprep.subr.mxu0 0.0
        %3768 = vmatpush2.msra.mxu0 0.0
        %3769 = vmatprep.subr.mxu0 0.0
        %3770 = vmatpush2.msra.mxu0 0.0
        %3771 = vmatprep.subr.mxu0 0.0
        %3772 = vmatpush2.msra.mxu0 0.0
        %3773 = vmatprep.subr.mxu0 0.0
        %3774 = vmatpush2.msra.mxu0 0.0
        %3775 = vmatprep.subr.mxu0 0.0
        %3776 = vmatpush2.msra.mxu0 0.0
        %3777 = vmatprep.subr.mxu0 0.0
        %3778 = vmatpush2.msra.mxu0 0.0
        %3779 = vmatprep.subr.mxu0 0.0
        %3780 = vmatpush2.msra.mxu0 0.0
        %3781 = vmatprep.subr.mxu0 0.0
        %3782 = vmatpush2.msra.mxu0 0.0
        %3783 = vmatprep.mubr.f32.mxu0 0.0
        %3784 = vmatmul.mubr.f32.gmra.mxu0 %v3705
        %v3785 = vpop.f32.mrf.mxu0
        %v3786 = vadd.f32 0.0, %v3785
        %v3787 = vpop.f32.mrf.mxu0
        %v3788 = vadd.f32 0.0, %v3787
        %3789 = vdwg.mxu0
        %3790 = vmatprep.subr.mxu0 0.0
        %3791 = vmatpush1.msra.mxu0 0.0
        %3792 = vmatprep.subr.mxu0 0.0
        %3793 = vmatpush1.msra.mxu0 0.0
        %3794 = vmatprep.subr.mxu0 0.0
        %3795 = vmatpush1.msra.mxu0 0.0
        %3796 = vmatprep.subr.mxu0 0.0
        %3797 = vmatpush1.msra.mxu0 0.0
        %3798 = vmatprep.subr.mxu0 0.0
        %3799 = vmatpush1.msra.mxu0 0.0
        %3800 = vmatprep.subr.mxu0 0.0
        %3801 = vmatpush1.msra.mxu0 0.0
        %3802 = vmatprep.subr.mxu0 0.0
        %3803 = vmatpush1.msra.mxu0 0.0
        %3804 = vmatprep.subr.mxu0 0.0
        %3805 = vmatpush1.msra.mxu0 0.0
        %3806 = vmatprep.subr.mxu0 0.0
        %3807 = vmatpush1.msra.mxu0 0.0
        %3808 = vmatprep.subr.mxu0 0.0
        %3809 = vmatpush1.msra.mxu0 0.0
        %3810 = vmatprep.subr.mxu0 0.0
        %3811 = vmatpush1.msra.mxu0 0.0
        %3812 = vmatprep.subr.mxu0 0.0
        %3813 = vmatpush1.msra.mxu0 0.0
        %3814 = vmatprep.subr.mxu0 0.0
        %3815 = vmatpush1.msra.mxu0 0.0
        %3816 = vmatprep.subr.mxu0 0.0
        %3817 = vmatpush1.msra.mxu0 0.0
        %3818 = vmatprep.subr.mxu0 0.0
        %3819 = vmatpush1.msra.mxu0 0.0
        %3820 = vmatprep.subr.mxu0 %v3717
        %3821 = vmatpush1.msra.mxu0 %v3714
        %3822 = vmatprep.subr.mxu0 0.0
        %3823 = vmatpush2.msra.mxu0 0.0
        %3824 = vmatprep.subr.mxu0 0.0
        %3825 = vmatpush2.msra.mxu0 0.0
        %3826 = vmatprep.subr.mxu0 0.0
        %3827 = vmatpush2.msra.mxu0 0.0
        %3828 = vmatprep.subr.mxu0 0.0
        %3829 = vmatpush2.msra.mxu0 0.0
        %3830 = vmatprep.subr.mxu0 0.0
        %3831 = vmatpush2.msra.mxu0 0.0
        %3832 = vmatprep.subr.mxu0 0.0
        %3833 = vmatpush2.msra.mxu0 0.0
        %3834 = vmatprep.subr.mxu0 0.0
        %3835 = vmatpush2.msra.mxu0 0.0
        %3836 = vmatprep.subr.mxu0 0.0
        %3837 = vmatpush2.msra.mxu0 0.0
        %3838 = vmatprep.subr.mxu0 0.0
        %3839 = vmatpush2.msra.mxu0 0.0
        %3840 = vmatprep.subr.mxu0 0.0
        %3841 = vmatpush2.msra.mxu0 0.0
        %3842 = vmatprep.subr.mxu0 0.0
        %3843 = vmatpush2.msra.mxu0 0.0
        %3844 = vmatprep.subr.mxu0 0.0
        %3845 = vmatpush2.msra.mxu0 0.0
        %3846 = vmatprep.subr.mxu0 0.0
        %3847 = vmatpush2.msra.mxu0 0.0
        %3848 = vmatprep.subr.mxu0 0.0
        %3849 = vmatpush2.msra.mxu0 0.0
        %3850 = vmatprep.subr.mxu0 0.0
        %3851 = vmatpush2.msra.mxu0 0.0
        %3852 = vmatprep.subr.mxu0 0.0
        %3853 = vmatpush2.msra.mxu0 0.0
        %3854 = vmatprep.mubr.f32.mxu0 0.0
        %3855 = vmatmul.mubr.f32.gmra.mxu0 %v3705
        %v3856 = vpop.f32.mrf.mxu0
        %v3857 = vadd.f32 0.0, %v3856
        %v3858 = vpop.f32.mrf.mxu0
        %v3859 = vadd.f32 0.0, %v3858
        %3860 = vdwg.mxu0
        %v3861 = vadd.f32 %v3658, %v3786
        %v3862 = vadd.f32 %v3659, %v3788
        %v3863 = vadd.f32 %v3660, %v3857
        %v3864 = vadd.f32 %v3661, %v3859
        %s3865 = scalar_lea.vmem %s1, 66
        %v3866 = vld [vmem:[%s3865] ss:$8 sm:$0xf]
        %v3868 = vlaneseq
        %v3869 = vshrl.u32 %v3868, 7
        %v3870 = vsub.s32 0, %v3869
        %v3871 = vrot.slane %v3866, %v3870
        %v3872 = vlaneseq
        %v3873 = vshrl.u32 %v3872, 7
        %v3874 = vsub.s32 1, %v3873
        %v3875 = vrot.slane %v3866, %v3874
        %v3876 = vlaneseq
        %v3877 = vshrl.u32 %v3876, 7
        %v3878 = vsub.s32 2, %v3877
        %v3879 = vrot.slane %v3866, %v3878
        %v3880 = vlaneseq
        %v3881 = vshrl.u32 %v3880, 7
        %v3882 = vsub.s32 3, %v3881
        %v3883 = vrot.slane %v3866, %v3882
        %v3888 = vmul.f32 %v274, %v3871
        %v3889 = vmul.f32 %v273, %v3875
        %v3890 = vmul.f32 %v272, %v3879
        %v3891 = vmul.f32 %v275, %v3883
        %s3892 = scalar_lea.vmem %s2, 72
        %v3893 = vld [vmem:[%s3892] sm:$0xf]
        %v3895 = vsel %vm345, %v3893, 0
        %v3898 = vsel %vm349, %v3888, 0
        %v3901 = vsel %vm349, %v3889, 0
        %v3904 = vsel %vm349, %v3890, 0
        %v3907 = vsel %vm349, %v3891, 0
        %3909 = vmatprep.subr.mxu0 0.0
        %3910 = vmatpush1.msra.mxu0 0.0
        %3911 = vmatprep.subr.mxu0 0.0
        %3912 = vmatpush1.msra.mxu0 0.0
        %3913 = vmatprep.subr.mxu0 0.0
        %3914 = vmatpush1.msra.mxu0 0.0
        %3915 = vmatprep.subr.mxu0 0.0
        %3916 = vmatpush1.msra.mxu0 0.0
        %3917 = vmatprep.subr.mxu0 0.0
        %3918 = vmatpush1.msra.mxu0 0.0
        %3919 = vmatprep.subr.mxu0 0.0
        %3920 = vmatpush1.msra.mxu0 0.0
        %3921 = vmatprep.subr.mxu0 0.0
        %3922 = vmatpush1.msra.mxu0 0.0
        %3923 = vmatprep.subr.mxu0 0.0
        %3924 = vmatpush1.msra.mxu0 0.0
        %3925 = vmatprep.subr.mxu0 0.0
        %3926 = vmatpush1.msra.mxu0 0.0
        %3927 = vmatprep.subr.mxu0 0.0
        %3928 = vmatpush1.msra.mxu0 0.0
        %3929 = vmatprep.subr.mxu0 0.0
        %3930 = vmatpush1.msra.mxu0 0.0
        %3931 = vmatprep.subr.mxu0 0.0
        %3932 = vmatpush1.msra.mxu0 0.0
        %3933 = vmatprep.subr.mxu0 0.0
        %3934 = vmatpush1.msra.mxu0 0.0
        %3935 = vmatprep.subr.mxu0 0.0
        %3936 = vmatpush1.msra.mxu0 0.0
        %3937 = vmatprep.subr.mxu0 0.0
        %3938 = vmatpush1.msra.mxu0 0.0
        %3939 = vmatprep.subr.mxu0 %v3901
        %3940 = vmatpush1.msra.mxu0 %v3898
        %3941 = vmatprep.subr.mxu0 0.0
        %3942 = vmatpush2.msra.mxu0 0.0
        %3943 = vmatprep.subr.mxu0 0.0
        %3944 = vmatpush2.msra.mxu0 0.0
        %3945 = vmatprep.subr.mxu0 0.0
        %3946 = vmatpush2.msra.mxu0 0.0
        %3947 = vmatprep.subr.mxu0 0.0
        %3948 = vmatpush2.msra.mxu0 0.0
        %3949 = vmatprep.subr.mxu0 0.0
        %3950 = vmatpush2.msra.mxu0 0.0
        %3951 = vmatprep.subr.mxu0 0.0
        %3952 = vmatpush2.msra.mxu0 0.0
        %3953 = vmatprep.subr.mxu0 0.0
        %3954 = vmatpush2.msra.mxu0 0.0
        %3955 = vmatprep.subr.mxu0 0.0
        %3956 = vmatpush2.msra.mxu0 0.0
        %3957 = vmatprep.subr.mxu0 0.0
        %3958 = vmatpush2.msra.mxu0 0.0
        %3959 = vmatprep.subr.mxu0 0.0
        %3960 = vmatpush2.msra.mxu0 0.0
        %3961 = vmatprep.subr.mxu0 0.0
        %3962 = vmatpush2.msra.mxu0 0.0
        %3963 = vmatprep.subr.mxu0 0.0
        %3964 = vmatpush2.msra.mxu0 0.0
        %3965 = vmatprep.subr.mxu0 0.0
        %3966 = vmatpush2.msra.mxu0 0.0
        %3967 = vmatprep.subr.mxu0 0.0
        %3968 = vmatpush2.msra.mxu0 0.0
        %3969 = vmatprep.subr.mxu0 0.0
        %3970 = vmatpush2.msra.mxu0 0.0
        %3971 = vmatprep.subr.mxu0 0.0
        %3972 = vmatpush2.msra.mxu0 0.0
        %3973 = vmatprep.mubr.f32.mxu0 0.0
        %3974 = vmatmul.mubr.f32.gmra.mxu0 %v3895
        %v3975 = vpop.f32.mrf.mxu0
        %v3976 = vadd.f32 0.0, %v3975
        %v3977 = vpop.f32.mrf.mxu0
        %v3978 = vadd.f32 0.0, %v3977
        %3979 = vdwg.mxu0
        %3980 = vmatprep.subr.mxu0 0.0
        %3981 = vmatpush1.msra.mxu0 0.0
        %3982 = vmatprep.subr.mxu0 0.0
        %3983 = vmatpush1.msra.mxu0 0.0
        %3984 = vmatprep.subr.mxu0 0.0
        %3985 = vmatpush1.msra.mxu0 0.0
        %3986 = vmatprep.subr.mxu0 0.0
        %3987 = vmatpush1.msra.mxu0 0.0
        %3988 = vmatprep.subr.mxu0 0.0
        %3989 = vmatpush1.msra.mxu0 0.0
        %3990 = vmatprep.subr.mxu0 0.0
        %3991 = vmatpush1.msra.mxu0 0.0
        %3992 = vmatprep.subr.mxu0 0.0
        %3993 = vmatpush1.msra.mxu0 0.0
        %3994 = vmatprep.subr.mxu0 0.0
        %3995 = vmatpush1.msra.mxu0 0.0
        %3996 = vmatprep.subr.mxu0 0.0
        %3997 = vmatpush1.msra.mxu0 0.0
        %3998 = vmatprep.subr.mxu0 0.0
        %3999 = vmatpush1.msra.mxu0 0.0
        %4000 = vmatprep.subr.mxu0 0.0
        %4001 = vmatpush1.msra.mxu0 0.0
        %4002 = vmatprep.subr.mxu0 0.0
        %4003 = vmatpush1.msra.mxu0 0.0
        %4004 = vmatprep.subr.mxu0 0.0
        %4005 = vmatpush1.msra.mxu0 0.0
        %4006 = vmatprep.subr.mxu0 0.0
        %4007 = vmatpush1.msra.mxu0 0.0
        %4008 = vmatprep.subr.mxu0 0.0
        %4009 = vmatpush1.msra.mxu0 0.0
        %4010 = vmatprep.subr.mxu0 %v3907
        %4011 = vmatpush1.msra.mxu0 %v3904
        %4012 = vmatprep.subr.mxu0 0.0
        %4013 = vmatpush2.msra.mxu0 0.0
        %4014 = vmatprep.subr.mxu0 0.0
        %4015 = vmatpush2.msra.mxu0 0.0
        %4016 = vmatprep.subr.mxu0 0.0
        %4017 = vmatpush2.msra.mxu0 0.0
        %4018 = vmatprep.subr.mxu0 0.0
        %4019 = vmatpush2.msra.mxu0 0.0
        %4020 = vmatprep.subr.mxu0 0.0
        %4021 = vmatpush2.msra.mxu0 0.0
        %4022 = vmatprep.subr.mxu0 0.0
        %4023 = vmatpush2.msra.mxu0 0.0
        %4024 = vmatprep.subr.mxu0 0.0
        %4025 = vmatpush2.msra.mxu0 0.0
        %4026 = vmatprep.subr.mxu0 0.0
        %4027 = vmatpush2.msra.mxu0 0.0
        %4028 = vmatprep.subr.mxu0 0.0
        %4029 = vmatpush2.msra.mxu0 0.0
        %4030 = vmatprep.subr.mxu0 0.0
        %4031 = vmatpush2.msra.mxu0 0.0
        %4032 = vmatprep.subr.mxu0 0.0
        %4033 = vmatpush2.msra.mxu0 0.0
        %4034 = vmatprep.subr.mxu0 0.0
        %4035 = vmatpush2.msra.mxu0 0.0
        %4036 = vmatprep.subr.mxu0 0.0
        %4037 = vmatpush2.msra.mxu0 0.0
        %4038 = vmatprep.subr.mxu0 0.0
        %4039 = vmatpush2.msra.mxu0 0.0
        %4040 = vmatprep.subr.mxu0 0.0
        %4041 = vmatpush2.msra.mxu0 0.0
        %4042 = vmatprep.subr.mxu0 0.0
        %4043 = vmatpush2.msra.mxu0 0.0
        %4044 = vmatprep.mubr.f32.mxu0 0.0
        %4045 = vmatmul.mubr.f32.gmra.mxu0 %v3895
        %v4046 = vpop.f32.mrf.mxu0
        %v4047 = vadd.f32 0.0, %v4046
        %v4048 = vpop.f32.mrf.mxu0
        %v4049 = vadd.f32 0.0, %v4048
        %4050 = vdwg.mxu0
        %v4051 = vadd.f32 %v3861, %v3976
        %v4052 = vadd.f32 %v3862, %v3978
        %v4053 = vadd.f32 %v3863, %v4047
        %v4054 = vadd.f32 %v3864, %v4049
        %s4055 = scalar_lea.vmem %s1, 67
        %v4056 = vld [vmem:[%s4055] ss:$8 sm:$0xf]
        %v4058 = vlaneseq
        %v4059 = vshrl.u32 %v4058, 7
        %v4060 = vsub.s32 0, %v4059
        %v4061 = vrot.slane %v4056, %v4060
        %v4062 = vlaneseq
        %v4063 = vshrl.u32 %v4062, 7
        %v4064 = vsub.s32 1, %v4063
        %v4065 = vrot.slane %v4056, %v4064
        %v4066 = vlaneseq
        %v4067 = vshrl.u32 %v4066, 7
        %v4068 = vsub.s32 2, %v4067
        %v4069 = vrot.slane %v4056, %v4068
        %v4070 = vlaneseq
        %v4071 = vshrl.u32 %v4070, 7
        %v4072 = vsub.s32 3, %v4071
        %v4073 = vrot.slane %v4056, %v4072
        %v4078 = vmul.f32 %v314, %v4061
        %v4079 = vmul.f32 %v313, %v4065
        %v4080 = vmul.f32 %v312, %v4069
        %v4081 = vmul.f32 %v315, %v4073
        %s4082 = scalar_lea.vmem %s2, 76
        %v4083 = vld [vmem:[%s4082] sm:$0xf]
        %v4085 = vsel %vm345, %v4083, 0
        %v4088 = vsel %vm349, %v4078, 0
        %v4091 = vsel %vm349, %v4079, 0
        %v4094 = vsel %vm349, %v4080, 0
        %v4097 = vsel %vm349, %v4081, 0
        %4099 = vmatprep.subr.mxu0 0.0
        %4100 = vmatpush1.msra.mxu0 0.0
        %4101 = vmatprep.subr.mxu0 0.0
        %4102 = vmatpush1.msra.mxu0 0.0
        %4103 = vmatprep.subr.mxu0 0.0
        %4104 = vmatpush1.msra.mxu0 0.0
        %4105 = vmatprep.subr.mxu0 0.0
        %4106 = vmatpush1.msra.mxu0 0.0
        %4107 = vmatprep.subr.mxu0 0.0
        %4108 = vmatpush1.msra.mxu0 0.0
        %4109 = vmatprep.subr.mxu0 0.0
        %4110 = vmatpush1.msra.mxu0 0.0
        %4111 = vmatprep.subr.mxu0 0.0
        %4112 = vmatpush1.msra.mxu0 0.0
        %4113 = vmatprep.subr.mxu0 0.0
        %4114 = vmatpush1.msra.mxu0 0.0
        %4115 = vmatprep.subr.mxu0 0.0
        %4116 = vmatpush1.msra.mxu0 0.0
        %4117 = vmatprep.subr.mxu0 0.0
        %4118 = vmatpush1.msra.mxu0 0.0
        %4119 = vmatprep.subr.mxu0 0.0
        %4120 = vmatpush1.msra.mxu0 0.0
        %4121 = vmatprep.subr.mxu0 0.0
        %4122 = vmatpush1.msra.mxu0 0.0
        %4123 = vmatprep.subr.mxu0 0.0
        %4124 = vmatpush1.msra.mxu0 0.0
        %4125 = vmatprep.subr.mxu0 0.0
        %4126 = vmatpush1.msra.mxu0 0.0
        %4127 = vmatprep.subr.mxu0 0.0
        %4128 = vmatpush1.msra.mxu0 0.0
        %4129 = vmatprep.subr.mxu0 %v4091
        %4130 = vmatpush1.msra.mxu0 %v4088
        %4131 = vmatprep.subr.mxu0 0.0
        %4132 = vmatpush2.msra.mxu0 0.0
        %4133 = vmatprep.subr.mxu0 0.0
        %4134 = vmatpush2.msra.mxu0 0.0
        %4135 = vmatprep.subr.mxu0 0.0
        %4136 = vmatpush2.msra.mxu0 0.0
        %4137 = vmatprep.subr.mxu0 0.0
        %4138 = vmatpush2.msra.mxu0 0.0
        %4139 = vmatprep.subr.mxu0 0.0
        %4140 = vmatpush2.msra.mxu0 0.0
        %4141 = vmatprep.subr.mxu0 0.0
        %4142 = vmatpush2.msra.mxu0 0.0
        %4143 = vmatprep.subr.mxu0 0.0
        %4144 = vmatpush2.msra.mxu0 0.0
        %4145 = vmatprep.subr.mxu0 0.0
        %4146 = vmatpush2.msra.mxu0 0.0
        %4147 = vmatprep.subr.mxu0 0.0
        %4148 = vmatpush2.msra.mxu0 0.0
        %4149 = vmatprep.subr.mxu0 0.0
        %4150 = vmatpush2.msra.mxu0 0.0
        %4151 = vmatprep.subr.mxu0 0.0
        %4152 = vmatpush2.msra.mxu0 0.0
        %4153 = vmatprep.subr.mxu0 0.0
        %4154 = vmatpush2.msra.mxu0 0.0
        %4155 = vmatprep.subr.mxu0 0.0
        %4156 = vmatpush2.msra.mxu0 0.0
        %4157 = vmatprep.subr.mxu0 0.0
        %4158 = vmatpush2.msra.mxu0 0.0
        %4159 = vmatprep.subr.mxu0 0.0
        %4160 = vmatpush2.msra.mxu0 0.0
        %4161 = vmatprep.subr.mxu0 0.0
        %4162 = vmatpush2.msra.mxu0 0.0
        %4163 = vmatprep.mubr.f32.mxu0 0.0
        %4164 = vmatmul.mubr.f32.gmra.mxu0 %v4085
        %v4165 = vpop.f32.mrf.mxu0
        %v4166 = vadd.f32 0.0, %v4165
        %v4167 = vpop.f32.mrf.mxu0
        %v4168 = vadd.f32 0.0, %v4167
        %4169 = vdwg.mxu0
        %4170 = vmatprep.subr.mxu0 0.0
        %4171 = vmatpush1.msra.mxu0 0.0
        %4172 = vmatprep.subr.mxu0 0.0
        %4173 = vmatpush1.msra.mxu0 0.0
        %4174 = vmatprep.subr.mxu0 0.0
        %4175 = vmatpush1.msra.mxu0 0.0
        %4176 = vmatprep.subr.mxu0 0.0
        %4177 = vmatpush1.msra.mxu0 0.0
        %4178 = vmatprep.subr.mxu0 0.0
        %4179 = vmatpush1.msra.mxu0 0.0
        %4180 = vmatprep.subr.mxu0 0.0
        %4181 = vmatpush1.msra.mxu0 0.0
        %4182 = vmatprep.subr.mxu0 0.0
        %4183 = vmatpush1.msra.mxu0 0.0
        %4184 = vmatprep.subr.mxu0 0.0
        %4185 = vmatpush1.msra.mxu0 0.0
        %4186 = vmatprep.subr.mxu0 0.0
        %4187 = vmatpush1.msra.mxu0 0.0
        %4188 = vmatprep.subr.mxu0 0.0
        %4189 = vmatpush1.msra.mxu0 0.0
        %4190 = vmatprep.subr.mxu0 0.0
        %4191 = vmatpush1.msra.mxu0 0.0
        %4192 = vmatprep.subr.mxu0 0.0
        %4193 = vmatpush1.msra.mxu0 0.0
        %4194 = vmatprep.subr.mxu0 0.0
        %4195 = vmatpush1.msra.mxu0 0.0
        %4196 = vmatprep.subr.mxu0 0.0
        %4197 = vmatpush1.msra.mxu0 0.0
        %4198 = vmatprep.subr.mxu0 0.0
        %4199 = vmatpush1.msra.mxu0 0.0
        %4200 = vmatprep.subr.mxu0 %v4097
        %4201 = vmatpush1.msra.mxu0 %v4094
        %4202 = vmatprep.subr.mxu0 0.0
        %4203 = vmatpush2.msra.mxu0 0.0
        %4204 = vmatprep.subr.mxu0 0.0
        %4205 = vmatpush2.msra.mxu0 0.0
        %4206 = vmatprep.subr.mxu0 0.0
        %4207 = vmatpush2.msra.mxu0 0.0
        %4208 = vmatprep.subr.mxu0 0.0
        %4209 = vmatpush2.msra.mxu0 0.0
        %4210 = vmatprep.subr.mxu0 0.0
        %4211 = vmatpush2.msra.mxu0 0.0
        %4212 = vmatprep.subr.mxu0 0.0
        %4213 = vmatpush2.msra.mxu0 0.0
        %4214 = vmatprep.subr.mxu0 0.0
        %4215 = vmatpush2.msra.mxu0 0.0
        %4216 = vmatprep.subr.mxu0 0.0
        %4217 = vmatpush2.msra.mxu0 0.0
        %4218 = vmatprep.subr.mxu0 0.0
        %4219 = vmatpush2.msra.mxu0 0.0
        %4220 = vmatprep.subr.mxu0 0.0
        %4221 = vmatpush2.msra.mxu0 0.0
        %4222 = vmatprep.subr.mxu0 0.0
        %4223 = vmatpush2.msra.mxu0 0.0
        %4224 = vmatprep.subr.mxu0 0.0
        %4225 = vmatpush2.msra.mxu0 0.0
        %4226 = vmatprep.subr.mxu0 0.0
        %4227 = vmatpush2.msra.mxu0 0.0
        %4228 = vmatprep.subr.mxu0 0.0
        %4229 = vmatpush2.msra.mxu0 0.0
        %4230 = vmatprep.subr.mxu0 0.0
        %4231 = vmatpush2.msra.mxu0 0.0
        %4232 = vmatprep.subr.mxu0 0.0
        %4233 = vmatpush2.msra.mxu0 0.0
        %4234 = vmatprep.mubr.f32.mxu0 0.0
        %4235 = vmatmul.mubr.f32.gmra.mxu0 %v4085
        %v4236 = vpop.f32.mrf.mxu0
        %v4237 = vadd.f32 0.0, %v4236
        %v4238 = vpop.f32.mrf.mxu0
        %v4239 = vadd.f32 0.0, %v4238
        %4240 = vdwg.mxu0
        %v4241 = vadd.f32 %v4051, %v4166
        %v4242 = vadd.f32 %v4052, %v4168
        %v4243 = vadd.f32 %v4053, %v4237
        %v4244 = vadd.f32 %v4054, %v4239
        %s4245 = scalar_lea.vmem %s1, 68
        %v4246 = vld [vmem:[%s4245] ss:$8 sm:$0xf]
        %v4248 = vlaneseq
        %v4249 = vshrl.u32 %v4248, 7
        %v4250 = vsub.s32 0, %v4249
        %v4251 = vrot.slane %v4246, %v4250
        %v4252 = vlaneseq
        %v4253 = vshrl.u32 %v4252, 7
        %v4254 = vsub.s32 1, %v4253
        %v4255 = vrot.slane %v4246, %v4254
        %v4256 = vlaneseq
        %v4257 = vshrl.u32 %v4256, 7
        %v4258 = vsub.s32 2, %v4257
        %v4259 = vrot.slane %v4246, %v4258
        %v4260 = vlaneseq
        %v4261 = vshrl.u32 %v4260, 7
        %v4262 = vsub.s32 3, %v4261
        %v4263 = vrot.slane %v4246, %v4262
        %v4268 = vmul.f32 %v672, %v4251
        %v4269 = vmul.f32 %v671, %v4255
        %v4270 = vmul.f32 %v670, %v4259
        %v4271 = vmul.f32 %v673, %v4263
        %s4272 = scalar_lea.vmem %s2, 80
        %v4273 = vld [vmem:[%s4272] sm:$0xf]
        %v4275 = vsel %vm345, %v4273, 0
        %v4278 = vsel %vm349, %v4268, 0
        %v4281 = vsel %vm349, %v4269, 0
        %v4284 = vsel %vm349, %v4270, 0
        %v4287 = vsel %vm349, %v4271, 0
        %4289 = vmatprep.subr.mxu0 0.0
        %4290 = vmatpush1.msra.mxu0 0.0
        %4291 = vmatprep.subr.mxu0 0.0
        %4292 = vmatpush1.msra.mxu0 0.0
        %4293 = vmatprep.subr.mxu0 0.0
        %4294 = vmatpush1.msra.mxu0 0.0
        %4295 = vmatprep.subr.mxu0 0.0
        %4296 = vmatpush1.msra.mxu0 0.0
        %4297 = vmatprep.subr.mxu0 0.0
        %4298 = vmatpush1.msra.mxu0 0.0
        %4299 = vmatprep.subr.mxu0 0.0
        %4300 = vmatpush1.msra.mxu0 0.0
        %4301 = vmatprep.subr.mxu0 0.0
        %4302 = vmatpush1.msra.mxu0 0.0
        %4303 = vmatprep.subr.mxu0 0.0
        %4304 = vmatpush1.msra.mxu0 0.0
        %4305 = vmatprep.subr.mxu0 0.0
        %4306 = vmatpush1.msra.mxu0 0.0
        %4307 = vmatprep.subr.mxu0 0.0
        %4308 = vmatpush1.msra.mxu0 0.0
        %4309 = vmatprep.subr.mxu0 0.0
        %4310 = vmatpush1.msra.mxu0 0.0
        %4311 = vmatprep.subr.mxu0 0.0
        %4312 = vmatpush1.msra.mxu0 0.0
        %4313 = vmatprep.subr.mxu0 0.0
        %4314 = vmatpush1.msra.mxu0 0.0
        %4315 = vmatprep.subr.mxu0 0.0
        %4316 = vmatpush1.msra.mxu0 0.0
        %4317 = vmatprep.subr.mxu0 0.0
        %4318 = vmatpush1.msra.mxu0 0.0
        %4319 = vmatprep.subr.mxu0 %v4281
        %4320 = vmatpush1.msra.mxu0 %v4278
        %4321 = vmatprep.subr.mxu0 0.0
        %4322 = vmatpush2.msra.mxu0 0.0
        %4323 = vmatprep.subr.mxu0 0.0
        %4324 = vmatpush2.msra.mxu0 0.0
        %4325 = vmatprep.subr.mxu0 0.0
        %4326 = vmatpush2.msra.mxu0 0.0
        %4327 = vmatprep.subr.mxu0 0.0
        %4328 = vmatpush2.msra.mxu0 0.0
        %4329 = vmatprep.subr.mxu0 0.0
        %4330 = vmatpush2.msra.mxu0 0.0
        %4331 = vmatprep.subr.mxu0 0.0
        %4332 = vmatpush2.msra.mxu0 0.0
        %4333 = vmatprep.subr.mxu0 0.0
        %4334 = vmatpush2.msra.mxu0 0.0
        %4335 = vmatprep.subr.mxu0 0.0
        %4336 = vmatpush2.msra.mxu0 0.0
        %4337 = vmatprep.subr.mxu0 0.0
        %4338 = vmatpush2.msra.mxu0 0.0
        %4339 = vmatprep.subr.mxu0 0.0
        %4340 = vmatpush2.msra.mxu0 0.0
        %4341 = vmatprep.subr.mxu0 0.0
        %4342 = vmatpush2.msra.mxu0 0.0
        %4343 = vmatprep.subr.mxu0 0.0
        %4344 = vmatpush2.msra.mxu0 0.0
        %4345 = vmatprep.subr.mxu0 0.0
        %4346 = vmatpush2.msra.mxu0 0.0
        %4347 = vmatprep.subr.mxu0 0.0
        %4348 = vmatpush2.msra.mxu0 0.0
        %4349 = vmatprep.subr.mxu0 0.0
        %4350 = vmatpush2.msra.mxu0 0.0
        %4351 = vmatprep.subr.mxu0 0.0
        %4352 = vmatpush2.msra.mxu0 0.0
        %4353 = vmatprep.mubr.f32.mxu0 0.0
        %4354 = vmatmul.mubr.f32.gmra.mxu0 %v4275
        %v4355 = vpop.f32.mrf.mxu0
        %v4356 = vadd.f32 0.0, %v4355
        %v4357 = vpop.f32.mrf.mxu0
        %v4358 = vadd.f32 0.0, %v4357
        %4359 = vdwg.mxu0
        %4360 = vmatprep.subr.mxu0 0.0
        %4361 = vmatpush1.msra.mxu0 0.0
        %4362 = vmatprep.subr.mxu0 0.0
        %4363 = vmatpush1.msra.mxu0 0.0
        %4364 = vmatprep.subr.mxu0 0.0
        %4365 = vmatpush1.msra.mxu0 0.0
        %4366 = vmatprep.subr.mxu0 0.0
        %4367 = vmatpush1.msra.mxu0 0.0
        %4368 = vmatprep.subr.mxu0 0.0
        %4369 = vmatpush1.msra.mxu0 0.0
        %4370 = vmatprep.subr.mxu0 0.0
        %4371 = vmatpush1.msra.mxu0 0.0
        %4372 = vmatprep.subr.mxu0 0.0
        %4373 = vmatpush1.msra.mxu0 0.0
        %4374 = vmatprep.subr.mxu0 0.0
        %4375 = vmatpush1.msra.mxu0 0.0
        %4376 = vmatprep.subr.mxu0 0.0
        %4377 = vmatpush1.msra.mxu0 0.0
        %4378 = vmatprep.subr.mxu0 0.0
        %4379 = vmatpush1.msra.mxu0 0.0
        %4380 = vmatprep.subr.mxu0 0.0
        %4381 = vmatpush1.msra.mxu0 0.0
        %4382 = vmatprep.subr.mxu0 0.0
        %4383 = vmatpush1.msra.mxu0 0.0
        %4384 = vmatprep.subr.mxu0 0.0
        %4385 = vmatpush1.msra.mxu0 0.0
        %4386 = vmatprep.subr.mxu0 0.0
        %4387 = vmatpush1.msra.mxu0 0.0
        %4388 = vmatprep.subr.mxu0 0.0
        %4389 = vmatpush1.msra.mxu0 0.0
        %4390 = vmatprep.subr.mxu0 %v4287
        %4391 = vmatpush1.msra.mxu0 %v4284
        %4392 = vmatprep.subr.mxu0 0.0
        %4393 = vmatpush2.msra.mxu0 0.0
        %4394 = vmatprep.subr.mxu0 0.0
        %4395 = vmatpush2.msra.mxu0 0.0
        %4396 = vmatprep.subr.mxu0 0.0
        %4397 = vmatpush2.msra.mxu0 0.0
        %4398 = vmatprep.subr.mxu0 0.0
        %4399 = vmatpush2.msra.mxu0 0.0
        %4400 = vmatprep.subr.mxu0 0.0
        %4401 = vmatpush2.msra.mxu0 0.0
        %4402 = vmatprep.subr.mxu0 0.0
        %4403 = vmatpush2.msra.mxu0 0.0
        %4404 = vmatprep.subr.mxu0 0.0
        %4405 = vmatpush2.msra.mxu0 0.0
        %4406 = vmatprep.subr.mxu0 0.0
        %4407 = vmatpush2.msra.mxu0 0.0
        %4408 = vmatprep.subr.mxu0 0.0
        %4409 = vmatpush2.msra.mxu0 0.0
        %4410 = vmatprep.subr.mxu0 0.0
        %4411 = vmatpush2.msra.mxu0 0.0
        %4412 = vmatprep.subr.mxu0 0.0
        %4413 = vmatpush2.msra.mxu0 0.0
        %4414 = vmatprep.subr.mxu0 0.0
        %4415 = vmatpush2.msra.mxu0 0.0
        %4416 = vmatprep.subr.mxu0 0.0
        %4417 = vmatpush2.msra.mxu0 0.0
        %4418 = vmatprep.subr.mxu0 0.0
        %4419 = vmatpush2.msra.mxu0 0.0
        %4420 = vmatprep.subr.mxu0 0.0
        %4421 = vmatpush2.msra.mxu0 0.0
        %4422 = vmatprep.subr.mxu0 0.0
        %4423 = vmatpush2.msra.mxu0 0.0
        %4424 = vmatprep.mubr.f32.mxu0 0.0
        %4425 = vmatmul.mubr.f32.gmra.mxu0 %v4275
        %v4426 = vpop.f32.mrf.mxu0
        %v4427 = vadd.f32 0.0, %v4426
        %v4428 = vpop.f32.mrf.mxu0
        %v4429 = vadd.f32 0.0, %v4428
        %4430 = vdwg.mxu0
        %v4431 = vadd.f32 %v4241, %v4356
        %v4432 = vadd.f32 %v4242, %v4358
        %v4433 = vadd.f32 %v4243, %v4427
        %v4434 = vadd.f32 %v4244, %v4429
        %s4435 = scalar_lea.vmem %s1, 69
        %v4436 = vld [vmem:[%s4435] ss:$8 sm:$0xf]
        %v4438 = vlaneseq
        %v4439 = vshrl.u32 %v4438, 7
        %v4440 = vsub.s32 0, %v4439
        %v4441 = vrot.slane %v4436, %v4440
        %v4442 = vlaneseq
        %v4443 = vshrl.u32 %v4442, 7
        %v4444 = vsub.s32 1, %v4443
        %v4445 = vrot.slane %v4436, %v4444
        %v4446 = vlaneseq
        %v4447 = vshrl.u32 %v4446, 7
        %v4448 = vsub.s32 2, %v4447
        %v4449 = vrot.slane %v4436, %v4448
        %v4450 = vlaneseq
        %v4451 = vshrl.u32 %v4450, 7
        %v4452 = vsub.s32 3, %v4451
        %v4453 = vrot.slane %v4436, %v4452
        %v4458 = vmul.f32 %v875, %v4441
        %v4459 = vmul.f32 %v874, %v4445
        %v4460 = vmul.f32 %v873, %v4449
        %v4461 = vmul.f32 %v876, %v4453
        %s4462 = scalar_lea.vmem %s2, 84
        %v4463 = vld [vmem:[%s4462] sm:$0xf]
        %v4465 = vsel %vm345, %v4463, 0
        %v4468 = vsel %vm349, %v4458, 0
        %v4471 = vsel %vm349, %v4459, 0
        %v4474 = vsel %vm349, %v4460, 0
        %v4477 = vsel %vm349, %v4461, 0
        %4479 = vmatprep.subr.mxu0 0.0
        %4480 = vmatpush1.msra.mxu0 0.0
        %4481 = vmatprep.subr.mxu0 0.0
        %4482 = vmatpush1.msra.mxu0 0.0
        %4483 = vmatprep.subr.mxu0 0.0
        %4484 = vmatpush1.msra.mxu0 0.0
        %4485 = vmatprep.subr.mxu0 0.0
        %4486 = vmatpush1.msra.mxu0 0.0
        %4487 = vmatprep.subr.mxu0 0.0
        %4488 = vmatpush1.msra.mxu0 0.0
        %4489 = vmatprep.subr.mxu0 0.0
        %4490 = vmatpush1.msra.mxu0 0.0
        %4491 = vmatprep.subr.mxu0 0.0
        %4492 = vmatpush1.msra.mxu0 0.0
        %4493 = vmatprep.subr.mxu0 0.0
        %4494 = vmatpush1.msra.mxu0 0.0
        %4495 = vmatprep.subr.mxu0 0.0
        %4496 = vmatpush1.msra.mxu0 0.0
        %4497 = vmatprep.subr.mxu0 0.0
        %4498 = vmatpush1.msra.mxu0 0.0
        %4499 = vmatprep.subr.mxu0 0.0
        %4500 = vmatpush1.msra.mxu0 0.0
        %4501 = vmatprep.subr.mxu0 0.0
        %4502 = vmatpush1.msra.mxu0 0.0
        %4503 = vmatprep.subr.mxu0 0.0
        %4504 = vmatpush1.msra.mxu0 0.0
        %4505 = vmatprep.subr.mxu0 0.0
        %4506 = vmatpush1.msra.mxu0 0.0
        %4507 = vmatprep.subr.mxu0 0.0
        %4508 = vmatpush1.msra.mxu0 0.0
        %4509 = vmatprep.subr.mxu0 %v4471
        %4510 = vmatpush1.msra.mxu0 %v4468
        %4511 = vmatprep.subr.mxu0 0.0
        %4512 = vmatpush2.msra.mxu0 0.0
        %4513 = vmatprep.subr.mxu0 0.0
        %4514 = vmatpush2.msra.mxu0 0.0
        %4515 = vmatprep.subr.mxu0 0.0
        %4516 = vmatpush2.msra.mxu0 0.0
        %4517 = vmatprep.subr.mxu0 0.0
        %4518 = vmatpush2.msra.mxu0 0.0
        %4519 = vmatprep.subr.mxu0 0.0
        %4520 = vmatpush2.msra.mxu0 0.0
        %4521 = vmatprep.subr.mxu0 0.0
        %4522 = vmatpush2.msra.mxu0 0.0
        %4523 = vmatprep.subr.mxu0 0.0
        %4524 = vmatpush2.msra.mxu0 0.0
        %4525 = vmatprep.subr.mxu0 0.0
        %4526 = vmatpush2.msra.mxu0 0.0
        %4527 = vmatprep.subr.mxu0 0.0
        %4528 = vmatpush2.msra.mxu0 0.0
        %4529 = vmatprep.subr.mxu0 0.0
        %4530 = vmatpush2.msra.mxu0 0.0
        %4531 = vmatprep.subr.mxu0 0.0
        %4532 = vmatpush2.msra.mxu0 0.0
        %4533 = vmatprep.subr.mxu0 0.0
        %4534 = vmatpush2.msra.mxu0 0.0
        %4535 = vmatprep.subr.mxu0 0.0
        %4536 = vmatpush2.msra.mxu0 0.0
        %4537 = vmatprep.subr.mxu0 0.0
        %4538 = vmatpush2.msra.mxu0 0.0
        %4539 = vmatprep.subr.mxu0 0.0
        %4540 = vmatpush2.msra.mxu0 0.0
        %4541 = vmatprep.subr.mxu0 0.0
        %4542 = vmatpush2.msra.mxu0 0.0
        %4543 = vmatprep.mubr.f32.mxu0 0.0
        %4544 = vmatmul.mubr.f32.gmra.mxu0 %v4465
        %v4545 = vpop.f32.mrf.mxu0
        %v4546 = vadd.f32 0.0, %v4545
        %v4547 = vpop.f32.mrf.mxu0
        %v4548 = vadd.f32 0.0, %v4547
        %4549 = vdwg.mxu0
        %4550 = vmatprep.subr.mxu0 0.0
        %4551 = vmatpush1.msra.mxu0 0.0
        %4552 = vmatprep.subr.mxu0 0.0
        %4553 = vmatpush1.msra.mxu0 0.0
        %4554 = vmatprep.subr.mxu0 0.0
        %4555 = vmatpush1.msra.mxu0 0.0
        %4556 = vmatprep.subr.mxu0 0.0
        %4557 = vmatpush1.msra.mxu0 0.0
        %4558 = vmatprep.subr.mxu0 0.0
        %4559 = vmatpush1.msra.mxu0 0.0
        %4560 = vmatprep.subr.mxu0 0.0
        %4561 = vmatpush1.msra.mxu0 0.0
        %4562 = vmatprep.subr.mxu0 0.0
        %4563 = vmatpush1.msra.mxu0 0.0
        %4564 = vmatprep.subr.mxu0 0.0
        %4565 = vmatpush1.msra.mxu0 0.0
        %4566 = vmatprep.subr.mxu0 0.0
        %4567 = vmatpush1.msra.mxu0 0.0
        %4568 = vmatprep.subr.mxu0 0.0
        %4569 = vmatpush1.msra.mxu0 0.0
        %4570 = vmatprep.subr.mxu0 0.0
        %4571 = vmatpush1.msra.mxu0 0.0
        %4572 = vmatprep.subr.mxu0 0.0
        %4573 = vmatpush1.msra.mxu0 0.0
        %4574 = vmatprep.subr.mxu0 0.0
        %4575 = vmatpush1.msra.mxu0 0.0
        %4576 = vmatprep.subr.mxu0 0.0
        %4577 = vmatpush1.msra.mxu0 0.0
        %4578 = vmatprep.subr.mxu0 0.0
        %4579 = vmatpush1.msra.mxu0 0.0
        %4580 = vmatprep.subr.mxu0 %v4477
        %4581 = vmatpush1.msra.mxu0 %v4474
        %4582 = vmatprep.subr.mxu0 0.0
        %4583 = vmatpush2.msra.mxu0 0.0
        %4584 = vmatprep.subr.mxu0 0.0
        %4585 = vmatpush2.msra.mxu0 0.0
        %4586 = vmatprep.subr.mxu0 0.0
        %4587 = vmatpush2.msra.mxu0 0.0
        %4588 = vmatprep.subr.mxu0 0.0
        %4589 = vmatpush2.msra.mxu0 0.0
        %4590 = vmatprep.subr.mxu0 0.0
        %4591 = vmatpush2.msra.mxu0 0.0
        %4592 = vmatprep.subr.mxu0 0.0
        %4593 = vmatpush2.msra.mxu0 0.0
        %4594 = vmatprep.subr.mxu0 0.0
        %4595 = vmatpush2.msra.mxu0 0.0
        %4596 = vmatprep.subr.mxu0 0.0
        %4597 = vmatpush2.msra.mxu0 0.0
        %4598 = vmatprep.subr.mxu0 0.0
        %4599 = vmatpush2.msra.mxu0 0.0
        %4600 = vmatprep.subr.mxu0 0.0
        %4601 = vmatpush2.msra.mxu0 0.0
        %4602 = vmatprep.subr.mxu0 0.0
        %4603 = vmatpush2.msra.mxu0 0.0
        %4604 = vmatprep.subr.mxu0 0.0
        %4605 = vmatpush2.msra.mxu0 0.0
        %4606 = vmatprep.subr.mxu0 0.0
        %4607 = vmatpush2.msra.mxu0 0.0
        %4608 = vmatprep.subr.mxu0 0.0
        %4609 = vmatpush2.msra.mxu0 0.0
        %4610 = vmatprep.subr.mxu0 0.0
        %4611 = vmatpush2.msra.mxu0 0.0
        %4612 = vmatprep.subr.mxu0 0.0
        %4613 = vmatpush2.msra.mxu0 0.0
        %4614 = vmatprep.mubr.f32.mxu0 0.0
        %4615 = vmatmul.mubr.f32.gmra.mxu0 %v4465
        %v4616 = vpop.f32.mrf.mxu0
        %v4617 = vadd.f32 0.0, %v4616
        %v4618 = vpop.f32.mrf.mxu0
        %v4619 = vadd.f32 0.0, %v4618
        %4620 = vdwg.mxu0
        %v4621 = vadd.f32 %v4431, %v4546
        %v4622 = vadd.f32 %v4432, %v4548
        %v4623 = vadd.f32 %v4433, %v4617
        %v4624 = vadd.f32 %v4434, %v4619
        %s4625 = scalar_lea.vmem %s1, 70
        %v4626 = vld [vmem:[%s4625] ss:$8 sm:$0xf]
        %v4628 = vlaneseq
        %v4629 = vshrl.u32 %v4628, 7
        %v4630 = vsub.s32 0, %v4629
        %v4631 = vrot.slane %v4626, %v4630
        %v4632 = vlaneseq
        %v4633 = vshrl.u32 %v4632, 7
        %v4634 = vsub.s32 1, %v4633
        %v4635 = vrot.slane %v4626, %v4634
        %v4636 = vlaneseq
        %v4637 = vshrl.u32 %v4636, 7
        %v4638 = vsub.s32 2, %v4637
        %v4639 = vrot.slane %v4626, %v4638
        %v4640 = vlaneseq
        %v4641 = vshrl.u32 %v4640, 7
        %v4642 = vsub.s32 3, %v4641
        %v4643 = vrot.slane %v4626, %v4642
        %v4648 = vmul.f32 %v1078, %v4631
        %v4649 = vmul.f32 %v1077, %v4635
        %v4650 = vmul.f32 %v1076, %v4639
        %v4651 = vmul.f32 %v1079, %v4643
        %s4652 = scalar_lea.vmem %s2, 88
        %v4653 = vld [vmem:[%s4652] sm:$0xf]
        %v4655 = vsel %vm345, %v4653, 0
        %v4658 = vsel %vm349, %v4648, 0
        %v4661 = vsel %vm349, %v4649, 0
        %v4664 = vsel %vm349, %v4650, 0
        %v4667 = vsel %vm349, %v4651, 0
        %4669 = vmatprep.subr.mxu0 0.0
        %4670 = vmatpush1.msra.mxu0 0.0
        %4671 = vmatprep.subr.mxu0 0.0
        %4672 = vmatpush1.msra.mxu0 0.0
        %4673 = vmatprep.subr.mxu0 0.0
        %4674 = vmatpush1.msra.mxu0 0.0
        %4675 = vmatprep.subr.mxu0 0.0
        %4676 = vmatpush1.msra.mxu0 0.0
        %4677 = vmatprep.subr.mxu0 0.0
        %4678 = vmatpush1.msra.mxu0 0.0
        %4679 = vmatprep.subr.mxu0 0.0
        %4680 = vmatpush1.msra.mxu0 0.0
        %4681 = vmatprep.subr.mxu0 0.0
        %4682 = vmatpush1.msra.mxu0 0.0
        %4683 = vmatprep.subr.mxu0 0.0
        %4684 = vmatpush1.msra.mxu0 0.0
        %4685 = vmatprep.subr.mxu0 0.0
        %4686 = vmatpush1.msra.mxu0 0.0
        %4687 = vmatprep.subr.mxu0 0.0
        %4688 = vmatpush1.msra.mxu0 0.0
        %4689 = vmatprep.subr.mxu0 0.0
        %4690 = vmatpush1.msra.mxu0 0.0
        %4691 = vmatprep.subr.mxu0 0.0
        %4692 = vmatpush1.msra.mxu0 0.0
        %4693 = vmatprep.subr.mxu0 0.0
        %4694 = vmatpush1.msra.mxu0 0.0
        %4695 = vmatprep.subr.mxu0 0.0
        %4696 = vmatpush1.msra.mxu0 0.0
        %4697 = vmatprep.subr.mxu0 0.0
        %4698 = vmatpush1.msra.mxu0 0.0
        %4699 = vmatprep.subr.mxu0 %v4661
        %4700 = vmatpush1.msra.mxu0 %v4658
        %4701 = vmatprep.subr.mxu0 0.0
        %4702 = vmatpush2.msra.mxu0 0.0
        %4703 = vmatprep.subr.mxu0 0.0
        %4704 = vmatpush2.msra.mxu0 0.0
        %4705 = vmatprep.subr.mxu0 0.0
        %4706 = vmatpush2.msra.mxu0 0.0
        %4707 = vmatprep.subr.mxu0 0.0
        %4708 = vmatpush2.msra.mxu0 0.0
        %4709 = vmatprep.subr.mxu0 0.0
        %4710 = vmatpush2.msra.mxu0 0.0
        %4711 = vmatprep.subr.mxu0 0.0
        %4712 = vmatpush2.msra.mxu0 0.0
        %4713 = vmatprep.subr.mxu0 0.0
        %4714 = vmatpush2.msra.mxu0 0.0
        %4715 = vmatprep.subr.mxu0 0.0
        %4716 = vmatpush2.msra.mxu0 0.0
        %4717 = vmatprep.subr.mxu0 0.0
        %4718 = vmatpush2.msra.mxu0 0.0
        %4719 = vmatprep.subr.mxu0 0.0
        %4720 = vmatpush2.msra.mxu0 0.0
        %4721 = vmatprep.subr.mxu0 0.0
        %4722 = vmatpush2.msra.mxu0 0.0
        %4723 = vmatprep.subr.mxu0 0.0
        %4724 = vmatpush2.msra.mxu0 0.0
        %4725 = vmatprep.subr.mxu0 0.0
        %4726 = vmatpush2.msra.mxu0 0.0
        %4727 = vmatprep.subr.mxu0 0.0
        %4728 = vmatpush2.msra.mxu0 0.0
        %4729 = vmatprep.subr.mxu0 0.0
        %4730 = vmatpush2.msra.mxu0 0.0
        %4731 = vmatprep.subr.mxu0 0.0
        %4732 = vmatpush2.msra.mxu0 0.0
        %4733 = vmatprep.mubr.f32.mxu0 0.0
        %4734 = vmatmul.mubr.f32.gmra.mxu0 %v4655
        %v4735 = vpop.f32.mrf.mxu0
        %v4736 = vadd.f32 0.0, %v4735
        %v4737 = vpop.f32.mrf.mxu0
        %v4738 = vadd.f32 0.0, %v4737
        %4739 = vdwg.mxu0
        %4740 = vmatprep.subr.mxu0 0.0
        %4741 = vmatpush1.msra.mxu0 0.0
        %4742 = vmatprep.subr.mxu0 0.0
        %4743 = vmatpush1.msra.mxu0 0.0
        %4744 = vmatprep.subr.mxu0 0.0
        %4745 = vmatpush1.msra.mxu0 0.0
        %4746 = vmatprep.subr.mxu0 0.0
        %4747 = vmatpush1.msra.mxu0 0.0
        %4748 = vmatprep.subr.mxu0 0.0
        %4749 = vmatpush1.msra.mxu0 0.0
        %4750 = vmatprep.subr.mxu0 0.0
        %4751 = vmatpush1.msra.mxu0 0.0
        %4752 = vmatprep.subr.mxu0 0.0
        %4753 = vmatpush1.msra.mxu0 0.0
        %4754 = vmatprep.subr.mxu0 0.0
        %4755 = vmatpush1.msra.mxu0 0.0
        %4756 = vmatprep.subr.mxu0 0.0
        %4757 = vmatpush1.msra.mxu0 0.0
        %4758 = vmatprep.subr.mxu0 0.0
        %4759 = vmatpush1.msra.mxu0 0.0
        %4760 = vmatprep.subr.mxu0 0.0
        %4761 = vmatpush1.msra.mxu0 0.0
        %4762 = vmatprep.subr.mxu0 0.0
        %4763 = vmatpush1.msra.mxu0 0.0
        %4764 = vmatprep.subr.mxu0 0.0
        %4765 = vmatpush1.msra.mxu0 0.0
        %4766 = vmatprep.subr.mxu0 0.0
        %4767 = vmatpush1.msra.mxu0 0.0
        %4768 = vmatprep.subr.mxu0 0.0
        %4769 = vmatpush1.msra.mxu0 0.0
        %4770 = vmatprep.subr.mxu0 %v4667
        %4771 = vmatpush1.msra.mxu0 %v4664
        %4772 = vmatprep.subr.mxu0 0.0
        %4773 = vmatpush2.msra.mxu0 0.0
        %4774 = vmatprep.subr.mxu0 0.0
        %4775 = vmatpush2.msra.mxu0 0.0
        %4776 = vmatprep.subr.mxu0 0.0
        %4777 = vmatpush2.msra.mxu0 0.0
        %4778 = vmatprep.subr.mxu0 0.0
        %4779 = vmatpush2.msra.mxu0 0.0
        %4780 = vmatprep.subr.mxu0 0.0
        %4781 = vmatpush2.msra.mxu0 0.0
        %4782 = vmatprep.subr.mxu0 0.0
        %4783 = vmatpush2.msra.mxu0 0.0
        %4784 = vmatprep.subr.mxu0 0.0
        %4785 = vmatpush2.msra.mxu0 0.0
        %4786 = vmatprep.subr.mxu0 0.0
        %4787 = vmatpush2.msra.mxu0 0.0
        %4788 = vmatprep.subr.mxu0 0.0
        %4789 = vmatpush2.msra.mxu0 0.0
        %4790 = vmatprep.subr.mxu0 0.0
        %4791 = vmatpush2.msra.mxu0 0.0
        %4792 = vmatprep.subr.mxu0 0.0
        %4793 = vmatpush2.msra.mxu0 0.0
        %4794 = vmatprep.subr.mxu0 0.0
        %4795 = vmatpush2.msra.mxu0 0.0
        %4796 = vmatprep.subr.mxu0 0.0
        %4797 = vmatpush2.msra.mxu0 0.0
        %4798 = vmatprep.subr.mxu0 0.0
        %4799 = vmatpush2.msra.mxu0 0.0
        %4800 = vmatprep.subr.mxu0 0.0
        %4801 = vmatpush2.msra.mxu0 0.0
        %4802 = vmatprep.subr.mxu0 0.0
        %4803 = vmatpush2.msra.mxu0 0.0
        %4804 = vmatprep.mubr.f32.mxu0 0.0
        %4805 = vmatmul.mubr.f32.gmra.mxu0 %v4655
        %v4806 = vpop.f32.mrf.mxu0
        %v4807 = vadd.f32 0.0, %v4806
        %v4808 = vpop.f32.mrf.mxu0
        %v4809 = vadd.f32 0.0, %v4808
        %4810 = vdwg.mxu0
        %v4811 = vadd.f32 %v4621, %v4736
        %v4812 = vadd.f32 %v4622, %v4738
        %v4813 = vadd.f32 %v4623, %v4807
        %v4814 = vadd.f32 %v4624, %v4809
        %s4815 = scalar_lea.vmem %s1, 71
        %v4816 = vld [vmem:[%s4815] ss:$8 sm:$0xf]
        %v4818 = vlaneseq
        %v4819 = vshrl.u32 %v4818, 7
        %v4820 = vsub.s32 0, %v4819
        %v4821 = vrot.slane %v4816, %v4820
        %v4822 = vlaneseq
        %v4823 = vshrl.u32 %v4822, 7
        %v4824 = vsub.s32 1, %v4823
        %v4825 = vrot.slane %v4816, %v4824
        %v4826 = vlaneseq
        %v4827 = vshrl.u32 %v4826, 7
        %v4828 = vsub.s32 2, %v4827
        %v4829 = vrot.slane %v4816, %v4828
        %v4830 = vlaneseq
        %v4831 = vshrl.u32 %v4830, 7
        %v4832 = vsub.s32 3, %v4831
        %v4833 = vrot.slane %v4816, %v4832
        %v4838 = vmul.f32 %v1281, %v4821
        %v4839 = vmul.f32 %v1280, %v4825
        %v4840 = vmul.f32 %v1279, %v4829
        %v4841 = vmul.f32 %v1282, %v4833
        %s4842 = scalar_lea.vmem %s2, 92
        %v4843 = vld [vmem:[%s4842] sm:$0xf]
        %v4845 = vsel %vm345, %v4843, 0
        %v4848 = vsel %vm349, %v4838, 0
        %v4851 = vsel %vm349, %v4839, 0
        %v4854 = vsel %vm349, %v4840, 0
        %v4857 = vsel %vm349, %v4841, 0
        %4859 = vmatprep.subr.mxu0 0.0
        %4860 = vmatpush1.msra.mxu0 0.0
        %4861 = vmatprep.subr.mxu0 0.0
        %4862 = vmatpush1.msra.mxu0 0.0
        %4863 = vmatprep.subr.mxu0 0.0
        %4864 = vmatpush1.msra.mxu0 0.0
        %4865 = vmatprep.subr.mxu0 0.0
        %4866 = vmatpush1.msra.mxu0 0.0
        %4867 = vmatprep.subr.mxu0 0.0
        %4868 = vmatpush1.msra.mxu0 0.0
        %4869 = vmatprep.subr.mxu0 0.0
        %4870 = vmatpush1.msra.mxu0 0.0
        %4871 = vmatprep.subr.mxu0 0.0
        %4872 = vmatpush1.msra.mxu0 0.0
        %4873 = vmatprep.subr.mxu0 0.0
        %4874 = vmatpush1.msra.mxu0 0.0
        %4875 = vmatprep.subr.mxu0 0.0
        %4876 = vmatpush1.msra.mxu0 0.0
        %4877 = vmatprep.subr.mxu0 0.0
        %4878 = vmatpush1.msra.mxu0 0.0
        %4879 = vmatprep.subr.mxu0 0.0
        %4880 = vmatpush1.msra.mxu0 0.0
        %4881 = vmatprep.subr.mxu0 0.0
        %4882 = vmatpush1.msra.mxu0 0.0
        %4883 = vmatprep.subr.mxu0 0.0
        %4884 = vmatpush1.msra.mxu0 0.0
        %4885 = vmatprep.subr.mxu0 0.0
        %4886 = vmatpush1.msra.mxu0 0.0
        %4887 = vmatprep.subr.mxu0 0.0
        %4888 = vmatpush1.msra.mxu0 0.0
        %4889 = vmatprep.subr.mxu0 %v4851
        %4890 = vmatpush1.msra.mxu0 %v4848
        %4891 = vmatprep.subr.mxu0 0.0
        %4892 = vmatpush2.msra.mxu0 0.0
        %4893 = vmatprep.subr.mxu0 0.0
        %4894 = vmatpush2.msra.mxu0 0.0
        %4895 = vmatprep.subr.mxu0 0.0
        %4896 = vmatpush2.msra.mxu0 0.0
        %4897 = vmatprep.subr.mxu0 0.0
        %4898 = vmatpush2.msra.mxu0 0.0
        %4899 = vmatprep.subr.mxu0 0.0
        %4900 = vmatpush2.msra.mxu0 0.0
        %4901 = vmatprep.subr.mxu0 0.0
        %4902 = vmatpush2.msra.mxu0 0.0
        %4903 = vmatprep.subr.mxu0 0.0
        %4904 = vmatpush2.msra.mxu0 0.0
        %4905 = vmatprep.subr.mxu0 0.0
        %4906 = vmatpush2.msra.mxu0 0.0
        %4907 = vmatprep.subr.mxu0 0.0
        %4908 = vmatpush2.msra.mxu0 0.0
        %4909 = vmatprep.subr.mxu0 0.0
        %4910 = vmatpush2.msra.mxu0 0.0
        %4911 = vmatprep.subr.mxu0 0.0
        %4912 = vmatpush2.msra.mxu0 0.0
        %4913 = vmatprep.subr.mxu0 0.0
        %4914 = vmatpush2.msra.mxu0 0.0
        %4915 = vmatprep.subr.mxu0 0.0
        %4916 = vmatpush2.msra.mxu0 0.0
        %4917 = vmatprep.subr.mxu0 0.0
        %4918 = vmatpush2.msra.mxu0 0.0
        %4919 = vmatprep.subr.mxu0 0.0
        %4920 = vmatpush2.msra.mxu0 0.0
        %4921 = vmatprep.subr.mxu0 0.0
        %4922 = vmatpush2.msra.mxu0 0.0
        %4923 = vmatprep.mubr.f32.mxu0 0.0
        %4924 = vmatmul.mubr.f32.gmra.mxu0 %v4845
        %v4925 = vpop.f32.mrf.mxu0
        %v4926 = vadd.f32 0.0, %v4925
        %v4927 = vpop.f32.mrf.mxu0
        %v4928 = vadd.f32 0.0, %v4927
        %4929 = vdwg.mxu0
        %4930 = vmatprep.subr.mxu0 0.0
        %4931 = vmatpush1.msra.mxu0 0.0
        %4932 = vmatprep.subr.mxu0 0.0
        %4933 = vmatpush1.msra.mxu0 0.0
        %4934 = vmatprep.subr.mxu0 0.0
        %4935 = vmatpush1.msra.mxu0 0.0
        %4936 = vmatprep.subr.mxu0 0.0
        %4937 = vmatpush1.msra.mxu0 0.0
        %4938 = vmatprep.subr.mxu0 0.0
        %4939 = vmatpush1.msra.mxu0 0.0
        %4940 = vmatprep.subr.mxu0 0.0
        %4941 = vmatpush1.msra.mxu0 0.0
        %4942 = vmatprep.subr.mxu0 0.0
        %4943 = vmatpush1.msra.mxu0 0.0
        %4944 = vmatprep.subr.mxu0 0.0
        %4945 = vmatpush1.msra.mxu0 0.0
        %4946 = vmatprep.subr.mxu0 0.0
        %4947 = vmatpush1.msra.mxu0 0.0
        %4948 = vmatprep.subr.mxu0 0.0
        %4949 = vmatpush1.msra.mxu0 0.0
        %4950 = vmatprep.subr.mxu0 0.0
        %4951 = vmatpush1.msra.mxu0 0.0
        %4952 = vmatprep.subr.mxu0 0.0
        %4953 = vmatpush1.msra.mxu0 0.0
        %4954 = vmatprep.subr.mxu0 0.0
        %4955 = vmatpush1.msra.mxu0 0.0
        %4956 = vmatprep.subr.mxu0 0.0
        %4957 = vmatpush1.msra.mxu0 0.0
        %4958 = vmatprep.subr.mxu0 0.0
        %4959 = vmatpush1.msra.mxu0 0.0
        %4960 = vmatprep.subr.mxu0 %v4857
        %4961 = vmatpush1.msra.mxu0 %v4854
        %4962 = vmatprep.subr.mxu0 0.0
        %4963 = vmatpush2.msra.mxu0 0.0
        %4964 = vmatprep.subr.mxu0 0.0
        %4965 = vmatpush2.msra.mxu0 0.0
        %4966 = vmatprep.subr.mxu0 0.0
        %4967 = vmatpush2.msra.mxu0 0.0
        %4968 = vmatprep.subr.mxu0 0.0
        %4969 = vmatpush2.msra.mxu0 0.0
        %4970 = vmatprep.subr.mxu0 0.0
        %4971 = vmatpush2.msra.mxu0 0.0
        %4972 = vmatprep.subr.mxu0 0.0
        %4973 = vmatpush2.msra.mxu0 0.0
        %4974 = vmatprep.subr.mxu0 0.0
        %4975 = vmatpush2.msra.mxu0 0.0
        %4976 = vmatprep.subr.mxu0 0.0
        %4977 = vmatpush2.msra.mxu0 0.0
        %4978 = vmatprep.subr.mxu0 0.0
        %4979 = vmatpush2.msra.mxu0 0.0
        %4980 = vmatprep.subr.mxu0 0.0
        %4981 = vmatpush2.msra.mxu0 0.0
        %4982 = vmatprep.subr.mxu0 0.0
        %4983 = vmatpush2.msra.mxu0 0.0
        %4984 = vmatprep.subr.mxu0 0.0
        %4985 = vmatpush2.msra.mxu0 0.0
        %4986 = vmatprep.subr.mxu0 0.0
        %4987 = vmatpush2.msra.mxu0 0.0
        %4988 = vmatprep.subr.mxu0 0.0
        %4989 = vmatpush2.msra.mxu0 0.0
        %4990 = vmatprep.subr.mxu0 0.0
        %4991 = vmatpush2.msra.mxu0 0.0
        %4992 = vmatprep.subr.mxu0 0.0
        %4993 = vmatpush2.msra.mxu0 0.0
        %4994 = vmatprep.mubr.f32.mxu0 0.0
        %4995 = vmatmul.mubr.f32.gmra.mxu0 %v4845
        %v4996 = vpop.f32.mrf.mxu0
        %v4997 = vadd.f32 0.0, %v4996
        %v4998 = vpop.f32.mrf.mxu0
        %v4999 = vadd.f32 0.0, %v4998
        %5000 = vdwg.mxu0
        %v5001 = vadd.f32 %v4811, %v4926
        %v5002 = vadd.f32 %v4812, %v4928
        %v5003 = vadd.f32 %v4813, %v4997
        %v5004 = vadd.f32 %v4814, %v4999
        %s5005 = scalar_lea.vmem %s1, 96
        %v5006 = vld [vmem:[%s5005] ss:$8 sm:$0xf]
        %v5008 = vlaneseq
        %v5009 = vshrl.u32 %v5008, 7
        %v5010 = vsub.s32 0, %v5009
        %v5011 = vrot.slane %v5006, %v5010
        %v5012 = vlaneseq
        %v5013 = vshrl.u32 %v5012, 7
        %v5014 = vsub.s32 1, %v5013
        %v5015 = vrot.slane %v5006, %v5014
        %v5016 = vlaneseq
        %v5017 = vshrl.u32 %v5016, 7
        %v5018 = vsub.s32 2, %v5017
        %v5019 = vrot.slane %v5006, %v5018
        %v5020 = vlaneseq
        %v5021 = vshrl.u32 %v5020, 7
        %v5022 = vsub.s32 3, %v5021
        %v5023 = vrot.slane %v5006, %v5022
        %v5028 = vmul.f32 %v1484, %v5011
        %v5029 = vmul.f32 %v1483, %v5015
        %v5030 = vmul.f32 %v1482, %v5019
        %v5031 = vmul.f32 %v1485, %v5023
        %s5032 = scalar_lea.vmem %s2, 96
        %v5033 = vld [vmem:[%s5032] sm:$0xf]
        %v5035 = vsel %vm345, %v5033, 0
        %v5038 = vsel %vm349, %v5028, 0
        %v5041 = vsel %vm349, %v5029, 0
        %v5044 = vsel %vm349, %v5030, 0
        %v5047 = vsel %vm349, %v5031, 0
        %5049 = vmatprep.subr.mxu0 0.0
        %5050 = vmatpush1.msra.mxu0 0.0
        %5051 = vmatprep.subr.mxu0 0.0
        %5052 = vmatpush1.msra.mxu0 0.0
        %5053 = vmatprep.subr.mxu0 0.0
        %5054 = vmatpush1.msra.mxu0 0.0
        %5055 = vmatprep.subr.mxu0 0.0
        %5056 = vmatpush1.msra.mxu0 0.0
        %5057 = vmatprep.subr.mxu0 0.0
        %5058 = vmatpush1.msra.mxu0 0.0
        %5059 = vmatprep.subr.mxu0 0.0
        %5060 = vmatpush1.msra.mxu0 0.0
        %5061 = vmatprep.subr.mxu0 0.0
        %5062 = vmatpush1.msra.mxu0 0.0
        %5063 = vmatprep.subr.mxu0 0.0
        %5064 = vmatpush1.msra.mxu0 0.0
        %5065 = vmatprep.subr.mxu0 0.0
        %5066 = vmatpush1.msra.mxu0 0.0
        %5067 = vmatprep.subr.mxu0 0.0
        %5068 = vmatpush1.msra.mxu0 0.0
        %5069 = vmatprep.subr.mxu0 0.0
        %5070 = vmatpush1.msra.mxu0 0.0
        %5071 = vmatprep.subr.mxu0 0.0
        %5072 = vmatpush1.msra.mxu0 0.0
        %5073 = vmatprep.subr.mxu0 0.0
        %5074 = vmatpush1.msra.mxu0 0.0
        %5075 = vmatprep.subr.mxu0 0.0
        %5076 = vmatpush1.msra.mxu0 0.0
        %5077 = vmatprep.subr.mxu0 0.0
        %5078 = vmatpush1.msra.mxu0 0.0
        %5079 = vmatprep.subr.mxu0 %v5041
        %5080 = vmatpush1.msra.mxu0 %v5038
        %5081 = vmatprep.subr.mxu0 0.0
        %5082 = vmatpush2.msra.mxu0 0.0
        %5083 = vmatprep.subr.mxu0 0.0
        %5084 = vmatpush2.msra.mxu0 0.0
        %5085 = vmatprep.subr.mxu0 0.0
        %5086 = vmatpush2.msra.mxu0 0.0
        %5087 = vmatprep.subr.mxu0 0.0
        %5088 = vmatpush2.msra.mxu0 0.0
        %5089 = vmatprep.subr.mxu0 0.0
        %5090 = vmatpush2.msra.mxu0 0.0
        %5091 = vmatprep.subr.mxu0 0.0
        %5092 = vmatpush2.msra.mxu0 0.0
        %5093 = vmatprep.subr.mxu0 0.0
        %5094 = vmatpush2.msra.mxu0 0.0
        %5095 = vmatprep.subr.mxu0 0.0
        %5096 = vmatpush2.msra.mxu0 0.0
        %5097 = vmatprep.subr.mxu0 0.0
        %5098 = vmatpush2.msra.mxu0 0.0
        %5099 = vmatprep.subr.mxu0 0.0
        %5100 = vmatpush2.msra.mxu0 0.0
        %5101 = vmatprep.subr.mxu0 0.0
        %5102 = vmatpush2.msra.mxu0 0.0
        %5103 = vmatprep.subr.mxu0 0.0
        %5104 = vmatpush2.msra.mxu0 0.0
        %5105 = vmatprep.subr.mxu0 0.0
        %5106 = vmatpush2.msra.mxu0 0.0
        %5107 = vmatprep.subr.mxu0 0.0
        %5108 = vmatpush2.msra.mxu0 0.0
        %5109 = vmatprep.subr.mxu0 0.0
        %5110 = vmatpush2.msra.mxu0 0.0
        %5111 = vmatprep.subr.mxu0 0.0
        %5112 = vmatpush2.msra.mxu0 0.0
        %5113 = vmatprep.mubr.f32.mxu0 0.0
        %5114 = vmatmul.mubr.f32.gmra.mxu0 %v5035
        %v5115 = vpop.f32.mrf.mxu0
        %v5116 = vadd.f32 0.0, %v5115
        %v5117 = vpop.f32.mrf.mxu0
        %v5118 = vadd.f32 0.0, %v5117
        %5119 = vdwg.mxu0
        %5120 = vmatprep.subr.mxu0 0.0
        %5121 = vmatpush1.msra.mxu0 0.0
        %5122 = vmatprep.subr.mxu0 0.0
        %5123 = vmatpush1.msra.mxu0 0.0
        %5124 = vmatprep.subr.mxu0 0.0
        %5125 = vmatpush1.msra.mxu0 0.0
        %5126 = vmatprep.subr.mxu0 0.0
        %5127 = vmatpush1.msra.mxu0 0.0
        %5128 = vmatprep.subr.mxu0 0.0
        %5129 = vmatpush1.msra.mxu0 0.0
        %5130 = vmatprep.subr.mxu0 0.0
        %5131 = vmatpush1.msra.mxu0 0.0
        %5132 = vmatprep.subr.mxu0 0.0
        %5133 = vmatpush1.msra.mxu0 0.0
        %5134 = vmatprep.subr.mxu0 0.0
        %5135 = vmatpush1.msra.mxu0 0.0
        %5136 = vmatprep.subr.mxu0 0.0
        %5137 = vmatpush1.msra.mxu0 0.0
        %5138 = vmatprep.subr.mxu0 0.0
        %5139 = vmatpush1.msra.mxu0 0.0
        %5140 = vmatprep.subr.mxu0 0.0
        %5141 = vmatpush1.msra.mxu0 0.0
        %5142 = vmatprep.subr.mxu0 0.0
        %5143 = vmatpush1.msra.mxu0 0.0
        %5144 = vmatprep.subr.mxu0 0.0
        %5145 = vmatpush1.msra.mxu0 0.0
        %5146 = vmatprep.subr.mxu0 0.0
        %5147 = vmatpush1.msra.mxu0 0.0
        %5148 = vmatprep.subr.mxu0 0.0
        %5149 = vmatpush1.msra.mxu0 0.0
        %5150 = vmatprep.subr.mxu0 %v5047
        %5151 = vmatpush1.msra.mxu0 %v5044
        %5152 = vmatprep.subr.mxu0 0.0
        %5153 = vmatpush2.msra.mxu0 0.0
        %5154 = vmatprep.subr.mxu0 0.0
        %5155 = vmatpush2.msra.mxu0 0.0
        %5156 = vmatprep.subr.mxu0 0.0
        %5157 = vmatpush2.msra.mxu0 0.0
        %5158 = vmatprep.subr.mxu0 0.0
        %5159 = vmatpush2.msra.mxu0 0.0
        %5160 = vmatprep.subr.mxu0 0.0
        %5161 = vmatpush2.msra.mxu0 0.0
        %5162 = vmatprep.subr.mxu0 0.0
        %5163 = vmatpush2.msra.mxu0 0.0
        %5164 = vmatprep.subr.mxu0 0.0
        %5165 = vmatpush2.msra.mxu0 0.0
        %5166 = vmatprep.subr.mxu0 0.0
        %5167 = vmatpush2.msra.mxu0 0.0
        %5168 = vmatprep.subr.mxu0 0.0
        %5169 = vmatpush2.msra.mxu0 0.0
        %5170 = vmatprep.subr.mxu0 0.0
        %5171 = vmatpush2.msra.mxu0 0.0
        %5172 = vmatprep.subr.mxu0 0.0
        %5173 = vmatpush2.msra.mxu0 0.0
        %5174 = vmatprep.subr.mxu0 0.0
        %5175 = vmatpush2.msra.mxu0 0.0
        %5176 = vmatprep.subr.mxu0 0.0
        %5177 = vmatpush2.msra.mxu0 0.0
        %5178 = vmatprep.subr.mxu0 0.0
        %5179 = vmatpush2.msra.mxu0 0.0
        %5180 = vmatprep.subr.mxu0 0.0
        %5181 = vmatpush2.msra.mxu0 0.0
        %5182 = vmatprep.subr.mxu0 0.0
        %5183 = vmatpush2.msra.mxu0 0.0
        %5184 = vmatprep.mubr.f32.mxu0 0.0
        %5185 = vmatmul.mubr.f32.gmra.mxu0 %v5035
        %v5186 = vpop.f32.mrf.mxu0
        %v5187 = vadd.f32 0.0, %v5186
        %v5188 = vpop.f32.mrf.mxu0
        %v5189 = vadd.f32 0.0, %v5188
        %5190 = vdwg.mxu0
        %v5191 = vadd.f32 %v5001, %v5116
        %v5192 = vadd.f32 %v5002, %v5118
        %v5193 = vadd.f32 %v5003, %v5187
        %v5194 = vadd.f32 %v5004, %v5189
        %s5195 = scalar_lea.vmem %s1, 97
        %v5196 = vld [vmem:[%s5195] ss:$8 sm:$0xf]
        %v5198 = vlaneseq
        %v5199 = vshrl.u32 %v5198, 7
        %v5200 = vsub.s32 0, %v5199
        %v5201 = vrot.slane %v5196, %v5200
        %v5202 = vlaneseq
        %v5203 = vshrl.u32 %v5202, 7
        %v5204 = vsub.s32 1, %v5203
        %v5205 = vrot.slane %v5196, %v5204
        %v5206 = vlaneseq
        %v5207 = vshrl.u32 %v5206, 7
        %v5208 = vsub.s32 2, %v5207
        %v5209 = vrot.slane %v5196, %v5208
        %v5210 = vlaneseq
        %v5211 = vshrl.u32 %v5210, 7
        %v5212 = vsub.s32 3, %v5211
        %v5213 = vrot.slane %v5196, %v5212
        %v5218 = vmul.f32 %v1687, %v5201
        %v5219 = vmul.f32 %v1686, %v5205
        %v5220 = vmul.f32 %v1685, %v5209
        %v5221 = vmul.f32 %v1688, %v5213
        %s5222 = scalar_lea.vmem %s2, 100
        %v5223 = vld [vmem:[%s5222] sm:$0xf]
        %v5225 = vsel %vm345, %v5223, 0
        %v5228 = vsel %vm349, %v5218, 0
        %v5231 = vsel %vm349, %v5219, 0
        %v5234 = vsel %vm349, %v5220, 0
        %v5237 = vsel %vm349, %v5221, 0
        %5239 = vmatprep.subr.mxu0 0.0
        %5240 = vmatpush1.msra.mxu0 0.0
        %5241 = vmatprep.subr.mxu0 0.0
        %5242 = vmatpush1.msra.mxu0 0.0
        %5243 = vmatprep.subr.mxu0 0.0
        %5244 = vmatpush1.msra.mxu0 0.0
        %5245 = vmatprep.subr.mxu0 0.0
        %5246 = vmatpush1.msra.mxu0 0.0
        %5247 = vmatprep.subr.mxu0 0.0
        %5248 = vmatpush1.msra.mxu0 0.0
        %5249 = vmatprep.subr.mxu0 0.0
        %5250 = vmatpush1.msra.mxu0 0.0
        %5251 = vmatprep.subr.mxu0 0.0
        %5252 = vmatpush1.msra.mxu0 0.0
        %5253 = vmatprep.subr.mxu0 0.0
        %5254 = vmatpush1.msra.mxu0 0.0
        %5255 = vmatprep.subr.mxu0 0.0
        %5256 = vmatpush1.msra.mxu0 0.0
        %5257 = vmatprep.subr.mxu0 0.0
        %5258 = vmatpush1.msra.mxu0 0.0
        %5259 = vmatprep.subr.mxu0 0.0
        %5260 = vmatpush1.msra.mxu0 0.0
        %5261 = vmatprep.subr.mxu0 0.0
        %5262 = vmatpush1.msra.mxu0 0.0
        %5263 = vmatprep.subr.mxu0 0.0
        %5264 = vmatpush1.msra.mxu0 0.0
        %5265 = vmatprep.subr.mxu0 0.0
        %5266 = vmatpush1.msra.mxu0 0.0
        %5267 = vmatprep.subr.mxu0 0.0
        %5268 = vmatpush1.msra.mxu0 0.0
        %5269 = vmatprep.subr.mxu0 %v5231
        %5270 = vmatpush1.msra.mxu0 %v5228
        %5271 = vmatprep.subr.mxu0 0.0
        %5272 = vmatpush2.msra.mxu0 0.0
        %5273 = vmatprep.subr.mxu0 0.0
        %5274 = vmatpush2.msra.mxu0 0.0
        %5275 = vmatprep.subr.mxu0 0.0
        %5276 = vmatpush2.msra.mxu0 0.0
        %5277 = vmatprep.subr.mxu0 0.0
        %5278 = vmatpush2.msra.mxu0 0.0
        %5279 = vmatprep.subr.mxu0 0.0
        %5280 = vmatpush2.msra.mxu0 0.0
        %5281 = vmatprep.subr.mxu0 0.0
        %5282 = vmatpush2.msra.mxu0 0.0
        %5283 = vmatprep.subr.mxu0 0.0
        %5284 = vmatpush2.msra.mxu0 0.0
        %5285 = vmatprep.subr.mxu0 0.0
        %5286 = vmatpush2.msra.mxu0 0.0
        %5287 = vmatprep.subr.mxu0 0.0
        %5288 = vmatpush2.msra.mxu0 0.0
        %5289 = vmatprep.subr.mxu0 0.0
        %5290 = vmatpush2.msra.mxu0 0.0
        %5291 = vmatprep.subr.mxu0 0.0
        %5292 = vmatpush2.msra.mxu0 0.0
        %5293 = vmatprep.subr.mxu0 0.0
        %5294 = vmatpush2.msra.mxu0 0.0
        %5295 = vmatprep.subr.mxu0 0.0
        %5296 = vmatpush2.msra.mxu0 0.0
        %5297 = vmatprep.subr.mxu0 0.0
        %5298 = vmatpush2.msra.mxu0 0.0
        %5299 = vmatprep.subr.mxu0 0.0
        %5300 = vmatpush2.msra.mxu0 0.0
        %5301 = vmatprep.subr.mxu0 0.0
        %5302 = vmatpush2.msra.mxu0 0.0
        %5303 = vmatprep.mubr.f32.mxu0 0.0
        %5304 = vmatmul.mubr.f32.gmra.mxu0 %v5225
        %v5305 = vpop.f32.mrf.mxu0
        %v5306 = vadd.f32 0.0, %v5305
        %v5307 = vpop.f32.mrf.mxu0
        %v5308 = vadd.f32 0.0, %v5307
        %5309 = vdwg.mxu0
        %5310 = vmatprep.subr.mxu0 0.0
        %5311 = vmatpush1.msra.mxu0 0.0
        %5312 = vmatprep.subr.mxu0 0.0
        %5313 = vmatpush1.msra.mxu0 0.0
        %5314 = vmatprep.subr.mxu0 0.0
        %5315 = vmatpush1.msra.mxu0 0.0
        %5316 = vmatprep.subr.mxu0 0.0
        %5317 = vmatpush1.msra.mxu0 0.0
        %5318 = vmatprep.subr.mxu0 0.0
        %5319 = vmatpush1.msra.mxu0 0.0
        %5320 = vmatprep.subr.mxu0 0.0
        %5321 = vmatpush1.msra.mxu0 0.0
        %5322 = vmatprep.subr.mxu0 0.0
        %5323 = vmatpush1.msra.mxu0 0.0
        %5324 = vmatprep.subr.mxu0 0.0
        %5325 = vmatpush1.msra.mxu0 0.0
        %5326 = vmatprep.subr.mxu0 0.0
        %5327 = vmatpush1.msra.mxu0 0.0
        %5328 = vmatprep.subr.mxu0 0.0
        %5329 = vmatpush1.msra.mxu0 0.0
        %5330 = vmatprep.subr.mxu0 0.0
        %5331 = vmatpush1.msra.mxu0 0.0
        %5332 = vmatprep.subr.mxu0 0.0
        %5333 = vmatpush1.msra.mxu0 0.0
        %5334 = vmatprep.subr.mxu0 0.0
        %5335 = vmatpush1.msra.mxu0 0.0
        %5336 = vmatprep.subr.mxu0 0.0
        %5337 = vmatpush1.msra.mxu0 0.0
        %5338 = vmatprep.subr.mxu0 0.0
        %5339 = vmatpush1.msra.mxu0 0.0
        %5340 = vmatprep.subr.mxu0 %v5237
        %5341 = vmatpush1.msra.mxu0 %v5234
        %5342 = vmatprep.subr.mxu0 0.0
        %5343 = vmatpush2.msra.mxu0 0.0
        %5344 = vmatprep.subr.mxu0 0.0
        %5345 = vmatpush2.msra.mxu0 0.0
        %5346 = vmatprep.subr.mxu0 0.0
        %5347 = vmatpush2.msra.mxu0 0.0
        %5348 = vmatprep.subr.mxu0 0.0
        %5349 = vmatpush2.msra.mxu0 0.0
        %5350 = vmatprep.subr.mxu0 0.0
        %5351 = vmatpush2.msra.mxu0 0.0
        %5352 = vmatprep.subr.mxu0 0.0
        %5353 = vmatpush2.msra.mxu0 0.0
        %5354 = vmatprep.subr.mxu0 0.0
        %5355 = vmatpush2.msra.mxu0 0.0
        %5356 = vmatprep.subr.mxu0 0.0
        %5357 = vmatpush2.msra.mxu0 0.0
        %5358 = vmatprep.subr.mxu0 0.0
        %5359 = vmatpush2.msra.mxu0 0.0
        %5360 = vmatprep.subr.mxu0 0.0
        %5361 = vmatpush2.msra.mxu0 0.0
        %5362 = vmatprep.subr.mxu0 0.0
        %5363 = vmatpush2.msra.mxu0 0.0
        %5364 = vmatprep.subr.mxu0 0.0
        %5365 = vmatpush2.msra.mxu0 0.0
        %5366 = vmatprep.subr.mxu0 0.0
        %5367 = vmatpush2.msra.mxu0 0.0
        %5368 = vmatprep.subr.mxu0 0.0
        %5369 = vmatpush2.msra.mxu0 0.0
        %5370 = vmatprep.subr.mxu0 0.0
        %5371 = vmatpush2.msra.mxu0 0.0
        %5372 = vmatprep.subr.mxu0 0.0
        %5373 = vmatpush2.msra.mxu0 0.0
        %5374 = vmatprep.mubr.f32.mxu0 0.0
        %5375 = vmatmul.mubr.f32.gmra.mxu0 %v5225
        %v5376 = vpop.f32.mrf.mxu0
        %v5377 = vadd.f32 0.0, %v5376
        %v5378 = vpop.f32.mrf.mxu0
        %v5379 = vadd.f32 0.0, %v5378
        %5380 = vdwg.mxu0
        %v5381 = vadd.f32 %v5191, %v5306
        %v5382 = vadd.f32 %v5192, %v5308
        %v5383 = vadd.f32 %v5193, %v5377
        %v5384 = vadd.f32 %v5194, %v5379
        %s5385 = scalar_lea.vmem %s1, 98
        %v5386 = vld [vmem:[%s5385] ss:$8 sm:$0xf]
        %v5388 = vlaneseq
        %v5389 = vshrl.u32 %v5388, 7
        %v5390 = vsub.s32 0, %v5389
        %v5391 = vrot.slane %v5386, %v5390
        %v5392 = vlaneseq
        %v5393 = vshrl.u32 %v5392, 7
        %v5394 = vsub.s32 1, %v5393
        %v5395 = vrot.slane %v5386, %v5394
        %v5396 = vlaneseq
        %v5397 = vshrl.u32 %v5396, 7
        %v5398 = vsub.s32 2, %v5397
        %v5399 = vrot.slane %v5386, %v5398
        %v5400 = vlaneseq
        %v5401 = vshrl.u32 %v5400, 7
        %v5402 = vsub.s32 3, %v5401
        %v5403 = vrot.slane %v5386, %v5402
        %v5408 = vmul.f32 %v1890, %v5391
        %v5409 = vmul.f32 %v1889, %v5395
        %v5410 = vmul.f32 %v1888, %v5399
        %v5411 = vmul.f32 %v1891, %v5403
        %s5412 = scalar_lea.vmem %s2, 104
        %v5413 = vld [vmem:[%s5412] sm:$0xf]
        %v5415 = vsel %vm345, %v5413, 0
        %v5418 = vsel %vm349, %v5408, 0
        %v5421 = vsel %vm349, %v5409, 0
        %v5424 = vsel %vm349, %v5410, 0
        %v5427 = vsel %vm349, %v5411, 0
        %5429 = vmatprep.subr.mxu0 0.0
        %5430 = vmatpush1.msra.mxu0 0.0
        %5431 = vmatprep.subr.mxu0 0.0
        %5432 = vmatpush1.msra.mxu0 0.0
        %5433 = vmatprep.subr.mxu0 0.0
        %5434 = vmatpush1.msra.mxu0 0.0
        %5435 = vmatprep.subr.mxu0 0.0
        %5436 = vmatpush1.msra.mxu0 0.0
        %5437 = vmatprep.subr.mxu0 0.0
        %5438 = vmatpush1.msra.mxu0 0.0
        %5439 = vmatprep.subr.mxu0 0.0
        %5440 = vmatpush1.msra.mxu0 0.0
        %5441 = vmatprep.subr.mxu0 0.0
        %5442 = vmatpush1.msra.mxu0 0.0
        %5443 = vmatprep.subr.mxu0 0.0
        %5444 = vmatpush1.msra.mxu0 0.0
        %5445 = vmatprep.subr.mxu0 0.0
        %5446 = vmatpush1.msra.mxu0 0.0
        %5447 = vmatprep.subr.mxu0 0.0
        %5448 = vmatpush1.msra.mxu0 0.0
        %5449 = vmatprep.subr.mxu0 0.0
        %5450 = vmatpush1.msra.mxu0 0.0
        %5451 = vmatprep.subr.mxu0 0.0
        %5452 = vmatpush1.msra.mxu0 0.0
        %5453 = vmatprep.subr.mxu0 0.0
        %5454 = vmatpush1.msra.mxu0 0.0
        %5455 = vmatprep.subr.mxu0 0.0
        %5456 = vmatpush1.msra.mxu0 0.0
        %5457 = vmatprep.subr.mxu0 0.0
        %5458 = vmatpush1.msra.mxu0 0.0
        %5459 = vmatprep.subr.mxu0 %v5421
        %5460 = vmatpush1.msra.mxu0 %v5418
        %5461 = vmatprep.subr.mxu0 0.0
        %5462 = vmatpush2.msra.mxu0 0.0
        %5463 = vmatprep.subr.mxu0 0.0
        %5464 = vmatpush2.msra.mxu0 0.0
        %5465 = vmatprep.subr.mxu0 0.0
        %5466 = vmatpush2.msra.mxu0 0.0
        %5467 = vmatprep.subr.mxu0 0.0
        %5468 = vmatpush2.msra.mxu0 0.0
        %5469 = vmatprep.subr.mxu0 0.0
        %5470 = vmatpush2.msra.mxu0 0.0
        %5471 = vmatprep.subr.mxu0 0.0
        %5472 = vmatpush2.msra.mxu0 0.0
        %5473 = vmatprep.subr.mxu0 0.0
        %5474 = vmatpush2.msra.mxu0 0.0
        %5475 = vmatprep.subr.mxu0 0.0
        %5476 = vmatpush2.msra.mxu0 0.0
        %5477 = vmatprep.subr.mxu0 0.0
        %5478 = vmatpush2.msra.mxu0 0.0
        %5479 = vmatprep.subr.mxu0 0.0
        %5480 = vmatpush2.msra.mxu0 0.0
        %5481 = vmatprep.subr.mxu0 0.0
        %5482 = vmatpush2.msra.mxu0 0.0
        %5483 = vmatprep.subr.mxu0 0.0
        %5484 = vmatpush2.msra.mxu0 0.0
        %5485 = vmatprep.subr.mxu0 0.0
        %5486 = vmatpush2.msra.mxu0 0.0
        %5487 = vmatprep.subr.mxu0 0.0
        %5488 = vmatpush2.msra.mxu0 0.0
        %5489 = vmatprep.subr.mxu0 0.0
        %5490 = vmatpush2.msra.mxu0 0.0
        %5491 = vmatprep.subr.mxu0 0.0
        %5492 = vmatpush2.msra.mxu0 0.0
        %5493 = vmatprep.mubr.f32.mxu0 0.0
        %5494 = vmatmul.mubr.f32.gmra.mxu0 %v5415
        %v5495 = vpop.f32.mrf.mxu0
        %v5496 = vadd.f32 0.0, %v5495
        %v5497 = vpop.f32.mrf.mxu0
        %v5498 = vadd.f32 0.0, %v5497
        %5499 = vdwg.mxu0
        %5500 = vmatprep.subr.mxu0 0.0
        %5501 = vmatpush1.msra.mxu0 0.0
        %5502 = vmatprep.subr.mxu0 0.0
        %5503 = vmatpush1.msra.mxu0 0.0
        %5504 = vmatprep.subr.mxu0 0.0
        %5505 = vmatpush1.msra.mxu0 0.0
        %5506 = vmatprep.subr.mxu0 0.0
        %5507 = vmatpush1.msra.mxu0 0.0
        %5508 = vmatprep.subr.mxu0 0.0
        %5509 = vmatpush1.msra.mxu0 0.0
        %5510 = vmatprep.subr.mxu0 0.0
        %5511 = vmatpush1.msra.mxu0 0.0
        %5512 = vmatprep.subr.mxu0 0.0
        %5513 = vmatpush1.msra.mxu0 0.0
        %5514 = vmatprep.subr.mxu0 0.0
        %5515 = vmatpush1.msra.mxu0 0.0
        %5516 = vmatprep.subr.mxu0 0.0
        %5517 = vmatpush1.msra.mxu0 0.0
        %5518 = vmatprep.subr.mxu0 0.0
        %5519 = vmatpush1.msra.mxu0 0.0
        %5520 = vmatprep.subr.mxu0 0.0
        %5521 = vmatpush1.msra.mxu0 0.0
        %5522 = vmatprep.subr.mxu0 0.0
        %5523 = vmatpush1.msra.mxu0 0.0
        %5524 = vmatprep.subr.mxu0 0.0
        %5525 = vmatpush1.msra.mxu0 0.0
        %5526 = vmatprep.subr.mxu0 0.0
        %5527 = vmatpush1.msra.mxu0 0.0
        %5528 = vmatprep.subr.mxu0 0.0
        %5529 = vmatpush1.msra.mxu0 0.0
        %5530 = vmatprep.subr.mxu0 %v5427
        %5531 = vmatpush1.msra.mxu0 %v5424
        %5532 = vmatprep.subr.mxu0 0.0
        %5533 = vmatpush2.msra.mxu0 0.0
        %5534 = vmatprep.subr.mxu0 0.0
        %5535 = vmatpush2.msra.mxu0 0.0
        %5536 = vmatprep.subr.mxu0 0.0
        %5537 = vmatpush2.msra.mxu0 0.0
        %5538 = vmatprep.subr.mxu0 0.0
        %5539 = vmatpush2.msra.mxu0 0.0
        %5540 = vmatprep.subr.mxu0 0.0
        %5541 = vmatpush2.msra.mxu0 0.0
        %5542 = vmatprep.subr.mxu0 0.0
        %5543 = vmatpush2.msra.mxu0 0.0
        %5544 = vmatprep.subr.mxu0 0.0
        %5545 = vmatpush2.msra.mxu0 0.0
        %5546 = vmatprep.subr.mxu0 0.0
        %5547 = vmatpush2.msra.mxu0 0.0
        %5548 = vmatprep.subr.mxu0 0.0
        %5549 = vmatpush2.msra.mxu0 0.0
        %5550 = vmatprep.subr.mxu0 0.0
        %5551 = vmatpush2.msra.mxu0 0.0
        %5552 = vmatprep.subr.mxu0 0.0
        %5553 = vmatpush2.msra.mxu0 0.0
        %5554 = vmatprep.subr.mxu0 0.0
        %5555 = vmatpush2.msra.mxu0 0.0
        %5556 = vmatprep.subr.mxu0 0.0
        %5557 = vmatpush2.msra.mxu0 0.0
        %5558 = vmatprep.subr.mxu0 0.0
        %5559 = vmatpush2.msra.mxu0 0.0
        %5560 = vmatprep.subr.mxu0 0.0
        %5561 = vmatpush2.msra.mxu0 0.0
        %5562 = vmatprep.subr.mxu0 0.0
        %5563 = vmatpush2.msra.mxu0 0.0
        %5564 = vmatprep.mubr.f32.mxu0 0.0
        %5565 = vmatmul.mubr.f32.gmra.mxu0 %v5415
        %v5566 = vpop.f32.mrf.mxu0
        %v5567 = vadd.f32 0.0, %v5566
        %v5568 = vpop.f32.mrf.mxu0
        %v5569 = vadd.f32 0.0, %v5568
        %5570 = vdwg.mxu0
        %v5571 = vadd.f32 %v5381, %v5496
        %v5572 = vadd.f32 %v5382, %v5498
        %v5573 = vadd.f32 %v5383, %v5567
        %v5574 = vadd.f32 %v5384, %v5569
        %v5575 = vld [vmem:[%s4] sm:$0xf]
        %5577 = vset.pattern.permute.xlu0 0
        %5578 = vperm.xlu0 %5577, %v5575
        %v5579 = vpop.permute.xlu0 %5578
        %v5581 = vadd.f32 %v5571, %v5579
        %v5582 = vadd.f32 %v5572, %v5579
        %v5583 = vadd.f32 %v5573, %v5579
        %v5584 = vadd.f32 %v5574, %v5579
        %v5585 = vmax.f32 %v5581, 0.0
        %v5586 = vmax.f32 %v5582, 0.0
        %v5587 = vmax.f32 %v5583, 0.0
        %v5588 = vmax.f32 %v5584, 0.0
        %5589 = vrot.lane.b32.xlu0 %v5585, 73
        %v5590 = vpop.permute.xlu0 %5589
        %5591 = vrot.lane.b32.xlu0 %v5586, 73
        %v5592 = vpop.permute.xlu0 %5591
        %5593 = vrot.lane.b32.xlu0 %v5587, 73
        %v5594 = vpop.permute.xlu0 %5593
        %5595 = vrot.lane.b32.xlu0 %v5588, 73
        %v5596 = vpop.permute.xlu0 %5595
        %v5597 = vsel %vm271, %v5594, %v5596
        %v5598 = vsel %vm271, %v5592, %v5594
        %v5599 = vsel %vm271, %v5590, %v5592
        %v5600 = vsel %vm271, %v5596, %v5590
        %v5601 = vmul.f32 %v5600, %v281
        %v5602 = vmul.f32 %v5599, %v285
        %v5603 = vmul.f32 %v5598, %v289
        %v5604 = vmul.f32 %v5597, %v293
        %v5605 = vld [vmem:[%s3] sm:$0xf]
        %5606 = vrot.lane.b32.xlu0 %v5585, 72
        %v5607 = vpop.permute.xlu0 %5606
        %5608 = vrot.lane.b32.xlu0 %v5586, 72
        %v5609 = vpop.permute.xlu0 %5608
        %5610 = vrot.lane.b32.xlu0 %v5587, 72
        %v5611 = vpop.permute.xlu0 %5610
        %5612 = vrot.lane.b32.xlu0 %v5588, 72
        %v5613 = vpop.permute.xlu0 %5612
        %v5614 = vsel %vm311, %v5611, %v5613
        %v5615 = vsel %vm311, %v5609, %v5611
        %v5616 = vsel %vm311, %v5607, %v5609
        %v5617 = vsel %vm311, %v5613, %v5607
        %v5618 = vmul.f32 %v5617, %v322
        %v5619 = vmul.f32 %v5616, %v326
        %v5620 = vmul.f32 %v5615, %v330
        %v5621 = vmul.f32 %v5614, %v334
        %s5622 = scalar_lea.vmem %s3, 4
        %v5623 = vld [vmem:[%s5622] sm:$0xf]
        %v5625 = vsel %vm345, %v5623, 0
        %v5628 = vsel %vm349, %v5618, 0
        %v5631 = vsel %vm349, %v5619, 0
        %v5634 = vsel %vm349, %v5620, 0
        %v5637 = vsel %vm349, %v5621, 0
        %5639 = vmatprep.subr.mxu0 0.0
        %5640 = vmatpush1.msra.mxu0 0.0
        %5641 = vmatprep.subr.mxu0 0.0
        %5642 = vmatpush1.msra.mxu0 0.0
        %5643 = vmatprep.subr.mxu0 0.0
        %5644 = vmatpush1.msra.mxu0 0.0
        %5645 = vmatprep.subr.mxu0 0.0
        %5646 = vmatpush1.msra.mxu0 0.0
        %5647 = vmatprep.subr.mxu0 0.0
        %5648 = vmatpush1.msra.mxu0 0.0
        %5649 = vmatprep.subr.mxu0 0.0
        %5650 = vmatpush1.msra.mxu0 0.0
        %5651 = vmatprep.subr.mxu0 0.0
        %5652 = vmatpush1.msra.mxu0 0.0
        %5653 = vmatprep.subr.mxu0 0.0
        %5654 = vmatpush1.msra.mxu0 0.0
        %5655 = vmatprep.subr.mxu0 0.0
        %5656 = vmatpush1.msra.mxu0 0.0
        %5657 = vmatprep.subr.mxu0 0.0
        %5658 = vmatpush1.msra.mxu0 0.0
        %5659 = vmatprep.subr.mxu0 0.0
        %5660 = vmatpush1.msra.mxu0 0.0
        %5661 = vmatprep.subr.mxu0 0.0
        %5662 = vmatpush1.msra.mxu0 0.0
        %5663 = vmatprep.subr.mxu0 0.0
        %5664 = vmatpush1.msra.mxu0 0.0
        %5665 = vmatprep.subr.mxu0 0.0
        %5666 = vmatpush1.msra.mxu0 0.0
        %5667 = vmatprep.subr.mxu0 0.0
        %5668 = vmatpush1.msra.mxu0 0.0
        %5669 = vmatprep.subr.mxu0 %v5631
        %5670 = vmatpush1.msra.mxu0 %v5628
        %5671 = vmatprep.subr.mxu0 0.0
        %5672 = vmatpush2.msra.mxu0 0.0
        %5673 = vmatprep.subr.mxu0 0.0
        %5674 = vmatpush2.msra.mxu0 0.0
        %5675 = vmatprep.subr.mxu0 0.0
        %5676 = vmatpush2.msra.mxu0 0.0
        %5677 = vmatprep.subr.mxu0 0.0
        %5678 = vmatpush2.msra.mxu0 0.0
        %5679 = vmatprep.subr.mxu0 0.0
        %5680 = vmatpush2.msra.mxu0 0.0
        %5681 = vmatprep.subr.mxu0 0.0
        %5682 = vmatpush2.msra.mxu0 0.0
        %5683 = vmatprep.subr.mxu0 0.0
        %5684 = vmatpush2.msra.mxu0 0.0
        %5685 = vmatprep.subr.mxu0 0.0
        %5686 = vmatpush2.msra.mxu0 0.0
        %5687 = vmatprep.subr.mxu0 0.0
        %5688 = vmatpush2.msra.mxu0 0.0
        %5689 = vmatprep.subr.mxu0 0.0
        %5690 = vmatpush2.msra.mxu0 0.0
        %5691 = vmatprep.subr.mxu0 0.0
        %5692 = vmatpush2.msra.mxu0 0.0
        %5693 = vmatprep.subr.mxu0 0.0
        %5694 = vmatpush2.msra.mxu0 0.0
        %5695 = vmatprep.subr.mxu0 0.0
        %5696 = vmatpush2.msra.mxu0 0.0
        %5697 = vmatprep.subr.mxu0 0.0
        %5698 = vmatpush2.msra.mxu0 0.0
        %5699 = vmatprep.subr.mxu0 0.0
        %5700 = vmatpush2.msra.mxu0 0.0
        %5701 = vmatprep.subr.mxu0 0.0
        %5702 = vmatpush2.msra.mxu0 0.0
        %5703 = vmatprep.mubr.f32.mxu0 0.0
        %5704 = vmatmul.mubr.f32.gmra.mxu0 %v5625
        %v5705 = vpop.f32.mrf.mxu0
        %v5706 = vadd.f32 0.0, %v5705
        %v5707 = vpop.f32.mrf.mxu0
        %v5708 = vadd.f32 0.0, %v5707
        %5709 = vdwg.mxu0
        %5710 = vmatprep.subr.mxu0 0.0
        %5711 = vmatpush1.msra.mxu0 0.0
        %5712 = vmatprep.subr.mxu0 0.0
        %5713 = vmatpush1.msra.mxu0 0.0
        %5714 = vmatprep.subr.mxu0 0.0
        %5715 = vmatpush1.msra.mxu0 0.0
        %5716 = vmatprep.subr.mxu0 0.0
        %5717 = vmatpush1.msra.mxu0 0.0
        %5718 = vmatprep.subr.mxu0 0.0
        %5719 = vmatpush1.msra.mxu0 0.0
        %5720 = vmatprep.subr.mxu0 0.0
        %5721 = vmatpush1.msra.mxu0 0.0
        %5722 = vmatprep.subr.mxu0 0.0
        %5723 = vmatpush1.msra.mxu0 0.0
        %5724 = vmatprep.subr.mxu0 0.0
        %5725 = vmatpush1.msra.mxu0 0.0
        %5726 = vmatprep.subr.mxu0 0.0
        %5727 = vmatpush1.msra.mxu0 0.0
        %5728 = vmatprep.subr.mxu0 0.0
        %5729 = vmatpush1.msra.mxu0 0.0
        %5730 = vmatprep.subr.mxu0 0.0
        %5731 = vmatpush1.msra.mxu0 0.0
        %5732 = vmatprep.subr.mxu0 0.0
        %5733 = vmatpush1.msra.mxu0 0.0
        %5734 = vmatprep.subr.mxu0 0.0
        %5735 = vmatpush1.msra.mxu0 0.0
        %5736 = vmatprep.subr.mxu0 0.0
        %5737 = vmatpush1.msra.mxu0 0.0
        %5738 = vmatprep.subr.mxu0 0.0
        %5739 = vmatpush1.msra.mxu0 0.0
        %5740 = vmatprep.subr.mxu0 %v5637
        %5741 = vmatpush1.msra.mxu0 %v5634
        %5742 = vmatprep.subr.mxu0 0.0
        %5743 = vmatpush2.msra.mxu0 0.0
        %5744 = vmatprep.subr.mxu0 0.0
        %5745 = vmatpush2.msra.mxu0 0.0
        %5746 = vmatprep.subr.mxu0 0.0
        %5747 = vmatpush2.msra.mxu0 0.0
        %5748 = vmatprep.subr.mxu0 0.0
        %5749 = vmatpush2.msra.mxu0 0.0
        %5750 = vmatprep.subr.mxu0 0.0
        %5751 = vmatpush2.msra.mxu0 0.0
        %5752 = vmatprep.subr.mxu0 0.0
        %5753 = vmatpush2.msra.mxu0 0.0
        %5754 = vmatprep.subr.mxu0 0.0
        %5755 = vmatpush2.msra.mxu0 0.0
        %5756 = vmatprep.subr.mxu0 0.0
        %5757 = vmatpush2.msra.mxu0 0.0
        %5758 = vmatprep.subr.mxu0 0.0
        %5759 = vmatpush2.msra.mxu0 0.0
        %5760 = vmatprep.subr.mxu0 0.0
        %5761 = vmatpush2.msra.mxu0 0.0
        %5762 = vmatprep.subr.mxu0 0.0
        %5763 = vmatpush2.msra.mxu0 0.0
        %5764 = vmatprep.subr.mxu0 0.0
        %5765 = vmatpush2.msra.mxu0 0.0
        %5766 = vmatprep.subr.mxu0 0.0
        %5767 = vmatpush2.msra.mxu0 0.0
        %5768 = vmatprep.subr.mxu0 0.0
        %5769 = vmatpush2.msra.mxu0 0.0
        %5770 = vmatprep.subr.mxu0 0.0
        %5771 = vmatpush2.msra.mxu0 0.0
        %5772 = vmatprep.subr.mxu0 0.0
        %5773 = vmatpush2.msra.mxu0 0.0
        %5774 = vmatprep.mubr.f32.mxu0 0.0
        %5775 = vmatmul.mubr.f32.gmra.mxu0 %v5625
        %v5776 = vpop.f32.mrf.mxu0
        %v5777 = vadd.f32 0.0, %v5776
        %v5778 = vpop.f32.mrf.mxu0
        %v5779 = vadd.f32 0.0, %v5778
        %5780 = vdwg.mxu0
        %v5782 = vsel %vm345, %v5605, 0
        %v5785 = vsel %vm349, %v5601, 0
        %v5788 = vsel %vm349, %v5602, 0
        %v5791 = vsel %vm349, %v5603, 0
        %v5794 = vsel %vm349, %v5604, 0
        %5796 = vmatprep.subr.mxu0 0.0
        %5797 = vmatpush1.msra.mxu0 0.0
        %5798 = vmatprep.subr.mxu0 0.0
        %5799 = vmatpush1.msra.mxu0 0.0
        %5800 = vmatprep.subr.mxu0 0.0
        %5801 = vmatpush1.msra.mxu0 0.0
        %5802 = vmatprep.subr.mxu0 0.0
        %5803 = vmatpush1.msra.mxu0 0.0
        %5804 = vmatprep.subr.mxu0 0.0
        %5805 = vmatpush1.msra.mxu0 0.0
        %5806 = vmatprep.subr.mxu0 0.0
        %5807 = vmatpush1.msra.mxu0 0.0
        %5808 = vmatprep.subr.mxu0 0.0
        %5809 = vmatpush1.msra.mxu0 0.0
        %5810 = vmatprep.subr.mxu0 0.0
        %5811 = vmatpush1.msra.mxu0 0.0
        %5812 = vmatprep.subr.mxu0 0.0
        %5813 = vmatpush1.msra.mxu0 0.0
        %5814 = vmatprep.subr.mxu0 0.0
        %5815 = vmatpush1.msra.mxu0 0.0
        %5816 = vmatprep.subr.mxu0 0.0
        %5817 = vmatpush1.msra.mxu0 0.0
        %5818 = vmatprep.subr.mxu0 0.0
        %5819 = vmatpush1.msra.mxu0 0.0
        %5820 = vmatprep.subr.mxu0 0.0
        %5821 = vmatpush1.msra.mxu0 0.0
        %5822 = vmatprep.subr.mxu0 0.0
        %5823 = vmatpush1.msra.mxu0 0.0
        %5824 = vmatprep.subr.mxu0 0.0
        %5825 = vmatpush1.msra.mxu0 0.0
        %5826 = vmatprep.subr.mxu0 %v5788
        %5827 = vmatpush1.msra.mxu0 %v5785
        %5828 = vmatprep.subr.mxu0 0.0
        %5829 = vmatpush2.msra.mxu0 0.0
        %5830 = vmatprep.subr.mxu0 0.0
        %5831 = vmatpush2.msra.mxu0 0.0
        %5832 = vmatprep.subr.mxu0 0.0
        %5833 = vmatpush2.msra.mxu0 0.0
        %5834 = vmatprep.subr.mxu0 0.0
        %5835 = vmatpush2.msra.mxu0 0.0
        %5836 = vmatprep.subr.mxu0 0.0
        %5837 = vmatpush2.msra.mxu0 0.0
        %5838 = vmatprep.subr.mxu0 0.0
        %5839 = vmatpush2.msra.mxu0 0.0
        %5840 = vmatprep.subr.mxu0 0.0
        %5841 = vmatpush2.msra.mxu0 0.0
        %5842 = vmatprep.subr.mxu0 0.0
        %5843 = vmatpush2.msra.mxu0 0.0
        %5844 = vmatprep.subr.mxu0 0.0
        %5845 = vmatpush2.msra.mxu0 0.0
        %5846 = vmatprep.subr.mxu0 0.0
        %5847 = vmatpush2.msra.mxu0 0.0
        %5848 = vmatprep.subr.mxu0 0.0
        %5849 = vmatpush2.msra.mxu0 0.0
        %5850 = vmatprep.subr.mxu0 0.0
        %5851 = vmatpush2.msra.mxu0 0.0
        %5852 = vmatprep.subr.mxu0 0.0
        %5853 = vmatpush2.msra.mxu0 0.0
        %5854 = vmatprep.subr.mxu0 0.0
        %5855 = vmatpush2.msra.mxu0 0.0
        %5856 = vmatprep.subr.mxu0 0.0
        %5857 = vmatpush2.msra.mxu0 0.0
        %5858 = vmatprep.subr.mxu0 0.0
        %5859 = vmatpush2.msra.mxu0 0.0
        %5860 = vmatprep.mubr.f32.mxu0 0.0
        %5861 = vmatmul.mubr.f32.gmra.mxu0 %v5782
        %v5862 = vpop.f32.mrf.mxu0
        %v5863 = vadd.f32 %v5706, %v5862
        %v5864 = vpop.f32.mrf.mxu0
        %v5865 = vadd.f32 %v5708, %v5864
        %5866 = vdwg.mxu0
        %5867 = vmatprep.subr.mxu0 0.0
        %5868 = vmatpush1.msra.mxu0 0.0
        %5869 = vmatprep.subr.mxu0 0.0
        %5870 = vmatpush1.msra.mxu0 0.0
        %5871 = vmatprep.subr.mxu0 0.0
        %5872 = vmatpush1.msra.mxu0 0.0
        %5873 = vmatprep.subr.mxu0 0.0
        %5874 = vmatpush1.msra.mxu0 0.0
        %5875 = vmatprep.subr.mxu0 0.0
        %5876 = vmatpush1.msra.mxu0 0.0
        %5877 = vmatprep.subr.mxu0 0.0
        %5878 = vmatpush1.msra.mxu0 0.0
        %5879 = vmatprep.subr.mxu0 0.0
        %5880 = vmatpush1.msra.mxu0 0.0
        %5881 = vmatprep.subr.mxu0 0.0
        %5882 = vmatpush1.msra.mxu0 0.0
        %5883 = vmatprep.subr.mxu0 0.0
        %5884 = vmatpush1.msra.mxu0 0.0
        %5885 = vmatprep.subr.mxu0 0.0
        %5886 = vmatpush1.msra.mxu0 0.0
        %5887 = vmatprep.subr.mxu0 0.0
        %5888 = vmatpush1.msra.mxu0 0.0
        %5889 = vmatprep.subr.mxu0 0.0
        %5890 = vmatpush1.msra.mxu0 0.0
        %5891 = vmatprep.subr.mxu0 0.0
        %5892 = vmatpush1.msra.mxu0 0.0
        %5893 = vmatprep.subr.mxu0 0.0
        %5894 = vmatpush1.msra.mxu0 0.0
        %5895 = vmatprep.subr.mxu0 0.0
        %5896 = vmatpush1.msra.mxu0 0.0
        %5897 = vmatprep.subr.mxu0 %v5794
        %5898 = vmatpush1.msra.mxu0 %v5791
        %5899 = vmatprep.subr.mxu0 0.0
        %5900 = vmatpush2.msra.mxu0 0.0
        %5901 = vmatprep.subr.mxu0 0.0
        %5902 = vmatpush2.msra.mxu0 0.0
        %5903 = vmatprep.subr.mxu0 0.0
        %5904 = vmatpush2.msra.mxu0 0.0
        %5905 = vmatprep.subr.mxu0 0.0
        %5906 = vmatpush2.msra.mxu0 0.0
        %5907 = vmatprep.subr.mxu0 0.0
        %5908 = vmatpush2.msra.mxu0 0.0
        %5909 = vmatprep.subr.mxu0 0.0
        %5910 = vmatpush2.msra.mxu0 0.0
        %5911 = vmatprep.subr.mxu0 0.0
        %5912 = vmatpush2.msra.mxu0 0.0
        %5913 = vmatprep.subr.mxu0 0.0
        %5914 = vmatpush2.msra.mxu0 0.0
        %5915 = vmatprep.subr.mxu0 0.0
        %5916 = vmatpush2.msra.mxu0 0.0
        %5917 = vmatprep.subr.mxu0 0.0
        %5918 = vmatpush2.msra.mxu0 0.0
        %5919 = vmatprep.subr.mxu0 0.0
        %5920 = vmatpush2.msra.mxu0 0.0
        %5921 = vmatprep.subr.mxu0 0.0
        %5922 = vmatpush2.msra.mxu0 0.0
        %5923 = vmatprep.subr.mxu0 0.0
        %5924 = vmatpush2.msra.mxu0 0.0
        %5925 = vmatprep.subr.mxu0 0.0
        %5926 = vmatpush2.msra.mxu0 0.0
        %5927 = vmatprep.subr.mxu0 0.0
        %5928 = vmatpush2.msra.mxu0 0.0
        %5929 = vmatprep.subr.mxu0 0.0
        %5930 = vmatpush2.msra.mxu0 0.0
        %5931 = vmatprep.mubr.f32.mxu0 0.0
        %5932 = vmatmul.mubr.f32.gmra.mxu0 %v5782
        %v5933 = vpop.f32.mrf.mxu0
        %v5934 = vadd.f32 %v5777, %v5933
        %v5935 = vpop.f32.mrf.mxu0
        %v5936 = vadd.f32 %v5779, %v5935
        %5937 = vdwg.mxu0
        %5938 = vrot.lane.b32.xlu0 %v5585, 71
        %v5939 = vpop.permute.xlu0 %5938
        %5940 = vrot.lane.b32.xlu0 %v5586, 71
        %v5941 = vpop.permute.xlu0 %5940
        %5942 = vrot.lane.b32.xlu0 %v5587, 71
        %v5943 = vpop.permute.xlu0 %5942
        %5944 = vrot.lane.b32.xlu0 %v5588, 71
        %v5945 = vpop.permute.xlu0 %5944
        %v5946 = vsel %vm669, %v5943, %v5945
        %v5947 = vsel %vm669, %v5941, %v5943
        %v5948 = vsel %vm669, %v5939, %v5941
        %v5949 = vsel %vm669, %v5945, %v5939
        %v5950 = vmul.f32 %v5949, %v680
        %v5951 = vmul.f32 %v5948, %v684
        %v5952 = vmul.f32 %v5947, %v688
        %v5953 = vmul.f32 %v5946, %v692
        %s5954 = scalar_lea.vmem %s3, 8
        %v5955 = vld [vmem:[%s5954] sm:$0xf]
        %v5957 = vsel %vm345, %v5955, 0
        %v5960 = vsel %vm349, %v5950, 0
        %v5963 = vsel %vm349, %v5951, 0
        %v5966 = vsel %vm349, %v5952, 0
        %v5969 = vsel %vm349, %v5953, 0
        %5971 = vmatprep.subr.mxu0 0.0
        %5972 = vmatpush1.msra.mxu0 0.0
        %5973 = vmatprep.subr.mxu0 0.0
        %5974 = vmatpush1.msra.mxu0 0.0
        %5975 = vmatprep.subr.mxu0 0.0
        %5976 = vmatpush1.msra.mxu0 0.0
        %5977 = vmatprep.subr.mxu0 0.0
        %5978 = vmatpush1.msra.mxu0 0.0
        %5979 = vmatprep.subr.mxu0 0.0
        %5980 = vmatpush1.msra.mxu0 0.0
        %5981 = vmatprep.subr.mxu0 0.0
        %5982 = vmatpush1.msra.mxu0 0.0
        %5983 = vmatprep.subr.mxu0 0.0
        %5984 = vmatpush1.msra.mxu0 0.0
        %5985 = vmatprep.subr.mxu0 0.0
        %5986 = vmatpush1.msra.mxu0 0.0
        %5987 = vmatprep.subr.mxu0 0.0
        %5988 = vmatpush1.msra.mxu0 0.0
        %5989 = vmatprep.subr.mxu0 0.0
        %5990 = vmatpush1.msra.mxu0 0.0
        %5991 = vmatprep.subr.mxu0 0.0
        %5992 = vmatpush1.msra.mxu0 0.0
        %5993 = vmatprep.subr.mxu0 0.0
        %5994 = vmatpush1.msra.mxu0 0.0
        %5995 = vmatprep.subr.mxu0 0.0
        %5996 = vmatpush1.msra.mxu0 0.0
        %5997 = vmatprep.subr.mxu0 0.0
        %5998 = vmatpush1.msra.mxu0 0.0
        %5999 = vmatprep.subr.mxu0 0.0
        %6000 = vmatpush1.msra.mxu0 0.0
        %6001 = vmatprep.subr.mxu0 %v5963
        %6002 = vmatpush1.msra.mxu0 %v5960
        %6003 = vmatprep.subr.mxu0 0.0
        %6004 = vmatpush2.msra.mxu0 0.0
        %6005 = vmatprep.subr.mxu0 0.0
        %6006 = vmatpush2.msra.mxu0 0.0
        %6007 = vmatprep.subr.mxu0 0.0
        %6008 = vmatpush2.msra.mxu0 0.0
        %6009 = vmatprep.subr.mxu0 0.0
        %6010 = vmatpush2.msra.mxu0 0.0
        %6011 = vmatprep.subr.mxu0 0.0
        %6012 = vmatpush2.msra.mxu0 0.0
        %6013 = vmatprep.subr.mxu0 0.0
        %6014 = vmatpush2.msra.mxu0 0.0
        %6015 = vmatprep.subr.mxu0 0.0
        %6016 = vmatpush2.msra.mxu0 0.0
        %6017 = vmatprep.subr.mxu0 0.0
        %6018 = vmatpush2.msra.mxu0 0.0
        %6019 = vmatprep.subr.mxu0 0.0
        %6020 = vmatpush2.msra.mxu0 0.0
        %6021 = vmatprep.subr.mxu0 0.0
        %6022 = vmatpush2.msra.mxu0 0.0
        %6023 = vmatprep.subr.mxu0 0.0
        %6024 = vmatpush2.msra.mxu0 0.0
        %6025 = vmatprep.subr.mxu0 0.0
        %6026 = vmatpush2.msra.mxu0 0.0
        %6027 = vmatprep.subr.mxu0 0.0
        %6028 = vmatpush2.msra.mxu0 0.0
        %6029 = vmatprep.subr.mxu0 0.0
        %6030 = vmatpush2.msra.mxu0 0.0
        %6031 = vmatprep.subr.mxu0 0.0
        %6032 = vmatpush2.msra.mxu0 0.0
        %6033 = vmatprep.subr.mxu0 0.0
        %6034 = vmatpush2.msra.mxu0 0.0
        %6035 = vmatprep.mubr.f32.mxu0 0.0
        %6036 = vmatmul.mubr.f32.gmra.mxu0 %v5957
        %v6037 = vpop.f32.mrf.mxu0
        %v6038 = vadd.f32 0.0, %v6037
        %v6039 = vpop.f32.mrf.mxu0
        %v6040 = vadd.f32 0.0, %v6039
        %6041 = vdwg.mxu0
        %6042 = vmatprep.subr.mxu0 0.0
        %6043 = vmatpush1.msra.mxu0 0.0
        %6044 = vmatprep.subr.mxu0 0.0
        %6045 = vmatpush1.msra.mxu0 0.0
        %6046 = vmatprep.subr.mxu0 0.0
        %6047 = vmatpush1.msra.mxu0 0.0
        %6048 = vmatprep.subr.mxu0 0.0
        %6049 = vmatpush1.msra.mxu0 0.0
        %6050 = vmatprep.subr.mxu0 0.0
        %6051 = vmatpush1.msra.mxu0 0.0
        %6052 = vmatprep.subr.mxu0 0.0
        %6053 = vmatpush1.msra.mxu0 0.0
        %6054 = vmatprep.subr.mxu0 0.0
        %6055 = vmatpush1.msra.mxu0 0.0
        %6056 = vmatprep.subr.mxu0 0.0
        %6057 = vmatpush1.msra.mxu0 0.0
        %6058 = vmatprep.subr.mxu0 0.0
        %6059 = vmatpush1.msra.mxu0 0.0
        %6060 = vmatprep.subr.mxu0 0.0
        %6061 = vmatpush1.msra.mxu0 0.0
        %6062 = vmatprep.subr.mxu0 0.0
        %6063 = vmatpush1.msra.mxu0 0.0
        %6064 = vmatprep.subr.mxu0 0.0
        %6065 = vmatpush1.msra.mxu0 0.0
        %6066 = vmatprep.subr.mxu0 0.0
        %6067 = vmatpush1.msra.mxu0 0.0
        %6068 = vmatprep.subr.mxu0 0.0
        %6069 = vmatpush1.msra.mxu0 0.0
        %6070 = vmatprep.subr.mxu0 0.0
        %6071 = vmatpush1.msra.mxu0 0.0
        %6072 = vmatprep.subr.mxu0 %v5969
        %6073 = vmatpush1.msra.mxu0 %v5966
        %6074 = vmatprep.subr.mxu0 0.0
        %6075 = vmatpush2.msra.mxu0 0.0
        %6076 = vmatprep.subr.mxu0 0.0
        %6077 = vmatpush2.msra.mxu0 0.0
        %6078 = vmatprep.subr.mxu0 0.0
        %6079 = vmatpush2.msra.mxu0 0.0
        %6080 = vmatprep.subr.mxu0 0.0
        %6081 = vmatpush2.msra.mxu0 0.0
        %6082 = vmatprep.subr.mxu0 0.0
        %6083 = vmatpush2.msra.mxu0 0.0
        %6084 = vmatprep.subr.mxu0 0.0
        %6085 = vmatpush2.msra.mxu0 0.0
        %6086 = vmatprep.subr.mxu0 0.0
        %6087 = vmatpush2.msra.mxu0 0.0
        %6088 = vmatprep.subr.mxu0 0.0
        %6089 = vmatpush2.msra.mxu0 0.0
        %6090 = vmatprep.subr.mxu0 0.0
        %6091 = vmatpush2.msra.mxu0 0.0
        %6092 = vmatprep.subr.mxu0 0.0
        %6093 = vmatpush2.msra.mxu0 0.0
        %6094 = vmatprep.subr.mxu0 0.0
        %6095 = vmatpush2.msra.mxu0 0.0
        %6096 = vmatprep.subr.mxu0 0.0
        %6097 = vmatpush2.msra.mxu0 0.0
        %6098 = vmatprep.subr.mxu0 0.0
        %6099 = vmatpush2.msra.mxu0 0.0
        %6100 = vmatprep.subr.mxu0 0.0
        %6101 = vmatpush2.msra.mxu0 0.0
        %6102 = vmatprep.subr.mxu0 0.0
        %6103 = vmatpush2.msra.mxu0 0.0
        %6104 = vmatprep.subr.mxu0 0.0
        %6105 = vmatpush2.msra.mxu0 0.0
        %6106 = vmatprep.mubr.f32.mxu0 0.0
        %6107 = vmatmul.mubr.f32.gmra.mxu0 %v5957
        %v6108 = vpop.f32.mrf.mxu0
        %v6109 = vadd.f32 0.0, %v6108
        %v6110 = vpop.f32.mrf.mxu0
        %v6111 = vadd.f32 0.0, %v6110
        %6112 = vdwg.mxu0
        %v6113 = vadd.f32 %v5863, %v6038
        %v6114 = vadd.f32 %v5865, %v6040
        %v6115 = vadd.f32 %v5934, %v6109
        %v6116 = vadd.f32 %v5936, %v6111
        %6117 = vrot.lane.b32.xlu0 %v5585, 65
        %v6118 = vpop.permute.xlu0 %6117
        %6119 = vrot.lane.b32.xlu0 %v5586, 65
        %v6120 = vpop.permute.xlu0 %6119
        %6121 = vrot.lane.b32.xlu0 %v5587, 65
        %v6122 = vpop.permute.xlu0 %6121
        %6123 = vrot.lane.b32.xlu0 %v5588, 65
        %v6124 = vpop.permute.xlu0 %6123
        %v6125 = vsel %vm872, %v6122, %v6124
        %v6126 = vsel %vm872, %v6120, %v6122
        %v6127 = vsel %vm872, %v6118, %v6120
        %v6128 = vsel %vm872, %v6124, %v6118
        %v6129 = vmul.f32 %v6128, %v883
        %v6130 = vmul.f32 %v6127, %v887
        %v6131 = vmul.f32 %v6126, %v891
        %v6132 = vmul.f32 %v6125, %v895
        %s6133 = scalar_lea.vmem %s3, 12
        %v6134 = vld [vmem:[%s6133] sm:$0xf]
        %v6136 = vsel %vm345, %v6134, 0
        %v6139 = vsel %vm349, %v6129, 0
        %v6142 = vsel %vm349, %v6130, 0
        %v6145 = vsel %vm349, %v6131, 0
        %v6148 = vsel %vm349, %v6132, 0
        %6150 = vmatprep.subr.mxu0 0.0
        %6151 = vmatpush1.msra.mxu0 0.0
        %6152 = vmatprep.subr.mxu0 0.0
        %6153 = vmatpush1.msra.mxu0 0.0
        %6154 = vmatprep.subr.mxu0 0.0
        %6155 = vmatpush1.msra.mxu0 0.0
        %6156 = vmatprep.subr.mxu0 0.0
        %6157 = vmatpush1.msra.mxu0 0.0
        %6158 = vmatprep.subr.mxu0 0.0
        %6159 = vmatpush1.msra.mxu0 0.0
        %6160 = vmatprep.subr.mxu0 0.0
        %6161 = vmatpush1.msra.mxu0 0.0
        %6162 = vmatprep.subr.mxu0 0.0
        %6163 = vmatpush1.msra.mxu0 0.0
        %6164 = vmatprep.subr.mxu0 0.0
        %6165 = vmatpush1.msra.mxu0 0.0
        %6166 = vmatprep.subr.mxu0 0.0
        %6167 = vmatpush1.msra.mxu0 0.0
        %6168 = vmatprep.subr.mxu0 0.0
        %6169 = vmatpush1.msra.mxu0 0.0
        %6170 = vmatprep.subr.mxu0 0.0
        %6171 = vmatpush1.msra.mxu0 0.0
        %6172 = vmatprep.subr.mxu0 0.0
        %6173 = vmatpush1.msra.mxu0 0.0
        %6174 = vmatprep.subr.mxu0 0.0
        %6175 = vmatpush1.msra.mxu0 0.0
        %6176 = vmatprep.subr.mxu0 0.0
        %6177 = vmatpush1.msra.mxu0 0.0
        %6178 = vmatprep.subr.mxu0 0.0
        %6179 = vmatpush1.msra.mxu0 0.0
        %6180 = vmatprep.subr.mxu0 %v6142
        %6181 = vmatpush1.msra.mxu0 %v6139
        %6182 = vmatprep.subr.mxu0 0.0
        %6183 = vmatpush2.msra.mxu0 0.0
        %6184 = vmatprep.subr.mxu0 0.0
        %6185 = vmatpush2.msra.mxu0 0.0
        %6186 = vmatprep.subr.mxu0 0.0
        %6187 = vmatpush2.msra.mxu0 0.0
        %6188 = vmatprep.subr.mxu0 0.0
        %6189 = vmatpush2.msra.mxu0 0.0
        %6190 = vmatprep.subr.mxu0 0.0
        %6191 = vmatpush2.msra.mxu0 0.0
        %6192 = vmatprep.subr.mxu0 0.0
        %6193 = vmatpush2.msra.mxu0 0.0
        %6194 = vmatprep.subr.mxu0 0.0
        %6195 = vmatpush2.msra.mxu0 0.0
        %6196 = vmatprep.subr.mxu0 0.0
        %6197 = vmatpush2.msra.mxu0 0.0
        %6198 = vmatprep.subr.mxu0 0.0
        %6199 = vmatpush2.msra.mxu0 0.0
        %6200 = vmatprep.subr.mxu0 0.0
        %6201 = vmatpush2.msra.mxu0 0.0
        %6202 = vmatprep.subr.mxu0 0.0
        %6203 = vmatpush2.msra.mxu0 0.0
        %6204 = vmatprep.subr.mxu0 0.0
        %6205 = vmatpush2.msra.mxu0 0.0
        %6206 = vmatprep.subr.mxu0 0.0
        %6207 = vmatpush2.msra.mxu0 0.0
        %6208 = vmatprep.subr.mxu0 0.0
        %6209 = vmatpush2.msra.mxu0 0.0
        %6210 = vmatprep.subr.mxu0 0.0
        %6211 = vmatpush2.msra.mxu0 0.0
        %6212 = vmatprep.subr.mxu0 0.0
        %6213 = vmatpush2.msra.mxu0 0.0
        %6214 = vmatprep.mubr.f32.mxu0 0.0
        %6215 = vmatmul.mubr.f32.gmra.mxu0 %v6136
        %v6216 = vpop.f32.mrf.mxu0
        %v6217 = vadd.f32 0.0, %v6216
        %v6218 = vpop.f32.mrf.mxu0
        %v6219 = vadd.f32 0.0, %v6218
        %6220 = vdwg.mxu0
        %6221 = vmatprep.subr.mxu0 0.0
        %6222 = vmatpush1.msra.mxu0 0.0
        %6223 = vmatprep.subr.mxu0 0.0
        %6224 = vmatpush1.msra.mxu0 0.0
        %6225 = vmatprep.subr.mxu0 0.0
        %6226 = vmatpush1.msra.mxu0 0.0
        %6227 = vmatprep.subr.mxu0 0.0
        %6228 = vmatpush1.msra.mxu0 0.0
        %6229 = vmatprep.subr.mxu0 0.0
        %6230 = vmatpush1.msra.mxu0 0.0
        %6231 = vmatprep.subr.mxu0 0.0
        %6232 = vmatpush1.msra.mxu0 0.0
        %6233 = vmatprep.subr.mxu0 0.0
        %6234 = vmatpush1.msra.mxu0 0.0
        %6235 = vmatprep.subr.mxu0 0.0
        %6236 = vmatpush1.msra.mxu0 0.0
        %6237 = vmatprep.subr.mxu0 0.0
        %6238 = vmatpush1.msra.mxu0 0.0
        %6239 = vmatprep.subr.mxu0 0.0
        %6240 = vmatpush1.msra.mxu0 0.0
        %6241 = vmatprep.subr.mxu0 0.0
        %6242 = vmatpush1.msra.mxu0 0.0
        %6243 = vmatprep.subr.mxu0 0.0
        %6244 = vmatpush1.msra.mxu0 0.0
        %6245 = vmatprep.subr.mxu0 0.0
        %6246 = vmatpush1.msra.mxu0 0.0
        %6247 = vmatprep.subr.mxu0 0.0
        %6248 = vmatpush1.msra.mxu0 0.0
        %6249 = vmatprep.subr.mxu0 0.0
        %6250 = vmatpush1.msra.mxu0 0.0
        %6251 = vmatprep.subr.mxu0 %v6148
        %6252 = vmatpush1.msra.mxu0 %v6145
        %6253 = vmatprep.subr.mxu0 0.0
        %6254 = vmatpush2.msra.mxu0 0.0
        %6255 = vmatprep.subr.mxu0 0.0
        %6256 = vmatpush2.msra.mxu0 0.0
        %6257 = vmatprep.subr.mxu0 0.0
        %6258 = vmatpush2.msra.mxu0 0.0
        %6259 = vmatprep.subr.mxu0 0.0
        %6260 = vmatpush2.msra.mxu0 0.0
        %6261 = vmatprep.subr.mxu0 0.0
        %6262 = vmatpush2.msra.mxu0 0.0
        %6263 = vmatprep.subr.mxu0 0.0
        %6264 = vmatpush2.msra.mxu0 0.0
        %6265 = vmatprep.subr.mxu0 0.0
        %6266 = vmatpush2.msra.mxu0 0.0
        %6267 = vmatprep.subr.mxu0 0.0
        %6268 = vmatpush2.msra.mxu0 0.0
        %6269 = vmatprep.subr.mxu0 0.0
        %6270 = vmatpush2.msra.mxu0 0.0
        %6271 = vmatprep.subr.mxu0 0.0
        %6272 = vmatpush2.msra.mxu0 0.0
        %6273 = vmatprep.subr.mxu0 0.0
        %6274 = vmatpush2.msra.mxu0 0.0
        %6275 = vmatprep.subr.mxu0 0.0
        %6276 = vmatpush2.msra.mxu0 0.0
        %6277 = vmatprep.subr.mxu0 0.0
        %6278 = vmatpush2.msra.mxu0 0.0
        %6279 = vmatprep.subr.mxu0 0.0
        %6280 = vmatpush2.msra.mxu0 0.0
        %6281 = vmatprep.subr.mxu0 0.0
        %6282 = vmatpush2.msra.mxu0 0.0
        %6283 = vmatprep.subr.mxu0 0.0
        %6284 = vmatpush2.msra.mxu0 0.0
        %6285 = vmatprep.mubr.f32.mxu0 0.0
        %6286 = vmatmul.mubr.f32.gmra.mxu0 %v6136
        %v6287 = vpop.f32.mrf.mxu0
        %v6288 = vadd.f32 0.0, %v6287
        %v6289 = vpop.f32.mrf.mxu0
        %v6290 = vadd.f32 0.0, %v6289
        %6291 = vdwg.mxu0
        %v6292 = vadd.f32 %v6113, %v6217
        %v6293 = vadd.f32 %v6114, %v6219
        %v6294 = vadd.f32 %v6115, %v6288
        %v6295 = vadd.f32 %v6116, %v6290
        %6296 = vrot.lane.b32.xlu0 %v5585, 64
        %v6297 = vpop.permute.xlu0 %6296
        %6298 = vrot.lane.b32.xlu0 %v5586, 64
        %v6299 = vpop.permute.xlu0 %6298
        %6300 = vrot.lane.b32.xlu0 %v5587, 64
        %v6301 = vpop.permute.xlu0 %6300
        %6302 = vrot.lane.b32.xlu0 %v5588, 64
        %v6303 = vpop.permute.xlu0 %6302
        %v6304 = vsel %vm1075, %v6301, %v6303
        %v6305 = vsel %vm1075, %v6299, %v6301
        %v6306 = vsel %vm1075, %v6297, %v6299
        %v6307 = vsel %vm1075, %v6303, %v6297
        %v6308 = vmul.f32 %v6307, %v1086
        %v6309 = vmul.f32 %v6306, %v1090
        %v6310 = vmul.f32 %v6305, %v1094
        %v6311 = vmul.f32 %v6304, %v1098
        %s6312 = scalar_lea.vmem %s3, 16
        %v6313 = vld [vmem:[%s6312] sm:$0xf]
        %v6315 = vsel %vm345, %v6313, 0
        %v6318 = vsel %vm349, %v6308, 0
        %v6321 = vsel %vm349, %v6309, 0
        %v6324 = vsel %vm349, %v6310, 0
        %v6327 = vsel %vm349, %v6311, 0
        %6329 = vmatprep.subr.mxu0 0.0
        %6330 = vmatpush1.msra.mxu0 0.0
        %6331 = vmatprep.subr.mxu0 0.0
        %6332 = vmatpush1.msra.mxu0 0.0
        %6333 = vmatprep.subr.mxu0 0.0
        %6334 = vmatpush1.msra.mxu0 0.0
        %6335 = vmatprep.subr.mxu0 0.0
        %6336 = vmatpush1.msra.mxu0 0.0
        %6337 = vmatprep.subr.mxu0 0.0
        %6338 = vmatpush1.msra.mxu0 0.0
        %6339 = vmatprep.subr.mxu0 0.0
        %6340 = vmatpush1.msra.mxu0 0.0
        %6341 = vmatprep.subr.mxu0 0.0
        %6342 = vmatpush1.msra.mxu0 0.0
        %6343 = vmatprep.subr.mxu0 0.0
        %6344 = vmatpush1.msra.mxu0 0.0
        %6345 = vmatprep.subr.mxu0 0.0
        %6346 = vmatpush1.msra.mxu0 0.0
        %6347 = vmatprep.subr.mxu0 0.0
        %6348 = vmatpush1.msra.mxu0 0.0
        %6349 = vmatprep.subr.mxu0 0.0
        %6350 = vmatpush1.msra.mxu0 0.0
        %6351 = vmatprep.subr.mxu0 0.0
        %6352 = vmatpush1.msra.mxu0 0.0
        %6353 = vmatprep.subr.mxu0 0.0
        %6354 = vmatpush1.msra.mxu0 0.0
        %6355 = vmatprep.subr.mxu0 0.0
        %6356 = vmatpush1.msra.mxu0 0.0
        %6357 = vmatprep.subr.mxu0 0.0
        %6358 = vmatpush1.msra.mxu0 0.0
        %6359 = vmatprep.subr.mxu0 %v6321
        %6360 = vmatpush1.msra.mxu0 %v6318
        %6361 = vmatprep.subr.mxu0 0.0
        %6362 = vmatpush2.msra.mxu0 0.0
        %6363 = vmatprep.subr.mxu0 0.0
        %6364 = vmatpush2.msra.mxu0 0.0
        %6365 = vmatprep.subr.mxu0 0.0
        %6366 = vmatpush2.msra.mxu0 0.0
        %6367 = vmatprep.subr.mxu0 0.0
        %6368 = vmatpush2.msra.mxu0 0.0
        %6369 = vmatprep.subr.mxu0 0.0
        %6370 = vmatpush2.msra.mxu0 0.0
        %6371 = vmatprep.subr.mxu0 0.0
        %6372 = vmatpush2.msra.mxu0 0.0
        %6373 = vmatprep.subr.mxu0 0.0
        %6374 = vmatpush2.msra.mxu0 0.0
        %6375 = vmatprep.subr.mxu0 0.0
        %6376 = vmatpush2.msra.mxu0 0.0
        %6377 = vmatprep.subr.mxu0 0.0
        %6378 = vmatpush2.msra.mxu0 0.0
        %6379 = vmatprep.subr.mxu0 0.0
        %6380 = vmatpush2.msra.mxu0 0.0
        %6381 = vmatprep.subr.mxu0 0.0
        %6382 = vmatpush2.msra.mxu0 0.0
        %6383 = vmatprep.subr.mxu0 0.0
        %6384 = vmatpush2.msra.mxu0 0.0
        %6385 = vmatprep.subr.mxu0 0.0
        %6386 = vmatpush2.msra.mxu0 0.0
        %6387 = vmatprep.subr.mxu0 0.0
        %6388 = vmatpush2.msra.mxu0 0.0
        %6389 = vmatprep.subr.mxu0 0.0
        %6390 = vmatpush2.msra.mxu0 0.0
        %6391 = vmatprep.subr.mxu0 0.0
        %6392 = vmatpush2.msra.mxu0 0.0
        %6393 = vmatprep.mubr.f32.mxu0 0.0
        %6394 = vmatmul.mubr.f32.gmra.mxu0 %v6315
        %v6395 = vpop.f32.mrf.mxu0
        %v6396 = vadd.f32 0.0, %v6395
        %v6397 = vpop.f32.mrf.mxu0
        %v6398 = vadd.f32 0.0, %v6397
        %6399 = vdwg.mxu0
        %6400 = vmatprep.subr.mxu0 0.0
        %6401 = vmatpush1.msra.mxu0 0.0
        %6402 = vmatprep.subr.mxu0 0.0
        %6403 = vmatpush1.msra.mxu0 0.0
        %6404 = vmatprep.subr.mxu0 0.0
        %6405 = vmatpush1.msra.mxu0 0.0
        %6406 = vmatprep.subr.mxu0 0.0
        %6407 = vmatpush1.msra.mxu0 0.0
        %6408 = vmatprep.subr.mxu0 0.0
        %6409 = vmatpush1.msra.mxu0 0.0
        %6410 = vmatprep.subr.mxu0 0.0
        %6411 = vmatpush1.msra.mxu0 0.0
        %6412 = vmatprep.subr.mxu0 0.0
        %6413 = vmatpush1.msra.mxu0 0.0
        %6414 = vmatprep.subr.mxu0 0.0
        %6415 = vmatpush1.msra.mxu0 0.0
        %6416 = vmatprep.subr.mxu0 0.0
        %6417 = vmatpush1.msra.mxu0 0.0
        %6418 = vmatprep.subr.mxu0 0.0
        %6419 = vmatpush1.msra.mxu0 0.0
        %6420 = vmatprep.subr.mxu0 0.0
        %6421 = vmatpush1.msra.mxu0 0.0
        %6422 = vmatprep.subr.mxu0 0.0
        %6423 = vmatpush1.msra.mxu0 0.0
        %6424 = vmatprep.subr.mxu0 0.0
        %6425 = vmatpush1.msra.mxu0 0.0
        %6426 = vmatprep.subr.mxu0 0.0
        %6427 = vmatpush1.msra.mxu0 0.0
        %6428 = vmatprep.subr.mxu0 0.0
        %6429 = vmatpush1.msra.mxu0 0.0
        %6430 = vmatprep.subr.mxu0 %v6327
        %6431 = vmatpush1.msra.mxu0 %v6324
        %6432 = vmatprep.subr.mxu0 0.0
        %6433 = vmatpush2.msra.mxu0 0.0
        %6434 = vmatprep.subr.mxu0 0.0
        %6435 = vmatpush2.msra.mxu0 0.0
        %6436 = vmatprep.subr.mxu0 0.0
        %6437 = vmatpush2.msra.mxu0 0.0
        %6438 = vmatprep.subr.mxu0 0.0
        %6439 = vmatpush2.msra.mxu0 0.0
        %6440 = vmatprep.subr.mxu0 0.0
        %6441 = vmatpush2.msra.mxu0 0.0
        %6442 = vmatprep.subr.mxu0 0.0
        %6443 = vmatpush2.msra.mxu0 0.0
        %6444 = vmatprep.subr.mxu0 0.0
        %6445 = vmatpush2.msra.mxu0 0.0
        %6446 = vmatprep.subr.mxu0 0.0
        %6447 = vmatpush2.msra.mxu0 0.0
        %6448 = vmatprep.subr.mxu0 0.0
        %6449 = vmatpush2.msra.mxu0 0.0
        %6450 = vmatprep.subr.mxu0 0.0
        %6451 = vmatpush2.msra.mxu0 0.0
        %6452 = vmatprep.subr.mxu0 0.0
        %6453 = vmatpush2.msra.mxu0 0.0
        %6454 = vmatprep.subr.mxu0 0.0
        %6455 = vmatpush2.msra.mxu0 0.0
        %6456 = vmatprep.subr.mxu0 0.0
        %6457 = vmatpush2.msra.mxu0 0.0
        %6458 = vmatprep.subr.mxu0 0.0
        %6459 = vmatpush2.msra.mxu0 0.0
        %6460 = vmatprep.subr.mxu0 0.0
        %6461 = vmatpush2.msra.mxu0 0.0
        %6462 = vmatprep.subr.mxu0 0.0
        %6463 = vmatpush2.msra.mxu0 0.0
        %6464 = vmatprep.mubr.f32.mxu0 0.0
        %6465 = vmatmul.mubr.f32.gmra.mxu0 %v6315
        %v6466 = vpop.f32.mrf.mxu0
        %v6467 = vadd.f32 0.0, %v6466
        %v6468 = vpop.f32.mrf.mxu0
        %v6469 = vadd.f32 0.0, %v6468
        %6470 = vdwg.mxu0
        %v6471 = vadd.f32 %v6292, %v6396
        %v6472 = vadd.f32 %v6293, %v6398
        %v6473 = vadd.f32 %v6294, %v6467
        %v6474 = vadd.f32 %v6295, %v6469
        %6475 = vrot.lane.b32.xlu0 %v5585, 63
        %v6476 = vpop.permute.xlu0 %6475
        %6477 = vrot.lane.b32.xlu0 %v5586, 63
        %v6478 = vpop.permute.xlu0 %6477
        %6479 = vrot.lane.b32.xlu0 %v5587, 63
        %v6480 = vpop.permute.xlu0 %6479
        %6481 = vrot.lane.b32.xlu0 %v5588, 63
        %v6482 = vpop.permute.xlu0 %6481
        %v6483 = vsel %vm1278, %v6480, %v6482
        %v6484 = vsel %vm1278, %v6478, %v6480
        %v6485 = vsel %vm1278, %v6476, %v6478
        %v6486 = vsel %vm1278, %v6482, %v6476
        %v6487 = vmul.f32 %v6486, %v1289
        %v6488 = vmul.f32 %v6485, %v1293
        %v6489 = vmul.f32 %v6484, %v1297
        %v6490 = vmul.f32 %v6483, %v1301
        %s6491 = scalar_lea.vmem %s3, 20
        %v6492 = vld [vmem:[%s6491] sm:$0xf]
        %v6494 = vsel %vm345, %v6492, 0
        %v6497 = vsel %vm349, %v6487, 0
        %v6500 = vsel %vm349, %v6488, 0
        %v6503 = vsel %vm349, %v6489, 0
        %v6506 = vsel %vm349, %v6490, 0
        %6508 = vmatprep.subr.mxu0 0.0
        %6509 = vmatpush1.msra.mxu0 0.0
        %6510 = vmatprep.subr.mxu0 0.0
        %6511 = vmatpush1.msra.mxu0 0.0
        %6512 = vmatprep.subr.mxu0 0.0
        %6513 = vmatpush1.msra.mxu0 0.0
        %6514 = vmatprep.subr.mxu0 0.0
        %6515 = vmatpush1.msra.mxu0 0.0
        %6516 = vmatprep.subr.mxu0 0.0
        %6517 = vmatpush1.msra.mxu0 0.0
        %6518 = vmatprep.subr.mxu0 0.0
        %6519 = vmatpush1.msra.mxu0 0.0
        %6520 = vmatprep.subr.mxu0 0.0
        %6521 = vmatpush1.msra.mxu0 0.0
        %6522 = vmatprep.subr.mxu0 0.0
        %6523 = vmatpush1.msra.mxu0 0.0
        %6524 = vmatprep.subr.mxu0 0.0
        %6525 = vmatpush1.msra.mxu0 0.0
        %6526 = vmatprep.subr.mxu0 0.0
        %6527 = vmatpush1.msra.mxu0 0.0
        %6528 = vmatprep.subr.mxu0 0.0
        %6529 = vmatpush1.msra.mxu0 0.0
        %6530 = vmatprep.subr.mxu0 0.0
        %6531 = vmatpush1.msra.mxu0 0.0
        %6532 = vmatprep.subr.mxu0 0.0
        %6533 = vmatpush1.msra.mxu0 0.0
        %6534 = vmatprep.subr.mxu0 0.0
        %6535 = vmatpush1.msra.mxu0 0.0
        %6536 = vmatprep.subr.mxu0 0.0
        %6537 = vmatpush1.msra.mxu0 0.0
        %6538 = vmatprep.subr.mxu0 %v6500
        %6539 = vmatpush1.msra.mxu0 %v6497
        %6540 = vmatprep.subr.mxu0 0.0
        %6541 = vmatpush2.msra.mxu0 0.0
        %6542 = vmatprep.subr.mxu0 0.0
        %6543 = vmatpush2.msra.mxu0 0.0
        %6544 = vmatprep.subr.mxu0 0.0
        %6545 = vmatpush2.msra.mxu0 0.0
        %6546 = vmatprep.subr.mxu0 0.0
        %6547 = vmatpush2.msra.mxu0 0.0
        %6548 = vmatprep.subr.mxu0 0.0
        %6549 = vmatpush2.msra.mxu0 0.0
        %6550 = vmatprep.subr.mxu0 0.0
        %6551 = vmatpush2.msra.mxu0 0.0
        %6552 = vmatprep.subr.mxu0 0.0
        %6553 = vmatpush2.msra.mxu0 0.0
        %6554 = vmatprep.subr.mxu0 0.0
        %6555 = vmatpush2.msra.mxu0 0.0
        %6556 = vmatprep.subr.mxu0 0.0
        %6557 = vmatpush2.msra.mxu0 0.0
        %6558 = vmatprep.subr.mxu0 0.0
        %6559 = vmatpush2.msra.mxu0 0.0
        %6560 = vmatprep.subr.mxu0 0.0
        %6561 = vmatpush2.msra.mxu0 0.0
        %6562 = vmatprep.subr.mxu0 0.0
        %6563 = vmatpush2.msra.mxu0 0.0
        %6564 = vmatprep.subr.mxu0 0.0
        %6565 = vmatpush2.msra.mxu0 0.0
        %6566 = vmatprep.subr.mxu0 0.0
        %6567 = vmatpush2.msra.mxu0 0.0
        %6568 = vmatprep.subr.mxu0 0.0
        %6569 = vmatpush2.msra.mxu0 0.0
        %6570 = vmatprep.subr.mxu0 0.0
        %6571 = vmatpush2.msra.mxu0 0.0
        %6572 = vmatprep.mubr.f32.mxu0 0.0
        %6573 = vmatmul.mubr.f32.gmra.mxu0 %v6494
        %v6574 = vpop.f32.mrf.mxu0
        %v6575 = vadd.f32 0.0, %v6574
        %v6576 = vpop.f32.mrf.mxu0
        %v6577 = vadd.f32 0.0, %v6576
        %6578 = vdwg.mxu0
        %6579 = vmatprep.subr.mxu0 0.0
        %6580 = vmatpush1.msra.mxu0 0.0
        %6581 = vmatprep.subr.mxu0 0.0
        %6582 = vmatpush1.msra.mxu0 0.0
        %6583 = vmatprep.subr.mxu0 0.0
        %6584 = vmatpush1.msra.mxu0 0.0
        %6585 = vmatprep.subr.mxu0 0.0
        %6586 = vmatpush1.msra.mxu0 0.0
        %6587 = vmatprep.subr.mxu0 0.0
        %6588 = vmatpush1.msra.mxu0 0.0
        %6589 = vmatprep.subr.mxu0 0.0
        %6590 = vmatpush1.msra.mxu0 0.0
        %6591 = vmatprep.subr.mxu0 0.0
        %6592 = vmatpush1.msra.mxu0 0.0
        %6593 = vmatprep.subr.mxu0 0.0
        %6594 = vmatpush1.msra.mxu0 0.0
        %6595 = vmatprep.subr.mxu0 0.0
        %6596 = vmatpush1.msra.mxu0 0.0
        %6597 = vmatprep.subr.mxu0 0.0
        %6598 = vmatpush1.msra.mxu0 0.0
        %6599 = vmatprep.subr.mxu0 0.0
        %6600 = vmatpush1.msra.mxu0 0.0
        %6601 = vmatprep.subr.mxu0 0.0
        %6602 = vmatpush1.msra.mxu0 0.0
        %6603 = vmatprep.subr.mxu0 0.0
        %6604 = vmatpush1.msra.mxu0 0.0
        %6605 = vmatprep.subr.mxu0 0.0
        %6606 = vmatpush1.msra.mxu0 0.0
        %6607 = vmatprep.subr.mxu0 0.0
        %6608 = vmatpush1.msra.mxu0 0.0
        %6609 = vmatprep.subr.mxu0 %v6506
        %6610 = vmatpush1.msra.mxu0 %v6503
        %6611 = vmatprep.subr.mxu0 0.0
        %6612 = vmatpush2.msra.mxu0 0.0
        %6613 = vmatprep.subr.mxu0 0.0
        %6614 = vmatpush2.msra.mxu0 0.0
        %6615 = vmatprep.subr.mxu0 0.0
        %6616 = vmatpush2.msra.mxu0 0.0
        %6617 = vmatprep.subr.mxu0 0.0
        %6618 = vmatpush2.msra.mxu0 0.0
        %6619 = vmatprep.subr.mxu0 0.0
        %6620 = vmatpush2.msra.mxu0 0.0
        %6621 = vmatprep.subr.mxu0 0.0
        %6622 = vmatpush2.msra.mxu0 0.0
        %6623 = vmatprep.subr.mxu0 0.0
        %6624 = vmatpush2.msra.mxu0 0.0
        %6625 = vmatprep.subr.mxu0 0.0
        %6626 = vmatpush2.msra.mxu0 0.0
        %6627 = vmatprep.subr.mxu0 0.0
        %6628 = vmatpush2.msra.mxu0 0.0
        %6629 = vmatprep.subr.mxu0 0.0
        %6630 = vmatpush2.msra.mxu0 0.0
        %6631 = vmatprep.subr.mxu0 0.0
        %6632 = vmatpush2.msra.mxu0 0.0
        %6633 = vmatprep.subr.mxu0 0.0
        %6634 = vmatpush2.msra.mxu0 0.0
        %6635 = vmatprep.subr.mxu0 0.0
        %6636 = vmatpush2.msra.mxu0 0.0
        %6637 = vmatprep.subr.mxu0 0.0
        %6638 = vmatpush2.msra.mxu0 0.0
        %6639 = vmatprep.subr.mxu0 0.0
        %6640 = vmatpush2.msra.mxu0 0.0
        %6641 = vmatprep.subr.mxu0 0.0
        %6642 = vmatpush2.msra.mxu0 0.0
        %6643 = vmatprep.mubr.f32.mxu0 0.0
        %6644 = vmatmul.mubr.f32.gmra.mxu0 %v6494
        %v6645 = vpop.f32.mrf.mxu0
        %v6646 = vadd.f32 0.0, %v6645
        %v6647 = vpop.f32.mrf.mxu0
        %v6648 = vadd.f32 0.0, %v6647
        %6649 = vdwg.mxu0
        %v6650 = vadd.f32 %v6471, %v6575
        %v6651 = vadd.f32 %v6472, %v6577
        %v6652 = vadd.f32 %v6473, %v6646
        %v6653 = vadd.f32 %v6474, %v6648
        %6654 = vrot.lane.b32.xlu0 %v5585, 57
        %v6655 = vpop.permute.xlu0 %6654
        %6656 = vrot.lane.b32.xlu0 %v5586, 57
        %v6657 = vpop.permute.xlu0 %6656
        %6658 = vrot.lane.b32.xlu0 %v5587, 57
        %v6659 = vpop.permute.xlu0 %6658
        %6660 = vrot.lane.b32.xlu0 %v5588, 57
        %v6661 = vpop.permute.xlu0 %6660
        %v6662 = vsel %vm1481, %v6659, %v6661
        %v6663 = vsel %vm1481, %v6657, %v6659
        %v6664 = vsel %vm1481, %v6655, %v6657
        %v6665 = vsel %vm1481, %v6661, %v6655
        %v6666 = vmul.f32 %v6665, %v1492
        %v6667 = vmul.f32 %v6664, %v1496
        %v6668 = vmul.f32 %v6663, %v1500
        %v6669 = vmul.f32 %v6662, %v1504
        %s6670 = scalar_lea.vmem %s3, 24
        %v6671 = vld [vmem:[%s6670] sm:$0xf]
        %v6673 = vsel %vm345, %v6671, 0
        %v6676 = vsel %vm349, %v6666, 0
        %v6679 = vsel %vm349, %v6667, 0
        %v6682 = vsel %vm349, %v6668, 0
        %v6685 = vsel %vm349, %v6669, 0
        %6687 = vmatprep.subr.mxu0 0.0
        %6688 = vmatpush1.msra.mxu0 0.0
        %6689 = vmatprep.subr.mxu0 0.0
        %6690 = vmatpush1.msra.mxu0 0.0
        %6691 = vmatprep.subr.mxu0 0.0
        %6692 = vmatpush1.msra.mxu0 0.0
        %6693 = vmatprep.subr.mxu0 0.0
        %6694 = vmatpush1.msra.mxu0 0.0
        %6695 = vmatprep.subr.mxu0 0.0
        %6696 = vmatpush1.msra.mxu0 0.0
        %6697 = vmatprep.subr.mxu0 0.0
        %6698 = vmatpush1.msra.mxu0 0.0
        %6699 = vmatprep.subr.mxu0 0.0
        %6700 = vmatpush1.msra.mxu0 0.0
        %6701 = vmatprep.subr.mxu0 0.0
        %6702 = vmatpush1.msra.mxu0 0.0
        %6703 = vmatprep.subr.mxu0 0.0
        %6704 = vmatpush1.msra.mxu0 0.0
        %6705 = vmatprep.subr.mxu0 0.0
        %6706 = vmatpush1.msra.mxu0 0.0
        %6707 = vmatprep.subr.mxu0 0.0
        %6708 = vmatpush1.msra.mxu0 0.0
        %6709 = vmatprep.subr.mxu0 0.0
        %6710 = vmatpush1.msra.mxu0 0.0
        %6711 = vmatprep.subr.mxu0 0.0
        %6712 = vmatpush1.msra.mxu0 0.0
        %6713 = vmatprep.subr.mxu0 0.0
        %6714 = vmatpush1.msra.mxu0 0.0
        %6715 = vmatprep.subr.mxu0 0.0
        %6716 = vmatpush1.msra.mxu0 0.0
        %6717 = vmatprep.subr.mxu0 %v6679
        %6718 = vmatpush1.msra.mxu0 %v6676
        %6719 = vmatprep.subr.mxu0 0.0
        %6720 = vmatpush2.msra.mxu0 0.0
        %6721 = vmatprep.subr.mxu0 0.0
        %6722 = vmatpush2.msra.mxu0 0.0
        %6723 = vmatprep.subr.mxu0 0.0
        %6724 = vmatpush2.msra.mxu0 0.0
        %6725 = vmatprep.subr.mxu0 0.0
        %6726 = vmatpush2.msra.mxu0 0.0
        %6727 = vmatprep.subr.mxu0 0.0
        %6728 = vmatpush2.msra.mxu0 0.0
        %6729 = vmatprep.subr.mxu0 0.0
        %6730 = vmatpush2.msra.mxu0 0.0
        %6731 = vmatprep.subr.mxu0 0.0
        %6732 = vmatpush2.msra.mxu0 0.0
        %6733 = vmatprep.subr.mxu0 0.0
        %6734 = vmatpush2.msra.mxu0 0.0
        %6735 = vmatprep.subr.mxu0 0.0
        %6736 = vmatpush2.msra.mxu0 0.0
        %6737 = vmatprep.subr.mxu0 0.0
        %6738 = vmatpush2.msra.mxu0 0.0
        %6739 = vmatprep.subr.mxu0 0.0
        %6740 = vmatpush2.msra.mxu0 0.0
        %6741 = vmatprep.subr.mxu0 0.0
        %6742 = vmatpush2.msra.mxu0 0.0
        %6743 = vmatprep.subr.mxu0 0.0
        %6744 = vmatpush2.msra.mxu0 0.0
        %6745 = vmatprep.subr.mxu0 0.0
        %6746 = vmatpush2.msra.mxu0 0.0
        %6747 = vmatprep.subr.mxu0 0.0
        %6748 = vmatpush2.msra.mxu0 0.0
        %6749 = vmatprep.subr.mxu0 0.0
        %6750 = vmatpush2.msra.mxu0 0.0
        %6751 = vmatprep.mubr.f32.mxu0 0.0
        %6752 = vmatmul.mubr.f32.gmra.mxu0 %v6673
        %v6753 = vpop.f32.mrf.mxu0
        %v6754 = vadd.f32 0.0, %v6753
        %v6755 = vpop.f32.mrf.mxu0
        %v6756 = vadd.f32 0.0, %v6755
        %6757 = vdwg.mxu0
        %6758 = vmatprep.subr.mxu0 0.0
        %6759 = vmatpush1.msra.mxu0 0.0
        %6760 = vmatprep.subr.mxu0 0.0
        %6761 = vmatpush1.msra.mxu0 0.0
        %6762 = vmatprep.subr.mxu0 0.0
        %6763 = vmatpush1.msra.mxu0 0.0
        %6764 = vmatprep.subr.mxu0 0.0
        %6765 = vmatpush1.msra.mxu0 0.0
        %6766 = vmatprep.subr.mxu0 0.0
        %6767 = vmatpush1.msra.mxu0 0.0
        %6768 = vmatprep.subr.mxu0 0.0
        %6769 = vmatpush1.msra.mxu0 0.0
        %6770 = vmatprep.subr.mxu0 0.0
        %6771 = vmatpush1.msra.mxu0 0.0
        %6772 = vmatprep.subr.mxu0 0.0
        %6773 = vmatpush1.msra.mxu0 0.0
        %6774 = vmatprep.subr.mxu0 0.0
        %6775 = vmatpush1.msra.mxu0 0.0
        %6776 = vmatprep.subr.mxu0 0.0
        %6777 = vmatpush1.msra.mxu0 0.0
        %6778 = vmatprep.subr.mxu0 0.0
        %6779 = vmatpush1.msra.mxu0 0.0
        %6780 = vmatprep.subr.mxu0 0.0
        %6781 = vmatpush1.msra.mxu0 0.0
        %6782 = vmatprep.subr.mxu0 0.0
        %6783 = vmatpush1.msra.mxu0 0.0
        %6784 = vmatprep.subr.mxu0 0.0
        %6785 = vmatpush1.msra.mxu0 0.0
        %6786 = vmatprep.subr.mxu0 0.0
        %6787 = vmatpush1.msra.mxu0 0.0
        %6788 = vmatprep.subr.mxu0 %v6685
        %6789 = vmatpush1.msra.mxu0 %v6682
        %6790 = vmatprep.subr.mxu0 0.0
        %6791 = vmatpush2.msra.mxu0 0.0
        %6792 = vmatprep.subr.mxu0 0.0
        %6793 = vmatpush2.msra.mxu0 0.0
        %6794 = vmatprep.subr.mxu0 0.0
        %6795 = vmatpush2.msra.mxu0 0.0
        %6796 = vmatprep.subr.mxu0 0.0
        %6797 = vmatpush2.msra.mxu0 0.0
        %6798 = vmatprep.subr.mxu0 0.0
        %6799 = vmatpush2.msra.mxu0 0.0
        %6800 = vmatprep.subr.mxu0 0.0
        %6801 = vmatpush2.msra.mxu0 0.0
        %6802 = vmatprep.subr.mxu0 0.0
        %6803 = vmatpush2.msra.mxu0 0.0
        %6804 = vmatprep.subr.mxu0 0.0
        %6805 = vmatpush2.msra.mxu0 0.0
        %6806 = vmatprep.subr.mxu0 0.0
        %6807 = vmatpush2.msra.mxu0 0.0
        %6808 = vmatprep.subr.mxu0 0.0
        %6809 = vmatpush2.msra.mxu0 0.0
        %6810 = vmatprep.subr.mxu0 0.0
        %6811 = vmatpush2.msra.mxu0 0.0
        %6812 = vmatprep.subr.mxu0 0.0
        %6813 = vmatpush2.msra.mxu0 0.0
        %6814 = vmatprep.subr.mxu0 0.0
        %6815 = vmatpush2.msra.mxu0 0.0
        %6816 = vmatprep.subr.mxu0 0.0
        %6817 = vmatpush2.msra.mxu0 0.0
        %6818 = vmatprep.subr.mxu0 0.0
        %6819 = vmatpush2.msra.mxu0 0.0
        %6820 = vmatprep.subr.mxu0 0.0
        %6821 = vmatpush2.msra.mxu0 0.0
        %6822 = vmatprep.mubr.f32.mxu0 0.0
        %6823 = vmatmul.mubr.f32.gmra.mxu0 %v6673
        %v6824 = vpop.f32.mrf.mxu0
        %v6825 = vadd.f32 0.0, %v6824
        %v6826 = vpop.f32.mrf.mxu0
        %v6827 = vadd.f32 0.0, %v6826
        %6828 = vdwg.mxu0
        %v6829 = vadd.f32 %v6650, %v6754
        %v6830 = vadd.f32 %v6651, %v6756
        %v6831 = vadd.f32 %v6652, %v6825
        %v6832 = vadd.f32 %v6653, %v6827
        %6833 = vrot.lane.b32.xlu0 %v5585, 56
        %v6834 = vpop.permute.xlu0 %6833
        %6835 = vrot.lane.b32.xlu0 %v5586, 56
        %v6836 = vpop.permute.xlu0 %6835
        %6837 = vrot.lane.b32.xlu0 %v5587, 56
        %v6838 = vpop.permute.xlu0 %6837
        %6839 = vrot.lane.b32.xlu0 %v5588, 56
        %v6840 = vpop.permute.xlu0 %6839
        %v6841 = vsel %vm1684, %v6838, %v6840
        %v6842 = vsel %vm1684, %v6836, %v6838
        %v6843 = vsel %vm1684, %v6834, %v6836
        %v6844 = vsel %vm1684, %v6840, %v6834
        %v6845 = vmul.f32 %v6844, %v1695
        %v6846 = vmul.f32 %v6843, %v1699
        %v6847 = vmul.f32 %v6842, %v1703
        %v6848 = vmul.f32 %v6841, %v1707
        %s6849 = scalar_lea.vmem %s3, 28
        %v6850 = vld [vmem:[%s6849] sm:$0xf]
        %v6852 = vsel %vm345, %v6850, 0
        %v6855 = vsel %vm349, %v6845, 0
        %v6858 = vsel %vm349, %v6846, 0
        %v6861 = vsel %vm349, %v6847, 0
        %v6864 = vsel %vm349, %v6848, 0
        %6866 = vmatprep.subr.mxu0 0.0
        %6867 = vmatpush1.msra.mxu0 0.0
        %6868 = vmatprep.subr.mxu0 0.0
        %6869 = vmatpush1.msra.mxu0 0.0
        %6870 = vmatprep.subr.mxu0 0.0
        %6871 = vmatpush1.msra.mxu0 0.0
        %6872 = vmatprep.subr.mxu0 0.0
        %6873 = vmatpush1.msra.mxu0 0.0
        %6874 = vmatprep.subr.mxu0 0.0
        %6875 = vmatpush1.msra.mxu0 0.0
        %6876 = vmatprep.subr.mxu0 0.0
        %6877 = vmatpush1.msra.mxu0 0.0
        %6878 = vmatprep.subr.mxu0 0.0
        %6879 = vmatpush1.msra.mxu0 0.0
        %6880 = vmatprep.subr.mxu0 0.0
        %6881 = vmatpush1.msra.mxu0 0.0
        %6882 = vmatprep.subr.mxu0 0.0
        %6883 = vmatpush1.msra.mxu0 0.0
        %6884 = vmatprep.subr.mxu0 0.0
        %6885 = vmatpush1.msra.mxu0 0.0
        %6886 = vmatprep.subr.mxu0 0.0
        %6887 = vmatpush1.msra.mxu0 0.0
        %6888 = vmatprep.subr.mxu0 0.0
        %6889 = vmatpush1.msra.mxu0 0.0
        %6890 = vmatprep.subr.mxu0 0.0
        %6891 = vmatpush1.msra.mxu0 0.0
        %6892 = vmatprep.subr.mxu0 0.0
        %6893 = vmatpush1.msra.mxu0 0.0
        %6894 = vmatprep.subr.mxu0 0.0
        %6895 = vmatpush1.msra.mxu0 0.0
        %6896 = vmatprep.subr.mxu0 %v6858
        %6897 = vmatpush1.msra.mxu0 %v6855
        %6898 = vmatprep.subr.mxu0 0.0
        %6899 = vmatpush2.msra.mxu0 0.0
        %6900 = vmatprep.subr.mxu0 0.0
        %6901 = vmatpush2.msra.mxu0 0.0
        %6902 = vmatprep.subr.mxu0 0.0
        %6903 = vmatpush2.msra.mxu0 0.0
        %6904 = vmatprep.subr.mxu0 0.0
        %6905 = vmatpush2.msra.mxu0 0.0
        %6906 = vmatprep.subr.mxu0 0.0
        %6907 = vmatpush2.msra.mxu0 0.0
        %6908 = vmatprep.subr.mxu0 0.0
        %6909 = vmatpush2.msra.mxu0 0.0
        %6910 = vmatprep.subr.mxu0 0.0
        %6911 = vmatpush2.msra.mxu0 0.0
        %6912 = vmatprep.subr.mxu0 0.0
        %6913 = vmatpush2.msra.mxu0 0.0
        %6914 = vmatprep.subr.mxu0 0.0
        %6915 = vmatpush2.msra.mxu0 0.0
        %6916 = vmatprep.subr.mxu0 0.0
        %6917 = vmatpush2.msra.mxu0 0.0
        %6918 = vmatprep.subr.mxu0 0.0
        %6919 = vmatpush2.msra.mxu0 0.0
        %6920 = vmatprep.subr.mxu0 0.0
        %6921 = vmatpush2.msra.mxu0 0.0
        %6922 = vmatprep.subr.mxu0 0.0
        %6923 = vmatpush2.msra.mxu0 0.0
        %6924 = vmatprep.subr.mxu0 0.0
        %6925 = vmatpush2.msra.mxu0 0.0
        %6926 = vmatprep.subr.mxu0 0.0
        %6927 = vmatpush2.msra.mxu0 0.0
        %6928 = vmatprep.subr.mxu0 0.0
        %6929 = vmatpush2.msra.mxu0 0.0
        %6930 = vmatprep.mubr.f32.mxu0 0.0
        %6931 = vmatmul.mubr.f32.gmra.mxu0 %v6852
        %v6932 = vpop.f32.mrf.mxu0
        %v6933 = vadd.f32 0.0, %v6932
        %v6934 = vpop.f32.mrf.mxu0
        %v6935 = vadd.f32 0.0, %v6934
        %6936 = vdwg.mxu0
        %6937 = vmatprep.subr.mxu0 0.0
        %6938 = vmatpush1.msra.mxu0 0.0
        %6939 = vmatprep.subr.mxu0 0.0
        %6940 = vmatpush1.msra.mxu0 0.0
        %6941 = vmatprep.subr.mxu0 0.0
        %6942 = vmatpush1.msra.mxu0 0.0
        %6943 = vmatprep.subr.mxu0 0.0
        %6944 = vmatpush1.msra.mxu0 0.0
        %6945 = vmatprep.subr.mxu0 0.0
        %6946 = vmatpush1.msra.mxu0 0.0
        %6947 = vmatprep.subr.mxu0 0.0
        %6948 = vmatpush1.msra.mxu0 0.0
        %6949 = vmatprep.subr.mxu0 0.0
        %6950 = vmatpush1.msra.mxu0 0.0
        %6951 = vmatprep.subr.mxu0 0.0
        %6952 = vmatpush1.msra.mxu0 0.0
        %6953 = vmatprep.subr.mxu0 0.0
        %6954 = vmatpush1.msra.mxu0 0.0
        %6955 = vmatprep.subr.mxu0 0.0
        %6956 = vmatpush1.msra.mxu0 0.0
        %6957 = vmatprep.subr.mxu0 0.0
        %6958 = vmatpush1.msra.mxu0 0.0
        %6959 = vmatprep.subr.mxu0 0.0
        %6960 = vmatpush1.msra.mxu0 0.0
        %6961 = vmatprep.subr.mxu0 0.0
        %6962 = vmatpush1.msra.mxu0 0.0
        %6963 = vmatprep.subr.mxu0 0.0
        %6964 = vmatpush1.msra.mxu0 0.0
        %6965 = vmatprep.subr.mxu0 0.0
        %6966 = vmatpush1.msra.mxu0 0.0
        %6967 = vmatprep.subr.mxu0 %v6864
        %6968 = vmatpush1.msra.mxu0 %v6861
        %6969 = vmatprep.subr.mxu0 0.0
        %6970 = vmatpush2.msra.mxu0 0.0
        %6971 = vmatprep.subr.mxu0 0.0
        %6972 = vmatpush2.msra.mxu0 0.0
        %6973 = vmatprep.subr.mxu0 0.0
        %6974 = vmatpush2.msra.mxu0 0.0
        %6975 = vmatprep.subr.mxu0 0.0
        %6976 = vmatpush2.msra.mxu0 0.0
        %6977 = vmatprep.subr.mxu0 0.0
        %6978 = vmatpush2.msra.mxu0 0.0
        %6979 = vmatprep.subr.mxu0 0.0
        %6980 = vmatpush2.msra.mxu0 0.0
        %6981 = vmatprep.subr.mxu0 0.0
        %6982 = vmatpush2.msra.mxu0 0.0
        %6983 = vmatprep.subr.mxu0 0.0
        %6984 = vmatpush2.msra.mxu0 0.0
        %6985 = vmatprep.subr.mxu0 0.0
        %6986 = vmatpush2.msra.mxu0 0.0
        %6987 = vmatprep.subr.mxu0 0.0
        %6988 = vmatpush2.msra.mxu0 0.0
        %6989 = vmatprep.subr.mxu0 0.0
        %6990 = vmatpush2.msra.mxu0 0.0
        %6991 = vmatprep.subr.mxu0 0.0
        %6992 = vmatpush2.msra.mxu0 0.0
        %6993 = vmatprep.subr.mxu0 0.0
        %6994 = vmatpush2.msra.mxu0 0.0
        %6995 = vmatprep.subr.mxu0 0.0
        %6996 = vmatpush2.msra.mxu0 0.0
        %6997 = vmatprep.subr.mxu0 0.0
        %6998 = vmatpush2.msra.mxu0 0.0
        %6999 = vmatprep.subr.mxu0 0.0
        %7000 = vmatpush2.msra.mxu0 0.0
        %7001 = vmatprep.mubr.f32.mxu0 0.0
        %7002 = vmatmul.mubr.f32.gmra.mxu0 %v6852
        %v7003 = vpop.f32.mrf.mxu0
        %v7004 = vadd.f32 0.0, %v7003
        %v7005 = vpop.f32.mrf.mxu0
        %v7006 = vadd.f32 0.0, %v7005
        %7007 = vdwg.mxu0
        %v7008 = vadd.f32 %v6829, %v6933
        %v7009 = vadd.f32 %v6830, %v6935
        %v7010 = vadd.f32 %v6831, %v7004
        %v7011 = vadd.f32 %v6832, %v7006
        %7012 = vrot.lane.b32.xlu0 %v5585, 55
        %v7013 = vpop.permute.xlu0 %7012
        %7014 = vrot.lane.b32.xlu0 %v5586, 55
        %v7015 = vpop.permute.xlu0 %7014
        %7016 = vrot.lane.b32.xlu0 %v5587, 55
        %v7017 = vpop.permute.xlu0 %7016
        %7018 = vrot.lane.b32.xlu0 %v5588, 55
        %v7019 = vpop.permute.xlu0 %7018
        %v7020 = vsel %vm1887, %v7017, %v7019
        %v7021 = vsel %vm1887, %v7015, %v7017
        %v7022 = vsel %vm1887, %v7013, %v7015
        %v7023 = vsel %vm1887, %v7019, %v7013
        %v7024 = vmul.f32 %v7023, %v1898
        %v7025 = vmul.f32 %v7022, %v1902
        %v7026 = vmul.f32 %v7021, %v1906
        %v7027 = vmul.f32 %v7020, %v1910
        %s7028 = scalar_lea.vmem %s3, 32
        %v7029 = vld [vmem:[%s7028] sm:$0xf]
        %v7031 = vsel %vm345, %v7029, 0
        %v7034 = vsel %vm349, %v7024, 0
        %v7037 = vsel %vm349, %v7025, 0
        %v7040 = vsel %vm349, %v7026, 0
        %v7043 = vsel %vm349, %v7027, 0
        %7045 = vmatprep.subr.mxu0 0.0
        %7046 = vmatpush1.msra.mxu0 0.0
        %7047 = vmatprep.subr.mxu0 0.0
        %7048 = vmatpush1.msra.mxu0 0.0
        %7049 = vmatprep.subr.mxu0 0.0
        %7050 = vmatpush1.msra.mxu0 0.0
        %7051 = vmatprep.subr.mxu0 0.0
        %7052 = vmatpush1.msra.mxu0 0.0
        %7053 = vmatprep.subr.mxu0 0.0
        %7054 = vmatpush1.msra.mxu0 0.0
        %7055 = vmatprep.subr.mxu0 0.0
        %7056 = vmatpush1.msra.mxu0 0.0
        %7057 = vmatprep.subr.mxu0 0.0
        %7058 = vmatpush1.msra.mxu0 0.0
        %7059 = vmatprep.subr.mxu0 0.0
        %7060 = vmatpush1.msra.mxu0 0.0
        %7061 = vmatprep.subr.mxu0 0.0
        %7062 = vmatpush1.msra.mxu0 0.0
        %7063 = vmatprep.subr.mxu0 0.0
        %7064 = vmatpush1.msra.mxu0 0.0
        %7065 = vmatprep.subr.mxu0 0.0
        %7066 = vmatpush1.msra.mxu0 0.0
        %7067 = vmatprep.subr.mxu0 0.0
        %7068 = vmatpush1.msra.mxu0 0.0
        %7069 = vmatprep.subr.mxu0 0.0
        %7070 = vmatpush1.msra.mxu0 0.0
        %7071 = vmatprep.subr.mxu0 0.0
        %7072 = vmatpush1.msra.mxu0 0.0
        %7073 = vmatprep.subr.mxu0 0.0
        %7074 = vmatpush1.msra.mxu0 0.0
        %7075 = vmatprep.subr.mxu0 %v7037
        %7076 = vmatpush1.msra.mxu0 %v7034
        %7077 = vmatprep.subr.mxu0 0.0
        %7078 = vmatpush2.msra.mxu0 0.0
        %7079 = vmatprep.subr.mxu0 0.0
        %7080 = vmatpush2.msra.mxu0 0.0
        %7081 = vmatprep.subr.mxu0 0.0
        %7082 = vmatpush2.msra.mxu0 0.0
        %7083 = vmatprep.subr.mxu0 0.0
        %7084 = vmatpush2.msra.mxu0 0.0
        %7085 = vmatprep.subr.mxu0 0.0
        %7086 = vmatpush2.msra.mxu0 0.0
        %7087 = vmatprep.subr.mxu0 0.0
        %7088 = vmatpush2.msra.mxu0 0.0
        %7089 = vmatprep.subr.mxu0 0.0
        %7090 = vmatpush2.msra.mxu0 0.0
        %7091 = vmatprep.subr.mxu0 0.0
        %7092 = vmatpush2.msra.mxu0 0.0
        %7093 = vmatprep.subr.mxu0 0.0
        %7094 = vmatpush2.msra.mxu0 0.0
        %7095 = vmatprep.subr.mxu0 0.0
        %7096 = vmatpush2.msra.mxu0 0.0
        %7097 = vmatprep.subr.mxu0 0.0
        %7098 = vmatpush2.msra.mxu0 0.0
        %7099 = vmatprep.subr.mxu0 0.0
        %7100 = vmatpush2.msra.mxu0 0.0
        %7101 = vmatprep.subr.mxu0 0.0
        %7102 = vmatpush2.msra.mxu0 0.0
        %7103 = vmatprep.subr.mxu0 0.0
        %7104 = vmatpush2.msra.mxu0 0.0
        %7105 = vmatprep.subr.mxu0 0.0
        %7106 = vmatpush2.msra.mxu0 0.0
        %7107 = vmatprep.subr.mxu0 0.0
        %7108 = vmatpush2.msra.mxu0 0.0
        %7109 = vmatprep.mubr.f32.mxu0 0.0
        %7110 = vmatmul.mubr.f32.gmra.mxu0 %v7031
        %v7111 = vpop.f32.mrf.mxu0
        %v7112 = vadd.f32 0.0, %v7111
        %v7113 = vpop.f32.mrf.mxu0
        %v7114 = vadd.f32 0.0, %v7113
        %7115 = vdwg.mxu0
        %7116 = vmatprep.subr.mxu0 0.0
        %7117 = vmatpush1.msra.mxu0 0.0
        %7118 = vmatprep.subr.mxu0 0.0
        %7119 = vmatpush1.msra.mxu0 0.0
        %7120 = vmatprep.subr.mxu0 0.0
        %7121 = vmatpush1.msra.mxu0 0.0
        %7122 = vmatprep.subr.mxu0 0.0
        %7123 = vmatpush1.msra.mxu0 0.0
        %7124 = vmatprep.subr.mxu0 0.0
        %7125 = vmatpush1.msra.mxu0 0.0
        %7126 = vmatprep.subr.mxu0 0.0
        %7127 = vmatpush1.msra.mxu0 0.0
        %7128 = vmatprep.subr.mxu0 0.0
        %7129 = vmatpush1.msra.mxu0 0.0
        %7130 = vmatprep.subr.mxu0 0.0
        %7131 = vmatpush1.msra.mxu0 0.0
        %7132 = vmatprep.subr.mxu0 0.0
        %7133 = vmatpush1.msra.mxu0 0.0
        %7134 = vmatprep.subr.mxu0 0.0
        %7135 = vmatpush1.msra.mxu0 0.0
        %7136 = vmatprep.subr.mxu0 0.0
        %7137 = vmatpush1.msra.mxu0 0.0
        %7138 = vmatprep.subr.mxu0 0.0
        %7139 = vmatpush1.msra.mxu0 0.0
        %7140 = vmatprep.subr.mxu0 0.0
        %7141 = vmatpush1.msra.mxu0 0.0
        %7142 = vmatprep.subr.mxu0 0.0
        %7143 = vmatpush1.msra.mxu0 0.0
        %7144 = vmatprep.subr.mxu0 0.0
        %7145 = vmatpush1.msra.mxu0 0.0
        %7146 = vmatprep.subr.mxu0 %v7043
        %7147 = vmatpush1.msra.mxu0 %v7040
        %7148 = vmatprep.subr.mxu0 0.0
        %7149 = vmatpush2.msra.mxu0 0.0
        %7150 = vmatprep.subr.mxu0 0.0
        %7151 = vmatpush2.msra.mxu0 0.0
        %7152 = vmatprep.subr.mxu0 0.0
        %7153 = vmatpush2.msra.mxu0 0.0
        %7154 = vmatprep.subr.mxu0 0.0
        %7155 = vmatpush2.msra.mxu0 0.0
        %7156 = vmatprep.subr.mxu0 0.0
        %7157 = vmatpush2.msra.mxu0 0.0
        %7158 = vmatprep.subr.mxu0 0.0
        %7159 = vmatpush2.msra.mxu0 0.0
        %7160 = vmatprep.subr.mxu0 0.0
        %7161 = vmatpush2.msra.mxu0 0.0
        %7162 = vmatprep.subr.mxu0 0.0
        %7163 = vmatpush2.msra.mxu0 0.0
        %7164 = vmatprep.subr.mxu0 0.0
        %7165 = vmatpush2.msra.mxu0 0.0
        %7166 = vmatprep.subr.mxu0 0.0
        %7167 = vmatpush2.msra.mxu0 0.0
        %7168 = vmatprep.subr.mxu0 0.0
        %7169 = vmatpush2.msra.mxu0 0.0
        %7170 = vmatprep.subr.mxu0 0.0
        %7171 = vmatpush2.msra.mxu0 0.0
        %7172 = vmatprep.subr.mxu0 0.0
        %7173 = vmatpush2.msra.mxu0 0.0
        %7174 = vmatprep.subr.mxu0 0.0
        %7175 = vmatpush2.msra.mxu0 0.0
        %7176 = vmatprep.subr.mxu0 0.0
        %7177 = vmatpush2.msra.mxu0 0.0
        %7178 = vmatprep.subr.mxu0 0.0
        %7179 = vmatpush2.msra.mxu0 0.0
        %7180 = vmatprep.mubr.f32.mxu0 0.0
        %7181 = vmatmul.mubr.f32.gmra.mxu0 %v7031
        %v7182 = vpop.f32.mrf.mxu0
        %v7183 = vadd.f32 0.0, %v7182
        %v7184 = vpop.f32.mrf.mxu0
        %v7185 = vadd.f32 0.0, %v7184
        %7186 = vdwg.mxu0
        %v7187 = vadd.f32 %v7008, %v7112
        %v7188 = vadd.f32 %v7009, %v7114
        %v7189 = vadd.f32 %v7010, %v7183
        %v7190 = vadd.f32 %v7011, %v7185
        %7191 = vrot.lane.b32.xlu0 %v5585, 9
        %v7192 = vpop.permute.xlu0 %7191
        %7193 = vrot.lane.b32.xlu0 %v5586, 9
        %v7194 = vpop.permute.xlu0 %7193
        %7195 = vrot.lane.b32.xlu0 %v5587, 9
        %v7196 = vpop.permute.xlu0 %7195
        %7197 = vrot.lane.b32.xlu0 %v5588, 9
        %v7198 = vpop.permute.xlu0 %7197
        %v7199 = vsel %vm2090, %v7196, %v7198
        %v7200 = vsel %vm2090, %v7194, %v7196
        %v7201 = vsel %vm2090, %v7192, %v7194
        %v7202 = vsel %vm2090, %v7198, %v7192
        %v7203 = vmul.f32 %v7202, %v2101
        %v7204 = vmul.f32 %v7201, %v2105
        %v7205 = vmul.f32 %v7200, %v2109
        %v7206 = vmul.f32 %v7199, %v2113
        %s7207 = scalar_lea.vmem %s3, 36
        %v7208 = vld [vmem:[%s7207] sm:$0xf]
        %v7210 = vsel %vm345, %v7208, 0
        %v7213 = vsel %vm349, %v7203, 0
        %v7216 = vsel %vm349, %v7204, 0
        %v7219 = vsel %vm349, %v7205, 0
        %v7222 = vsel %vm349, %v7206, 0
        %7224 = vmatprep.subr.mxu0 0.0
        %7225 = vmatpush1.msra.mxu0 0.0
        %7226 = vmatprep.subr.mxu0 0.0
        %7227 = vmatpush1.msra.mxu0 0.0
        %7228 = vmatprep.subr.mxu0 0.0
        %7229 = vmatpush1.msra.mxu0 0.0
        %7230 = vmatprep.subr.mxu0 0.0
        %7231 = vmatpush1.msra.mxu0 0.0
        %7232 = vmatprep.subr.mxu0 0.0
        %7233 = vmatpush1.msra.mxu0 0.0
        %7234 = vmatprep.subr.mxu0 0.0
        %7235 = vmatpush1.msra.mxu0 0.0
        %7236 = vmatprep.subr.mxu0 0.0
        %7237 = vmatpush1.msra.mxu0 0.0
        %7238 = vmatprep.subr.mxu0 0.0
        %7239 = vmatpush1.msra.mxu0 0.0
        %7240 = vmatprep.subr.mxu0 0.0
        %7241 = vmatpush1.msra.mxu0 0.0
        %7242 = vmatprep.subr.mxu0 0.0
        %7243 = vmatpush1.msra.mxu0 0.0
        %7244 = vmatprep.subr.mxu0 0.0
        %7245 = vmatpush1.msra.mxu0 0.0
        %7246 = vmatprep.subr.mxu0 0.0
        %7247 = vmatpush1.msra.mxu0 0.0
        %7248 = vmatprep.subr.mxu0 0.0
        %7249 = vmatpush1.msra.mxu0 0.0
        %7250 = vmatprep.subr.mxu0 0.0
        %7251 = vmatpush1.msra.mxu0 0.0
        %7252 = vmatprep.subr.mxu0 0.0
        %7253 = vmatpush1.msra.mxu0 0.0
        %7254 = vmatprep.subr.mxu0 %v7216
        %7255 = vmatpush1.msra.mxu0 %v7213
        %7256 = vmatprep.subr.mxu0 0.0
        %7257 = vmatpush2.msra.mxu0 0.0
        %7258 = vmatprep.subr.mxu0 0.0
        %7259 = vmatpush2.msra.mxu0 0.0
        %7260 = vmatprep.subr.mxu0 0.0
        %7261 = vmatpush2.msra.mxu0 0.0
        %7262 = vmatprep.subr.mxu0 0.0
        %7263 = vmatpush2.msra.mxu0 0.0
        %7264 = vmatprep.subr.mxu0 0.0
        %7265 = vmatpush2.msra.mxu0 0.0
        %7266 = vmatprep.subr.mxu0 0.0
        %7267 = vmatpush2.msra.mxu0 0.0
        %7268 = vmatprep.subr.mxu0 0.0
        %7269 = vmatpush2.msra.mxu0 0.0
        %7270 = vmatprep.subr.mxu0 0.0
        %7271 = vmatpush2.msra.mxu0 0.0
        %7272 = vmatprep.subr.mxu0 0.0
        %7273 = vmatpush2.msra.mxu0 0.0
        %7274 = vmatprep.subr.mxu0 0.0
        %7275 = vmatpush2.msra.mxu0 0.0
        %7276 = vmatprep.subr.mxu0 0.0
        %7277 = vmatpush2.msra.mxu0 0.0
        %7278 = vmatprep.subr.mxu0 0.0
        %7279 = vmatpush2.msra.mxu0 0.0
        %7280 = vmatprep.subr.mxu0 0.0
        %7281 = vmatpush2.msra.mxu0 0.0
        %7282 = vmatprep.subr.mxu0 0.0
        %7283 = vmatpush2.msra.mxu0 0.0
        %7284 = vmatprep.subr.mxu0 0.0
        %7285 = vmatpush2.msra.mxu0 0.0
        %7286 = vmatprep.subr.mxu0 0.0
        %7287 = vmatpush2.msra.mxu0 0.0
        %7288 = vmatprep.mubr.f32.mxu0 0.0
        %7289 = vmatmul.mubr.f32.gmra.mxu0 %v7210
        %v7290 = vpop.f32.mrf.mxu0
        %v7291 = vadd.f32 0.0, %v7290
        %v7292 = vpop.f32.mrf.mxu0
        %v7293 = vadd.f32 0.0, %v7292
        %7294 = vdwg.mxu0
        %7295 = vmatprep.subr.mxu0 0.0
        %7296 = vmatpush1.msra.mxu0 0.0
        %7297 = vmatprep.subr.mxu0 0.0
        %7298 = vmatpush1.msra.mxu0 0.0
        %7299 = vmatprep.subr.mxu0 0.0
        %7300 = vmatpush1.msra.mxu0 0.0
        %7301 = vmatprep.subr.mxu0 0.0
        %7302 = vmatpush1.msra.mxu0 0.0
        %7303 = vmatprep.subr.mxu0 0.0
        %7304 = vmatpush1.msra.mxu0 0.0
        %7305 = vmatprep.subr.mxu0 0.0
        %7306 = vmatpush1.msra.mxu0 0.0
        %7307 = vmatprep.subr.mxu0 0.0
        %7308 = vmatpush1.msra.mxu0 0.0
        %7309 = vmatprep.subr.mxu0 0.0
        %7310 = vmatpush1.msra.mxu0 0.0
        %7311 = vmatprep.subr.mxu0 0.0
        %7312 = vmatpush1.msra.mxu0 0.0
        %7313 = vmatprep.subr.mxu0 0.0
        %7314 = vmatpush1.msra.mxu0 0.0
        %7315 = vmatprep.subr.mxu0 0.0
        %7316 = vmatpush1.msra.mxu0 0.0
        %7317 = vmatprep.subr.mxu0 0.0
        %7318 = vmatpush1.msra.mxu0 0.0
        %7319 = vmatprep.subr.mxu0 0.0
        %7320 = vmatpush1.msra.mxu0 0.0
        %7321 = vmatprep.subr.mxu0 0.0
        %7322 = vmatpush1.msra.mxu0 0.0
        %7323 = vmatprep.subr.mxu0 0.0
        %7324 = vmatpush1.msra.mxu0 0.0
        %7325 = vmatprep.subr.mxu0 %v7222
        %7326 = vmatpush1.msra.mxu0 %v7219
        %7327 = vmatprep.subr.mxu0 0.0
        %7328 = vmatpush2.msra.mxu0 0.0
        %7329 = vmatprep.subr.mxu0 0.0
        %7330 = vmatpush2.msra.mxu0 0.0
        %7331 = vmatprep.subr.mxu0 0.0
        %7332 = vmatpush2.msra.mxu0 0.0
        %7333 = vmatprep.subr.mxu0 0.0
        %7334 = vmatpush2.msra.mxu0 0.0
        %7335 = vmatprep.subr.mxu0 0.0
        %7336 = vmatpush2.msra.mxu0 0.0
        %7337 = vmatprep.subr.mxu0 0.0
        %7338 = vmatpush2.msra.mxu0 0.0
        %7339 = vmatprep.subr.mxu0 0.0
        %7340 = vmatpush2.msra.mxu0 0.0
        %7341 = vmatprep.subr.mxu0 0.0
        %7342 = vmatpush2.msra.mxu0 0.0
        %7343 = vmatprep.subr.mxu0 0.0
        %7344 = vmatpush2.msra.mxu0 0.0
        %7345 = vmatprep.subr.mxu0 0.0
        %7346 = vmatpush2.msra.mxu0 0.0
        %7347 = vmatprep.subr.mxu0 0.0
        %7348 = vmatpush2.msra.mxu0 0.0
        %7349 = vmatprep.subr.mxu0 0.0
        %7350 = vmatpush2.msra.mxu0 0.0
        %7351 = vmatprep.subr.mxu0 0.0
        %7352 = vmatpush2.msra.mxu0 0.0
        %7353 = vmatprep.subr.mxu0 0.0
        %7354 = vmatpush2.msra.mxu0 0.0
        %7355 = vmatprep.subr.mxu0 0.0
        %7356 = vmatpush2.msra.mxu0 0.0
        %7357 = vmatprep.subr.mxu0 0.0
        %7358 = vmatpush2.msra.mxu0 0.0
        %7359 = vmatprep.mubr.f32.mxu0 0.0
        %7360 = vmatmul.mubr.f32.gmra.mxu0 %v7210
        %v7361 = vpop.f32.mrf.mxu0
        %v7362 = vadd.f32 0.0, %v7361
        %v7363 = vpop.f32.mrf.mxu0
        %v7364 = vadd.f32 0.0, %v7363
        %7365 = vdwg.mxu0
        %v7366 = vadd.f32 %v7187, %v7291
        %v7367 = vadd.f32 %v7188, %v7293
        %v7368 = vadd.f32 %v7189, %v7362
        %v7369 = vadd.f32 %v7190, %v7364
        %7370 = vrot.lane.b32.xlu0 %v5585, 8
        %v7371 = vpop.permute.xlu0 %7370
        %7372 = vrot.lane.b32.xlu0 %v5586, 8
        %v7373 = vpop.permute.xlu0 %7372
        %7374 = vrot.lane.b32.xlu0 %v5587, 8
        %v7375 = vpop.permute.xlu0 %7374
        %7376 = vrot.lane.b32.xlu0 %v5588, 8
        %v7377 = vpop.permute.xlu0 %7376
        %v7378 = vsel %vm2293, %v7375, %v7377
        %v7379 = vsel %vm2293, %v7373, %v7375
        %v7380 = vsel %vm2293, %v7371, %v7373
        %v7381 = vsel %vm2293, %v7377, %v7371
        %v7382 = vmul.f32 %v7381, %v2304
        %v7383 = vmul.f32 %v7380, %v2308
        %v7384 = vmul.f32 %v7379, %v2312
        %v7385 = vmul.f32 %v7378, %v2316
        %s7386 = scalar_lea.vmem %s3, 40
        %v7387 = vld [vmem:[%s7386] sm:$0xf]
        %v7389 = vsel %vm345, %v7387, 0
        %v7392 = vsel %vm349, %v7382, 0
        %v7395 = vsel %vm349, %v7383, 0
        %v7398 = vsel %vm349, %v7384, 0
        %v7401 = vsel %vm349, %v7385, 0
        %7403 = vmatprep.subr.mxu0 0.0
        %7404 = vmatpush1.msra.mxu0 0.0
        %7405 = vmatprep.subr.mxu0 0.0
        %7406 = vmatpush1.msra.mxu0 0.0
        %7407 = vmatprep.subr.mxu0 0.0
        %7408 = vmatpush1.msra.mxu0 0.0
        %7409 = vmatprep.subr.mxu0 0.0
        %7410 = vmatpush1.msra.mxu0 0.0
        %7411 = vmatprep.subr.mxu0 0.0
        %7412 = vmatpush1.msra.mxu0 0.0
        %7413 = vmatprep.subr.mxu0 0.0
        %7414 = vmatpush1.msra.mxu0 0.0
        %7415 = vmatprep.subr.mxu0 0.0
        %7416 = vmatpush1.msra.mxu0 0.0
        %7417 = vmatprep.subr.mxu0 0.0
        %7418 = vmatpush1.msra.mxu0 0.0
        %7419 = vmatprep.subr.mxu0 0.0
        %7420 = vmatpush1.msra.mxu0 0.0
        %7421 = vmatprep.subr.mxu0 0.0
        %7422 = vmatpush1.msra.mxu0 0.0
        %7423 = vmatprep.subr.mxu0 0.0
        %7424 = vmatpush1.msra.mxu0 0.0
        %7425 = vmatprep.subr.mxu0 0.0
        %7426 = vmatpush1.msra.mxu0 0.0
        %7427 = vmatprep.subr.mxu0 0.0
        %7428 = vmatpush1.msra.mxu0 0.0
        %7429 = vmatprep.subr.mxu0 0.0
        %7430 = vmatpush1.msra.mxu0 0.0
        %7431 = vmatprep.subr.mxu0 0.0
        %7432 = vmatpush1.msra.mxu0 0.0
        %7433 = vmatprep.subr.mxu0 %v7395
        %7434 = vmatpush1.msra.mxu0 %v7392
        %7435 = vmatprep.subr.mxu0 0.0
        %7436 = vmatpush2.msra.mxu0 0.0
        %7437 = vmatprep.subr.mxu0 0.0
        %7438 = vmatpush2.msra.mxu0 0.0
        %7439 = vmatprep.subr.mxu0 0.0
        %7440 = vmatpush2.msra.mxu0 0.0
        %7441 = vmatprep.subr.mxu0 0.0
        %7442 = vmatpush2.msra.mxu0 0.0
        %7443 = vmatprep.subr.mxu0 0.0
        %7444 = vmatpush2.msra.mxu0 0.0
        %7445 = vmatprep.subr.mxu0 0.0
        %7446 = vmatpush2.msra.mxu0 0.0
        %7447 = vmatprep.subr.mxu0 0.0
        %7448 = vmatpush2.msra.mxu0 0.0
        %7449 = vmatprep.subr.mxu0 0.0
        %7450 = vmatpush2.msra.mxu0 0.0
        %7451 = vmatprep.subr.mxu0 0.0
        %7452 = vmatpush2.msra.mxu0 0.0
        %7453 = vmatprep.subr.mxu0 0.0
        %7454 = vmatpush2.msra.mxu0 0.0
        %7455 = vmatprep.subr.mxu0 0.0
        %7456 = vmatpush2.msra.mxu0 0.0
        %7457 = vmatprep.subr.mxu0 0.0
        %7458 = vmatpush2.msra.mxu0 0.0
        %7459 = vmatprep.subr.mxu0 0.0
        %7460 = vmatpush2.msra.mxu0 0.0
        %7461 = vmatprep.subr.mxu0 0.0
        %7462 = vmatpush2.msra.mxu0 0.0
        %7463 = vmatprep.subr.mxu0 0.0
        %7464 = vmatpush2.msra.mxu0 0.0
        %7465 = vmatprep.subr.mxu0 0.0
        %7466 = vmatpush2.msra.mxu0 0.0
        %7467 = vmatprep.mubr.f32.mxu0 0.0
        %7468 = vmatmul.mubr.f32.gmra.mxu0 %v7389
        %v7469 = vpop.f32.mrf.mxu0
        %v7470 = vadd.f32 0.0, %v7469
        %v7471 = vpop.f32.mrf.mxu0
        %v7472 = vadd.f32 0.0, %v7471
        %7473 = vdwg.mxu0
        %7474 = vmatprep.subr.mxu0 0.0
        %7475 = vmatpush1.msra.mxu0 0.0
        %7476 = vmatprep.subr.mxu0 0.0
        %7477 = vmatpush1.msra.mxu0 0.0
        %7478 = vmatprep.subr.mxu0 0.0
        %7479 = vmatpush1.msra.mxu0 0.0
        %7480 = vmatprep.subr.mxu0 0.0
        %7481 = vmatpush1.msra.mxu0 0.0
        %7482 = vmatprep.subr.mxu0 0.0
        %7483 = vmatpush1.msra.mxu0 0.0
        %7484 = vmatprep.subr.mxu0 0.0
        %7485 = vmatpush1.msra.mxu0 0.0
        %7486 = vmatprep.subr.mxu0 0.0
        %7487 = vmatpush1.msra.mxu0 0.0
        %7488 = vmatprep.subr.mxu0 0.0
        %7489 = vmatpush1.msra.mxu0 0.0
        %7490 = vmatprep.subr.mxu0 0.0
        %7491 = vmatpush1.msra.mxu0 0.0
        %7492 = vmatprep.subr.mxu0 0.0
        %7493 = vmatpush1.msra.mxu0 0.0
        %7494 = vmatprep.subr.mxu0 0.0
        %7495 = vmatpush1.msra.mxu0 0.0
        %7496 = vmatprep.subr.mxu0 0.0
        %7497 = vmatpush1.msra.mxu0 0.0
        %7498 = vmatprep.subr.mxu0 0.0
        %7499 = vmatpush1.msra.mxu0 0.0
        %7500 = vmatprep.subr.mxu0 0.0
        %7501 = vmatpush1.msra.mxu0 0.0
        %7502 = vmatprep.subr.mxu0 0.0
        %7503 = vmatpush1.msra.mxu0 0.0
        %7504 = vmatprep.subr.mxu0 %v7401
        %7505 = vmatpush1.msra.mxu0 %v7398
        %7506 = vmatprep.subr.mxu0 0.0
        %7507 = vmatpush2.msra.mxu0 0.0
        %7508 = vmatprep.subr.mxu0 0.0
        %7509 = vmatpush2.msra.mxu0 0.0
        %7510 = vmatprep.subr.mxu0 0.0
        %7511 = vmatpush2.msra.mxu0 0.0
        %7512 = vmatprep.subr.mxu0 0.0
        %7513 = vmatpush2.msra.mxu0 0.0
        %7514 = vmatprep.subr.mxu0 0.0
        %7515 = vmatpush2.msra.mxu0 0.0
        %7516 = vmatprep.subr.mxu0 0.0
        %7517 = vmatpush2.msra.mxu0 0.0
        %7518 = vmatprep.subr.mxu0 0.0
        %7519 = vmatpush2.msra.mxu0 0.0
        %7520 = vmatprep.subr.mxu0 0.0
        %7521 = vmatpush2.msra.mxu0 0.0
        %7522 = vmatprep.subr.mxu0 0.0
        %7523 = vmatpush2.msra.mxu0 0.0
        %7524 = vmatprep.subr.mxu0 0.0
        %7525 = vmatpush2.msra.mxu0 0.0
        %7526 = vmatprep.subr.mxu0 0.0
        %7527 = vmatpush2.msra.mxu0 0.0
        %7528 = vmatprep.subr.mxu0 0.0
        %7529 = vmatpush2.msra.mxu0 0.0
        %7530 = vmatprep.subr.mxu0 0.0
        %7531 = vmatpush2.msra.mxu0 0.0
        %7532 = vmatprep.subr.mxu0 0.0
        %7533 = vmatpush2.msra.mxu0 0.0
        %7534 = vmatprep.subr.mxu0 0.0
        %7535 = vmatpush2.msra.mxu0 0.0
        %7536 = vmatprep.subr.mxu0 0.0
        %7537 = vmatpush2.msra.mxu0 0.0
        %7538 = vmatprep.mubr.f32.mxu0 0.0
        %7539 = vmatmul.mubr.f32.gmra.mxu0 %v7389
        %v7540 = vpop.f32.mrf.mxu0
        %v7541 = vadd.f32 0.0, %v7540
        %v7542 = vpop.f32.mrf.mxu0
        %v7543 = vadd.f32 0.0, %v7542
        %7544 = vdwg.mxu0
        %v7545 = vadd.f32 %v7366, %v7470
        %v7546 = vadd.f32 %v7367, %v7472
        %v7547 = vadd.f32 %v7368, %v7541
        %v7548 = vadd.f32 %v7369, %v7543
        %7549 = vrot.lane.b32.xlu0 %v5585, 7
        %v7550 = vpop.permute.xlu0 %7549
        %7551 = vrot.lane.b32.xlu0 %v5586, 7
        %v7552 = vpop.permute.xlu0 %7551
        %7553 = vrot.lane.b32.xlu0 %v5587, 7
        %v7554 = vpop.permute.xlu0 %7553
        %7555 = vrot.lane.b32.xlu0 %v5588, 7
        %v7556 = vpop.permute.xlu0 %7555
        %v7557 = vsel %vm2496, %v7554, %v7556
        %v7558 = vsel %vm2496, %v7552, %v7554
        %v7559 = vsel %vm2496, %v7550, %v7552
        %v7560 = vsel %vm2496, %v7556, %v7550
        %v7561 = vmul.f32 %v7560, %v2507
        %v7562 = vmul.f32 %v7559, %v2511
        %v7563 = vmul.f32 %v7558, %v2515
        %v7564 = vmul.f32 %v7557, %v2519
        %s7565 = scalar_lea.vmem %s3, 44
        %v7566 = vld [vmem:[%s7565] sm:$0xf]
        %v7568 = vsel %vm345, %v7566, 0
        %v7571 = vsel %vm349, %v7561, 0
        %v7574 = vsel %vm349, %v7562, 0
        %v7577 = vsel %vm349, %v7563, 0
        %v7580 = vsel %vm349, %v7564, 0
        %7582 = vmatprep.subr.mxu0 0.0
        %7583 = vmatpush1.msra.mxu0 0.0
        %7584 = vmatprep.subr.mxu0 0.0
        %7585 = vmatpush1.msra.mxu0 0.0
        %7586 = vmatprep.subr.mxu0 0.0
        %7587 = vmatpush1.msra.mxu0 0.0
        %7588 = vmatprep.subr.mxu0 0.0
        %7589 = vmatpush1.msra.mxu0 0.0
        %7590 = vmatprep.subr.mxu0 0.0
        %7591 = vmatpush1.msra.mxu0 0.0
        %7592 = vmatprep.subr.mxu0 0.0
        %7593 = vmatpush1.msra.mxu0 0.0
        %7594 = vmatprep.subr.mxu0 0.0
        %7595 = vmatpush1.msra.mxu0 0.0
        %7596 = vmatprep.subr.mxu0 0.0
        %7597 = vmatpush1.msra.mxu0 0.0
        %7598 = vmatprep.subr.mxu0 0.0
        %7599 = vmatpush1.msra.mxu0 0.0
        %7600 = vmatprep.subr.mxu0 0.0
        %7601 = vmatpush1.msra.mxu0 0.0
        %7602 = vmatprep.subr.mxu0 0.0
        %7603 = vmatpush1.msra.mxu0 0.0
        %7604 = vmatprep.subr.mxu0 0.0
        %7605 = vmatpush1.msra.mxu0 0.0
        %7606 = vmatprep.subr.mxu0 0.0
        %7607 = vmatpush1.msra.mxu0 0.0
        %7608 = vmatprep.subr.mxu0 0.0
        %7609 = vmatpush1.msra.mxu0 0.0
        %7610 = vmatprep.subr.mxu0 0.0
        %7611 = vmatpush1.msra.mxu0 0.0
        %7612 = vmatprep.subr.mxu0 %v7574
        %7613 = vmatpush1.msra.mxu0 %v7571
        %7614 = vmatprep.subr.mxu0 0.0
        %7615 = vmatpush2.msra.mxu0 0.0
        %7616 = vmatprep.subr.mxu0 0.0
        %7617 = vmatpush2.msra.mxu0 0.0
        %7618 = vmatprep.subr.mxu0 0.0
        %7619 = vmatpush2.msra.mxu0 0.0
        %7620 = vmatprep.subr.mxu0 0.0
        %7621 = vmatpush2.msra.mxu0 0.0
        %7622 = vmatprep.subr.mxu0 0.0
        %7623 = vmatpush2.msra.mxu0 0.0
        %7624 = vmatprep.subr.mxu0 0.0
        %7625 = vmatpush2.msra.mxu0 0.0
        %7626 = vmatprep.subr.mxu0 0.0
        %7627 = vmatpush2.msra.mxu0 0.0
        %7628 = vmatprep.subr.mxu0 0.0
        %7629 = vmatpush2.msra.mxu0 0.0
        %7630 = vmatprep.subr.mxu0 0.0
        %7631 = vmatpush2.msra.mxu0 0.0
        %7632 = vmatprep.subr.mxu0 0.0
        %7633 = vmatpush2.msra.mxu0 0.0
        %7634 = vmatprep.subr.mxu0 0.0
        %7635 = vmatpush2.msra.mxu0 0.0
        %7636 = vmatprep.subr.mxu0 0.0
        %7637 = vmatpush2.msra.mxu0 0.0
        %7638 = vmatprep.subr.mxu0 0.0
        %7639 = vmatpush2.msra.mxu0 0.0
        %7640 = vmatprep.subr.mxu0 0.0
        %7641 = vmatpush2.msra.mxu0 0.0
        %7642 = vmatprep.subr.mxu0 0.0
        %7643 = vmatpush2.msra.mxu0 0.0
        %7644 = vmatprep.subr.mxu0 0.0
        %7645 = vmatpush2.msra.mxu0 0.0
        %7646 = vmatprep.mubr.f32.mxu0 0.0
        %7647 = vmatmul.mubr.f32.gmra.mxu0 %v7568
        %v7648 = vpop.f32.mrf.mxu0
        %v7649 = vadd.f32 0.0, %v7648
        %v7650 = vpop.f32.mrf.mxu0
        %v7651 = vadd.f32 0.0, %v7650
        %7652 = vdwg.mxu0
        %7653 = vmatprep.subr.mxu0 0.0
        %7654 = vmatpush1.msra.mxu0 0.0
        %7655 = vmatprep.subr.mxu0 0.0
        %7656 = vmatpush1.msra.mxu0 0.0
        %7657 = vmatprep.subr.mxu0 0.0
        %7658 = vmatpush1.msra.mxu0 0.0
        %7659 = vmatprep.subr.mxu0 0.0
        %7660 = vmatpush1.msra.mxu0 0.0
        %7661 = vmatprep.subr.mxu0 0.0
        %7662 = vmatpush1.msra.mxu0 0.0
        %7663 = vmatprep.subr.mxu0 0.0
        %7664 = vmatpush1.msra.mxu0 0.0
        %7665 = vmatprep.subr.mxu0 0.0
        %7666 = vmatpush1.msra.mxu0 0.0
        %7667 = vmatprep.subr.mxu0 0.0
        %7668 = vmatpush1.msra.mxu0 0.0
        %7669 = vmatprep.subr.mxu0 0.0
        %7670 = vmatpush1.msra.mxu0 0.0
        %7671 = vmatprep.subr.mxu0 0.0
        %7672 = vmatpush1.msra.mxu0 0.0
        %7673 = vmatprep.subr.mxu0 0.0
        %7674 = vmatpush1.msra.mxu0 0.0
        %7675 = vmatprep.subr.mxu0 0.0
        %7676 = vmatpush1.msra.mxu0 0.0
        %7677 = vmatprep.subr.mxu0 0.0
        %7678 = vmatpush1.msra.mxu0 0.0
        %7679 = vmatprep.subr.mxu0 0.0
        %7680 = vmatpush1.msra.mxu0 0.0
        %7681 = vmatprep.subr.mxu0 0.0
        %7682 = vmatpush1.msra.mxu0 0.0
        %7683 = vmatprep.subr.mxu0 %v7580
        %7684 = vmatpush1.msra.mxu0 %v7577
        %7685 = vmatprep.subr.mxu0 0.0
        %7686 = vmatpush2.msra.mxu0 0.0
        %7687 = vmatprep.subr.mxu0 0.0
        %7688 = vmatpush2.msra.mxu0 0.0
        %7689 = vmatprep.subr.mxu0 0.0
        %7690 = vmatpush2.msra.mxu0 0.0
        %7691 = vmatprep.subr.mxu0 0.0
        %7692 = vmatpush2.msra.mxu0 0.0
        %7693 = vmatprep.subr.mxu0 0.0
        %7694 = vmatpush2.msra.mxu0 0.0
        %7695 = vmatprep.subr.mxu0 0.0
        %7696 = vmatpush2.msra.mxu0 0.0
        %7697 = vmatprep.subr.mxu0 0.0
        %7698 = vmatpush2.msra.mxu0 0.0
        %7699 = vmatprep.subr.mxu0 0.0
        %7700 = vmatpush2.msra.mxu0 0.0
        %7701 = vmatprep.subr.mxu0 0.0
        %7702 = vmatpush2.msra.mxu0 0.0
        %7703 = vmatprep.subr.mxu0 0.0
        %7704 = vmatpush2.msra.mxu0 0.0
        %7705 = vmatprep.subr.mxu0 0.0
        %7706 = vmatpush2.msra.mxu0 0.0
        %7707 = vmatprep.subr.mxu0 0.0
        %7708 = vmatpush2.msra.mxu0 0.0
        %7709 = vmatprep.subr.mxu0 0.0
        %7710 = vmatpush2.msra.mxu0 0.0
        %7711 = vmatprep.subr.mxu0 0.0
        %7712 = vmatpush2.msra.mxu0 0.0
        %7713 = vmatprep.subr.mxu0 0.0
        %7714 = vmatpush2.msra.mxu0 0.0
        %7715 = vmatprep.subr.mxu0 0.0
        %7716 = vmatpush2.msra.mxu0 0.0
        %7717 = vmatprep.mubr.f32.mxu0 0.0
        %7718 = vmatmul.mubr.f32.gmra.mxu0 %v7568
        %v7719 = vpop.f32.mrf.mxu0
        %v7720 = vadd.f32 0.0, %v7719
        %v7721 = vpop.f32.mrf.mxu0
        %v7722 = vadd.f32 0.0, %v7721
        %7723 = vdwg.mxu0
        %v7724 = vadd.f32 %v7545, %v7649
        %v7725 = vadd.f32 %v7546, %v7651
        %v7726 = vadd.f32 %v7547, %v7720
        %v7727 = vadd.f32 %v7548, %v7722
        %7728 = vrot.lane.b32.xlu0 %v5585, 1
        %v7729 = vpop.permute.xlu0 %7728
        %7730 = vrot.lane.b32.xlu0 %v5586, 1
        %v7731 = vpop.permute.xlu0 %7730
        %7732 = vrot.lane.b32.xlu0 %v5587, 1
        %v7733 = vpop.permute.xlu0 %7732
        %7734 = vrot.lane.b32.xlu0 %v5588, 1
        %v7735 = vpop.permute.xlu0 %7734
        %v7736 = vsel %vm2699, %v7733, %v7735
        %v7737 = vsel %vm2699, %v7731, %v7733
        %v7738 = vsel %vm2699, %v7729, %v7731
        %v7739 = vsel %vm2699, %v7735, %v7729
        %v7740 = vmul.f32 %v7739, %v2710
        %v7741 = vmul.f32 %v7738, %v2714
        %v7742 = vmul.f32 %v7737, %v2718
        %v7743 = vmul.f32 %v7736, %v2722
        %s7744 = scalar_lea.vmem %s3, 48
        %v7745 = vld [vmem:[%s7744] sm:$0xf]
        %v7747 = vsel %vm345, %v7745, 0
        %v7750 = vsel %vm349, %v7740, 0
        %v7753 = vsel %vm349, %v7741, 0
        %v7756 = vsel %vm349, %v7742, 0
        %v7759 = vsel %vm349, %v7743, 0
        %7761 = vmatprep.subr.mxu0 0.0
        %7762 = vmatpush1.msra.mxu0 0.0
        %7763 = vmatprep.subr.mxu0 0.0
        %7764 = vmatpush1.msra.mxu0 0.0
        %7765 = vmatprep.subr.mxu0 0.0
        %7766 = vmatpush1.msra.mxu0 0.0
        %7767 = vmatprep.subr.mxu0 0.0
        %7768 = vmatpush1.msra.mxu0 0.0
        %7769 = vmatprep.subr.mxu0 0.0
        %7770 = vmatpush1.msra.mxu0 0.0
        %7771 = vmatprep.subr.mxu0 0.0
        %7772 = vmatpush1.msra.mxu0 0.0
        %7773 = vmatprep.subr.mxu0 0.0
        %7774 = vmatpush1.msra.mxu0 0.0
        %7775 = vmatprep.subr.mxu0 0.0
        %7776 = vmatpush1.msra.mxu0 0.0
        %7777 = vmatprep.subr.mxu0 0.0
        %7778 = vmatpush1.msra.mxu0 0.0
        %7779 = vmatprep.subr.mxu0 0.0
        %7780 = vmatpush1.msra.mxu0 0.0
        %7781 = vmatprep.subr.mxu0 0.0
        %7782 = vmatpush1.msra.mxu0 0.0
        %7783 = vmatprep.subr.mxu0 0.0
        %7784 = vmatpush1.msra.mxu0 0.0
        %7785 = vmatprep.subr.mxu0 0.0
        %7786 = vmatpush1.msra.mxu0 0.0
        %7787 = vmatprep.subr.mxu0 0.0
        %7788 = vmatpush1.msra.mxu0 0.0
        %7789 = vmatprep.subr.mxu0 0.0
        %7790 = vmatpush1.msra.mxu0 0.0
        %7791 = vmatprep.subr.mxu0 %v7753
        %7792 = vmatpush1.msra.mxu0 %v7750
        %7793 = vmatprep.subr.mxu0 0.0
        %7794 = vmatpush2.msra.mxu0 0.0
        %7795 = vmatprep.subr.mxu0 0.0
        %7796 = vmatpush2.msra.mxu0 0.0
        %7797 = vmatprep.subr.mxu0 0.0
        %7798 = vmatpush2.msra.mxu0 0.0
        %7799 = vmatprep.subr.mxu0 0.0
        %7800 = vmatpush2.msra.mxu0 0.0
        %7801 = vmatprep.subr.mxu0 0.0
        %7802 = vmatpush2.msra.mxu0 0.0
        %7803 = vmatprep.subr.mxu0 0.0
        %7804 = vmatpush2.msra.mxu0 0.0
        %7805 = vmatprep.subr.mxu0 0.0
        %7806 = vmatpush2.msra.mxu0 0.0
        %7807 = vmatprep.subr.mxu0 0.0
        %7808 = vmatpush2.msra.mxu0 0.0
        %7809 = vmatprep.subr.mxu0 0.0
        %7810 = vmatpush2.msra.mxu0 0.0
        %7811 = vmatprep.subr.mxu0 0.0
        %7812 = vmatpush2.msra.mxu0 0.0
        %7813 = vmatprep.subr.mxu0 0.0
        %7814 = vmatpush2.msra.mxu0 0.0
        %7815 = vmatprep.subr.mxu0 0.0
        %7816 = vmatpush2.msra.mxu0 0.0
        %7817 = vmatprep.subr.mxu0 0.0
        %7818 = vmatpush2.msra.mxu0 0.0
        %7819 = vmatprep.subr.mxu0 0.0
        %7820 = vmatpush2.msra.mxu0 0.0
        %7821 = vmatprep.subr.mxu0 0.0
        %7822 = vmatpush2.msra.mxu0 0.0
        %7823 = vmatprep.subr.mxu0 0.0
        %7824 = vmatpush2.msra.mxu0 0.0
        %7825 = vmatprep.mubr.f32.mxu0 0.0
        %7826 = vmatmul.mubr.f32.gmra.mxu0 %v7747
        %v7827 = vpop.f32.mrf.mxu0
        %v7828 = vadd.f32 0.0, %v7827
        %v7829 = vpop.f32.mrf.mxu0
        %v7830 = vadd.f32 0.0, %v7829
        %7831 = vdwg.mxu0
        %7832 = vmatprep.subr.mxu0 0.0
        %7833 = vmatpush1.msra.mxu0 0.0
        %7834 = vmatprep.subr.mxu0 0.0
        %7835 = vmatpush1.msra.mxu0 0.0
        %7836 = vmatprep.subr.mxu0 0.0
        %7837 = vmatpush1.msra.mxu0 0.0
        %7838 = vmatprep.subr.mxu0 0.0
        %7839 = vmatpush1.msra.mxu0 0.0
        %7840 = vmatprep.subr.mxu0 0.0
        %7841 = vmatpush1.msra.mxu0 0.0
        %7842 = vmatprep.subr.mxu0 0.0
        %7843 = vmatpush1.msra.mxu0 0.0
        %7844 = vmatprep.subr.mxu0 0.0
        %7845 = vmatpush1.msra.mxu0 0.0
        %7846 = vmatprep.subr.mxu0 0.0
        %7847 = vmatpush1.msra.mxu0 0.0
        %7848 = vmatprep.subr.mxu0 0.0
        %7849 = vmatpush1.msra.mxu0 0.0
        %7850 = vmatprep.subr.mxu0 0.0
        %7851 = vmatpush1.msra.mxu0 0.0
        %7852 = vmatprep.subr.mxu0 0.0
        %7853 = vmatpush1.msra.mxu0 0.0
        %7854 = vmatprep.subr.mxu0 0.0
        %7855 = vmatpush1.msra.mxu0 0.0
        %7856 = vmatprep.subr.mxu0 0.0
        %7857 = vmatpush1.msra.mxu0 0.0
        %7858 = vmatprep.subr.mxu0 0.0
        %7859 = vmatpush1.msra.mxu0 0.0
        %7860 = vmatprep.subr.mxu0 0.0
        %7861 = vmatpush1.msra.mxu0 0.0
        %7862 = vmatprep.subr.mxu0 %v7759
        %7863 = vmatpush1.msra.mxu0 %v7756
        %7864 = vmatprep.subr.mxu0 0.0
        %7865 = vmatpush2.msra.mxu0 0.0
        %7866 = vmatprep.subr.mxu0 0.0
        %7867 = vmatpush2.msra.mxu0 0.0
        %7868 = vmatprep.subr.mxu0 0.0
        %7869 = vmatpush2.msra.mxu0 0.0
        %7870 = vmatprep.subr.mxu0 0.0
        %7871 = vmatpush2.msra.mxu0 0.0
        %7872 = vmatprep.subr.mxu0 0.0
        %7873 = vmatpush2.msra.mxu0 0.0
        %7874 = vmatprep.subr.mxu0 0.0
        %7875 = vmatpush2.msra.mxu0 0.0
        %7876 = vmatprep.subr.mxu0 0.0
        %7877 = vmatpush2.msra.mxu0 0.0
        %7878 = vmatprep.subr.mxu0 0.0
        %7879 = vmatpush2.msra.mxu0 0.0
        %7880 = vmatprep.subr.mxu0 0.0
        %7881 = vmatpush2.msra.mxu0 0.0
        %7882 = vmatprep.subr.mxu0 0.0
        %7883 = vmatpush2.msra.mxu0 0.0
        %7884 = vmatprep.subr.mxu0 0.0
        %7885 = vmatpush2.msra.mxu0 0.0
        %7886 = vmatprep.subr.mxu0 0.0
        %7887 = vmatpush2.msra.mxu0 0.0
        %7888 = vmatprep.subr.mxu0 0.0
        %7889 = vmatpush2.msra.mxu0 0.0
        %7890 = vmatprep.subr.mxu0 0.0
        %7891 = vmatpush2.msra.mxu0 0.0
        %7892 = vmatprep.subr.mxu0 0.0
        %7893 = vmatpush2.msra.mxu0 0.0
        %7894 = vmatprep.subr.mxu0 0.0
        %7895 = vmatpush2.msra.mxu0 0.0
        %7896 = vmatprep.mubr.f32.mxu0 0.0
        %7897 = vmatmul.mubr.f32.gmra.mxu0 %v7747
        %v7898 = vpop.f32.mrf.mxu0
        %v7899 = vadd.f32 0.0, %v7898
        %v7900 = vpop.f32.mrf.mxu0
        %v7901 = vadd.f32 0.0, %v7900
        %7902 = vdwg.mxu0
        %v7903 = vadd.f32 %v7724, %v7828
        %v7904 = vadd.f32 %v7725, %v7830
        %v7905 = vadd.f32 %v7726, %v7899
        %v7906 = vadd.f32 %v7727, %v7901
        %s7907 = scalar_lea.vmem %s3, 52
        %v7908 = vld [vmem:[%s7907] sm:$0xf]
        %v7910 = vsel %vm345, %v7908, 0
        %v7913 = vsel %vm349, %v5585, 0
        %v7916 = vsel %vm349, %v5586, 0
        %v7919 = vsel %vm349, %v5587, 0
        %v7922 = vsel %vm349, %v5588, 0
        %7924 = vmatprep.subr.mxu0 0.0
        %7925 = vmatpush1.msra.mxu0 0.0
        %7926 = vmatprep.subr.mxu0 0.0
        %7927 = vmatpush1.msra.mxu0 0.0
        %7928 = vmatprep.subr.mxu0 0.0
        %7929 = vmatpush1.msra.mxu0 0.0
        %7930 = vmatprep.subr.mxu0 0.0
        %7931 = vmatpush1.msra.mxu0 0.0
        %7932 = vmatprep.subr.mxu0 0.0
        %7933 = vmatpush1.msra.mxu0 0.0
        %7934 = vmatprep.subr.mxu0 0.0
        %7935 = vmatpush1.msra.mxu0 0.0
        %7936 = vmatprep.subr.mxu0 0.0
        %7937 = vmatpush1.msra.mxu0 0.0
        %7938 = vmatprep.subr.mxu0 0.0
        %7939 = vmatpush1.msra.mxu0 0.0
        %7940 = vmatprep.subr.mxu0 0.0
        %7941 = vmatpush1.msra.mxu0 0.0
        %7942 = vmatprep.subr.mxu0 0.0
        %7943 = vmatpush1.msra.mxu0 0.0
        %7944 = vmatprep.subr.mxu0 0.0
        %7945 = vmatpush1.msra.mxu0 0.0
        %7946 = vmatprep.subr.mxu0 0.0
        %7947 = vmatpush1.msra.mxu0 0.0
        %7948 = vmatprep.subr.mxu0 0.0
        %7949 = vmatpush1.msra.mxu0 0.0
        %7950 = vmatprep.subr.mxu0 0.0
        %7951 = vmatpush1.msra.mxu0 0.0
        %7952 = vmatprep.subr.mxu0 0.0
        %7953 = vmatpush1.msra.mxu0 0.0
        %7954 = vmatprep.subr.mxu0 %v7916
        %7955 = vmatpush1.msra.mxu0 %v7913
        %7956 = vmatprep.subr.mxu0 0.0
        %7957 = vmatpush2.msra.mxu0 0.0
        %7958 = vmatprep.subr.mxu0 0.0
        %7959 = vmatpush2.msra.mxu0 0.0
        %7960 = vmatprep.subr.mxu0 0.0
        %7961 = vmatpush2.msra.mxu0 0.0
        %7962 = vmatprep.subr.mxu0 0.0
        %7963 = vmatpush2.msra.mxu0 0.0
        %7964 = vmatprep.subr.mxu0 0.0
        %7965 = vmatpush2.msra.mxu0 0.0
        %7966 = vmatprep.subr.mxu0 0.0
        %7967 = vmatpush2.msra.mxu0 0.0
        %7968 = vmatprep.subr.mxu0 0.0
        %7969 = vmatpush2.msra.mxu0 0.0
        %7970 = vmatprep.subr.mxu0 0.0
        %7971 = vmatpush2.msra.mxu0 0.0
        %7972 = vmatprep.subr.mxu0 0.0
        %7973 = vmatpush2.msra.mxu0 0.0
        %7974 = vmatprep.subr.mxu0 0.0
        %7975 = vmatpush2.msra.mxu0 0.0
        %7976 = vmatprep.subr.mxu0 0.0
        %7977 = vmatpush2.msra.mxu0 0.0
        %7978 = vmatprep.subr.mxu0 0.0
        %7979 = vmatpush2.msra.mxu0 0.0
        %7980 = vmatprep.subr.mxu0 0.0
        %7981 = vmatpush2.msra.mxu0 0.0
        %7982 = vmatprep.subr.mxu0 0.0
        %7983 = vmatpush2.msra.mxu0 0.0
        %7984 = vmatprep.subr.mxu0 0.0
        %7985 = vmatpush2.msra.mxu0 0.0
        %7986 = vmatprep.subr.mxu0 0.0
        %7987 = vmatpush2.msra.mxu0 0.0
        %7988 = vmatprep.mubr.f32.mxu0 0.0
        %7989 = vmatmul.mubr.f32.gmra.mxu0 %v7910
        %v7990 = vpop.f32.mrf.mxu0
        %v7991 = vadd.f32 0.0, %v7990
        %v7992 = vpop.f32.mrf.mxu0
        %v7993 = vadd.f32 0.0, %v7992
        %7994 = vdwg.mxu0
        %7995 = vmatprep.subr.mxu0 0.0
        %7996 = vmatpush1.msra.mxu0 0.0
        %7997 = vmatprep.subr.mxu0 0.0
        %7998 = vmatpush1.msra.mxu0 0.0
        %7999 = vmatprep.subr.mxu0 0.0
        %8000 = vmatpush1.msra.mxu0 0.0
        %8001 = vmatprep.subr.mxu0 0.0
        %8002 = vmatpush1.msra.mxu0 0.0
        %8003 = vmatprep.subr.mxu0 0.0
        %8004 = vmatpush1.msra.mxu0 0.0
        %8005 = vmatprep.subr.mxu0 0.0
        %8006 = vmatpush1.msra.mxu0 0.0
        %8007 = vmatprep.subr.mxu0 0.0
        %8008 = vmatpush1.msra.mxu0 0.0
        %8009 = vmatprep.subr.mxu0 0.0
        %8010 = vmatpush1.msra.mxu0 0.0
        %8011 = vmatprep.subr.mxu0 0.0
        %8012 = vmatpush1.msra.mxu0 0.0
        %8013 = vmatprep.subr.mxu0 0.0
        %8014 = vmatpush1.msra.mxu0 0.0
        %8015 = vmatprep.subr.mxu0 0.0
        %8016 = vmatpush1.msra.mxu0 0.0
        %8017 = vmatprep.subr.mxu0 0.0
        %8018 = vmatpush1.msra.mxu0 0.0
        %8019 = vmatprep.subr.mxu0 0.0
        %8020 = vmatpush1.msra.mxu0 0.0
        %8021 = vmatprep.subr.mxu0 0.0
        %8022 = vmatpush1.msra.mxu0 0.0
        %8023 = vmatprep.subr.mxu0 0.0
        %8024 = vmatpush1.msra.mxu0 0.0
        %8025 = vmatprep.subr.mxu0 %v7922
        %8026 = vmatpush1.msra.mxu0 %v7919
        %8027 = vmatprep.subr.mxu0 0.0
        %8028 = vmatpush2.msra.mxu0 0.0
        %8029 = vmatprep.subr.mxu0 0.0
        %8030 = vmatpush2.msra.mxu0 0.0
        %8031 = vmatprep.subr.mxu0 0.0
        %8032 = vmatpush2.msra.mxu0 0.0
        %8033 = vmatprep.subr.mxu0 0.0
        %8034 = vmatpush2.msra.mxu0 0.0
        %8035 = vmatprep.subr.mxu0 0.0
        %8036 = vmatpush2.msra.mxu0 0.0
        %8037 = vmatprep.subr.mxu0 0.0
        %8038 = vmatpush2.msra.mxu0 0.0
        %8039 = vmatprep.subr.mxu0 0.0
        %8040 = vmatpush2.msra.mxu0 0.0
        %8041 = vmatprep.subr.mxu0 0.0
        %8042 = vmatpush2.msra.mxu0 0.0
        %8043 = vmatprep.subr.mxu0 0.0
        %8044 = vmatpush2.msra.mxu0 0.0
        %8045 = vmatprep.subr.mxu0 0.0
        %8046 = vmatpush2.msra.mxu0 0.0
        %8047 = vmatprep.subr.mxu0 0.0
        %8048 = vmatpush2.msra.mxu0 0.0
        %8049 = vmatprep.subr.mxu0 0.0
        %8050 = vmatpush2.msra.mxu0 0.0
        %8051 = vmatprep.subr.mxu0 0.0
        %8052 = vmatpush2.msra.mxu0 0.0
        %8053 = vmatprep.subr.mxu0 0.0
        %8054 = vmatpush2.msra.mxu0 0.0
        %8055 = vmatprep.subr.mxu0 0.0
        %8056 = vmatpush2.msra.mxu0 0.0
        %8057 = vmatprep.subr.mxu0 0.0
        %8058 = vmatpush2.msra.mxu0 0.0
        %8059 = vmatprep.mubr.f32.mxu0 0.0
        %8060 = vmatmul.mubr.f32.gmra.mxu0 %v7910
        %v8061 = vpop.f32.mrf.mxu0
        %v8062 = vadd.f32 0.0, %v8061
        %v8063 = vpop.f32.mrf.mxu0
        %v8064 = vadd.f32 0.0, %v8063
        %8065 = vdwg.mxu0
        %v8066 = vadd.f32 %v7903, %v7991
        %v8067 = vadd.f32 %v7904, %v7993
        %v8068 = vadd.f32 %v7905, %v8062
        %v8069 = vadd.f32 %v7906, %v8064
        %8070 = vrot.lane.b32.xlu0 %v5585, 127
        %v8071 = vpop.permute.xlu0 %8070
        %8072 = vrot.lane.b32.xlu0 %v5586, 127
        %v8073 = vpop.permute.xlu0 %8072
        %8074 = vrot.lane.b32.xlu0 %v5587, 127
        %v8075 = vpop.permute.xlu0 %8074
        %8076 = vrot.lane.b32.xlu0 %v5588, 127
        %v8077 = vpop.permute.xlu0 %8076
        %v8078 = vsel %vm3061, %v8075, %v8077
        %v8079 = vsel %vm3061, %v8073, %v8075
        %v8080 = vsel %vm3061, %v8071, %v8073
        %v8081 = vsel %vm3061, %v8077, %v8071
        %v8082 = vmul.f32 %v8080, %v3072
        %v8083 = vmul.f32 %v8079, %v3076
        %v8084 = vmul.f32 %v8078, %v3080
        %v8085 = vmul.f32 %v8081, %v3084
        %s8086 = scalar_lea.vmem %s3, 56
        %v8087 = vld [vmem:[%s8086] sm:$0xf]
        %v8089 = vsel %vm345, %v8087, 0
        %v8092 = vsel %vm349, %v8082, 0
        %v8095 = vsel %vm349, %v8083, 0
        %v8098 = vsel %vm349, %v8084, 0
        %v8101 = vsel %vm349, %v8085, 0
        %8103 = vmatprep.subr.mxu0 0.0
        %8104 = vmatpush1.msra.mxu0 0.0
        %8105 = vmatprep.subr.mxu0 0.0
        %8106 = vmatpush1.msra.mxu0 0.0
        %8107 = vmatprep.subr.mxu0 0.0
        %8108 = vmatpush1.msra.mxu0 0.0
        %8109 = vmatprep.subr.mxu0 0.0
        %8110 = vmatpush1.msra.mxu0 0.0
        %8111 = vmatprep.subr.mxu0 0.0
        %8112 = vmatpush1.msra.mxu0 0.0
        %8113 = vmatprep.subr.mxu0 0.0
        %8114 = vmatpush1.msra.mxu0 0.0
        %8115 = vmatprep.subr.mxu0 0.0
        %8116 = vmatpush1.msra.mxu0 0.0
        %8117 = vmatprep.subr.mxu0 0.0
        %8118 = vmatpush1.msra.mxu0 0.0
        %8119 = vmatprep.subr.mxu0 0.0
        %8120 = vmatpush1.msra.mxu0 0.0
        %8121 = vmatprep.subr.mxu0 0.0
        %8122 = vmatpush1.msra.mxu0 0.0
        %8123 = vmatprep.subr.mxu0 0.0
        %8124 = vmatpush1.msra.mxu0 0.0
        %8125 = vmatprep.subr.mxu0 0.0
        %8126 = vmatpush1.msra.mxu0 0.0
        %8127 = vmatprep.subr.mxu0 0.0
        %8128 = vmatpush1.msra.mxu0 0.0
        %8129 = vmatprep.subr.mxu0 0.0
        %8130 = vmatpush1.msra.mxu0 0.0
        %8131 = vmatprep.subr.mxu0 0.0
        %8132 = vmatpush1.msra.mxu0 0.0
        %8133 = vmatprep.subr.mxu0 %v8095
        %8134 = vmatpush1.msra.mxu0 %v8092
        %8135 = vmatprep.subr.mxu0 0.0
        %8136 = vmatpush2.msra.mxu0 0.0
        %8137 = vmatprep.subr.mxu0 0.0
        %8138 = vmatpush2.msra.mxu0 0.0
        %8139 = vmatprep.subr.mxu0 0.0
        %8140 = vmatpush2.msra.mxu0 0.0
        %8141 = vmatprep.subr.mxu0 0.0
        %8142 = vmatpush2.msra.mxu0 0.0
        %8143 = vmatprep.subr.mxu0 0.0
        %8144 = vmatpush2.msra.mxu0 0.0
        %8145 = vmatprep.subr.mxu0 0.0
        %8146 = vmatpush2.msra.mxu0 0.0
        %8147 = vmatprep.subr.mxu0 0.0
        %8148 = vmatpush2.msra.mxu0 0.0
        %8149 = vmatprep.subr.mxu0 0.0
        %8150 = vmatpush2.msra.mxu0 0.0
        %8151 = vmatprep.subr.mxu0 0.0
        %8152 = vmatpush2.msra.mxu0 0.0
        %8153 = vmatprep.subr.mxu0 0.0
        %8154 = vmatpush2.msra.mxu0 0.0
        %8155 = vmatprep.subr.mxu0 0.0
        %8156 = vmatpush2.msra.mxu0 0.0
        %8157 = vmatprep.subr.mxu0 0.0
        %8158 = vmatpush2.msra.mxu0 0.0
        %8159 = vmatprep.subr.mxu0 0.0
        %8160 = vmatpush2.msra.mxu0 0.0
        %8161 = vmatprep.subr.mxu0 0.0
        %8162 = vmatpush2.msra.mxu0 0.0
        %8163 = vmatprep.subr.mxu0 0.0
        %8164 = vmatpush2.msra.mxu0 0.0
        %8165 = vmatprep.subr.mxu0 0.0
        %8166 = vmatpush2.msra.mxu0 0.0
        %8167 = vmatprep.mubr.f32.mxu0 0.0
        %8168 = vmatmul.mubr.f32.gmra.mxu0 %v8089
        %v8169 = vpop.f32.mrf.mxu0
        %v8170 = vadd.f32 0.0, %v8169
        %v8171 = vpop.f32.mrf.mxu0
        %v8172 = vadd.f32 0.0, %v8171
        %8173 = vdwg.mxu0
        %8174 = vmatprep.subr.mxu0 0.0
        %8175 = vmatpush1.msra.mxu0 0.0
        %8176 = vmatprep.subr.mxu0 0.0
        %8177 = vmatpush1.msra.mxu0 0.0
        %8178 = vmatprep.subr.mxu0 0.0
        %8179 = vmatpush1.msra.mxu0 0.0
        %8180 = vmatprep.subr.mxu0 0.0
        %8181 = vmatpush1.msra.mxu0 0.0
        %8182 = vmatprep.subr.mxu0 0.0
        %8183 = vmatpush1.msra.mxu0 0.0
        %8184 = vmatprep.subr.mxu0 0.0
        %8185 = vmatpush1.msra.mxu0 0.0
        %8186 = vmatprep.subr.mxu0 0.0
        %8187 = vmatpush1.msra.mxu0 0.0
        %8188 = vmatprep.subr.mxu0 0.0
        %8189 = vmatpush1.msra.mxu0 0.0
        %8190 = vmatprep.subr.mxu0 0.0
        %8191 = vmatpush1.msra.mxu0 0.0
        %8192 = vmatprep.subr.mxu0 0.0
        %8193 = vmatpush1.msra.mxu0 0.0
        %8194 = vmatprep.subr.mxu0 0.0
        %8195 = vmatpush1.msra.mxu0 0.0
        %8196 = vmatprep.subr.mxu0 0.0
        %8197 = vmatpush1.msra.mxu0 0.0
        %8198 = vmatprep.subr.mxu0 0.0
        %8199 = vmatpush1.msra.mxu0 0.0
        %8200 = vmatprep.subr.mxu0 0.0
        %8201 = vmatpush1.msra.mxu0 0.0
        %8202 = vmatprep.subr.mxu0 0.0
        %8203 = vmatpush1.msra.mxu0 0.0
        %8204 = vmatprep.subr.mxu0 %v8101
        %8205 = vmatpush1.msra.mxu0 %v8098
        %8206 = vmatprep.subr.mxu0 0.0
        %8207 = vmatpush2.msra.mxu0 0.0
        %8208 = vmatprep.subr.mxu0 0.0
        %8209 = vmatpush2.msra.mxu0 0.0
        %8210 = vmatprep.subr.mxu0 0.0
        %8211 = vmatpush2.msra.mxu0 0.0
        %8212 = vmatprep.subr.mxu0 0.0
        %8213 = vmatpush2.msra.mxu0 0.0
        %8214 = vmatprep.subr.mxu0 0.0
        %8215 = vmatpush2.msra.mxu0 0.0
        %8216 = vmatprep.subr.mxu0 0.0
        %8217 = vmatpush2.msra.mxu0 0.0
        %8218 = vmatprep.subr.mxu0 0.0
        %8219 = vmatpush2.msra.mxu0 0.0
        %8220 = vmatprep.subr.mxu0 0.0
        %8221 = vmatpush2.msra.mxu0 0.0
        %8222 = vmatprep.subr.mxu0 0.0
        %8223 = vmatpush2.msra.mxu0 0.0
        %8224 = vmatprep.subr.mxu0 0.0
        %8225 = vmatpush2.msra.mxu0 0.0
        %8226 = vmatprep.subr.mxu0 0.0
        %8227 = vmatpush2.msra.mxu0 0.0
        %8228 = vmatprep.subr.mxu0 0.0
        %8229 = vmatpush2.msra.mxu0 0.0
        %8230 = vmatprep.subr.mxu0 0.0
        %8231 = vmatpush2.msra.mxu0 0.0
        %8232 = vmatprep.subr.mxu0 0.0
        %8233 = vmatpush2.msra.mxu0 0.0
        %8234 = vmatprep.subr.mxu0 0.0
        %8235 = vmatpush2.msra.mxu0 0.0
        %8236 = vmatprep.subr.mxu0 0.0
        %8237 = vmatpush2.msra.mxu0 0.0
        %8238 = vmatprep.mubr.f32.mxu0 0.0
        %8239 = vmatmul.mubr.f32.gmra.mxu0 %v8089
        %v8240 = vpop.f32.mrf.mxu0
        %v8241 = vadd.f32 0.0, %v8240
        %v8242 = vpop.f32.mrf.mxu0
        %v8243 = vadd.f32 0.0, %v8242
        %8244 = vdwg.mxu0
        %v8245 = vadd.f32 %v8066, %v8170
        %v8246 = vadd.f32 %v8067, %v8172
        %v8247 = vadd.f32 %v8068, %v8241
        %v8248 = vadd.f32 %v8069, %v8243
        %8249 = vrot.lane.b32.xlu0 %v5585, 121
        %v8250 = vpop.permute.xlu0 %8249
        %8251 = vrot.lane.b32.xlu0 %v5586, 121
        %v8252 = vpop.permute.xlu0 %8251
        %8253 = vrot.lane.b32.xlu0 %v5587, 121
        %v8254 = vpop.permute.xlu0 %8253
        %8255 = vrot.lane.b32.xlu0 %v5588, 121
        %v8256 = vpop.permute.xlu0 %8255
        %v8257 = vsel %vm3264, %v8254, %v8256
        %v8258 = vsel %vm3264, %v8252, %v8254
        %v8259 = vsel %vm3264, %v8250, %v8252
        %v8260 = vsel %vm3264, %v8256, %v8250
        %v8261 = vmul.f32 %v8259, %v3275
        %v8262 = vmul.f32 %v8258, %v3279
        %v8263 = vmul.f32 %v8257, %v3283
        %v8264 = vmul.f32 %v8260, %v3287
        %s8265 = scalar_lea.vmem %s3, 60
        %v8266 = vld [vmem:[%s8265] sm:$0xf]
        %v8268 = vsel %vm345, %v8266, 0
        %v8271 = vsel %vm349, %v8261, 0
        %v8274 = vsel %vm349, %v8262, 0
        %v8277 = vsel %vm349, %v8263, 0
        %v8280 = vsel %vm349, %v8264, 0
        %8282 = vmatprep.subr.mxu0 0.0
        %8283 = vmatpush1.msra.mxu0 0.0
        %8284 = vmatprep.subr.mxu0 0.0
        %8285 = vmatpush1.msra.mxu0 0.0
        %8286 = vmatprep.subr.mxu0 0.0
        %8287 = vmatpush1.msra.mxu0 0.0
        %8288 = vmatprep.subr.mxu0 0.0
        %8289 = vmatpush1.msra.mxu0 0.0
        %8290 = vmatprep.subr.mxu0 0.0
        %8291 = vmatpush1.msra.mxu0 0.0
        %8292 = vmatprep.subr.mxu0 0.0
        %8293 = vmatpush1.msra.mxu0 0.0
        %8294 = vmatprep.subr.mxu0 0.0
        %8295 = vmatpush1.msra.mxu0 0.0
        %8296 = vmatprep.subr.mxu0 0.0
        %8297 = vmatpush1.msra.mxu0 0.0
        %8298 = vmatprep.subr.mxu0 0.0
        %8299 = vmatpush1.msra.mxu0 0.0
        %8300 = vmatprep.subr.mxu0 0.0
        %8301 = vmatpush1.msra.mxu0 0.0
        %8302 = vmatprep.subr.mxu0 0.0
        %8303 = vmatpush1.msra.mxu0 0.0
        %8304 = vmatprep.subr.mxu0 0.0
        %8305 = vmatpush1.msra.mxu0 0.0
        %8306 = vmatprep.subr.mxu0 0.0
        %8307 = vmatpush1.msra.mxu0 0.0
        %8308 = vmatprep.subr.mxu0 0.0
        %8309 = vmatpush1.msra.mxu0 0.0
        %8310 = vmatprep.subr.mxu0 0.0
        %8311 = vmatpush1.msra.mxu0 0.0
        %8312 = vmatprep.subr.mxu0 %v8274
        %8313 = vmatpush1.msra.mxu0 %v8271
        %8314 = vmatprep.subr.mxu0 0.0
        %8315 = vmatpush2.msra.mxu0 0.0
        %8316 = vmatprep.subr.mxu0 0.0
        %8317 = vmatpush2.msra.mxu0 0.0
        %8318 = vmatprep.subr.mxu0 0.0
        %8319 = vmatpush2.msra.mxu0 0.0
        %8320 = vmatprep.subr.mxu0 0.0
        %8321 = vmatpush2.msra.mxu0 0.0
        %8322 = vmatprep.subr.mxu0 0.0
        %8323 = vmatpush2.msra.mxu0 0.0
        %8324 = vmatprep.subr.mxu0 0.0
        %8325 = vmatpush2.msra.mxu0 0.0
        %8326 = vmatprep.subr.mxu0 0.0
        %8327 = vmatpush2.msra.mxu0 0.0
        %8328 = vmatprep.subr.mxu0 0.0
        %8329 = vmatpush2.msra.mxu0 0.0
        %8330 = vmatprep.subr.mxu0 0.0
        %8331 = vmatpush2.msra.mxu0 0.0
        %8332 = vmatprep.subr.mxu0 0.0
        %8333 = vmatpush2.msra.mxu0 0.0
        %8334 = vmatprep.subr.mxu0 0.0
        %8335 = vmatpush2.msra.mxu0 0.0
        %8336 = vmatprep.subr.mxu0 0.0
        %8337 = vmatpush2.msra.mxu0 0.0
        %8338 = vmatprep.subr.mxu0 0.0
        %8339 = vmatpush2.msra.mxu0 0.0
        %8340 = vmatprep.subr.mxu0 0.0
        %8341 = vmatpush2.msra.mxu0 0.0
        %8342 = vmatprep.subr.mxu0 0.0
        %8343 = vmatpush2.msra.mxu0 0.0
        %8344 = vmatprep.subr.mxu0 0.0
        %8345 = vmatpush2.msra.mxu0 0.0
        %8346 = vmatprep.mubr.f32.mxu0 0.0
        %8347 = vmatmul.mubr.f32.gmra.mxu0 %v8268
        %v8348 = vpop.f32.mrf.mxu0
        %v8349 = vadd.f32 0.0, %v8348
        %v8350 = vpop.f32.mrf.mxu0
        %v8351 = vadd.f32 0.0, %v8350
        %8352 = vdwg.mxu0
        %8353 = vmatprep.subr.mxu0 0.0
        %8354 = vmatpush1.msra.mxu0 0.0
        %8355 = vmatprep.subr.mxu0 0.0
        %8356 = vmatpush1.msra.mxu0 0.0
        %8357 = vmatprep.subr.mxu0 0.0
        %8358 = vmatpush1.msra.mxu0 0.0
        %8359 = vmatprep.subr.mxu0 0.0
        %8360 = vmatpush1.msra.mxu0 0.0
        %8361 = vmatprep.subr.mxu0 0.0
        %8362 = vmatpush1.msra.mxu0 0.0
        %8363 = vmatprep.subr.mxu0 0.0
        %8364 = vmatpush1.msra.mxu0 0.0
        %8365 = vmatprep.subr.mxu0 0.0
        %8366 = vmatpush1.msra.mxu0 0.0
        %8367 = vmatprep.subr.mxu0 0.0
        %8368 = vmatpush1.msra.mxu0 0.0
        %8369 = vmatprep.subr.mxu0 0.0
        %8370 = vmatpush1.msra.mxu0 0.0
        %8371 = vmatprep.subr.mxu0 0.0
        %8372 = vmatpush1.msra.mxu0 0.0
        %8373 = vmatprep.subr.mxu0 0.0
        %8374 = vmatpush1.msra.mxu0 0.0
        %8375 = vmatprep.subr.mxu0 0.0
        %8376 = vmatpush1.msra.mxu0 0.0
        %8377 = vmatprep.subr.mxu0 0.0
        %8378 = vmatpush1.msra.mxu0 0.0
        %8379 = vmatprep.subr.mxu0 0.0
        %8380 = vmatpush1.msra.mxu0 0.0
        %8381 = vmatprep.subr.mxu0 0.0
        %8382 = vmatpush1.msra.mxu0 0.0
        %8383 = vmatprep.subr.mxu0 %v8280
        %8384 = vmatpush1.msra.mxu0 %v8277
        %8385 = vmatprep.subr.mxu0 0.0
        %8386 = vmatpush2.msra.mxu0 0.0
        %8387 = vmatprep.subr.mxu0 0.0
        %8388 = vmatpush2.msra.mxu0 0.0
        %8389 = vmatprep.subr.mxu0 0.0
        %8390 = vmatpush2.msra.mxu0 0.0
        %8391 = vmatprep.subr.mxu0 0.0
        %8392 = vmatpush2.msra.mxu0 0.0
        %8393 = vmatprep.subr.mxu0 0.0
        %8394 = vmatpush2.msra.mxu0 0.0
        %8395 = vmatprep.subr.mxu0 0.0
        %8396 = vmatpush2.msra.mxu0 0.0
        %8397 = vmatprep.subr.mxu0 0.0
        %8398 = vmatpush2.msra.mxu0 0.0
        %8399 = vmatprep.subr.mxu0 0.0
        %8400 = vmatpush2.msra.mxu0 0.0
        %8401 = vmatprep.subr.mxu0 0.0
        %8402 = vmatpush2.msra.mxu0 0.0
        %8403 = vmatprep.subr.mxu0 0.0
        %8404 = vmatpush2.msra.mxu0 0.0
        %8405 = vmatprep.subr.mxu0 0.0
        %8406 = vmatpush2.msra.mxu0 0.0
        %8407 = vmatprep.subr.mxu0 0.0
        %8408 = vmatpush2.msra.mxu0 0.0
        %8409 = vmatprep.subr.mxu0 0.0
        %8410 = vmatpush2.msra.mxu0 0.0
        %8411 = vmatprep.subr.mxu0 0.0
        %8412 = vmatpush2.msra.mxu0 0.0
        %8413 = vmatprep.subr.mxu0 0.0
        %8414 = vmatpush2.msra.mxu0 0.0
        %8415 = vmatprep.subr.mxu0 0.0
        %8416 = vmatpush2.msra.mxu0 0.0
        %8417 = vmatprep.mubr.f32.mxu0 0.0
        %8418 = vmatmul.mubr.f32.gmra.mxu0 %v8268
        %v8419 = vpop.f32.mrf.mxu0
        %v8420 = vadd.f32 0.0, %v8419
        %v8421 = vpop.f32.mrf.mxu0
        %v8422 = vadd.f32 0.0, %v8421
        %8423 = vdwg.mxu0
        %v8424 = vadd.f32 %v8245, %v8349
        %v8425 = vadd.f32 %v8246, %v8351
        %v8426 = vadd.f32 %v8247, %v8420
        %v8427 = vadd.f32 %v8248, %v8422
        %8428 = vrot.lane.b32.xlu0 %v5585, 120
        %v8429 = vpop.permute.xlu0 %8428
        %8430 = vrot.lane.b32.xlu0 %v5586, 120
        %v8431 = vpop.permute.xlu0 %8430
        %8432 = vrot.lane.b32.xlu0 %v5587, 120
        %v8433 = vpop.permute.xlu0 %8432
        %8434 = vrot.lane.b32.xlu0 %v5588, 120
        %v8435 = vpop.permute.xlu0 %8434
        %v8436 = vsel %vm3467, %v8433, %v8435
        %v8437 = vsel %vm3467, %v8431, %v8433
        %v8438 = vsel %vm3467, %v8429, %v8431
        %v8439 = vsel %vm3467, %v8435, %v8429
        %v8440 = vmul.f32 %v8438, %v3478
        %v8441 = vmul.f32 %v8437, %v3482
        %v8442 = vmul.f32 %v8436, %v3486
        %v8443 = vmul.f32 %v8439, %v3490
        %s8444 = scalar_lea.vmem %s3, 64
        %v8445 = vld [vmem:[%s8444] sm:$0xf]
        %v8447 = vsel %vm345, %v8445, 0
        %v8450 = vsel %vm349, %v8440, 0
        %v8453 = vsel %vm349, %v8441, 0
        %v8456 = vsel %vm349, %v8442, 0
        %v8459 = vsel %vm349, %v8443, 0
        %8461 = vmatprep.subr.mxu0 0.0
        %8462 = vmatpush1.msra.mxu0 0.0
        %8463 = vmatprep.subr.mxu0 0.0
        %8464 = vmatpush1.msra.mxu0 0.0
        %8465 = vmatprep.subr.mxu0 0.0
        %8466 = vmatpush1.msra.mxu0 0.0
        %8467 = vmatprep.subr.mxu0 0.0
        %8468 = vmatpush1.msra.mxu0 0.0
        %8469 = vmatprep.subr.mxu0 0.0
        %8470 = vmatpush1.msra.mxu0 0.0
        %8471 = vmatprep.subr.mxu0 0.0
        %8472 = vmatpush1.msra.mxu0 0.0
        %8473 = vmatprep.subr.mxu0 0.0
        %8474 = vmatpush1.msra.mxu0 0.0
        %8475 = vmatprep.subr.mxu0 0.0
        %8476 = vmatpush1.msra.mxu0 0.0
        %8477 = vmatprep.subr.mxu0 0.0
        %8478 = vmatpush1.msra.mxu0 0.0
        %8479 = vmatprep.subr.mxu0 0.0
        %8480 = vmatpush1.msra.mxu0 0.0
        %8481 = vmatprep.subr.mxu0 0.0
        %8482 = vmatpush1.msra.mxu0 0.0
        %8483 = vmatprep.subr.mxu0 0.0
        %8484 = vmatpush1.msra.mxu0 0.0
        %8485 = vmatprep.subr.mxu0 0.0
        %8486 = vmatpush1.msra.mxu0 0.0
        %8487 = vmatprep.subr.mxu0 0.0
        %8488 = vmatpush1.msra.mxu0 0.0
        %8489 = vmatprep.subr.mxu0 0.0
        %8490 = vmatpush1.msra.mxu0 0.0
        %8491 = vmatprep.subr.mxu0 %v8453
        %8492 = vmatpush1.msra.mxu0 %v8450
        %8493 = vmatprep.subr.mxu0 0.0
        %8494 = vmatpush2.msra.mxu0 0.0
        %8495 = vmatprep.subr.mxu0 0.0
        %8496 = vmatpush2.msra.mxu0 0.0
        %8497 = vmatprep.subr.mxu0 0.0
        %8498 = vmatpush2.msra.mxu0 0.0
        %8499 = vmatprep.subr.mxu0 0.0
        %8500 = vmatpush2.msra.mxu0 0.0
        %8501 = vmatprep.subr.mxu0 0.0
        %8502 = vmatpush2.msra.mxu0 0.0
        %8503 = vmatprep.subr.mxu0 0.0
        %8504 = vmatpush2.msra.mxu0 0.0
        %8505 = vmatprep.subr.mxu0 0.0
        %8506 = vmatpush2.msra.mxu0 0.0
        %8507 = vmatprep.subr.mxu0 0.0
        %8508 = vmatpush2.msra.mxu0 0.0
        %8509 = vmatprep.subr.mxu0 0.0
        %8510 = vmatpush2.msra.mxu0 0.0
        %8511 = vmatprep.subr.mxu0 0.0
        %8512 = vmatpush2.msra.mxu0 0.0
        %8513 = vmatprep.subr.mxu0 0.0
        %8514 = vmatpush2.msra.mxu0 0.0
        %8515 = vmatprep.subr.mxu0 0.0
        %8516 = vmatpush2.msra.mxu0 0.0
        %8517 = vmatprep.subr.mxu0 0.0
        %8518 = vmatpush2.msra.mxu0 0.0
        %8519 = vmatprep.subr.mxu0 0.0
        %8520 = vmatpush2.msra.mxu0 0.0
        %8521 = vmatprep.subr.mxu0 0.0
        %8522 = vmatpush2.msra.mxu0 0.0
        %8523 = vmatprep.subr.mxu0 0.0
        %8524 = vmatpush2.msra.mxu0 0.0
        %8525 = vmatprep.mubr.f32.mxu0 0.0
        %8526 = vmatmul.mubr.f32.gmra.mxu0 %v8447
        %v8527 = vpop.f32.mrf.mxu0
        %v8528 = vadd.f32 0.0, %v8527
        %v8529 = vpop.f32.mrf.mxu0
        %v8530 = vadd.f32 0.0, %v8529
        %8531 = vdwg.mxu0
        %8532 = vmatprep.subr.mxu0 0.0
        %8533 = vmatpush1.msra.mxu0 0.0
        %8534 = vmatprep.subr.mxu0 0.0
        %8535 = vmatpush1.msra.mxu0 0.0
        %8536 = vmatprep.subr.mxu0 0.0
        %8537 = vmatpush1.msra.mxu0 0.0
        %8538 = vmatprep.subr.mxu0 0.0
        %8539 = vmatpush1.msra.mxu0 0.0
        %8540 = vmatprep.subr.mxu0 0.0
        %8541 = vmatpush1.msra.mxu0 0.0
        %8542 = vmatprep.subr.mxu0 0.0
        %8543 = vmatpush1.msra.mxu0 0.0
        %8544 = vmatprep.subr.mxu0 0.0
        %8545 = vmatpush1.msra.mxu0 0.0
        %8546 = vmatprep.subr.mxu0 0.0
        %8547 = vmatpush1.msra.mxu0 0.0
        %8548 = vmatprep.subr.mxu0 0.0
        %8549 = vmatpush1.msra.mxu0 0.0
        %8550 = vmatprep.subr.mxu0 0.0
        %8551 = vmatpush1.msra.mxu0 0.0
        %8552 = vmatprep.subr.mxu0 0.0
        %8553 = vmatpush1.msra.mxu0 0.0
        %8554 = vmatprep.subr.mxu0 0.0
        %8555 = vmatpush1.msra.mxu0 0.0
        %8556 = vmatprep.subr.mxu0 0.0
        %8557 = vmatpush1.msra.mxu0 0.0
        %8558 = vmatprep.subr.mxu0 0.0
        %8559 = vmatpush1.msra.mxu0 0.0
        %8560 = vmatprep.subr.mxu0 0.0
        %8561 = vmatpush1.msra.mxu0 0.0
        %8562 = vmatprep.subr.mxu0 %v8459
        %8563 = vmatpush1.msra.mxu0 %v8456
        %8564 = vmatprep.subr.mxu0 0.0
        %8565 = vmatpush2.msra.mxu0 0.0
        %8566 = vmatprep.subr.mxu0 0.0
        %8567 = vmatpush2.msra.mxu0 0.0
        %8568 = vmatprep.subr.mxu0 0.0
        %8569 = vmatpush2.msra.mxu0 0.0
        %8570 = vmatprep.subr.mxu0 0.0
        %8571 = vmatpush2.msra.mxu0 0.0
        %8572 = vmatprep.subr.mxu0 0.0
        %8573 = vmatpush2.msra.mxu0 0.0
        %8574 = vmatprep.subr.mxu0 0.0
        %8575 = vmatpush2.msra.mxu0 0.0
        %8576 = vmatprep.subr.mxu0 0.0
        %8577 = vmatpush2.msra.mxu0 0.0
        %8578 = vmatprep.subr.mxu0 0.0
        %8579 = vmatpush2.msra.mxu0 0.0
        %8580 = vmatprep.subr.mxu0 0.0
        %8581 = vmatpush2.msra.mxu0 0.0
        %8582 = vmatprep.subr.mxu0 0.0
        %8583 = vmatpush2.msra.mxu0 0.0
        %8584 = vmatprep.subr.mxu0 0.0
        %8585 = vmatpush2.msra.mxu0 0.0
        %8586 = vmatprep.subr.mxu0 0.0
        %8587 = vmatpush2.msra.mxu0 0.0
        %8588 = vmatprep.subr.mxu0 0.0
        %8589 = vmatpush2.msra.mxu0 0.0
        %8590 = vmatprep.subr.mxu0 0.0
        %8591 = vmatpush2.msra.mxu0 0.0
        %8592 = vmatprep.subr.mxu0 0.0
        %8593 = vmatpush2.msra.mxu0 0.0
        %8594 = vmatprep.subr.mxu0 0.0
        %8595 = vmatpush2.msra.mxu0 0.0
        %8596 = vmatprep.mubr.f32.mxu0 0.0
        %8597 = vmatmul.mubr.f32.gmra.mxu0 %v8447
        %v8598 = vpop.f32.mrf.mxu0
        %v8599 = vadd.f32 0.0, %v8598
        %v8600 = vpop.f32.mrf.mxu0
        %v8601 = vadd.f32 0.0, %v8600
        %8602 = vdwg.mxu0
        %v8603 = vadd.f32 %v8424, %v8528
        %v8604 = vadd.f32 %v8425, %v8530
        %v8605 = vadd.f32 %v8426, %v8599
        %v8606 = vadd.f32 %v8427, %v8601
        %8607 = vrot.lane.b32.xlu0 %v5585, 119
        %v8608 = vpop.permute.xlu0 %8607
        %8609 = vrot.lane.b32.xlu0 %v5586, 119
        %v8610 = vpop.permute.xlu0 %8609
        %8611 = vrot.lane.b32.xlu0 %v5587, 119
        %v8612 = vpop.permute.xlu0 %8611
        %8613 = vrot.lane.b32.xlu0 %v5588, 119
        %v8614 = vpop.permute.xlu0 %8613
        %v8615 = vsel %vm3670, %v8612, %v8614
        %v8616 = vsel %vm3670, %v8610, %v8612
        %v8617 = vsel %vm3670, %v8608, %v8610
        %v8618 = vsel %vm3670, %v8614, %v8608
        %v8619 = vmul.f32 %v8617, %v3681
        %v8620 = vmul.f32 %v8616, %v3685
        %v8621 = vmul.f32 %v8615, %v3689
        %v8622 = vmul.f32 %v8618, %v3693
        %s8623 = scalar_lea.vmem %s3, 68
        %v8624 = vld [vmem:[%s8623] sm:$0xf]
        %v8626 = vsel %vm345, %v8624, 0
        %v8629 = vsel %vm349, %v8619, 0
        %v8632 = vsel %vm349, %v8620, 0
        %v8635 = vsel %vm349, %v8621, 0
        %v8638 = vsel %vm349, %v8622, 0
        %8640 = vmatprep.subr.mxu0 0.0
        %8641 = vmatpush1.msra.mxu0 0.0
        %8642 = vmatprep.subr.mxu0 0.0
        %8643 = vmatpush1.msra.mxu0 0.0
        %8644 = vmatprep.subr.mxu0 0.0
        %8645 = vmatpush1.msra.mxu0 0.0
        %8646 = vmatprep.subr.mxu0 0.0
        %8647 = vmatpush1.msra.mxu0 0.0
        %8648 = vmatprep.subr.mxu0 0.0
        %8649 = vmatpush1.msra.mxu0 0.0
        %8650 = vmatprep.subr.mxu0 0.0
        %8651 = vmatpush1.msra.mxu0 0.0
        %8652 = vmatprep.subr.mxu0 0.0
        %8653 = vmatpush1.msra.mxu0 0.0
        %8654 = vmatprep.subr.mxu0 0.0
        %8655 = vmatpush1.msra.mxu0 0.0
        %8656 = vmatprep.subr.mxu0 0.0
        %8657 = vmatpush1.msra.mxu0 0.0
        %8658 = vmatprep.subr.mxu0 0.0
        %8659 = vmatpush1.msra.mxu0 0.0
        %8660 = vmatprep.subr.mxu0 0.0
        %8661 = vmatpush1.msra.mxu0 0.0
        %8662 = vmatprep.subr.mxu0 0.0
        %8663 = vmatpush1.msra.mxu0 0.0
        %8664 = vmatprep.subr.mxu0 0.0
        %8665 = vmatpush1.msra.mxu0 0.0
        %8666 = vmatprep.subr.mxu0 0.0
        %8667 = vmatpush1.msra.mxu0 0.0
        %8668 = vmatprep.subr.mxu0 0.0
        %8669 = vmatpush1.msra.mxu0 0.0
        %8670 = vmatprep.subr.mxu0 %v8632
        %8671 = vmatpush1.msra.mxu0 %v8629
        %8672 = vmatprep.subr.mxu0 0.0
        %8673 = vmatpush2.msra.mxu0 0.0
        %8674 = vmatprep.subr.mxu0 0.0
        %8675 = vmatpush2.msra.mxu0 0.0
        %8676 = vmatprep.subr.mxu0 0.0
        %8677 = vmatpush2.msra.mxu0 0.0
        %8678 = vmatprep.subr.mxu0 0.0
        %8679 = vmatpush2.msra.mxu0 0.0
        %8680 = vmatprep.subr.mxu0 0.0
        %8681 = vmatpush2.msra.mxu0 0.0
        %8682 = vmatprep.subr.mxu0 0.0
        %8683 = vmatpush2.msra.mxu0 0.0
        %8684 = vmatprep.subr.mxu0 0.0
        %8685 = vmatpush2.msra.mxu0 0.0
        %8686 = vmatprep.subr.mxu0 0.0
        %8687 = vmatpush2.msra.mxu0 0.0
        %8688 = vmatprep.subr.mxu0 0.0
        %8689 = vmatpush2.msra.mxu0 0.0
        %8690 = vmatprep.subr.mxu0 0.0
        %8691 = vmatpush2.msra.mxu0 0.0
        %8692 = vmatprep.subr.mxu0 0.0
        %8693 = vmatpush2.msra.mxu0 0.0
        %8694 = vmatprep.subr.mxu0 0.0
        %8695 = vmatpush2.msra.mxu0 0.0
        %8696 = vmatprep.subr.mxu0 0.0
        %8697 = vmatpush2.msra.mxu0 0.0
        %8698 = vmatprep.subr.mxu0 0.0
        %8699 = vmatpush2.msra.mxu0 0.0
        %8700 = vmatprep.subr.mxu0 0.0
        %8701 = vmatpush2.msra.mxu0 0.0
        %8702 = vmatprep.subr.mxu0 0.0
        %8703 = vmatpush2.msra.mxu0 0.0
        %8704 = vmatprep.mubr.f32.mxu0 0.0
        %8705 = vmatmul.mubr.f32.gmra.mxu0 %v8626
        %v8706 = vpop.f32.mrf.mxu0
        %v8707 = vadd.f32 0.0, %v8706
        %v8708 = vpop.f32.mrf.mxu0
        %v8709 = vadd.f32 0.0, %v8708
        %8710 = vdwg.mxu0
        %8711 = vmatprep.subr.mxu0 0.0
        %8712 = vmatpush1.msra.mxu0 0.0
        %8713 = vmatprep.subr.mxu0 0.0
        %8714 = vmatpush1.msra.mxu0 0.0
        %8715 = vmatprep.subr.mxu0 0.0
        %8716 = vmatpush1.msra.mxu0 0.0
        %8717 = vmatprep.subr.mxu0 0.0
        %8718 = vmatpush1.msra.mxu0 0.0
        %8719 = vmatprep.subr.mxu0 0.0
        %8720 = vmatpush1.msra.mxu0 0.0
        %8721 = vmatprep.subr.mxu0 0.0
        %8722 = vmatpush1.msra.mxu0 0.0
        %8723 = vmatprep.subr.mxu0 0.0
        %8724 = vmatpush1.msra.mxu0 0.0
        %8725 = vmatprep.subr.mxu0 0.0
        %8726 = vmatpush1.msra.mxu0 0.0
        %8727 = vmatprep.subr.mxu0 0.0
        %8728 = vmatpush1.msra.mxu0 0.0
        %8729 = vmatprep.subr.mxu0 0.0
        %8730 = vmatpush1.msra.mxu0 0.0
        %8731 = vmatprep.subr.mxu0 0.0
        %8732 = vmatpush1.msra.mxu0 0.0
        %8733 = vmatprep.subr.mxu0 0.0
        %8734 = vmatpush1.msra.mxu0 0.0
        %8735 = vmatprep.subr.mxu0 0.0
        %8736 = vmatpush1.msra.mxu0 0.0
        %8737 = vmatprep.subr.mxu0 0.0
        %8738 = vmatpush1.msra.mxu0 0.0
        %8739 = vmatprep.subr.mxu0 0.0
        %8740 = vmatpush1.msra.mxu0 0.0
        %8741 = vmatprep.subr.mxu0 %v8638
        %8742 = vmatpush1.msra.mxu0 %v8635
        %8743 = vmatprep.subr.mxu0 0.0
        %8744 = vmatpush2.msra.mxu0 0.0
        %8745 = vmatprep.subr.mxu0 0.0
        %8746 = vmatpush2.msra.mxu0 0.0
        %8747 = vmatprep.subr.mxu0 0.0
        %8748 = vmatpush2.msra.mxu0 0.0
        %8749 = vmatprep.subr.mxu0 0.0
        %8750 = vmatpush2.msra.mxu0 0.0
        %8751 = vmatprep.subr.mxu0 0.0
        %8752 = vmatpush2.msra.mxu0 0.0
        %8753 = vmatprep.subr.mxu0 0.0
        %8754 = vmatpush2.msra.mxu0 0.0
        %8755 = vmatprep.subr.mxu0 0.0
        %8756 = vmatpush2.msra.mxu0 0.0
        %8757 = vmatprep.subr.mxu0 0.0
        %8758 = vmatpush2.msra.mxu0 0.0
        %8759 = vmatprep.subr.mxu0 0.0
        %8760 = vmatpush2.msra.mxu0 0.0
        %8761 = vmatprep.subr.mxu0 0.0
        %8762 = vmatpush2.msra.mxu0 0.0
        %8763 = vmatprep.subr.mxu0 0.0
        %8764 = vmatpush2.msra.mxu0 0.0
        %8765 = vmatprep.subr.mxu0 0.0
        %8766 = vmatpush2.msra.mxu0 0.0
        %8767 = vmatprep.subr.mxu0 0.0
        %8768 = vmatpush2.msra.mxu0 0.0
        %8769 = vmatprep.subr.mxu0 0.0
        %8770 = vmatpush2.msra.mxu0 0.0
        %8771 = vmatprep.subr.mxu0 0.0
        %8772 = vmatpush2.msra.mxu0 0.0
        %8773 = vmatprep.subr.mxu0 0.0
        %8774 = vmatpush2.msra.mxu0 0.0
        %8775 = vmatprep.mubr.f32.mxu0 0.0
        %8776 = vmatmul.mubr.f32.gmra.mxu0 %v8626
        %v8777 = vpop.f32.mrf.mxu0
        %v8778 = vadd.f32 0.0, %v8777
        %v8779 = vpop.f32.mrf.mxu0
        %v8780 = vadd.f32 0.0, %v8779
        %8781 = vdwg.mxu0
        %v8782 = vadd.f32 %v8603, %v8707
        %v8783 = vadd.f32 %v8604, %v8709
        %v8784 = vadd.f32 %v8605, %v8778
        %v8785 = vadd.f32 %v8606, %v8780
        %v8786 = vmul.f32 %v5599, %v3871
        %v8787 = vmul.f32 %v5598, %v3875
        %v8788 = vmul.f32 %v5597, %v3879
        %v8789 = vmul.f32 %v5600, %v3883
        %s8790 = scalar_lea.vmem %s3, 72
        %v8791 = vld [vmem:[%s8790] sm:$0xf]
        %v8793 = vsel %vm345, %v8791, 0
        %v8796 = vsel %vm349, %v8786, 0
        %v8799 = vsel %vm349, %v8787, 0
        %v8802 = vsel %vm349, %v8788, 0
        %v8805 = vsel %vm349, %v8789, 0
        %8807 = vmatprep.subr.mxu0 0.0
        %8808 = vmatpush1.msra.mxu0 0.0
        %8809 = vmatprep.subr.mxu0 0.0
        %8810 = vmatpush1.msra.mxu0 0.0
        %8811 = vmatprep.subr.mxu0 0.0
        %8812 = vmatpush1.msra.mxu0 0.0
        %8813 = vmatprep.subr.mxu0 0.0
        %8814 = vmatpush1.msra.mxu0 0.0
        %8815 = vmatprep.subr.mxu0 0.0
        %8816 = vmatpush1.msra.mxu0 0.0
        %8817 = vmatprep.subr.mxu0 0.0
        %8818 = vmatpush1.msra.mxu0 0.0
        %8819 = vmatprep.subr.mxu0 0.0
        %8820 = vmatpush1.msra.mxu0 0.0
        %8821 = vmatprep.subr.mxu0 0.0
        %8822 = vmatpush1.msra.mxu0 0.0
        %8823 = vmatprep.subr.mxu0 0.0
        %8824 = vmatpush1.msra.mxu0 0.0
        %8825 = vmatprep.subr.mxu0 0.0
        %8826 = vmatpush1.msra.mxu0 0.0
        %8827 = vmatprep.subr.mxu0 0.0
        %8828 = vmatpush1.msra.mxu0 0.0
        %8829 = vmatprep.subr.mxu0 0.0
        %8830 = vmatpush1.msra.mxu0 0.0
        %8831 = vmatprep.subr.mxu0 0.0
        %8832 = vmatpush1.msra.mxu0 0.0
        %8833 = vmatprep.subr.mxu0 0.0
        %8834 = vmatpush1.msra.mxu0 0.0
        %8835 = vmatprep.subr.mxu0 0.0
        %8836 = vmatpush1.msra.mxu0 0.0
        %8837 = vmatprep.subr.mxu0 %v8799
        %8838 = vmatpush1.msra.mxu0 %v8796
        %8839 = vmatprep.subr.mxu0 0.0
        %8840 = vmatpush2.msra.mxu0 0.0
        %8841 = vmatprep.subr.mxu0 0.0
        %8842 = vmatpush2.msra.mxu0 0.0
        %8843 = vmatprep.subr.mxu0 0.0
        %8844 = vmatpush2.msra.mxu0 0.0
        %8845 = vmatprep.subr.mxu0 0.0
        %8846 = vmatpush2.msra.mxu0 0.0
        %8847 = vmatprep.subr.mxu0 0.0
        %8848 = vmatpush2.msra.mxu0 0.0
        %8849 = vmatprep.subr.mxu0 0.0
        %8850 = vmatpush2.msra.mxu0 0.0
        %8851 = vmatprep.subr.mxu0 0.0
        %8852 = vmatpush2.msra.mxu0 0.0
        %8853 = vmatprep.subr.mxu0 0.0
        %8854 = vmatpush2.msra.mxu0 0.0
        %8855 = vmatprep.subr.mxu0 0.0
        %8856 = vmatpush2.msra.mxu0 0.0
        %8857 = vmatprep.subr.mxu0 0.0
        %8858 = vmatpush2.msra.mxu0 0.0
        %8859 = vmatprep.subr.mxu0 0.0
        %8860 = vmatpush2.msra.mxu0 0.0
        %8861 = vmatprep.subr.mxu0 0.0
        %8862 = vmatpush2.msra.mxu0 0.0
        %8863 = vmatprep.subr.mxu0 0.0
        %8864 = vmatpush2.msra.mxu0 0.0
        %8865 = vmatprep.subr.mxu0 0.0
        %8866 = vmatpush2.msra.mxu0 0.0
        %8867 = vmatprep.subr.mxu0 0.0
        %8868 = vmatpush2.msra.mxu0 0.0
        %8869 = vmatprep.subr.mxu0 0.0
        %8870 = vmatpush2.msra.mxu0 0.0
        %8871 = vmatprep.mubr.f32.mxu0 0.0
        %8872 = vmatmul.mubr.f32.gmra.mxu0 %v8793
        %v8873 = vpop.f32.mrf.mxu0
        %v8874 = vadd.f32 0.0, %v8873
        %v8875 = vpop.f32.mrf.mxu0
        %v8876 = vadd.f32 0.0, %v8875
        %8877 = vdwg.mxu0
        %8878 = vmatprep.subr.mxu0 0.0
        %8879 = vmatpush1.msra.mxu0 0.0
        %8880 = vmatprep.subr.mxu0 0.0
        %8881 = vmatpush1.msra.mxu0 0.0
        %8882 = vmatprep.subr.mxu0 0.0
        %8883 = vmatpush1.msra.mxu0 0.0
        %8884 = vmatprep.subr.mxu0 0.0
        %8885 = vmatpush1.msra.mxu0 0.0
        %8886 = vmatprep.subr.mxu0 0.0
        %8887 = vmatpush1.msra.mxu0 0.0
        %8888 = vmatprep.subr.mxu0 0.0
        %8889 = vmatpush1.msra.mxu0 0.0
        %8890 = vmatprep.subr.mxu0 0.0
        %8891 = vmatpush1.msra.mxu0 0.0
        %8892 = vmatprep.subr.mxu0 0.0
        %8893 = vmatpush1.msra.mxu0 0.0
        %8894 = vmatprep.subr.mxu0 0.0
        %8895 = vmatpush1.msra.mxu0 0.0
        %8896 = vmatprep.subr.mxu0 0.0
        %8897 = vmatpush1.msra.mxu0 0.0
        %8898 = vmatprep.subr.mxu0 0.0
        %8899 = vmatpush1.msra.mxu0 0.0
        %8900 = vmatprep.subr.mxu0 0.0
        %8901 = vmatpush1.msra.mxu0 0.0
        %8902 = vmatprep.subr.mxu0 0.0
        %8903 = vmatpush1.msra.mxu0 0.0
        %8904 = vmatprep.subr.mxu0 0.0
        %8905 = vmatpush1.msra.mxu0 0.0
        %8906 = vmatprep.subr.mxu0 0.0
        %8907 = vmatpush1.msra.mxu0 0.0
        %8908 = vmatprep.subr.mxu0 %v8805
        %8909 = vmatpush1.msra.mxu0 %v8802
        %8910 = vmatprep.subr.mxu0 0.0
        %8911 = vmatpush2.msra.mxu0 0.0
        %8912 = vmatprep.subr.mxu0 0.0
        %8913 = vmatpush2.msra.mxu0 0.0
        %8914 = vmatprep.subr.mxu0 0.0
        %8915 = vmatpush2.msra.mxu0 0.0
        %8916 = vmatprep.subr.mxu0 0.0
        %8917 = vmatpush2.msra.mxu0 0.0
        %8918 = vmatprep.subr.mxu0 0.0
        %8919 = vmatpush2.msra.mxu0 0.0
        %8920 = vmatprep.subr.mxu0 0.0
        %8921 = vmatpush2.msra.mxu0 0.0
        %8922 = vmatprep.subr.mxu0 0.0
        %8923 = vmatpush2.msra.mxu0 0.0
        %8924 = vmatprep.subr.mxu0 0.0
        %8925 = vmatpush2.msra.mxu0 0.0
        %8926 = vmatprep.subr.mxu0 0.0
        %8927 = vmatpush2.msra.mxu0 0.0
        %8928 = vmatprep.subr.mxu0 0.0
        %8929 = vmatpush2.msra.mxu0 0.0
        %8930 = vmatprep.subr.mxu0 0.0
        %8931 = vmatpush2.msra.mxu0 0.0
        %8932 = vmatprep.subr.mxu0 0.0
        %8933 = vmatpush2.msra.mxu0 0.0
        %8934 = vmatprep.subr.mxu0 0.0
        %8935 = vmatpush2.msra.mxu0 0.0
        %8936 = vmatprep.subr.mxu0 0.0
        %8937 = vmatpush2.msra.mxu0 0.0
        %8938 = vmatprep.subr.mxu0 0.0
        %8939 = vmatpush2.msra.mxu0 0.0
        %8940 = vmatprep.subr.mxu0 0.0
        %8941 = vmatpush2.msra.mxu0 0.0
        %8942 = vmatprep.mubr.f32.mxu0 0.0
        %8943 = vmatmul.mubr.f32.gmra.mxu0 %v8793
        %v8944 = vpop.f32.mrf.mxu0
        %v8945 = vadd.f32 0.0, %v8944
        %v8946 = vpop.f32.mrf.mxu0
        %v8947 = vadd.f32 0.0, %v8946
        %8948 = vdwg.mxu0
        %v8949 = vadd.f32 %v8782, %v8874
        %v8950 = vadd.f32 %v8783, %v8876
        %v8951 = vadd.f32 %v8784, %v8945
        %v8952 = vadd.f32 %v8785, %v8947
        %v8953 = vmul.f32 %v5616, %v4061
        %v8954 = vmul.f32 %v5615, %v4065
        %v8955 = vmul.f32 %v5614, %v4069
        %v8956 = vmul.f32 %v5617, %v4073
        %s8957 = scalar_lea.vmem %s3, 76
        %v8958 = vld [vmem:[%s8957] sm:$0xf]
        %v8960 = vsel %vm345, %v8958, 0
        %v8963 = vsel %vm349, %v8953, 0
        %v8966 = vsel %vm349, %v8954, 0
        %v8969 = vsel %vm349, %v8955, 0
        %v8972 = vsel %vm349, %v8956, 0
        %8974 = vmatprep.subr.mxu0 0.0
        %8975 = vmatpush1.msra.mxu0 0.0
        %8976 = vmatprep.subr.mxu0 0.0
        %8977 = vmatpush1.msra.mxu0 0.0
        %8978 = vmatprep.subr.mxu0 0.0
        %8979 = vmatpush1.msra.mxu0 0.0
        %8980 = vmatprep.subr.mxu0 0.0
        %8981 = vmatpush1.msra.mxu0 0.0
        %8982 = vmatprep.subr.mxu0 0.0
        %8983 = vmatpush1.msra.mxu0 0.0
        %8984 = vmatprep.subr.mxu0 0.0
        %8985 = vmatpush1.msra.mxu0 0.0
        %8986 = vmatprep.subr.mxu0 0.0
        %8987 = vmatpush1.msra.mxu0 0.0
        %8988 = vmatprep.subr.mxu0 0.0
        %8989 = vmatpush1.msra.mxu0 0.0
        %8990 = vmatprep.subr.mxu0 0.0
        %8991 = vmatpush1.msra.mxu0 0.0
        %8992 = vmatprep.subr.mxu0 0.0
        %8993 = vmatpush1.msra.mxu0 0.0
        %8994 = vmatprep.subr.mxu0 0.0
        %8995 = vmatpush1.msra.mxu0 0.0
        %8996 = vmatprep.subr.mxu0 0.0
        %8997 = vmatpush1.msra.mxu0 0.0
        %8998 = vmatprep.subr.mxu0 0.0
        %8999 = vmatpush1.msra.mxu0 0.0
        %9000 = vmatprep.subr.mxu0 0.0
        %9001 = vmatpush1.msra.mxu0 0.0
        %9002 = vmatprep.subr.mxu0 0.0
        %9003 = vmatpush1.msra.mxu0 0.0
        %9004 = vmatprep.subr.mxu0 %v8966
        %9005 = vmatpush1.msra.mxu0 %v8963
        %9006 = vmatprep.subr.mxu0 0.0
        %9007 = vmatpush2.msra.mxu0 0.0
        %9008 = vmatprep.subr.mxu0 0.0
        %9009 = vmatpush2.msra.mxu0 0.0
        %9010 = vmatprep.subr.mxu0 0.0
        %9011 = vmatpush2.msra.mxu0 0.0
        %9012 = vmatprep.subr.mxu0 0.0
        %9013 = vmatpush2.msra.mxu0 0.0
        %9014 = vmatprep.subr.mxu0 0.0
        %9015 = vmatpush2.msra.mxu0 0.0
        %9016 = vmatprep.subr.mxu0 0.0
        %9017 = vmatpush2.msra.mxu0 0.0
        %9018 = vmatprep.subr.mxu0 0.0
        %9019 = vmatpush2.msra.mxu0 0.0
        %9020 = vmatprep.subr.mxu0 0.0
        %9021 = vmatpush2.msra.mxu0 0.0
        %9022 = vmatprep.subr.mxu0 0.0
        %9023 = vmatpush2.msra.mxu0 0.0
        %9024 = vmatprep.subr.mxu0 0.0
        %9025 = vmatpush2.msra.mxu0 0.0
        %9026 = vmatprep.subr.mxu0 0.0
        %9027 = vmatpush2.msra.mxu0 0.0
        %9028 = vmatprep.subr.mxu0 0.0
        %9029 = vmatpush2.msra.mxu0 0.0
        %9030 = vmatprep.subr.mxu0 0.0
        %9031 = vmatpush2.msra.mxu0 0.0
        %9032 = vmatprep.subr.mxu0 0.0
        %9033 = vmatpush2.msra.mxu0 0.0
        %9034 = vmatprep.subr.mxu0 0.0
        %9035 = vmatpush2.msra.mxu0 0.0
        %9036 = vmatprep.subr.mxu0 0.0
        %9037 = vmatpush2.msra.mxu0 0.0
        %9038 = vmatprep.mubr.f32.mxu0 0.0
        %9039 = vmatmul.mubr.f32.gmra.mxu0 %v8960
        %v9040 = vpop.f32.mrf.mxu0
        %v9041 = vadd.f32 0.0, %v9040
        %v9042 = vpop.f32.mrf.mxu0
        %v9043 = vadd.f32 0.0, %v9042
        %9044 = vdwg.mxu0
        %9045 = vmatprep.subr.mxu0 0.0
        %9046 = vmatpush1.msra.mxu0 0.0
        %9047 = vmatprep.subr.mxu0 0.0
        %9048 = vmatpush1.msra.mxu0 0.0
        %9049 = vmatprep.subr.mxu0 0.0
        %9050 = vmatpush1.msra.mxu0 0.0
        %9051 = vmatprep.subr.mxu0 0.0
        %9052 = vmatpush1.msra.mxu0 0.0
        %9053 = vmatprep.subr.mxu0 0.0
        %9054 = vmatpush1.msra.mxu0 0.0
        %9055 = vmatprep.subr.mxu0 0.0
        %9056 = vmatpush1.msra.mxu0 0.0
        %9057 = vmatprep.subr.mxu0 0.0
        %9058 = vmatpush1.msra.mxu0 0.0
        %9059 = vmatprep.subr.mxu0 0.0
        %9060 = vmatpush1.msra.mxu0 0.0
        %9061 = vmatprep.subr.mxu0 0.0
        %9062 = vmatpush1.msra.mxu0 0.0
        %9063 = vmatprep.subr.mxu0 0.0
        %9064 = vmatpush1.msra.mxu0 0.0
        %9065 = vmatprep.subr.mxu0 0.0
        %9066 = vmatpush1.msra.mxu0 0.0
        %9067 = vmatprep.subr.mxu0 0.0
        %9068 = vmatpush1.msra.mxu0 0.0
        %9069 = vmatprep.subr.mxu0 0.0
        %9070 = vmatpush1.msra.mxu0 0.0
        %9071 = vmatprep.subr.mxu0 0.0
        %9072 = vmatpush1.msra.mxu0 0.0
        %9073 = vmatprep.subr.mxu0 0.0
        %9074 = vmatpush1.msra.mxu0 0.0
        %9075 = vmatprep.subr.mxu0 %v8972
        %9076 = vmatpush1.msra.mxu0 %v8969
        %9077 = vmatprep.subr.mxu0 0.0
        %9078 = vmatpush2.msra.mxu0 0.0
        %9079 = vmatprep.subr.mxu0 0.0
        %9080 = vmatpush2.msra.mxu0 0.0
        %9081 = vmatprep.subr.mxu0 0.0
        %9082 = vmatpush2.msra.mxu0 0.0
        %9083 = vmatprep.subr.mxu0 0.0
        %9084 = vmatpush2.msra.mxu0 0.0
        %9085 = vmatprep.subr.mxu0 0.0
        %9086 = vmatpush2.msra.mxu0 0.0
        %9087 = vmatprep.subr.mxu0 0.0
        %9088 = vmatpush2.msra.mxu0 0.0
        %9089 = vmatprep.subr.mxu0 0.0
        %9090 = vmatpush2.msra.mxu0 0.0
        %9091 = vmatprep.subr.mxu0 0.0
        %9092 = vmatpush2.msra.mxu0 0.0
        %9093 = vmatprep.subr.mxu0 0.0
        %9094 = vmatpush2.msra.mxu0 0.0
        %9095 = vmatprep.subr.mxu0 0.0
        %9096 = vmatpush2.msra.mxu0 0.0
        %9097 = vmatprep.subr.mxu0 0.0
        %9098 = vmatpush2.msra.mxu0 0.0
        %9099 = vmatprep.subr.mxu0 0.0
        %9100 = vmatpush2.msra.mxu0 0.0
        %9101 = vmatprep.subr.mxu0 0.0
        %9102 = vmatpush2.msra.mxu0 0.0
        %9103 = vmatprep.subr.mxu0 0.0
        %9104 = vmatpush2.msra.mxu0 0.0
        %9105 = vmatprep.subr.mxu0 0.0
        %9106 = vmatpush2.msra.mxu0 0.0
        %9107 = vmatprep.subr.mxu0 0.0
        %9108 = vmatpush2.msra.mxu0 0.0
        %9109 = vmatprep.mubr.f32.mxu0 0.0
        %9110 = vmatmul.mubr.f32.gmra.mxu0 %v8960
        %v9111 = vpop.f32.mrf.mxu0
        %v9112 = vadd.f32 0.0, %v9111
        %v9113 = vpop.f32.mrf.mxu0
        %v9114 = vadd.f32 0.0, %v9113
        %9115 = vdwg.mxu0
        %v9116 = vadd.f32 %v8949, %v9041
        %v9117 = vadd.f32 %v8950, %v9043
        %v9118 = vadd.f32 %v8951, %v9112
        %v9119 = vadd.f32 %v8952, %v9114
        %v9120 = vmul.f32 %v5948, %v4251
        %v9121 = vmul.f32 %v5947, %v4255
        %v9122 = vmul.f32 %v5946, %v4259
        %v9123 = vmul.f32 %v5949, %v4263
        %s9124 = scalar_lea.vmem %s3, 80
        %v9125 = vld [vmem:[%s9124] sm:$0xf]
        %v9127 = vsel %vm345, %v9125, 0
        %v9130 = vsel %vm349, %v9120, 0
        %v9133 = vsel %vm349, %v9121, 0
        %v9136 = vsel %vm349, %v9122, 0
        %v9139 = vsel %vm349, %v9123, 0
        %9141 = vmatprep.subr.mxu0 0.0
        %9142 = vmatpush1.msra.mxu0 0.0
        %9143 = vmatprep.subr.mxu0 0.0
        %9144 = vmatpush1.msra.mxu0 0.0
        %9145 = vmatprep.subr.mxu0 0.0
        %9146 = vmatpush1.msra.mxu0 0.0
        %9147 = vmatprep.subr.mxu0 0.0
        %9148 = vmatpush1.msra.mxu0 0.0
        %9149 = vmatprep.subr.mxu0 0.0
        %9150 = vmatpush1.msra.mxu0 0.0
        %9151 = vmatprep.subr.mxu0 0.0
        %9152 = vmatpush1.msra.mxu0 0.0
        %9153 = vmatprep.subr.mxu0 0.0
        %9154 = vmatpush1.msra.mxu0 0.0
        %9155 = vmatprep.subr.mxu0 0.0
        %9156 = vmatpush1.msra.mxu0 0.0
        %9157 = vmatprep.subr.mxu0 0.0
        %9158 = vmatpush1.msra.mxu0 0.0
        %9159 = vmatprep.subr.mxu0 0.0
        %9160 = vmatpush1.msra.mxu0 0.0
        %9161 = vmatprep.subr.mxu0 0.0
        %9162 = vmatpush1.msra.mxu0 0.0
        %9163 = vmatprep.subr.mxu0 0.0
        %9164 = vmatpush1.msra.mxu0 0.0
        %9165 = vmatprep.subr.mxu0 0.0
        %9166 = vmatpush1.msra.mxu0 0.0
        %9167 = vmatprep.subr.mxu0 0.0
        %9168 = vmatpush1.msra.mxu0 0.0
        %9169 = vmatprep.subr.mxu0 0.0
        %9170 = vmatpush1.msra.mxu0 0.0
        %9171 = vmatprep.subr.mxu0 %v9133
        %9172 = vmatpush1.msra.mxu0 %v9130
        %9173 = vmatprep.subr.mxu0 0.0
        %9174 = vmatpush2.msra.mxu0 0.0
        %9175 = vmatprep.subr.mxu0 0.0
        %9176 = vmatpush2.msra.mxu0 0.0
        %9177 = vmatprep.subr.mxu0 0.0
        %9178 = vmatpush2.msra.mxu0 0.0
        %9179 = vmatprep.subr.mxu0 0.0
        %9180 = vmatpush2.msra.mxu0 0.0
        %9181 = vmatprep.subr.mxu0 0.0
        %9182 = vmatpush2.msra.mxu0 0.0
        %9183 = vmatprep.subr.mxu0 0.0
        %9184 = vmatpush2.msra.mxu0 0.0
        %9185 = vmatprep.subr.mxu0 0.0
        %9186 = vmatpush2.msra.mxu0 0.0
        %9187 = vmatprep.subr.mxu0 0.0
        %9188 = vmatpush2.msra.mxu0 0.0
        %9189 = vmatprep.subr.mxu0 0.0
        %9190 = vmatpush2.msra.mxu0 0.0
        %9191 = vmatprep.subr.mxu0 0.0
        %9192 = vmatpush2.msra.mxu0 0.0
        %9193 = vmatprep.subr.mxu0 0.0
        %9194 = vmatpush2.msra.mxu0 0.0
        %9195 = vmatprep.subr.mxu0 0.0
        %9196 = vmatpush2.msra.mxu0 0.0
        %9197 = vmatprep.subr.mxu0 0.0
        %9198 = vmatpush2.msra.mxu0 0.0
        %9199 = vmatprep.subr.mxu0 0.0
        %9200 = vmatpush2.msra.mxu0 0.0
        %9201 = vmatprep.subr.mxu0 0.0
        %9202 = vmatpush2.msra.mxu0 0.0
        %9203 = vmatprep.subr.mxu0 0.0
        %9204 = vmatpush2.msra.mxu0 0.0
        %9205 = vmatprep.mubr.f32.mxu0 0.0
        %9206 = vmatmul.mubr.f32.gmra.mxu0 %v9127
        %v9207 = vpop.f32.mrf.mxu0
        %v9208 = vadd.f32 0.0, %v9207
        %v9209 = vpop.f32.mrf.mxu0
        %v9210 = vadd.f32 0.0, %v9209
        %9211 = vdwg.mxu0
        %9212 = vmatprep.subr.mxu0 0.0
        %9213 = vmatpush1.msra.mxu0 0.0
        %9214 = vmatprep.subr.mxu0 0.0
        %9215 = vmatpush1.msra.mxu0 0.0
        %9216 = vmatprep.subr.mxu0 0.0
        %9217 = vmatpush1.msra.mxu0 0.0
        %9218 = vmatprep.subr.mxu0 0.0
        %9219 = vmatpush1.msra.mxu0 0.0
        %9220 = vmatprep.subr.mxu0 0.0
        %9221 = vmatpush1.msra.mxu0 0.0
        %9222 = vmatprep.subr.mxu0 0.0
        %9223 = vmatpush1.msra.mxu0 0.0
        %9224 = vmatprep.subr.mxu0 0.0
        %9225 = vmatpush1.msra.mxu0 0.0
        %9226 = vmatprep.subr.mxu0 0.0
        %9227 = vmatpush1.msra.mxu0 0.0
        %9228 = vmatprep.subr.mxu0 0.0
        %9229 = vmatpush1.msra.mxu0 0.0
        %9230 = vmatprep.subr.mxu0 0.0
        %9231 = vmatpush1.msra.mxu0 0.0
        %9232 = vmatprep.subr.mxu0 0.0
        %9233 = vmatpush1.msra.mxu0 0.0
        %9234 = vmatprep.subr.mxu0 0.0
        %9235 = vmatpush1.msra.mxu0 0.0
        %9236 = vmatprep.subr.mxu0 0.0
        %9237 = vmatpush1.msra.mxu0 0.0
        %9238 = vmatprep.subr.mxu0 0.0
        %9239 = vmatpush1.msra.mxu0 0.0
        %9240 = vmatprep.subr.mxu0 0.0
        %9241 = vmatpush1.msra.mxu0 0.0
        %9242 = vmatprep.subr.mxu0 %v9139
        %9243 = vmatpush1.msra.mxu0 %v9136
        %9244 = vmatprep.subr.mxu0 0.0
        %9245 = vmatpush2.msra.mxu0 0.0
        %9246 = vmatprep.subr.mxu0 0.0
        %9247 = vmatpush2.msra.mxu0 0.0
        %9248 = vmatprep.subr.mxu0 0.0
        %9249 = vmatpush2.msra.mxu0 0.0
        %9250 = vmatprep.subr.mxu0 0.0
        %9251 = vmatpush2.msra.mxu0 0.0
        %9252 = vmatprep.subr.mxu0 0.0
        %9253 = vmatpush2.msra.mxu0 0.0
        %9254 = vmatprep.subr.mxu0 0.0
        %9255 = vmatpush2.msra.mxu0 0.0
        %9256 = vmatprep.subr.mxu0 0.0
        %9257 = vmatpush2.msra.mxu0 0.0
        %9258 = vmatprep.subr.mxu0 0.0
        %9259 = vmatpush2.msra.mxu0 0.0
        %9260 = vmatprep.subr.mxu0 0.0
        %9261 = vmatpush2.msra.mxu0 0.0
        %9262 = vmatprep.subr.mxu0 0.0
        %9263 = vmatpush2.msra.mxu0 0.0
        %9264 = vmatprep.subr.mxu0 0.0
        %9265 = vmatpush2.msra.mxu0 0.0
        %9266 = vmatprep.subr.mxu0 0.0
        %9267 = vmatpush2.msra.mxu0 0.0
        %9268 = vmatprep.subr.mxu0 0.0
        %9269 = vmatpush2.msra.mxu0 0.0
        %9270 = vmatprep.subr.mxu0 0.0
        %9271 = vmatpush2.msra.mxu0 0.0
        %9272 = vmatprep.subr.mxu0 0.0
        %9273 = vmatpush2.msra.mxu0 0.0
        %9274 = vmatprep.subr.mxu0 0.0
        %9275 = vmatpush2.msra.mxu0 0.0
        %9276 = vmatprep.mubr.f32.mxu0 0.0
        %9277 = vmatmul.mubr.f32.gmra.mxu0 %v9127
        %v9278 = vpop.f32.mrf.mxu0
        %v9279 = vadd.f32 0.0, %v9278
        %v9280 = vpop.f32.mrf.mxu0
        %v9281 = vadd.f32 0.0, %v9280
        %9282 = vdwg.mxu0
        %v9283 = vadd.f32 %v9116, %v9208
        %v9284 = vadd.f32 %v9117, %v9210
        %v9285 = vadd.f32 %v9118, %v9279
        %v9286 = vadd.f32 %v9119, %v9281
        %v9287 = vmul.f32 %v6127, %v4441
        %v9288 = vmul.f32 %v6126, %v4445
        %v9289 = vmul.f32 %v6125, %v4449
        %v9290 = vmul.f32 %v6128, %v4453
        %s9291 = scalar_lea.vmem %s3, 84
        %v9292 = vld [vmem:[%s9291] sm:$0xf]
        %v9294 = vsel %vm345, %v9292, 0
        %v9297 = vsel %vm349, %v9287, 0
        %v9300 = vsel %vm349, %v9288, 0
        %v9303 = vsel %vm349, %v9289, 0
        %v9306 = vsel %vm349, %v9290, 0
        %9308 = vmatprep.subr.mxu0 0.0
        %9309 = vmatpush1.msra.mxu0 0.0
        %9310 = vmatprep.subr.mxu0 0.0
        %9311 = vmatpush1.msra.mxu0 0.0
        %9312 = vmatprep.subr.mxu0 0.0
        %9313 = vmatpush1.msra.mxu0 0.0
        %9314 = vmatprep.subr.mxu0 0.0
        %9315 = vmatpush1.msra.mxu0 0.0
        %9316 = vmatprep.subr.mxu0 0.0
        %9317 = vmatpush1.msra.mxu0 0.0
        %9318 = vmatprep.subr.mxu0 0.0
        %9319 = vmatpush1.msra.mxu0 0.0
        %9320 = vmatprep.subr.mxu0 0.0
        %9321 = vmatpush1.msra.mxu0 0.0
        %9322 = vmatprep.subr.mxu0 0.0
        %9323 = vmatpush1.msra.mxu0 0.0
        %9324 = vmatprep.subr.mxu0 0.0
        %9325 = vmatpush1.msra.mxu0 0.0
        %9326 = vmatprep.subr.mxu0 0.0
        %9327 = vmatpush1.msra.mxu0 0.0
        %9328 = vmatprep.subr.mxu0 0.0
        %9329 = vmatpush1.msra.mxu0 0.0
        %9330 = vmatprep.subr.mxu0 0.0
        %9331 = vmatpush1.msra.mxu0 0.0
        %9332 = vmatprep.subr.mxu0 0.0
        %9333 = vmatpush1.msra.mxu0 0.0
        %9334 = vmatprep.subr.mxu0 0.0
        %9335 = vmatpush1.msra.mxu0 0.0
        %9336 = vmatprep.subr.mxu0 0.0
        %9337 = vmatpush1.msra.mxu0 0.0
        %9338 = vmatprep.subr.mxu0 %v9300
        %9339 = vmatpush1.msra.mxu0 %v9297
        %9340 = vmatprep.subr.mxu0 0.0
        %9341 = vmatpush2.msra.mxu0 0.0
        %9342 = vmatprep.subr.mxu0 0.0
        %9343 = vmatpush2.msra.mxu0 0.0
        %9344 = vmatprep.subr.mxu0 0.0
        %9345 = vmatpush2.msra.mxu0 0.0
        %9346 = vmatprep.subr.mxu0 0.0
        %9347 = vmatpush2.msra.mxu0 0.0
        %9348 = vmatprep.subr.mxu0 0.0
        %9349 = vmatpush2.msra.mxu0 0.0
        %9350 = vmatprep.subr.mxu0 0.0
        %9351 = vmatpush2.msra.mxu0 0.0
        %9352 = vmatprep.subr.mxu0 0.0
        %9353 = vmatpush2.msra.mxu0 0.0
        %9354 = vmatprep.subr.mxu0 0.0
        %9355 = vmatpush2.msra.mxu0 0.0
        %9356 = vmatprep.subr.mxu0 0.0
        %9357 = vmatpush2.msra.mxu0 0.0
        %9358 = vmatprep.subr.mxu0 0.0
        %9359 = vmatpush2.msra.mxu0 0.0
        %9360 = vmatprep.subr.mxu0 0.0
        %9361 = vmatpush2.msra.mxu0 0.0
        %9362 = vmatprep.subr.mxu0 0.0
        %9363 = vmatpush2.msra.mxu0 0.0
        %9364 = vmatprep.subr.mxu0 0.0
        %9365 = vmatpush2.msra.mxu0 0.0
        %9366 = vmatprep.subr.mxu0 0.0
        %9367 = vmatpush2.msra.mxu0 0.0
        %9368 = vmatprep.subr.mxu0 0.0
        %9369 = vmatpush2.msra.mxu0 0.0
        %9370 = vmatprep.subr.mxu0 0.0
        %9371 = vmatpush2.msra.mxu0 0.0
        %9372 = vmatprep.mubr.f32.mxu0 0.0
        %9373 = vmatmul.mubr.f32.gmra.mxu0 %v9294
        %v9374 = vpop.f32.mrf.mxu0
        %v9375 = vadd.f32 0.0, %v9374
        %v9376 = vpop.f32.mrf.mxu0
        %v9377 = vadd.f32 0.0, %v9376
        %9378 = vdwg.mxu0
        %9379 = vmatprep.subr.mxu0 0.0
        %9380 = vmatpush1.msra.mxu0 0.0
        %9381 = vmatprep.subr.mxu0 0.0
        %9382 = vmatpush1.msra.mxu0 0.0
        %9383 = vmatprep.subr.mxu0 0.0
        %9384 = vmatpush1.msra.mxu0 0.0
        %9385 = vmatprep.subr.mxu0 0.0
        %9386 = vmatpush1.msra.mxu0 0.0
        %9387 = vmatprep.subr.mxu0 0.0
        %9388 = vmatpush1.msra.mxu0 0.0
        %9389 = vmatprep.subr.mxu0 0.0
        %9390 = vmatpush1.msra.mxu0 0.0
        %9391 = vmatprep.subr.mxu0 0.0
        %9392 = vmatpush1.msra.mxu0 0.0
        %9393 = vmatprep.subr.mxu0 0.0
        %9394 = vmatpush1.msra.mxu0 0.0
        %9395 = vmatprep.subr.mxu0 0.0
        %9396 = vmatpush1.msra.mxu0 0.0
        %9397 = vmatprep.subr.mxu0 0.0
        %9398 = vmatpush1.msra.mxu0 0.0
        %9399 = vmatprep.subr.mxu0 0.0
        %9400 = vmatpush1.msra.mxu0 0.0
        %9401 = vmatprep.subr.mxu0 0.0
        %9402 = vmatpush1.msra.mxu0 0.0
        %9403 = vmatprep.subr.mxu0 0.0
        %9404 = vmatpush1.msra.mxu0 0.0
        %9405 = vmatprep.subr.mxu0 0.0
        %9406 = vmatpush1.msra.mxu0 0.0
        %9407 = vmatprep.subr.mxu0 0.0
        %9408 = vmatpush1.msra.mxu0 0.0
        %9409 = vmatprep.subr.mxu0 %v9306
        %9410 = vmatpush1.msra.mxu0 %v9303
        %9411 = vmatprep.subr.mxu0 0.0
        %9412 = vmatpush2.msra.mxu0 0.0
        %9413 = vmatprep.subr.mxu0 0.0
        %9414 = vmatpush2.msra.mxu0 0.0
        %9415 = vmatprep.subr.mxu0 0.0
        %9416 = vmatpush2.msra.mxu0 0.0
        %9417 = vmatprep.subr.mxu0 0.0
        %9418 = vmatpush2.msra.mxu0 0.0
        %9419 = vmatprep.subr.mxu0 0.0
        %9420 = vmatpush2.msra.mxu0 0.0
        %9421 = vmatprep.subr.mxu0 0.0
        %9422 = vmatpush2.msra.mxu0 0.0
        %9423 = vmatprep.subr.mxu0 0.0
        %9424 = vmatpush2.msra.mxu0 0.0
        %9425 = vmatprep.subr.mxu0 0.0
        %9426 = vmatpush2.msra.mxu0 0.0
        %9427 = vmatprep.subr.mxu0 0.0
        %9428 = vmatpush2.msra.mxu0 0.0
        %9429 = vmatprep.subr.mxu0 0.0
        %9430 = vmatpush2.msra.mxu0 0.0
        %9431 = vmatprep.subr.mxu0 0.0
        %9432 = vmatpush2.msra.mxu0 0.0
        %9433 = vmatprep.subr.mxu0 0.0
        %9434 = vmatpush2.msra.mxu0 0.0
        %9435 = vmatprep.subr.mxu0 0.0
        %9436 = vmatpush2.msra.mxu0 0.0
        %9437 = vmatprep.subr.mxu0 0.0
        %9438 = vmatpush2.msra.mxu0 0.0
        %9439 = vmatprep.subr.mxu0 0.0
        %9440 = vmatpush2.msra.mxu0 0.0
        %9441 = vmatprep.subr.mxu0 0.0
        %9442 = vmatpush2.msra.mxu0 0.0
        %9443 = vmatprep.mubr.f32.mxu0 0.0
        %9444 = vmatmul.mubr.f32.gmra.mxu0 %v9294
        %v9445 = vpop.f32.mrf.mxu0
        %v9446 = vadd.f32 0.0, %v9445
        %v9447 = vpop.f32.mrf.mxu0
        %v9448 = vadd.f32 0.0, %v9447
        %9449 = vdwg.mxu0
        %v9450 = vadd.f32 %v9283, %v9375
        %v9451 = vadd.f32 %v9284, %v9377
        %v9452 = vadd.f32 %v9285, %v9446
        %v9453 = vadd.f32 %v9286, %v9448
        %v9454 = vmul.f32 %v6306, %v4631
        %v9455 = vmul.f32 %v6305, %v4635
        %v9456 = vmul.f32 %v6304, %v4639
        %v9457 = vmul.f32 %v6307, %v4643
        %s9458 = scalar_lea.vmem %s3, 88
        %v9459 = vld [vmem:[%s9458] sm:$0xf]
        %v9461 = vsel %vm345, %v9459, 0
        %v9464 = vsel %vm349, %v9454, 0
        %v9467 = vsel %vm349, %v9455, 0
        %v9470 = vsel %vm349, %v9456, 0
        %v9473 = vsel %vm349, %v9457, 0
        %9475 = vmatprep.subr.mxu0 0.0
        %9476 = vmatpush1.msra.mxu0 0.0
        %9477 = vmatprep.subr.mxu0 0.0
        %9478 = vmatpush1.msra.mxu0 0.0
        %9479 = vmatprep.subr.mxu0 0.0
        %9480 = vmatpush1.msra.mxu0 0.0
        %9481 = vmatprep.subr.mxu0 0.0
        %9482 = vmatpush1.msra.mxu0 0.0
        %9483 = vmatprep.subr.mxu0 0.0
        %9484 = vmatpush1.msra.mxu0 0.0
        %9485 = vmatprep.subr.mxu0 0.0
        %9486 = vmatpush1.msra.mxu0 0.0
        %9487 = vmatprep.subr.mxu0 0.0
        %9488 = vmatpush1.msra.mxu0 0.0
        %9489 = vmatprep.subr.mxu0 0.0
        %9490 = vmatpush1.msra.mxu0 0.0
        %9491 = vmatprep.subr.mxu0 0.0
        %9492 = vmatpush1.msra.mxu0 0.0
        %9493 = vmatprep.subr.mxu0 0.0
        %9494 = vmatpush1.msra.mxu0 0.0
        %9495 = vmatprep.subr.mxu0 0.0
        %9496 = vmatpush1.msra.mxu0 0.0
        %9497 = vmatprep.subr.mxu0 0.0
        %9498 = vmatpush1.msra.mxu0 0.0
        %9499 = vmatprep.subr.mxu0 0.0
        %9500 = vmatpush1.msra.mxu0 0.0
        %9501 = vmatprep.subr.mxu0 0.0
        %9502 = vmatpush1.msra.mxu0 0.0
        %9503 = vmatprep.subr.mxu0 0.0
        %9504 = vmatpush1.msra.mxu0 0.0
        %9505 = vmatprep.subr.mxu0 %v9467
        %9506 = vmatpush1.msra.mxu0 %v9464
        %9507 = vmatprep.subr.mxu0 0.0
        %9508 = vmatpush2.msra.mxu0 0.0
        %9509 = vmatprep.subr.mxu0 0.0
        %9510 = vmatpush2.msra.mxu0 0.0
        %9511 = vmatprep.subr.mxu0 0.0
        %9512 = vmatpush2.msra.mxu0 0.0
        %9513 = vmatprep.subr.mxu0 0.0
        %9514 = vmatpush2.msra.mxu0 0.0
        %9515 = vmatprep.subr.mxu0 0.0
        %9516 = vmatpush2.msra.mxu0 0.0
        %9517 = vmatprep.subr.mxu0 0.0
        %9518 = vmatpush2.msra.mxu0 0.0
        %9519 = vmatprep.subr.mxu0 0.0
        %9520 = vmatpush2.msra.mxu0 0.0
        %9521 = vmatprep.subr.mxu0 0.0
        %9522 = vmatpush2.msra.mxu0 0.0
        %9523 = vmatprep.subr.mxu0 0.0
        %9524 = vmatpush2.msra.mxu0 0.0
        %9525 = vmatprep.subr.mxu0 0.0
        %9526 = vmatpush2.msra.mxu0 0.0
        %9527 = vmatprep.subr.mxu0 0.0
        %9528 = vmatpush2.msra.mxu0 0.0
        %9529 = vmatprep.subr.mxu0 0.0
        %9530 = vmatpush2.msra.mxu0 0.0
        %9531 = vmatprep.subr.mxu0 0.0
        %9532 = vmatpush2.msra.mxu0 0.0
        %9533 = vmatprep.subr.mxu0 0.0
        %9534 = vmatpush2.msra.mxu0 0.0
        %9535 = vmatprep.subr.mxu0 0.0
        %9536 = vmatpush2.msra.mxu0 0.0
        %9537 = vmatprep.subr.mxu0 0.0
        %9538 = vmatpush2.msra.mxu0 0.0
        %9539 = vmatprep.mubr.f32.mxu0 0.0
        %9540 = vmatmul.mubr.f32.gmra.mxu0 %v9461
        %v9541 = vpop.f32.mrf.mxu0
        %v9542 = vadd.f32 0.0, %v9541
        %v9543 = vpop.f32.mrf.mxu0
        %v9544 = vadd.f32 0.0, %v9543
        %9545 = vdwg.mxu0
        %9546 = vmatprep.subr.mxu0 0.0
        %9547 = vmatpush1.msra.mxu0 0.0
        %9548 = vmatprep.subr.mxu0 0.0
        %9549 = vmatpush1.msra.mxu0 0.0
        %9550 = vmatprep.subr.mxu0 0.0
        %9551 = vmatpush1.msra.mxu0 0.0
        %9552 = vmatprep.subr.mxu0 0.0
        %9553 = vmatpush1.msra.mxu0 0.0
        %9554 = vmatprep.subr.mxu0 0.0
        %9555 = vmatpush1.msra.mxu0 0.0
        %9556 = vmatprep.subr.mxu0 0.0
        %9557 = vmatpush1.msra.mxu0 0.0
        %9558 = vmatprep.subr.mxu0 0.0
        %9559 = vmatpush1.msra.mxu0 0.0
        %9560 = vmatprep.subr.mxu0 0.0
        %9561 = vmatpush1.msra.mxu0 0.0
        %9562 = vmatprep.subr.mxu0 0.0
        %9563 = vmatpush1.msra.mxu0 0.0
        %9564 = vmatprep.subr.mxu0 0.0
        %9565 = vmatpush1.msra.mxu0 0.0
        %9566 = vmatprep.subr.mxu0 0.0
        %9567 = vmatpush1.msra.mxu0 0.0
        %9568 = vmatprep.subr.mxu0 0.0
        %9569 = vmatpush1.msra.mxu0 0.0
        %9570 = vmatprep.subr.mxu0 0.0
        %9571 = vmatpush1.msra.mxu0 0.0
        %9572 = vmatprep.subr.mxu0 0.0
        %9573 = vmatpush1.msra.mxu0 0.0
        %9574 = vmatprep.subr.mxu0 0.0
        %9575 = vmatpush1.msra.mxu0 0.0
        %9576 = vmatprep.subr.mxu0 %v9473
        %9577 = vmatpush1.msra.mxu0 %v9470
        %9578 = vmatprep.subr.mxu0 0.0
        %9579 = vmatpush2.msra.mxu0 0.0
        %9580 = vmatprep.subr.mxu0 0.0
        %9581 = vmatpush2.msra.mxu0 0.0
        %9582 = vmatprep.subr.mxu0 0.0
        %9583 = vmatpush2.msra.mxu0 0.0
        %9584 = vmatprep.subr.mxu0 0.0
        %9585 = vmatpush2.msra.mxu0 0.0
        %9586 = vmatprep.subr.mxu0 0.0
        %9587 = vmatpush2.msra.mxu0 0.0
        %9588 = vmatprep.subr.mxu0 0.0
        %9589 = vmatpush2.msra.mxu0 0.0
        %9590 = vmatprep.subr.mxu0 0.0
        %9591 = vmatpush2.msra.mxu0 0.0
        %9592 = vmatprep.subr.mxu0 0.0
        %9593 = vmatpush2.msra.mxu0 0.0
        %9594 = vmatprep.subr.mxu0 0.0
        %9595 = vmatpush2.msra.mxu0 0.0
        %9596 = vmatprep.subr.mxu0 0.0
        %9597 = vmatpush2.msra.mxu0 0.0
        %9598 = vmatprep.subr.mxu0 0.0
        %9599 = vmatpush2.msra.mxu0 0.0
        %9600 = vmatprep.subr.mxu0 0.0
        %9601 = vmatpush2.msra.mxu0 0.0
        %9602 = vmatprep.subr.mxu0 0.0
        %9603 = vmatpush2.msra.mxu0 0.0
        %9604 = vmatprep.subr.mxu0 0.0
        %9605 = vmatpush2.msra.mxu0 0.0
        %9606 = vmatprep.subr.mxu0 0.0
        %9607 = vmatpush2.msra.mxu0 0.0
        %9608 = vmatprep.subr.mxu0 0.0
        %9609 = vmatpush2.msra.mxu0 0.0
        %9610 = vmatprep.mubr.f32.mxu0 0.0
        %9611 = vmatmul.mubr.f32.gmra.mxu0 %v9461
        %v9612 = vpop.f32.mrf.mxu0
        %v9613 = vadd.f32 0.0, %v9612
        %v9614 = vpop.f32.mrf.mxu0
        %v9615 = vadd.f32 0.0, %v9614
        %9616 = vdwg.mxu0
        %v9617 = vadd.f32 %v9450, %v9542
        %v9618 = vadd.f32 %v9451, %v9544
        %v9619 = vadd.f32 %v9452, %v9613
        %v9620 = vadd.f32 %v9453, %v9615
        %v9621 = vmul.f32 %v6485, %v4821
        %v9622 = vmul.f32 %v6484, %v4825
        %v9623 = vmul.f32 %v6483, %v4829
        %v9624 = vmul.f32 %v6486, %v4833
        %s9625 = scalar_lea.vmem %s3, 92
        %v9626 = vld [vmem:[%s9625] sm:$0xf]
        %v9628 = vsel %vm345, %v9626, 0
        %v9631 = vsel %vm349, %v9621, 0
        %v9634 = vsel %vm349, %v9622, 0
        %v9637 = vsel %vm349, %v9623, 0
        %v9640 = vsel %vm349, %v9624, 0
        %9642 = vmatprep.subr.mxu0 0.0
        %9643 = vmatpush1.msra.mxu0 0.0
        %9644 = vmatprep.subr.mxu0 0.0
        %9645 = vmatpush1.msra.mxu0 0.0
        %9646 = vmatprep.subr.mxu0 0.0
        %9647 = vmatpush1.msra.mxu0 0.0
        %9648 = vmatprep.subr.mxu0 0.0
        %9649 = vmatpush1.msra.mxu0 0.0
        %9650 = vmatprep.subr.mxu0 0.0
        %9651 = vmatpush1.msra.mxu0 0.0
        %9652 = vmatprep.subr.mxu0 0.0
        %9653 = vmatpush1.msra.mxu0 0.0
        %9654 = vmatprep.subr.mxu0 0.0
        %9655 = vmatpush1.msra.mxu0 0.0
        %9656 = vmatprep.subr.mxu0 0.0
        %9657 = vmatpush1.msra.mxu0 0.0
        %9658 = vmatprep.subr.mxu0 0.0
        %9659 = vmatpush1.msra.mxu0 0.0
        %9660 = vmatprep.subr.mxu0 0.0
        %9661 = vmatpush1.msra.mxu0 0.0
        %9662 = vmatprep.subr.mxu0 0.0
        %9663 = vmatpush1.msra.mxu0 0.0
        %9664 = vmatprep.subr.mxu0 0.0
        %9665 = vmatpush1.msra.mxu0 0.0
        %9666 = vmatprep.subr.mxu0 0.0
        %9667 = vmatpush1.msra.mxu0 0.0
        %9668 = vmatprep.subr.mxu0 0.0
        %9669 = vmatpush1.msra.mxu0 0.0
        %9670 = vmatprep.subr.mxu0 0.0
        %9671 = vmatpush1.msra.mxu0 0.0
        %9672 = vmatprep.subr.mxu0 %v9634
        %9673 = vmatpush1.msra.mxu0 %v9631
        %9674 = vmatprep.subr.mxu0 0.0
        %9675 = vmatpush2.msra.mxu0 0.0
        %9676 = vmatprep.subr.mxu0 0.0
        %9677 = vmatpush2.msra.mxu0 0.0
        %9678 = vmatprep.subr.mxu0 0.0
        %9679 = vmatpush2.msra.mxu0 0.0
        %9680 = vmatprep.subr.mxu0 0.0
        %9681 = vmatpush2.msra.mxu0 0.0
        %9682 = vmatprep.subr.mxu0 0.0
        %9683 = vmatpush2.msra.mxu0 0.0
        %9684 = vmatprep.subr.mxu0 0.0
        %9685 = vmatpush2.msra.mxu0 0.0
        %9686 = vmatprep.subr.mxu0 0.0
        %9687 = vmatpush2.msra.mxu0 0.0
        %9688 = vmatprep.subr.mxu0 0.0
        %9689 = vmatpush2.msra.mxu0 0.0
        %9690 = vmatprep.subr.mxu0 0.0
        %9691 = vmatpush2.msra.mxu0 0.0
        %9692 = vmatprep.subr.mxu0 0.0
        %9693 = vmatpush2.msra.mxu0 0.0
        %9694 = vmatprep.subr.mxu0 0.0
        %9695 = vmatpush2.msra.mxu0 0.0
        %9696 = vmatprep.subr.mxu0 0.0
        %9697 = vmatpush2.msra.mxu0 0.0
        %9698 = vmatprep.subr.mxu0 0.0
        %9699 = vmatpush2.msra.mxu0 0.0
        %9700 = vmatprep.subr.mxu0 0.0
        %9701 = vmatpush2.msra.mxu0 0.0
        %9702 = vmatprep.subr.mxu0 0.0
        %9703 = vmatpush2.msra.mxu0 0.0
        %9704 = vmatprep.subr.mxu0 0.0
        %9705 = vmatpush2.msra.mxu0 0.0
        %9706 = vmatprep.mubr.f32.mxu0 0.0
        %9707 = vmatmul.mubr.f32.gmra.mxu0 %v9628
        %v9708 = vpop.f32.mrf.mxu0
        %v9709 = vadd.f32 0.0, %v9708
        %v9710 = vpop.f32.mrf.mxu0
        %v9711 = vadd.f32 0.0, %v9710
        %9712 = vdwg.mxu0
        %9713 = vmatprep.subr.mxu0 0.0
        %9714 = vmatpush1.msra.mxu0 0.0
        %9715 = vmatprep.subr.mxu0 0.0
        %9716 = vmatpush1.msra.mxu0 0.0
        %9717 = vmatprep.subr.mxu0 0.0
        %9718 = vmatpush1.msra.mxu0 0.0
        %9719 = vmatprep.subr.mxu0 0.0
        %9720 = vmatpush1.msra.mxu0 0.0
        %9721 = vmatprep.subr.mxu0 0.0
        %9722 = vmatpush1.msra.mxu0 0.0
        %9723 = vmatprep.subr.mxu0 0.0
        %9724 = vmatpush1.msra.mxu0 0.0
        %9725 = vmatprep.subr.mxu0 0.0
        %9726 = vmatpush1.msra.mxu0 0.0
        %9727 = vmatprep.subr.mxu0 0.0
        %9728 = vmatpush1.msra.mxu0 0.0
        %9729 = vmatprep.subr.mxu0 0.0
        %9730 = vmatpush1.msra.mxu0 0.0
        %9731 = vmatprep.subr.mxu0 0.0
        %9732 = vmatpush1.msra.mxu0 0.0
        %9733 = vmatprep.subr.mxu0 0.0
        %9734 = vmatpush1.msra.mxu0 0.0
        %9735 = vmatprep.subr.mxu0 0.0
        %9736 = vmatpush1.msra.mxu0 0.0
        %9737 = vmatprep.subr.mxu0 0.0
        %9738 = vmatpush1.msra.mxu0 0.0
        %9739 = vmatprep.subr.mxu0 0.0
        %9740 = vmatpush1.msra.mxu0 0.0
        %9741 = vmatprep.subr.mxu0 0.0
        %9742 = vmatpush1.msra.mxu0 0.0
        %9743 = vmatprep.subr.mxu0 %v9640
        %9744 = vmatpush1.msra.mxu0 %v9637
        %9745 = vmatprep.subr.mxu0 0.0
        %9746 = vmatpush2.msra.mxu0 0.0
        %9747 = vmatprep.subr.mxu0 0.0
        %9748 = vmatpush2.msra.mxu0 0.0
        %9749 = vmatprep.subr.mxu0 0.0
        %9750 = vmatpush2.msra.mxu0 0.0
        %9751 = vmatprep.subr.mxu0 0.0
        %9752 = vmatpush2.msra.mxu0 0.0
        %9753 = vmatprep.subr.mxu0 0.0
        %9754 = vmatpush2.msra.mxu0 0.0
        %9755 = vmatprep.subr.mxu0 0.0
        %9756 = vmatpush2.msra.mxu0 0.0
        %9757 = vmatprep.subr.mxu0 0.0
        %9758 = vmatpush2.msra.mxu0 0.0
        %9759 = vmatprep.subr.mxu0 0.0
        %9760 = vmatpush2.msra.mxu0 0.0
        %9761 = vmatprep.subr.mxu0 0.0
        %9762 = vmatpush2.msra.mxu0 0.0
        %9763 = vmatprep.subr.mxu0 0.0
        %9764 = vmatpush2.msra.mxu0 0.0
        %9765 = vmatprep.subr.mxu0 0.0
        %9766 = vmatpush2.msra.mxu0 0.0
        %9767 = vmatprep.subr.mxu0 0.0
        %9768 = vmatpush2.msra.mxu0 0.0
        %9769 = vmatprep.subr.mxu0 0.0
        %9770 = vmatpush2.msra.mxu0 0.0
        %9771 = vmatprep.subr.mxu0 0.0
        %9772 = vmatpush2.msra.mxu0 0.0
        %9773 = vmatprep.subr.mxu0 0.0
        %9774 = vmatpush2.msra.mxu0 0.0
        %9775 = vmatprep.subr.mxu0 0.0
        %9776 = vmatpush2.msra.mxu0 0.0
        %9777 = vmatprep.mubr.f32.mxu0 0.0
        %9778 = vmatmul.mubr.f32.gmra.mxu0 %v9628
        %v9779 = vpop.f32.mrf.mxu0
        %v9780 = vadd.f32 0.0, %v9779
        %v9781 = vpop.f32.mrf.mxu0
        %v9782 = vadd.f32 0.0, %v9781
        %9783 = vdwg.mxu0
        %v9784 = vadd.f32 %v9617, %v9709
        %v9785 = vadd.f32 %v9618, %v9711
        %v9786 = vadd.f32 %v9619, %v9780
        %v9787 = vadd.f32 %v9620, %v9782
        %v9788 = vmul.f32 %v6664, %v5011
        %v9789 = vmul.f32 %v6663, %v5015
        %v9790 = vmul.f32 %v6662, %v5019
        %v9791 = vmul.f32 %v6665, %v5023
        %s9792 = scalar_lea.vmem %s3, 96
        %v9793 = vld [vmem:[%s9792] sm:$0xf]
        %v9795 = vsel %vm345, %v9793, 0
        %v9798 = vsel %vm349, %v9788, 0
        %v9801 = vsel %vm349, %v9789, 0
        %v9804 = vsel %vm349, %v9790, 0
        %v9807 = vsel %vm349, %v9791, 0
        %9809 = vmatprep.subr.mxu0 0.0
        %9810 = vmatpush1.msra.mxu0 0.0
        %9811 = vmatprep.subr.mxu0 0.0
        %9812 = vmatpush1.msra.mxu0 0.0
        %9813 = vmatprep.subr.mxu0 0.0
        %9814 = vmatpush1.msra.mxu0 0.0
        %9815 = vmatprep.subr.mxu0 0.0
        %9816 = vmatpush1.msra.mxu0 0.0
        %9817 = vmatprep.subr.mxu0 0.0
        %9818 = vmatpush1.msra.mxu0 0.0
        %9819 = vmatprep.subr.mxu0 0.0
        %9820 = vmatpush1.msra.mxu0 0.0
        %9821 = vmatprep.subr.mxu0 0.0
        %9822 = vmatpush1.msra.mxu0 0.0
        %9823 = vmatprep.subr.mxu0 0.0
        %9824 = vmatpush1.msra.mxu0 0.0
        %9825 = vmatprep.subr.mxu0 0.0
        %9826 = vmatpush1.msra.mxu0 0.0
        %9827 = vmatprep.subr.mxu0 0.0
        %9828 = vmatpush1.msra.mxu0 0.0
        %9829 = vmatprep.subr.mxu0 0.0
        %9830 = vmatpush1.msra.mxu0 0.0
        %9831 = vmatprep.subr.mxu0 0.0
        %9832 = vmatpush1.msra.mxu0 0.0
        %9833 = vmatprep.subr.mxu0 0.0
        %9834 = vmatpush1.msra.mxu0 0.0
        %9835 = vmatprep.subr.mxu0 0.0
        %9836 = vmatpush1.msra.mxu0 0.0
        %9837 = vmatprep.subr.mxu0 0.0
        %9838 = vmatpush1.msra.mxu0 0.0
        %9839 = vmatprep.subr.mxu0 %v9801
        %9840 = vmatpush1.msra.mxu0 %v9798
        %9841 = vmatprep.subr.mxu0 0.0
        %9842 = vmatpush2.msra.mxu0 0.0
        %9843 = vmatprep.subr.mxu0 0.0
        %9844 = vmatpush2.msra.mxu0 0.0
        %9845 = vmatprep.subr.mxu0 0.0
        %9846 = vmatpush2.msra.mxu0 0.0
        %9847 = vmatprep.subr.mxu0 0.0
        %9848 = vmatpush2.msra.mxu0 0.0
        %9849 = vmatprep.subr.mxu0 0.0
        %9850 = vmatpush2.msra.mxu0 0.0
        %9851 = vmatprep.subr.mxu0 0.0
        %9852 = vmatpush2.msra.mxu0 0.0
        %9853 = vmatprep.subr.mxu0 0.0
        %9854 = vmatpush2.msra.mxu0 0.0
        %9855 = vmatprep.subr.mxu0 0.0
        %9856 = vmatpush2.msra.mxu0 0.0
        %9857 = vmatprep.subr.mxu0 0.0
        %9858 = vmatpush2.msra.mxu0 0.0
        %9859 = vmatprep.subr.mxu0 0.0
        %9860 = vmatpush2.msra.mxu0 0.0
        %9861 = vmatprep.subr.mxu0 0.0
        %9862 = vmatpush2.msra.mxu0 0.0
        %9863 = vmatprep.subr.mxu0 0.0
        %9864 = vmatpush2.msra.mxu0 0.0
        %9865 = vmatprep.subr.mxu0 0.0
        %9866 = vmatpush2.msra.mxu0 0.0
        %9867 = vmatprep.subr.mxu0 0.0
        %9868 = vmatpush2.msra.mxu0 0.0
        %9869 = vmatprep.subr.mxu0 0.0
        %9870 = vmatpush2.msra.mxu0 0.0
        %9871 = vmatprep.subr.mxu0 0.0
        %9872 = vmatpush2.msra.mxu0 0.0
        %9873 = vmatprep.mubr.f32.mxu0 0.0
        %9874 = vmatmul.mubr.f32.gmra.mxu0 %v9795
        %v9875 = vpop.f32.mrf.mxu0
        %v9876 = vadd.f32 0.0, %v9875
        %v9877 = vpop.f32.mrf.mxu0
        %v9878 = vadd.f32 0.0, %v9877
        %9879 = vdwg.mxu0
        %9880 = vmatprep.subr.mxu0 0.0
        %9881 = vmatpush1.msra.mxu0 0.0
        %9882 = vmatprep.subr.mxu0 0.0
        %9883 = vmatpush1.msra.mxu0 0.0
        %9884 = vmatprep.subr.mxu0 0.0
        %9885 = vmatpush1.msra.mxu0 0.0
        %9886 = vmatprep.subr.mxu0 0.0
        %9887 = vmatpush1.msra.mxu0 0.0
        %9888 = vmatprep.subr.mxu0 0.0
        %9889 = vmatpush1.msra.mxu0 0.0
        %9890 = vmatprep.subr.mxu0 0.0
        %9891 = vmatpush1.msra.mxu0 0.0
        %9892 = vmatprep.subr.mxu0 0.0
        %9893 = vmatpush1.msra.mxu0 0.0
        %9894 = vmatprep.subr.mxu0 0.0
        %9895 = vmatpush1.msra.mxu0 0.0
        %9896 = vmatprep.subr.mxu0 0.0
        %9897 = vmatpush1.msra.mxu0 0.0
        %9898 = vmatprep.subr.mxu0 0.0
        %9899 = vmatpush1.msra.mxu0 0.0
        %9900 = vmatprep.subr.mxu0 0.0
        %9901 = vmatpush1.msra.mxu0 0.0
        %9902 = vmatprep.subr.mxu0 0.0
        %9903 = vmatpush1.msra.mxu0 0.0
        %9904 = vmatprep.subr.mxu0 0.0
        %9905 = vmatpush1.msra.mxu0 0.0
        %9906 = vmatprep.subr.mxu0 0.0
        %9907 = vmatpush1.msra.mxu0 0.0
        %9908 = vmatprep.subr.mxu0 0.0
        %9909 = vmatpush1.msra.mxu0 0.0
        %9910 = vmatprep.subr.mxu0 %v9807
        %9911 = vmatpush1.msra.mxu0 %v9804
        %9912 = vmatprep.subr.mxu0 0.0
        %9913 = vmatpush2.msra.mxu0 0.0
        %9914 = vmatprep.subr.mxu0 0.0
        %9915 = vmatpush2.msra.mxu0 0.0
        %9916 = vmatprep.subr.mxu0 0.0
        %9917 = vmatpush2.msra.mxu0 0.0
        %9918 = vmatprep.subr.mxu0 0.0
        %9919 = vmatpush2.msra.mxu0 0.0
        %9920 = vmatprep.subr.mxu0 0.0
        %9921 = vmatpush2.msra.mxu0 0.0
        %9922 = vmatprep.subr.mxu0 0.0
        %9923 = vmatpush2.msra.mxu0 0.0
        %9924 = vmatprep.subr.mxu0 0.0
        %9925 = vmatpush2.msra.mxu0 0.0
        %9926 = vmatprep.subr.mxu0 0.0
        %9927 = vmatpush2.msra.mxu0 0.0
        %9928 = vmatprep.subr.mxu0 0.0
        %9929 = vmatpush2.msra.mxu0 0.0
        %9930 = vmatprep.subr.mxu0 0.0
        %9931 = vmatpush2.msra.mxu0 0.0
        %9932 = vmatprep.subr.mxu0 0.0
        %9933 = vmatpush2.msra.mxu0 0.0
        %9934 = vmatprep.subr.mxu0 0.0
        %9935 = vmatpush2.msra.mxu0 0.0
        %9936 = vmatprep.subr.mxu0 0.0
        %9937 = vmatpush2.msra.mxu0 0.0
        %9938 = vmatprep.subr.mxu0 0.0
        %9939 = vmatpush2.msra.mxu0 0.0
        %9940 = vmatprep.subr.mxu0 0.0
        %9941 = vmatpush2.msra.mxu0 0.0
        %9942 = vmatprep.subr.mxu0 0.0
        %9943 = vmatpush2.msra.mxu0 0.0
        %9944 = vmatprep.mubr.f32.mxu0 0.0
        %9945 = vmatmul.mubr.f32.gmra.mxu0 %v9795
        %v9946 = vpop.f32.mrf.mxu0
        %v9947 = vadd.f32 0.0, %v9946
        %v9948 = vpop.f32.mrf.mxu0
        %v9949 = vadd.f32 0.0, %v9948
        %9950 = vdwg.mxu0
        %v9951 = vadd.f32 %v9784, %v9876
        %v9952 = vadd.f32 %v9785, %v9878
        %v9953 = vadd.f32 %v9786, %v9947
        %v9954 = vadd.f32 %v9787, %v9949
        %v9955 = vmul.f32 %v6843, %v5201
        %v9956 = vmul.f32 %v6842, %v5205
        %v9957 = vmul.f32 %v6841, %v5209
        %v9958 = vmul.f32 %v6844, %v5213
        %s9959 = scalar_lea.vmem %s3, 100
        %v9960 = vld [vmem:[%s9959] sm:$0xf]
        %v9962 = vsel %vm345, %v9960, 0
        %v9965 = vsel %vm349, %v9955, 0
        %v9968 = vsel %vm349, %v9956, 0
        %v9971 = vsel %vm349, %v9957, 0
        %v9974 = vsel %vm349, %v9958, 0
        %9976 = vmatprep.subr.mxu0 0.0
        %9977 = vmatpush1.msra.mxu0 0.0
        %9978 = vmatprep.subr.mxu0 0.0
        %9979 = vmatpush1.msra.mxu0 0.0
        %9980 = vmatprep.subr.mxu0 0.0
        %9981 = vmatpush1.msra.mxu0 0.0
        %9982 = vmatprep.subr.mxu0 0.0
        %9983 = vmatpush1.msra.mxu0 0.0
        %9984 = vmatprep.subr.mxu0 0.0
        %9985 = vmatpush1.msra.mxu0 0.0
        %9986 = vmatprep.subr.mxu0 0.0
        %9987 = vmatpush1.msra.mxu0 0.0
        %9988 = vmatprep.subr.mxu0 0.0
        %9989 = vmatpush1.msra.mxu0 0.0
        %9990 = vmatprep.subr.mxu0 0.0
        %9991 = vmatpush1.msra.mxu0 0.0
        %9992 = vmatprep.subr.mxu0 0.0
        %9993 = vmatpush1.msra.mxu0 0.0
        %9994 = vmatprep.subr.mxu0 0.0
        %9995 = vmatpush1.msra.mxu0 0.0
        %9996 = vmatprep.subr.mxu0 0.0
        %9997 = vmatpush1.msra.mxu0 0.0
        %9998 = vmatprep.subr.mxu0 0.0
        %9999 = vmatpush1.msra.mxu0 0.0
        %10000 = vmatprep.subr.mxu0 0.0
        %10001 = vmatpush1.msra.mxu0 0.0
        %10002 = vmatprep.subr.mxu0 0.0
        %10003 = vmatpush1.msra.mxu0 0.0
        %10004 = vmatprep.subr.mxu0 0.0
        %10005 = vmatpush1.msra.mxu0 0.0
        %10006 = vmatprep.subr.mxu0 %v9968
        %10007 = vmatpush1.msra.mxu0 %v9965
        %10008 = vmatprep.subr.mxu0 0.0
        %10009 = vmatpush2.msra.mxu0 0.0
        %10010 = vmatprep.subr.mxu0 0.0
        %10011 = vmatpush2.msra.mxu0 0.0
        %10012 = vmatprep.subr.mxu0 0.0
        %10013 = vmatpush2.msra.mxu0 0.0
        %10014 = vmatprep.subr.mxu0 0.0
        %10015 = vmatpush2.msra.mxu0 0.0
        %10016 = vmatprep.subr.mxu0 0.0
        %10017 = vmatpush2.msra.mxu0 0.0
        %10018 = vmatprep.subr.mxu0 0.0
        %10019 = vmatpush2.msra.mxu0 0.0
        %10020 = vmatprep.subr.mxu0 0.0
        %10021 = vmatpush2.msra.mxu0 0.0
        %10022 = vmatprep.subr.mxu0 0.0
        %10023 = vmatpush2.msra.mxu0 0.0
        %10024 = vmatprep.subr.mxu0 0.0
        %10025 = vmatpush2.msra.mxu0 0.0
        %10026 = vmatprep.subr.mxu0 0.0
        %10027 = vmatpush2.msra.mxu0 0.0
        %10028 = vmatprep.subr.mxu0 0.0
        %10029 = vmatpush2.msra.mxu0 0.0
        %10030 = vmatprep.subr.mxu0 0.0
        %10031 = vmatpush2.msra.mxu0 0.0
        %10032 = vmatprep.subr.mxu0 0.0
        %10033 = vmatpush2.msra.mxu0 0.0
        %10034 = vmatprep.subr.mxu0 0.0
        %10035 = vmatpush2.msra.mxu0 0.0
        %10036 = vmatprep.subr.mxu0 0.0
        %10037 = vmatpush2.msra.mxu0 0.0
        %10038 = vmatprep.subr.mxu0 0.0
        %10039 = vmatpush2.msra.mxu0 0.0
        %10040 = vmatprep.mubr.f32.mxu0 0.0
        %10041 = vmatmul.mubr.f32.gmra.mxu0 %v9962
        %v10042 = vpop.f32.mrf.mxu0
        %v10043 = vadd.f32 0.0, %v10042
        %v10044 = vpop.f32.mrf.mxu0
        %v10045 = vadd.f32 0.0, %v10044
        %10046 = vdwg.mxu0
        %10047 = vmatprep.subr.mxu0 0.0
        %10048 = vmatpush1.msra.mxu0 0.0
        %10049 = vmatprep.subr.mxu0 0.0
        %10050 = vmatpush1.msra.mxu0 0.0
        %10051 = vmatprep.subr.mxu0 0.0
        %10052 = vmatpush1.msra.mxu0 0.0
        %10053 = vmatprep.subr.mxu0 0.0
        %10054 = vmatpush1.msra.mxu0 0.0
        %10055 = vmatprep.subr.mxu0 0.0
        %10056 = vmatpush1.msra.mxu0 0.0
        %10057 = vmatprep.subr.mxu0 0.0
        %10058 = vmatpush1.msra.mxu0 0.0
        %10059 = vmatprep.subr.mxu0 0.0
        %10060 = vmatpush1.msra.mxu0 0.0
        %10061 = vmatprep.subr.mxu0 0.0
        %10062 = vmatpush1.msra.mxu0 0.0
        %10063 = vmatprep.subr.mxu0 0.0
        %10064 = vmatpush1.msra.mxu0 0.0
        %10065 = vmatprep.subr.mxu0 0.0
        %10066 = vmatpush1.msra.mxu0 0.0
        %10067 = vmatprep.subr.mxu0 0.0
        %10068 = vmatpush1.msra.mxu0 0.0
        %10069 = vmatprep.subr.mxu0 0.0
        %10070 = vmatpush1.msra.mxu0 0.0
        %10071 = vmatprep.subr.mxu0 0.0
        %10072 = vmatpush1.msra.mxu0 0.0
        %10073 = vmatprep.subr.mxu0 0.0
        %10074 = vmatpush1.msra.mxu0 0.0
        %10075 = vmatprep.subr.mxu0 0.0
        %10076 = vmatpush1.msra.mxu0 0.0
        %10077 = vmatprep.subr.mxu0 %v9974
        %10078 = vmatpush1.msra.mxu0 %v9971
        %10079 = vmatprep.subr.mxu0 0.0
        %10080 = vmatpush2.msra.mxu0 0.0
        %10081 = vmatprep.subr.mxu0 0.0
        %10082 = vmatpush2.msra.mxu0 0.0
        %10083 = vmatprep.subr.mxu0 0.0
        %10084 = vmatpush2.msra.mxu0 0.0
        %10085 = vmatprep.subr.mxu0 0.0
        %10086 = vmatpush2.msra.mxu0 0.0
        %10087 = vmatprep.subr.mxu0 0.0
        %10088 = vmatpush2.msra.mxu0 0.0
        %10089 = vmatprep.subr.mxu0 0.0
        %10090 = vmatpush2.msra.mxu0 0.0
        %10091 = vmatprep.subr.mxu0 0.0
        %10092 = vmatpush2.msra.mxu0 0.0
        %10093 = vmatprep.subr.mxu0 0.0
        %10094 = vmatpush2.msra.mxu0 0.0
        %10095 = vmatprep.subr.mxu0 0.0
        %10096 = vmatpush2.msra.mxu0 0.0
        %10097 = vmatprep.subr.mxu0 0.0
        %10098 = vmatpush2.msra.mxu0 0.0
        %10099 = vmatprep.subr.mxu0 0.0
        %10100 = vmatpush2.msra.mxu0 0.0
        %10101 = vmatprep.subr.mxu0 0.0
        %10102 = vmatpush2.msra.mxu0 0.0
        %10103 = vmatprep.subr.mxu0 0.0
        %10104 = vmatpush2.msra.mxu0 0.0
        %10105 = vmatprep.subr.mxu0 0.0
        %10106 = vmatpush2.msra.mxu0 0.0
        %10107 = vmatprep.subr.mxu0 0.0
        %10108 = vmatpush2.msra.mxu0 0.0
        %10109 = vmatprep.subr.mxu0 0.0
        %10110 = vmatpush2.msra.mxu0 0.0
        %10111 = vmatprep.mubr.f32.mxu0 0.0
        %10112 = vmatmul.mubr.f32.gmra.mxu0 %v9962
        %v10113 = vpop.f32.mrf.mxu0
        %v10114 = vadd.f32 0.0, %v10113
        %v10115 = vpop.f32.mrf.mxu0
        %v10116 = vadd.f32 0.0, %v10115
        %10117 = vdwg.mxu0
        %v10118 = vadd.f32 %v9951, %v10043
        %v10119 = vadd.f32 %v9952, %v10045
        %v10120 = vadd.f32 %v9953, %v10114
        %v10121 = vadd.f32 %v9954, %v10116
        %v10122 = vmul.f32 %v7022, %v5391
        %v10123 = vmul.f32 %v7021, %v5395
        %v10124 = vmul.f32 %v7020, %v5399
        %v10125 = vmul.f32 %v7023, %v5403
        %s10126 = scalar_lea.vmem %s3, 104
        %v10127 = vld [vmem:[%s10126] sm:$0xf]
        %v10129 = vsel %vm345, %v10127, 0
        %v10132 = vsel %vm349, %v10122, 0
        %v10135 = vsel %vm349, %v10123, 0
        %v10138 = vsel %vm349, %v10124, 0
        %v10141 = vsel %vm349, %v10125, 0
        %10143 = vmatprep.subr.mxu0 0.0
        %10144 = vmatpush1.msra.mxu0 0.0
        %10145 = vmatprep.subr.mxu0 0.0
        %10146 = vmatpush1.msra.mxu0 0.0
        %10147 = vmatprep.subr.mxu0 0.0
        %10148 = vmatpush1.msra.mxu0 0.0
        %10149 = vmatprep.subr.mxu0 0.0
        %10150 = vmatpush1.msra.mxu0 0.0
        %10151 = vmatprep.subr.mxu0 0.0
        %10152 = vmatpush1.msra.mxu0 0.0
        %10153 = vmatprep.subr.mxu0 0.0
        %10154 = vmatpush1.msra.mxu0 0.0
        %10155 = vmatprep.subr.mxu0 0.0
        %10156 = vmatpush1.msra.mxu0 0.0
        %10157 = vmatprep.subr.mxu0 0.0
        %10158 = vmatpush1.msra.mxu0 0.0
        %10159 = vmatprep.subr.mxu0 0.0
        %10160 = vmatpush1.msra.mxu0 0.0
        %10161 = vmatprep.subr.mxu0 0.0
        %10162 = vmatpush1.msra.mxu0 0.0
        %10163 = vmatprep.subr.mxu0 0.0
        %10164 = vmatpush1.msra.mxu0 0.0
        %10165 = vmatprep.subr.mxu0 0.0
        %10166 = vmatpush1.msra.mxu0 0.0
        %10167 = vmatprep.subr.mxu0 0.0
        %10168 = vmatpush1.msra.mxu0 0.0
        %10169 = vmatprep.subr.mxu0 0.0
        %10170 = vmatpush1.msra.mxu0 0.0
        %10171 = vmatprep.subr.mxu0 0.0
        %10172 = vmatpush1.msra.mxu0 0.0
        %10173 = vmatprep.subr.mxu0 %v10135
        %10174 = vmatpush1.msra.mxu0 %v10132
        %10175 = vmatprep.subr.mxu0 0.0
        %10176 = vmatpush2.msra.mxu0 0.0
        %10177 = vmatprep.subr.mxu0 0.0
        %10178 = vmatpush2.msra.mxu0 0.0
        %10179 = vmatprep.subr.mxu0 0.0
        %10180 = vmatpush2.msra.mxu0 0.0
        %10181 = vmatprep.subr.mxu0 0.0
        %10182 = vmatpush2.msra.mxu0 0.0
        %10183 = vmatprep.subr.mxu0 0.0
        %10184 = vmatpush2.msra.mxu0 0.0
        %10185 = vmatprep.subr.mxu0 0.0
        %10186 = vmatpush2.msra.mxu0 0.0
        %10187 = vmatprep.subr.mxu0 0.0
        %10188 = vmatpush2.msra.mxu0 0.0
        %10189 = vmatprep.subr.mxu0 0.0
        %10190 = vmatpush2.msra.mxu0 0.0
        %10191 = vmatprep.subr.mxu0 0.0
        %10192 = vmatpush2.msra.mxu0 0.0
        %10193 = vmatprep.subr.mxu0 0.0
        %10194 = vmatpush2.msra.mxu0 0.0
        %10195 = vmatprep.subr.mxu0 0.0
        %10196 = vmatpush2.msra.mxu0 0.0
        %10197 = vmatprep.subr.mxu0 0.0
        %10198 = vmatpush2.msra.mxu0 0.0
        %10199 = vmatprep.subr.mxu0 0.0
        %10200 = vmatpush2.msra.mxu0 0.0
        %10201 = vmatprep.subr.mxu0 0.0
        %10202 = vmatpush2.msra.mxu0 0.0
        %10203 = vmatprep.subr.mxu0 0.0
        %10204 = vmatpush2.msra.mxu0 0.0
        %10205 = vmatprep.subr.mxu0 0.0
        %10206 = vmatpush2.msra.mxu0 0.0
        %10207 = vmatprep.mubr.f32.mxu0 0.0
        %10208 = vmatmul.mubr.f32.gmra.mxu0 %v10129
        %v10209 = vpop.f32.mrf.mxu0
        %v10210 = vadd.f32 0.0, %v10209
        %v10211 = vpop.f32.mrf.mxu0
        %v10212 = vadd.f32 0.0, %v10211
        %10213 = vdwg.mxu0
        %10214 = vmatprep.subr.mxu0 0.0
        %10215 = vmatpush1.msra.mxu0 0.0
        %10216 = vmatprep.subr.mxu0 0.0
        %10217 = vmatpush1.msra.mxu0 0.0
        %10218 = vmatprep.subr.mxu0 0.0
        %10219 = vmatpush1.msra.mxu0 0.0
        %10220 = vmatprep.subr.mxu0 0.0
        %10221 = vmatpush1.msra.mxu0 0.0
        %10222 = vmatprep.subr.mxu0 0.0
        %10223 = vmatpush1.msra.mxu0 0.0
        %10224 = vmatprep.subr.mxu0 0.0
        %10225 = vmatpush1.msra.mxu0 0.0
        %10226 = vmatprep.subr.mxu0 0.0
        %10227 = vmatpush1.msra.mxu0 0.0
        %10228 = vmatprep.subr.mxu0 0.0
        %10229 = vmatpush1.msra.mxu0 0.0
        %10230 = vmatprep.subr.mxu0 0.0
        %10231 = vmatpush1.msra.mxu0 0.0
        %10232 = vmatprep.subr.mxu0 0.0
        %10233 = vmatpush1.msra.mxu0 0.0
        %10234 = vmatprep.subr.mxu0 0.0
        %10235 = vmatpush1.msra.mxu0 0.0
        %10236 = vmatprep.subr.mxu0 0.0
        %10237 = vmatpush1.msra.mxu0 0.0
        %10238 = vmatprep.subr.mxu0 0.0
        %10239 = vmatpush1.msra.mxu0 0.0
        %10240 = vmatprep.subr.mxu0 0.0
        %10241 = vmatpush1.msra.mxu0 0.0
        %10242 = vmatprep.subr.mxu0 0.0
        %10243 = vmatpush1.msra.mxu0 0.0
        %10244 = vmatprep.subr.mxu0 %v10141
        %10245 = vmatpush1.msra.mxu0 %v10138
        %10246 = vmatprep.subr.mxu0 0.0
        %10247 = vmatpush2.msra.mxu0 0.0
        %10248 = vmatprep.subr.mxu0 0.0
        %10249 = vmatpush2.msra.mxu0 0.0
        %10250 = vmatprep.subr.mxu0 0.0
        %10251 = vmatpush2.msra.mxu0 0.0
        %10252 = vmatprep.subr.mxu0 0.0
        %10253 = vmatpush2.msra.mxu0 0.0
        %10254 = vmatprep.subr.mxu0 0.0
        %10255 = vmatpush2.msra.mxu0 0.0
        %10256 = vmatprep.subr.mxu0 0.0
        %10257 = vmatpush2.msra.mxu0 0.0
        %10258 = vmatprep.subr.mxu0 0.0
        %10259 = vmatpush2.msra.mxu0 0.0
        %10260 = vmatprep.subr.mxu0 0.0
        %10261 = vmatpush2.msra.mxu0 0.0
        %10262 = vmatprep.subr.mxu0 0.0
        %10263 = vmatpush2.msra.mxu0 0.0
        %10264 = vmatprep.subr.mxu0 0.0
        %10265 = vmatpush2.msra.mxu0 0.0
        %10266 = vmatprep.subr.mxu0 0.0
        %10267 = vmatpush2.msra.mxu0 0.0
        %10268 = vmatprep.subr.mxu0 0.0
        %10269 = vmatpush2.msra.mxu0 0.0
        %10270 = vmatprep.subr.mxu0 0.0
        %10271 = vmatpush2.msra.mxu0 0.0
        %10272 = vmatprep.subr.mxu0 0.0
        %10273 = vmatpush2.msra.mxu0 0.0
        %10274 = vmatprep.subr.mxu0 0.0
        %10275 = vmatpush2.msra.mxu0 0.0
        %10276 = vmatprep.subr.mxu0 0.0
        %10277 = vmatpush2.msra.mxu0 0.0
        %10278 = vmatprep.mubr.f32.mxu0 0.0
        %10279 = vmatmul.mubr.f32.gmra.mxu0 %v10129
        %v10280 = vpop.f32.mrf.mxu0
        %v10281 = vadd.f32 0.0, %v10280
        %v10282 = vpop.f32.mrf.mxu0
        %v10283 = vadd.f32 0.0, %v10282
        %10284 = vdwg.mxu0
        %v10285 = vadd.f32 %v10118, %v10210
        %v10286 = vadd.f32 %v10119, %v10212
        %v10287 = vadd.f32 %v10120, %v10281
        %v10288 = vadd.f32 %v10121, %v10283
        %v10289 = vld [vmem:[%s5] sm:$0xf]
        %10291 = vset.pattern.permute.xlu0 0
        %10292 = vperm.xlu0 %10291, %v10289
        %v10293 = vpop.permute.xlu0 %10292
        %v10295 = vadd.f32 %v10285, %v10293
        %v10296 = vadd.f32 %v10286, %v10293
        %v10297 = vadd.f32 %v10287, %v10293
        %v10298 = vadd.f32 %v10288, %v10293
        %v10299 = vadd.f32 %v10295, %v253
        %v10300 = vadd.f32 %v10296, %v257
        %v10301 = vadd.f32 %v10297, %v254
        %v10302 = vadd.f32 %v10298, %v258
        %v10303 = vmax.f32 %v10299, 0.0
        %v10304 = vmax.f32 %v10300, 0.0
        %v10305 = vmax.f32 %v10301, 0.0
        %v10306 = vmax.f32 %v10302, 0.0
        %v10311 = vcombine.low %v10303, %v10304
        %v10312 = vcombine.low %v10305, %v10306
        %10315 = vst [vmem:[%s245] sm:$0xff] %v10311
        %10316 = vst [vmem:[%s245 + $0x8] sm:$0xff] %v10312
        %s10317 = sand.u32 %s159, 1
        %s10318 = scalar_lea.sflag [#allocation3], %s10317
        %s10319 = sand.u32 %s159, 1
        %s10320 = smul.addr %s10319, 16
        %s10321 = scalar_lea.vmem [#allocation2], %s10320
        // Predicated region
        $region45: #{tpu_custom_call.1} parent=43 // pred_check
          %p10322 = pneg %p169
        $region46: #{tpu_custom_call.1} parent=43 // pred_check_branch
          %10324 = sbr.rel (%p10322) target = $region48
        $region47: #{tpu_custom_call.1} parent=43 // pred_region
          %s10325 = smul.u32 4, %s20
          %s10327 = ssub.s32 256, 256
          %10328 = vsyncadd %s10318, %s10327
          %s10329 = smul.addr %s10325, 64
          %s10330 = scalar_lea.hbm %s6, %s10329
          %s10332 = sshll.u32 %s10321, 4
          %s10333 = int_to_ptr.vmem [resolvable:$true] %s10332
          %10335 = dma.vmem_to_hbm [thread:$0]  %s10333, 256, %s10330, %s10318
        $region48: #{tpu_custom_call.1} parent=43 // pred_fallthru
          _
      $region44: #{tpu_custom_call.1} parent=5 // pred_fallthru
        _
      %p10336 = scmp.le.s32.totalorder 2, %s15
      // Predicated region
      $region49: #{tpu_custom_call.1} parent=5 // pred_check
        %p10337 = pneg %p10336
      $region50: #{tpu_custom_call.1} parent=5 // pred_check_branch
        %10339 = sbr.rel (%p10337) target = $region52
      $region51: #{tpu_custom_call.1} parent=5 // pred_region
        %s10340 = ssub.s32 %s15, 2
        // Predicated region
        $region53: #{tpu_custom_call.1} parent=51 // pred_check
          %p10341 = pneg %p175
        $region54: #{tpu_custom_call.1} parent=51 // pred_check_branch
          %10343 = sbr.rel (%p10341) target = $region56
        $region55: #{tpu_custom_call.1} parent=51 // pred_region
          %s10344 = sand.u32 %s160, 1
          %s10345 = scalar_lea.sflag [#allocation3], %s10344
          %s10346 = sand.u32 %s160, 1
          %s10347 = smul.addr %s10346, 16
          %s10348 = scalar_lea.vmem [#allocation2], %s10347
          %10349 = dma.done %s10345, 256
        $region56: #{tpu_custom_call.1} parent=51 // pred_fallthru
          _
      $region52: #{tpu_custom_call.1} parent=5 // pred_fallthru
        _
    $region6: #{tpu_custom_call.1} parent=1 // loop_footer
      %s19 = sadd.s32 1, %s15
    $region7: #{tpu_custom_call.1} parent=1 // loop_footer_branch
      %14 = sbr.rel target = $region3
    $region8: #{tpu_custom_call.1} parent=1 // loop_exit
      _
    %10350 = vsyncpa [#allocation3], 1
    %s10351 = scalar_lea.sflag [#allocation3], 1
    %10352 = vsyncpa %s10351, 1

</llo_original>
